<compile_context>
chip_gen: v7x
topology: tpu7x:2x2x1
jax: 0.10.0
libtpu: 0.0.40
codegen_flags: <defaults>
</compile_context>

<pallas_src>
import functools

import jax
import jax.numpy as jnp
from jax.experimental import pallas as pl
from jax.experimental.pallas import tpu as pltpu


def _round_up(x, m):
    return (x + m - 1) // m * m


# ----------------------------------------------------------------------------
# Tiled MXU matmul with fused bias (the conv workhorse)
# ----------------------------------------------------------------------------

def _mm_bias_kernel(a_ref, w_ref, b_ref, o_ref):
    # Single-K-block form: one MXU dot per (i, j) tile, bias fused, bf16 out.
    o_ref[...] = (jnp.dot(a_ref[...], w_ref[...],
                          preferred_element_type=jnp.float32)
                  + b_ref[...]).astype(o_ref.dtype)


def _mm_bias_acc_kernel(a_ref, w_ref, b_ref, o_ref, acc_ref):
    # Fallback for very large K: accumulate over the k grid axis.
    k = pl.program_id(2)

    @pl.when(k == 0)
    def _():
        acc_ref[...] = jnp.zeros_like(acc_ref)

    acc_ref[...] += jnp.dot(a_ref[...], w_ref[...],
                            preferred_element_type=jnp.float32)

    @pl.when(k == pl.num_programs(2) - 1)
    def _():
        o_ref[...] = (acc_ref[...] + b_ref[...]).astype(o_ref.dtype)


def _matmul_bias(a, w, b):
    """(M, K) @ (K, N) + b ; bf16 operands, f32 accumulate, bf16 output."""
    M, K = a.shape
    _, N = w.shape

    Np0 = _round_up(N, 128)
    tn = 256 if Np0 >= 256 else 128          # lane-dense output tiles
    Np = _round_up(N, tn)
    tm = _round_up(M, 8) if M <= 512 else 512
    Mp = _round_up(M, tm)

    if K > 2048:                             # fallback path only
        tk = 512
        Kp = _round_up(K, tk)
    else:
        tk = None
        Kp = _round_up(K, 128)

    a_bf = a.astype(jnp.bfloat16)
    w_bf = w.astype(jnp.bfloat16)
    if (Mp, Kp) != (M, K):
        a_bf = jnp.pad(a_bf, ((0, Mp - M), (0, Kp - K)))
    if (Kp, Np) != (K, N):
        w_bf = jnp.pad(w_bf, ((0, Kp - K), (0, Np - N)))
    b_p = jnp.pad(b.astype(jnp.float32), (0, Np - N)).reshape(1, Np)

    if tk is None:
        out = pl.pallas_call(
            _mm_bias_kernel,
            grid=(Mp // tm, Np // tn),
            in_specs=[pl.BlockSpec((tm, Kp), lambda i, j: (i, 0)),
                      pl.BlockSpec((Kp, tn), lambda i, j: (0, j)),
                      pl.BlockSpec((1, tn), lambda i, j: (0, j))],
            out_specs=pl.BlockSpec((tm, tn), lambda i, j: (i, j)),
            out_shape=jax.ShapeDtypeStruct((Mp, Np), jnp.bfloat16),
            compiler_params=pltpu.CompilerParams(
                dimension_semantics=("parallel", "parallel")),
        )(a_bf, w_bf, b_p)
    else:
        out = pl.pallas_call(
            _mm_bias_acc_kernel,
            grid=(Mp // tm, Np // tn, Kp // tk),
            in_specs=[pl.BlockSpec((tm, tk), lambda i, j, k: (i, k)),
                      pl.BlockSpec((tk, tn), lambda i, j, k: (k, j)),
                      pl.BlockSpec((1, tn), lambda i, j, k: (0, j))],
            out_specs=pl.BlockSpec((tm, tn), lambda i, j, k: (i, j)),
            out_shape=jax.ShapeDtypeStruct((Mp, Np), jnp.bfloat16),
            scratch_shapes=[pltpu.VMEM((tm, tn), jnp.float32)],
            compiler_params=pltpu.CompilerParams(
                dimension_semantics=("parallel", "parallel", "arbitrary")),
        )(a_bf, w_bf, b_p)
    return out[:M, :N]


# ----------------------------------------------------------------------------
# Conv2d = im2col (bf16, NHWC layout glue) + tiled Pallas matmul
# ----------------------------------------------------------------------------

def conv2d(x, p, stride, pad):
    """x: (N, H, W, C) NHWC; p['w']: (k*k*Cin, Cout), rows ordered (ki, kj, cin)."""
    k = p["k"]
    x = x.astype(jnp.bfloat16)               # bf16 before the 9x patch expansion
    N, H, W, C = x.shape
    Ho = (H + 2 * pad - k) // stride + 1
    Wo = (W + 2 * pad - k) // stride + 1
    if k == 1 and stride == 1 and pad == 0:
        patches = x.reshape(N * H * W, C)     # 1x1 conv: no im2col at all
    else:
        # TODO(synk): for large images fold the k*k tap loop into the matmul
        # kernel (halo'd input tiles) instead of materializing im2col in HBM.
        xp = jnp.pad(x, ((0, 0), (pad, pad), (pad, pad), (0, 0)))
        cols = [
            xp[:, i:i + Ho * stride:stride, j:j + Wo * stride:stride, :]
            for i in range(k) for j in range(k)
        ]
        patches = jnp.concatenate(cols, axis=-1).reshape(N * Ho * Wo, k * k * C)
    out = _matmul_bias(patches, p["w"], p["b"])     # (N*Ho*Wo, Cout) bf16
    return out.reshape(N, Ho, Wo, -1)


# ----------------------------------------------------------------------------
# InstanceNorm2d (+LeakyReLU 0.2  /  +residual add) -- bf16 in/out, f32 math
# ----------------------------------------------------------------------------

def _in_lrelu_kernel(x_ref, o_ref):
    x = x_ref[...].astype(jnp.float32)               # (HW, C)
    mean = jnp.mean(x, axis=0, keepdims=True)
    xc = x - mean
    var = jnp.mean(xc * xc, axis=0, keepdims=True)
    y = xc * jax.lax.rsqrt(var + 1e-5)
    o_ref[...] = jnp.where(y >= 0.0, y, 0.2 * y).astype(o_ref.dtype)


def _in_add_kernel(x_ref, r_ref, o_ref):
    x = x_ref[...].astype(jnp.float32)
    mean = jnp.mean(x, axis=0, keepdims=True)
    xc = x - mean
    var = jnp.mean(xc * xc, axis=0, keepdims=True)
    y = xc * jax.lax.rsqrt(var + 1e-5)
    o_ref[...] = (y + r_ref[...].astype(jnp.float32)).astype(o_ref.dtype)


def instance_norm(x, residual=None):
    """InstanceNorm2d (eps=1e-5, affine=False); +LeakyReLU(0.2) or +residual."""
    # TODO(synk): channels-in-sublanes / HW-in-lanes layout for lane-dense stores.
    N, H, W, C = x.shape
    HW = H * W
    x3 = x.reshape(N, HW, C).astype(jnp.bfloat16)
    spec = pl.BlockSpec((None, HW, C), lambda i: (i, 0, 0))
    out_shape = jax.ShapeDtypeStruct((N, HW, C), jnp.bfloat16)
    cp = pltpu.CompilerParams(dimension_semantics=("parallel",))
    if residual is None:
        out = pl.pallas_call(_in_lrelu_kernel, grid=(N,), out_shape=out_shape,
                             in_specs=[spec], out_specs=spec,
                             compiler_params=cp)(x3)
    else:
        r3 = residual.reshape(N, HW, C).astype(jnp.bfloat16)
        out = pl.pallas_call(_in_add_kernel, grid=(N,), out_shape=out_shape,
                             in_specs=[spec, spec], out_specs=spec,
                             compiler_params=cp)(x3, r3)
    return out.reshape(N, H, W, C)


# ----------------------------------------------------------------------------
# Correspondence warp fused with to_rgb (1x1 conv) + tanh
# ----------------------------------------------------------------------------

def _warp_to_rgb_kernel(fa_ref, fb_ref, br_ref, wrgb_ref, brgb_ref,
                        bw_ref, bi_ref, fan_ref, fbm_ref, *, tp, hw):
    r = pl.program_id(1)

    @pl.when(r == 0)
    def _():
        bw_ref[...] = jnp.zeros_like(bw_ref)
        fa = fa_ref[...].astype(jnp.float32)                 # (HW, C)
        fb = fb_ref[...].astype(jnp.float32)                 # (HWp, C)
        hwp = fb.shape[0]
        fa_mean = jnp.mean(fa, axis=0, keepdims=True)
        fa_c = fa - fa_mean
        norm_a = jnp.sqrt(jnp.sum(fa_c * fa_c, axis=1, keepdims=True))   # (HW,1)
        if hwp == hw:
            fb_mean = jnp.mean(fb, axis=0, keepdims=True)
            fb_real = fb
        else:
            rows = jax.lax.broadcasted_iota(jnp.int32, (hwp, 1), 0)
            valid = (rows < hw).astype(jnp.float32)
            fb_mean = jnp.sum(fb * valid, axis=0, keepdims=True) / hw
            fb_real = fb[:hw, :]
        fbm_ref[...] = fb_mean
        # Reference quirk (1): "fa" = centered fb divided by centered fa's norm.
        fan_ref[...] = ((fb_real - fb_mean) / norm_a).astype(jnp.bfloat16)

    fb_mean = fbm_ref[...]                                    # (1, C) f32
    start = pl.multiple_of(r * tp, tp)
    fb_t = fb_ref[pl.ds(start, tp), :].astype(jnp.float32) - fb_mean      # (tp, C)
    norm_b = jnp.sqrt(jnp.sum(fb_t * fb_t, axis=1, keepdims=True))
    fb_n = (fb_t / norm_b).astype(jnp.bfloat16)

    # energy_T[j, i] = sum_c fa_n[j, c] * fb_n[i, c]   (j: fa pos, i: fb pos)
    energy_t = jax.lax.dot_general(fan_ref[...], fb_n, (((1,), (1,)), ((), ())),
                                   preferred_element_type=jnp.float32)    # (HW, tp)
    # Reference quirk (2): softmax_alpha is never applied to the logits.
    m = jnp.max(energy_t, axis=0, keepdims=True)                          # (1, tp)
    e = jnp.exp(energy_t - m)
    inv = 1.0 / jnp.sum(e, axis=0, keepdims=True)                         # exact, tiny
    corr_t = (e * inv).astype(jnp.bfloat16)                               # (HW, tp)

    # b_warp[j, c] += sum_i corr[i, j] * b_raw[i, c]  (MXU-direct, no transpose;
    # padded fb rows multiply zero b_raw rows -> zero contribution)
    br_t = br_ref[pl.ds(start, tp), :]                                    # (tp, C) bf16
    bw_ref[...] += jnp.dot(corr_t, br_t, preferred_element_type=jnp.float32)

    @pl.when(r == pl.num_programs(1) - 1)
    def _():
        bw = bw_ref[...]                                                  # (HW, C) f32
        bi_ref[...] = jnp.tanh(
            jnp.dot(bw, wrgb_ref[...], preferred_element_type=jnp.float32)
            + brgb_ref[...])


def warp_to_rgb(fa, fb, b_raw, rgb_p):
    """Correspondence warp + fused to_rgb(1x1)+tanh. NHWC in, NHWC out."""
    N, H, W, C = fa.shape
    HW = H * W
    tp = min(512, _round_up(HW, 8))          # capped row tile; pad instead of tp=HW
    HWp = _round_up(HW, tp)
    n_rgb = rgb_p["w"].shape[1]

    fa3 = fa.reshape(N, HW, C).astype(jnp.bfloat16)
    fb3 = fb.reshape(N, HW, C).astype(jnp.bfloat16)
    br3 = b_raw.reshape(N, HW, C).astype(jnp.bfloat16)
    if HWp != HW:
        fb3 = jnp.pad(fb3, ((0, 0), (0, HWp - HW), (0, 0)), mode="edge")
        br3 = jnp.pad(br3, ((0, 0), (0, HWp - HW), (0, 0)))   # zeros
    w_rgb = rgb_p["w"].astype(jnp.float32)                    # (C, 3)
    b_rgb = rgb_p["b"].astype(jnp.float32).reshape(1, n_rgb)

    # Explicit VMEM budget (v7x has 64 MiB physical / 32 MiB scoped default).
    est = (2 * (HW * C * 2 + 2 * HWp * C * 2 + HW * C * 4 + HW * n_rgb * 4)
           + HW * C * 2 + C * 4 + 6 * HW * tp * 4)
    vmem_limit = int(min(max(2 * est + (4 << 20), 32 << 20), 64 << 20))

    # TODO(synk): add a second (flash-style) parallel axis over fa positions so
    # the warp stage uses both v7x TensorCores when the batch is small.
    bw, bi = pl.pallas_call(
        functools.partial(_warp_to_rgb_kernel, tp=tp, hw=HW),
        grid=(N, HWp // tp),
        in_specs=[pl.BlockSpec((None, HW, C), lambda b, r: (b, 0, 0)),
                  pl.BlockSpec((None, HWp, C), lambda b, r: (b, 0, 0)),
                  pl.BlockSpec((None, HWp, C), lambda b, r: (b, 0, 0)),
                  pl.BlockSpec((C, n_rgb), lambda b, r: (0, 0)),
                  pl.BlockSpec((1, n_rgb), lambda b, r: (0, 0))],
        out_specs=[pl.BlockSpec((None, HW, C), lambda b, r: (b, 0, 0)),
                   pl.BlockSpec((None, HW, n_rgb), lambda b, r: (b, 0, 0))],
        out_shape=(jax.ShapeDtypeStruct((N, HW, C), jnp.float32),
                   jax.ShapeDtypeStruct((N, HW, n_rgb), jnp.float32)),
        scratch_shapes=[pltpu.VMEM((HW, C), jnp.bfloat16),    # cached fa_n
                        pltpu.VMEM((1, C), jnp.float32)],     # cached fb_mean
        compiler_params=pltpu.CompilerParams(
            dimension_semantics=("parallel", "arbitrary"),
            vmem_limit_bytes=vmem_limit),
    )(fa3, fb3, br3, w_rgb, b_rgb)
    return bw.reshape(N, H, W, C), bi.reshape(N, H, W, n_rgb)


# ----------------------------------------------------------------------------
# Parameter initialization (deterministic, synthetic)
# ----------------------------------------------------------------------------

def _init_conv(key, cin, cout, k):
    kw, kb = jax.random.split(key)
    fan_in = cin * k * k
    w = jax.random.normal(kw, (k * k * cin, cout), jnp.float32) * (fan_in ** -0.5)
    b = jax.random.normal(kb, (cout,), jnp.float32) * 0.01
    return {"w": w, "b": b, "k": k}


def _init_basic_block(key, cin, cout):
    k1, k2, k3 = jax.random.split(key, 3)
    p = {"conv1": _init_conv(k1, cin, cout, 3), "conv2": _init_conv(k2, cout, cout, 3)}
    if cin != cout:
        p["shortcut"] = _init_conv(k3, cin, cout, 1)
    return p


def _init_adaptor(key, nc, ngf):
    keys = jax.random.split(key, 9)
    combos = [
        (nc, ngf, 3, 1, 1),
        (ngf, ngf * 2, 4, 2, 1),
        (ngf * 2, ngf * 4, 3, 1, 1),
        (ngf * 4, ngf * 8, 4, 2, 1),
        (ngf * 8, ngf * 8, 3, 1, 1),
        (ngf * 8, ngf * 8, 4, 2, 1),
    ]
    layers = []
    for i, (cin, cout, kk, s, pd) in enumerate(combos):
        layers.append(("combo", _init_conv(keys[i], cin, cout, kk), s, pd))
    for j, (cin, cout) in enumerate([(ngf * 8, ngf * 4), (ngf * 4, ngf * 4),
                                     (ngf * 4, ngf * 4)]):
        layers.append(("block", _init_basic_block(keys[6 + j], cin, cout)))
    return layers


def init_correspondence_net(key, ncA, ncB, ngf):
    kA, kB, kF, kC, kR = jax.random.split(key, 5)
    afb_keys = jax.random.split(kF, 5)
    afb = {
        "blocks": [_init_basic_block(afb_keys[i], ngf * 4, ngf * 4) for i in range(4)],
        "final": _init_conv(kC, ngf * 4, ngf * 4, 1),
    }
    return {
        "adaptorA": _init_adaptor(kA, ncA, ngf),
        "adaptorB": _init_adaptor(kB, ncB, ngf),
        "afb": afb,
        "to_rgb": _init_conv(kR, ngf * 4, 3, 1),
    }


# ----------------------------------------------------------------------------
# Forward pass
# ----------------------------------------------------------------------------

def run_basic_block(x, p):
    # TODO(synk): fuse the IN epilogues into the conv matmul for the deep layers.
    h = conv2d(x, p["conv1"], 1, 1)
    h = instance_norm(h)                        # IN + LeakyReLU(0.2)
    h = conv2d(h, p["conv2"], 1, 1)
    sc = conv2d(x, p["shortcut"], 1, 0) if "shortcut" in p else x
    return instance_norm(h, residual=sc)        # IN + residual add


def run_adaptor(x, layers):
    for layer in layers:
        if layer[0] == "combo":
            _, p, s, pd = layer
            x = conv2d(x, p, s, pd)
            x = instance_norm(x)                # IN + LeakyReLU(0.2)
        else:
            x = run_basic_block(x, layer[1])
    return x


def run_adaptive_feature_block(x, afb):
    for p in afb["blocks"]:
        x = run_basic_block(x, p)
    return conv2d(x, afb["final"], 1, 0)


def correspondence_net_forward(params, a, b):
    # NCHW at the module boundary (PyTorch layout); NHWC + bf16 inside.
    a = jnp.transpose(a, (0, 2, 3, 1))
    b = jnp.transpose(b, (0, 2, 3, 1))
    sa = run_adaptor(a, params["adaptorA"])
    sb = run_adaptor(b, params["adaptorB"])
    fa = run_adaptive_feature_block(sa, params["afb"])
    fb = run_adaptive_feature_block(sb, params["afb"])
    b_warp, b_img = warp_to_rgb(fa, fb, sb, params["to_rgb"])
    nchw = lambda t: jnp.transpose(t.astype(jnp.float32), (0, 3, 1, 2))
    return nchw(sa), nchw(sb), nchw(b_warp), nchw(b_img)


# ----------------------------------------------------------------------------

if __name__ == "__main__":
    key = jax.random.PRNGKey(0)
    ngf, ncA, ncB = 8, 3, 3
    N, H, W = 2, 16, 16          # spatial must be divisible by 8 (3 stride-2 convs)

    k_params, k_a, k_b = jax.random.split(key, 3)
    params = init_correspondence_net(k_params, ncA, ncB, ngf)
    a = jax.random.normal(k_a, (N, ncA, H, W), jnp.float32)
    b = jax.random.normal(k_b, (N, ncB, H, W), jnp.float32)

    fwd = jax.jit(functools.partial(correspondence_net_forward, params))
    sa, sb, b_warp, b_img = fwd(a, b)
    jax.block_until_ready((sa, sb, b_warp, b_img))

    assert sa.shape == (N, ngf * 4, H // 8, W // 8)
    assert sb.shape == (N, ngf * 4, H // 8, W // 8)
    assert b_warp.shape == (N, ngf * 4, H // 8, W // 8)
    assert b_img.shape == (N, 3, H // 8, W // 8)
    print("KERNEL_OK")
</pallas_src>

<mosaic_0001>
module attributes {stable_mosaic.version = 11 : i64} {
  func.func @_mm_bias_kernel(%arg0: i32, %arg1: i32, %arg2: memref<512x128xbf16, #tpu.memory_space<vmem>>, %arg3: memref<128x128xbf16, #tpu.memory_space<vmem>>, %arg4: memref<1x128xf32, #tpu.memory_space<vmem>>, %arg5: memref<512x128xbf16, #tpu.memory_space<vmem>>) attributes {dimension_semantics = [#tpu.dimension_semantics<parallel>, #tpu.dimension_semantics<parallel>], iteration_bounds = array<i64: 1, 1>, scalar_prefetch = 0 : i64, scratch_operands = 0 : i64, tpu.core_type = #tpu.core_type<tc>, window_params = [{transform_indices = @transform_0, window_bounds = array<i64: 512, 128>}, {transform_indices = @transform_1, window_bounds = array<i64: 128, 128>}, {transform_indices = @transform_2, window_bounds = array<i64: 1, 128>}, {transform_indices = @transform_3, window_bounds = array<i64: 512, 128>}]} {
    %c0 = arith.constant 0 : index
    %c0_0 = arith.constant 0 : index
    %0 = vector.load %arg2[%c0, %c0_0] : memref<512x128xbf16, #tpu.memory_space<vmem>>, vector<512x128xbf16>
    %c0_1 = arith.constant 0 : index
    %c0_2 = arith.constant 0 : index
    %1 = vector.load %arg3[%c0_1, %c0_2] : memref<128x128xbf16, #tpu.memory_space<vmem>>, vector<128x128xbf16>
    %cst = arith.constant dense<0.000000e+00> : vector<512x128xf32>
    %2 = tpu.matmul %0, %1, %cst {dimension_numbers = #tpu.dot_dimension_numbers<[1], [0], [0], [1], [0, 0, 1, 1], [], []>} : vector<512x128xbf16>, vector<128x128xbf16>, vector<512x128xf32> -> vector<512x128xf32>
    %c0_3 = arith.constant 0 : index
    %c0_4 = arith.constant 0 : index
    %3 = vector.load %arg4[%c0_3, %c0_4] : memref<1x128xf32, #tpu.memory_space<vmem>>, vector<1x128xf32>
    %4 = vector.broadcast %3 : vector<1x128xf32> to vector<512x128xf32>
    %5 = arith.addf %2, %4 : vector<512x128xf32>
    %6 = arith.truncf %5 : vector<512x128xf32> to vector<512x128xbf16>
    %c0_5 = arith.constant 0 : index
    %c0_6 = arith.constant 0 : index
    %7 = vector.load %arg5[%c0_5, %c0_6] : memref<512x128xbf16, #tpu.memory_space<vmem>>, vector<512x128xbf16>
    tpu.vector_store %arg5[%c0_5, %c0_6], %6 {strides = array<i32>} : memref<512x128xbf16, #tpu.memory_space<vmem>>, vector<512x128xbf16>,
    return
  }
  func.func @transform_0(%arg0: i32, %arg1: i32) -> (i32, i32) {
    %c0_i32 = arith.constant 0 : i32
    %c0_i32_0 = arith.constant 0 : i32
    return %arg0, %c0_i32 : i32, i32
  }
  func.func @transform_1(%arg0: i32, %arg1: i32) -> (i32, i32) {
    %c0_i32 = arith.constant 0 : i32
    %c0_i32_0 = arith.constant 0 : i32
    return %c0_i32, %arg1 : i32, i32
  }
  func.func @transform_2(%arg0: i32, %arg1: i32) -> (i32, i32) {
    %c0_i32 = arith.constant 0 : i32
    %c0_i32_0 = arith.constant 0 : i32
    return %c0_i32, %arg1 : i32, i32
  }
  func.func @transform_3(%arg0: i32, %arg1: i32) -> (i32, i32) {
    %c0_i32 = arith.constant 0 : i32
    return %arg0, %arg1 : i32, i32
  }
}

module attributes {stable_mosaic.version = 11 : i64} {
  func.func @_in_lrelu_kernel(%arg0: i32, %arg1: memref<1x256x8xbf16, #tpu.memory_space<vmem>>, %arg2: memref<1x256x8xbf16, #tpu.memory_space<vmem>>) attributes {dimension_semantics = [#tpu.dimension_semantics<parallel>], iteration_bounds = array<i64: 2>, scalar_prefetch = 0 : i64, scratch_operands = 0 : i64, tpu.core_type = #tpu.core_type<tc>, window_params = [{transform_indices = @transform_0, window_bounds = array<i64: 1, 256, 8>}, {transform_indices = @transform_1, window_bounds = array<i64: 1, 256, 8>}]} {
    %c0 = arith.constant 0 : index
    %c0_0 = arith.constant 0 : index
    %c0_1 = arith.constant 0 : index
    %0 = vector.load %arg1[%c0, %c0_0, %c0_1] : memref<1x256x8xbf16, #tpu.memory_space<vmem>>, vector<1x256x8xbf16>
    %1 = vector.shape_cast %0 : vector<1x256x8xbf16> to vector<256x8xbf16>
    %2 = arith.extf %1 : vector<256x8xbf16> to vector<256x8xf32>
    %cst = arith.constant dense<0.000000e+00> : vector<8xf32>
    %3 = vector.multi_reduction <add>, %2, %cst [0] : vector<256x8xf32> to vector<8xf32>
    %4 = vector.shape_cast %3 : vector<8xf32> to vector<1x8xf32>
    %cst_2 = arith.constant 2.560000e+02 : f32
    %5 = vector.broadcast %cst_2 : f32 to vector<1x8xf32>
    %6 = arith.divf %4, %5 : vector<1x8xf32>
    %7 = vector.broadcast %6 : vector<1x8xf32> to vector<256x8xf32>
    %8 = arith.subf %2, %7 : vector<256x8xf32>
    %9 = arith.mulf %8, %8 : vector<256x8xf32>
    %cst_3 = arith.constant dense<0.000000e+00> : vector<8xf32>
    %10 = vector.multi_reduction <add>, %9, %cst_3 [0] : vector<256x8xf32> to vector<8xf32>
    %11 = vector.shape_cast %10 : vector<8xf32> to vector<1x8xf32>
    %cst_4 = arith.constant 2.560000e+02 : f32
    %12 = vector.broadcast %cst_4 : f32 to vector<1x8xf32>
    %13 = arith.divf %11, %12 : vector<1x8xf32>
    %cst_5 = arith.constant 9.99999974E-6 : f32
    %14 = vector.broadcast %cst_5 : f32 to vector<1x8xf32>
    %15 = arith.addf %13, %14 : vector<1x8xf32>
    %16 = math.rsqrt %15 : vector<1x8xf32>
    %17 = vector.broadcast %16 : vector<1x8xf32> to vector<256x8xf32>
    %18 = arith.mulf %8, %17 : vector<256x8xf32>
    %cst_6 = arith.constant 0.000000e+00 : f32
    %19 = vector.broadcast %cst_6 : f32 to vector<256x8xf32>
    %20 = arith.cmpf oge, %18, %19 : vector<256x8xf32>
    %cst_7 = arith.constant 2.000000e-01 : f32
    %21 = vector.broadcast %cst_7 : f32 to vector<256x8xf32>
    %22 = arith.mulf %21, %18 : vector<256x8xf32>
    %23 = arith.select %20, %18, %22 : vector<256x8xi1>, vector<256x8xf32>
    %24 = arith.truncf %23 : vector<256x8xf32> to vector<256x8xbf16>
    %c0_8 = arith.constant 0 : index
    %c0_9 = arith.constant 0 : index
    %c0_10 = arith.constant 0 : index
    %25 = vector.load %arg2[%c0_8, %c0_9, %c0_10] : memref<1x256x8xbf16, #tpu.memory_space<vmem>>, vector<1x256x8xbf16>
    %26 = vector.shape_cast %25 : vector<1x256x8xbf16> to vector<256x8xbf16>
    %27 = vector.shape_cast %24 : vector<256x8xbf16> to vector<1x256x8xbf16>
    tpu.vector_store %arg2[%c0_8, %c0_9, %c0_10], %27 {strides = array<i32>} : memref<1x256x8xbf16, #tpu.memory_space<vmem>>, vector<1x256x8xbf16>,
    return
  }
  func.func @transform_0(%arg0: i32) -> (i32, i32, i32) {
    %c0_i32 = arith.constant 0 : i32
    %c0_i32_0 = arith.constant 0 : i32
    %c0_i32_1 = arith.constant 0 : i32
    return %arg0, %c0_i32, %c0_i32_0 : i32, i32, i32
  }
  func.func @transform_1(%arg0: i32) -> (i32, i32, i32) {
    %c0_i32 = arith.constant 0 : i32
    %c0_i32_0 = arith.constant 0 : i32
    %c0_i32_1 = arith.constant 0 : i32
    return %arg0, %c0_i32, %c0_i32_0 : i32, i32, i32
  }
}

module attributes {stable_mosaic.version = 11 : i64} {
  func.func @_in_lrelu_kernel(%arg0: i32, %arg1: memref<1x64x16xbf16, #tpu.memory_space<vmem>>, %arg2: memref<1x64x16xbf16, #tpu.memory_space<vmem>>) attributes {dimension_semantics = [#tpu.dimension_semantics<parallel>], iteration_bounds = array<i64: 2>, scalar_prefetch = 0 : i64, scratch_operands = 0 : i64, tpu.core_type = #tpu.core_type<tc>, window_params = [{transform_indices = @transform_0, window_bounds = array<i64: 1, 64, 16>}, {transform_indices = @transform_1, window_bounds = array<i64: 1, 64, 16>}]} {
    %c0 = arith.constant 0 : index
    %c0_0 = arith.constant 0 : index
    %c0_1 = arith.constant 0 : index
    %0 = vector.load %arg1[%c0, %c0_0, %c0_1] : memref<1x64x16xbf16, #tpu.memory_space<vmem>>, vector<1x64x16xbf16>
    %1 = vector.shape_cast %0 : vector<1x64x16xbf16> to vector<64x16xbf16>
    %2 = arith.extf %1 : vector<64x16xbf16> to vector<64x16xf32>
    %cst = arith.constant dense<0.000000e+00> : vector<16xf32>
    %3 = vector.multi_reduction <add>, %2, %cst [0] : vector<64x16xf32> to vector<16xf32>
    %4 = vector.shape_cast %3 : vector<16xf32> to vector<1x16xf32>
    %cst_2 = arith.constant 6.400000e+01 : f32
    %5 = vector.broadcast %cst_2 : f32 to vector<1x16xf32>
    %6 = arith.divf %4, %5 : vector<1x16xf32>
    %7 = vector.broadcast %6 : vector<1x16xf32> to vector<64x16xf32>
    %8 = arith.subf %2, %7 : vector<64x16xf32>
    %9 = arith.mulf %8, %8 : vector<64x16xf32>
    %cst_3 = arith.constant dense<0.000000e+00> : vector<16xf32>
    %10 = vector.multi_reduction <add>, %9, %cst_3 [0] : vector<64x16xf32> to vector<16xf32>
    %11 = vector.shape_cast %10 : vector<16xf32> to vector<1x16xf32>
    %cst_4 = arith.constant 6.400000e+01 : f32
    %12 = vector.broadcast %cst_4 : f32 to vector<1x16xf32>
    %13 = arith.divf %11, %12 : vector<1x16xf32>
    %cst_5 = arith.constant 9.99999974E-6 : f32
    %14 = vector.broadcast %cst_5 : f32 to vector<1x16xf32>
    %15 = arith.addf %13, %14 : vector<1x16xf32>
    %16 = math.rsqrt %15 : vector<1x16xf32>
    %17 = vector.broadcast %16 : vector<1x16xf32> to vector<64x16xf32>
    %18 = arith.mulf %8, %17 : vector<64x16xf32>
    %cst_6 = arith.constant 0.000000e+00 : f32
    %19 = vector.broadcast %cst_6 : f32 to vector<64x16xf32>
    %20 = arith.cmpf oge, %18, %19 : vector<64x16xf32>
    %cst_7 = arith.constant 2.000000e-01 : f32
    %21 = vector.broadcast %cst_7 : f32 to vector<64x16xf32>
    %22 = arith.mulf %21, %18 : vector<64x16xf32>
    %23 = arith.select %20, %18, %22 : vector<64x16xi1>, vector<64x16xf32>
    %24 = arith.truncf %23 : vector<64x16xf32> to vector<64x16xbf16>
    %c0_8 = arith.constant 0 : index
    %c0_9 = arith.constant 0 : index
    %c0_10 = arith.constant 0 : index
    %25 = vector.load %arg2[%c0_8, %c0_9, %c0_10] : memref<1x64x16xbf16, #tpu.memory_space<vmem>>, vector<1x64x16xbf16>
    %26 = vector.shape_cast %25 : vector<1x64x16xbf16> to vector<64x16xbf16>
    %27 = vector.shape_cast %24 : vector<64x16xbf16> to vector<1x64x16xbf16>
    tpu.vector_store %arg2[%c0_8, %c0_9, %c0_10], %27 {strides = array<i32>} : memref<1x64x16xbf16, #tpu.memory_space<vmem>>, vector<1x64x16xbf16>,
    return
  }
  func.func @transform_0(%arg0: i32) -> (i32, i32, i32) {
    %c0_i32 = arith.constant 0 : i32
    %c0_i32_0 = arith.constant 0 : i32
    %c0_i32_1 = arith.constant 0 : i32
    return %arg0, %c0_i32, %c0_i32_0 : i32, i32, i32
  }
  func.func @transform_1(%arg0: i32) -> (i32, i32, i32) {
    %c0_i32 = arith.constant 0 : i32
    %c0_i32_0 = arith.constant 0 : i32
    %c0_i32_1 = arith.constant 0 : i32
    return %arg0, %c0_i32, %c0_i32_0 : i32, i32, i32
  }
}

module attributes {stable_mosaic.version = 11 : i64} {
  func.func @_mm_bias_kernel(%arg0: i32, %arg1: i32, %arg2: memref<128x128xbf16, #tpu.memory_space<vmem>>, %arg3: memref<128x128xbf16, #tpu.memory_space<vmem>>, %arg4: memref<1x128xf32, #tpu.memory_space<vmem>>, %arg5: memref<128x128xbf16, #tpu.memory_space<vmem>>) attributes {dimension_semantics = [#tpu.dimension_semantics<parallel>, #tpu.dimension_semantics<parallel>], iteration_bounds = array<i64: 1, 1>, scalar_prefetch = 0 : i64, scratch_operands = 0 : i64, tpu.core_type = #tpu.core_type<tc>, window_params = [{transform_indices = @transform_0, window_bounds = array<i64: 128, 128>}, {transform_indices = @transform_1, window_bounds = array<i64: 128, 128>}, {transform_indices = @transform_2, window_bounds = array<i64: 1, 128>}, {transform_indices = @transform_3, window_bounds = array<i64: 128, 128>}]} {
    %c0 = arith.constant 0 : index
    %c0_0 = arith.constant 0 : index
    %0 = vector.load %arg2[%c0, %c0_0] : memref<128x128xbf16, #tpu.memory_space<vmem>>, vector<128x128xbf16>
    %c0_1 = arith.constant 0 : index
    %c0_2 = arith.constant 0 : index
    %1 = vector.load %arg3[%c0_1, %c0_2] : memref<128x128xbf16, #tpu.memory_space<vmem>>, vector<128x128xbf16>
    %cst = arith.constant dense<0.000000e+00> : vector<128x128xf32>
    %2 = tpu.matmul %0, %1, %cst {dimension_numbers = #tpu.dot_dimension_numbers<[1], [0], [0], [1], [0, 0, 1, 1], [], []>} : vector<128x128xbf16>, vector<128x128xbf16>, vector<128x128xf32> -> vector<128x128xf32>
    %c0_3 = arith.constant 0 : index
    %c0_4 = arith.constant 0 : index
    %3 = vector.load %arg4[%c0_3, %c0_4] : memref<1x128xf32, #tpu.memory_space<vmem>>, vector<1x128xf32>
    %4 = vector.broadcast %3 : vector<1x128xf32> to vector<128x128xf32>
    %5 = arith.addf %2, %4 : vector<128x128xf32>
    %6 = arith.truncf %5 : vector<128x128xf32> to vector<128x128xbf16>
    %c0_5 = arith.constant 0 : index
    %c0_6 = arith.constant 0 : index
    %7 = vector.load %arg5[%c0_5, %c0_6] : memref<128x128xbf16, #tpu.memory_space<vmem>>, vector<128x128xbf16>
    tpu.vector_store %arg5[%c0_5, %c0_6], %6 {strides = array<i32>} : memref<128x128xbf16, #tpu.memory_space<vmem>>, vector<128x128xbf16>,
    return
  }
  func.func @transform_0(%arg0: i32, %arg1: i32) -> (i32, i32) {
    %c0_i32 = arith.constant 0 : i32
    %c0_i32_0 = arith.constant 0 : i32
    return %arg0, %c0_i32 : i32, i32
  }
  func.func @transform_1(%arg0: i32, %arg1: i32) -> (i32, i32) {
    %c0_i32 = arith.constant 0 : i32
    %c0_i32_0 = arith.constant 0 : i32
    return %c0_i32, %arg1 : i32, i32
  }
  func.func @transform_2(%arg0: i32, %arg1: i32) -> (i32, i32) {
    %c0_i32 = arith.constant 0 : i32
    %c0_i32_0 = arith.constant 0 : i32
    return %c0_i32, %arg1 : i32, i32
  }
  func.func @transform_3(%arg0: i32, %arg1: i32) -> (i32, i32) {
    %c0_i32 = arith.constant 0 : i32
    return %arg0, %arg1 : i32, i32
  }
}

module attributes {stable_mosaic.version = 11 : i64} {
  func.func @_in_lrelu_kernel(%arg0: i32, %arg1: memref<1x64x32xbf16, #tpu.memory_space<vmem>>, %arg2: memref<1x64x32xbf16, #tpu.memory_space<vmem>>) attributes {dimension_semantics = [#tpu.dimension_semantics<parallel>], iteration_bounds = array<i64: 2>, scalar_prefetch = 0 : i64, scratch_operands = 0 : i64, tpu.core_type = #tpu.core_type<tc>, window_params = [{transform_indices = @transform_0, window_bounds = array<i64: 1, 64, 32>}, {transform_indices = @transform_1, window_bounds = array<i64: 1, 64, 32>}]} {
    %c0 = arith.constant 0 : index
    %c0_0 = arith.constant 0 : index
    %c0_1 = arith.constant 0 : index
    %0 = vector.load %arg1[%c0, %c0_0, %c0_1] : memref<1x64x32xbf16, #tpu.memory_space<vmem>>, vector<1x64x32xbf16>
    %1 = vector.shape_cast %0 : vector<1x64x32xbf16> to vector<64x32xbf16>
    %2 = arith.extf %1 : vector<64x32xbf16> to vector<64x32xf32>
    %cst = arith.constant dense<0.000000e+00> : vector<32xf32>
    %3 = vector.multi_reduction <add>, %2, %cst [0] : vector<64x32xf32> to vector<32xf32>
    %4 = vector.shape_cast %3 : vector<32xf32> to vector<1x32xf32>
    %cst_2 = arith.constant 6.400000e+01 : f32
    %5 = vector.broadcast %cst_2 : f32 to vector<1x32xf32>
    %6 = arith.divf %4, %5 : vector<1x32xf32>
    %7 = vector.broadcast %6 : vector<1x32xf32> to vector<64x32xf32>
    %8 = arith.subf %2, %7 : vector<64x32xf32>
    %9 = arith.mulf %8, %8 : vector<64x32xf32>
    %cst_3 = arith.constant dense<0.000000e+00> : vector<32xf32>
    %10 = vector.multi_reduction <add>, %9, %cst_3 [0] : vector<64x32xf32> to vector<32xf32>
    %11 = vector.shape_cast %10 : vector<32xf32> to vector<1x32xf32>
    %cst_4 = arith.constant 6.400000e+01 : f32
    %12 = vector.broadcast %cst_4 : f32 to vector<1x32xf32>
    %13 = arith.divf %11, %12 : vector<1x32xf32>
    %cst_5 = arith.constant 9.99999974E-6 : f32
    %14 = vector.broadcast %cst_5 : f32 to vector<1x32xf32>
    %15 = arith.addf %13, %14 : vector<1x32xf32>
    %16 = math.rsqrt %15 : vector<1x32xf32>
    %17 = vector.broadcast %16 : vector<1x32xf32> to vector<64x32xf32>
    %18 = arith.mulf %8, %17 : vector<64x32xf32>
    %cst_6 = arith.constant 0.000000e+00 : f32
    %19 = vector.broadcast %cst_6 : f32 to vector<64x32xf32>
    %20 = arith.cmpf oge, %18, %19 : vector<64x32xf32>
    %cst_7 = arith.constant 2.000000e-01 : f32
    %21 = vector.broadcast %cst_7 : f32 to vector<64x32xf32>
    %22 = arith.mulf %21, %18 : vector<64x32xf32>
    %23 = arith.select %20, %18, %22 : vector<64x32xi1>, vector<64x32xf32>
    %24 = arith.truncf %23 : vector<64x32xf32> to vector<64x32xbf16>
    %c0_8 = arith.constant 0 : index
    %c0_9 = arith.constant 0 : index
    %c0_10 = arith.constant 0 : index
    %25 = vector.load %arg2[%c0_8, %c0_9, %c0_10] : memref<1x64x32xbf16, #tpu.memory_space<vmem>>, vector<1x64x32xbf16>
    %26 = vector.shape_cast %25 : vector<1x64x32xbf16> to vector<64x32xbf16>
    %27 = vector.shape_cast %24 : vector<64x32xbf16> to vector<1x64x32xbf16>
    tpu.vector_store %arg2[%c0_8, %c0_9, %c0_10], %27 {strides = array<i32>} : memref<1x64x32xbf16, #tpu.memory_space<vmem>>, vector<1x64x32xbf16>,
    return
  }
  func.func @transform_0(%arg0: i32) -> (i32, i32, i32) {
    %c0_i32 = arith.constant 0 : i32
    %c0_i32_0 = arith.constant 0 : i32
    %c0_i32_1 = arith.constant 0 : i32
    return %arg0, %c0_i32, %c0_i32_0 : i32, i32, i32
  }
  func.func @transform_1(%arg0: i32) -> (i32, i32, i32) {
    %c0_i32 = arith.constant 0 : i32
    %c0_i32_0 = arith.constant 0 : i32
    %c0_i32_1 = arith.constant 0 : i32
    return %arg0, %c0_i32, %c0_i32_0 : i32, i32, i32
  }
}

module attributes {stable_mosaic.version = 11 : i64} {
  func.func @_mm_bias_kernel(%arg0: i32, %arg1: i32, %arg2: memref<128x256xbf16, #tpu.memory_space<vmem>>, %arg3: memref<256x128xbf16, #tpu.memory_space<vmem>>, %arg4: memref<1x128xf32, #tpu.memory_space<vmem>>, %arg5: memref<128x128xbf16, #tpu.memory_space<vmem>>) attributes {dimension_semantics = [#tpu.dimension_semantics<parallel>, #tpu.dimension_semantics<parallel>], iteration_bounds = array<i64: 1, 1>, scalar_prefetch = 0 : i64, scratch_operands = 0 : i64, tpu.core_type = #tpu.core_type<tc>, window_params = [{transform_indices = @transform_0, window_bounds = array<i64: 128, 256>}, {transform_indices = @transform_1, window_bounds = array<i64: 256, 128>}, {transform_indices = @transform_2, window_bounds = array<i64: 1, 128>}, {transform_indices = @transform_3, window_bounds = array<i64: 128, 128>}]} {
    %c0 = arith.constant 0 : index
    %c0_0 = arith.constant 0 : index
    %0 = vector.load %arg2[%c0, %c0_0] : memref<128x256xbf16, #tpu.memory_space<vmem>>, vector<128x256xbf16>
    %c0_1 = arith.constant 0 : index
    %c0_2 = arith.constant 0 : index
    %1 = vector.load %arg3[%c0_1, %c0_2] : memref<256x128xbf16, #tpu.memory_space<vmem>>, vector<256x128xbf16>
    %cst = arith.constant dense<0.000000e+00> : vector<128x128xf32>
    %2 = tpu.matmul %0, %1, %cst {dimension_numbers = #tpu.dot_dimension_numbers<[1], [0], [0], [1], [0, 0, 1, 1], [], []>} : vector<128x256xbf16>, vector<256x128xbf16>, vector<128x128xf32> -> vector<128x128xf32>
    %c0_3 = arith.constant 0 : index
    %c0_4 = arith.constant 0 : index
    %3 = vector.load %arg4[%c0_3, %c0_4] : memref<1x128xf32, #tpu.memory_space<vmem>>, vector<1x128xf32>
    %4 = vector.broadcast %3 : vector<1x128xf32> to vector<128x128xf32>
    %5 = arith.addf %2, %4 : vector<128x128xf32>
    %6 = arith.truncf %5 : vector<128x128xf32> to vector<128x128xbf16>
    %c0_5 = arith.constant 0 : index
    %c0_6 = arith.constant 0 : index
    %7 = vector.load %arg5[%c0_5, %c0_6] : memref<128x128xbf16, #tpu.memory_space<vmem>>, vector<128x128xbf16>
    tpu.vector_store %arg5[%c0_5, %c0_6], %6 {strides = array<i32>} : memref<128x128xbf16, #tpu.memory_space<vmem>>, vector<128x128xbf16>,
    return
  }
  func.func @transform_0(%arg0: i32, %arg1: i32) -> (i32, i32) {
    %c0_i32 = arith.constant 0 : i32
    %c0_i32_0 = arith.constant 0 : i32
    return %arg0, %c0_i32 : i32, i32
  }
  func.func @transform_1(%arg0: i32, %arg1: i32) -> (i32, i32) {
    %c0_i32 = arith.constant 0 : i32
    %c0_i32_0 = arith.constant 0 : i32
    return %c0_i32, %arg1 : i32, i32
  }
  func.func @transform_2(%arg0: i32, %arg1: i32) -> (i32, i32) {
    %c0_i32 = arith.constant 0 : i32
    %c0_i32_0 = arith.constant 0 : i32
    return %c0_i32, %arg1 : i32, i32
  }
  func.func @transform_3(%arg0: i32, %arg1: i32) -> (i32, i32) {
    %c0_i32 = arith.constant 0 : i32
    return %arg0, %arg1 : i32, i32
  }
}

module attributes {stable_mosaic.version = 11 : i64} {
  func.func @_mm_bias_kernel(%arg0: i32, %arg1: i32, %arg2: memref<32x512xbf16, #tpu.memory_space<vmem>>, %arg3: memref<512x128xbf16, #tpu.memory_space<vmem>>, %arg4: memref<1x128xf32, #tpu.memory_space<vmem>>, %arg5: memref<32x128xbf16, #tpu.memory_space<vmem>>) attributes {dimension_semantics = [#tpu.dimension_semantics<parallel>, #tpu.dimension_semantics<parallel>], iteration_bounds = array<i64: 1, 1>, scalar_prefetch = 0 : i64, scratch_operands = 0 : i64, tpu.core_type = #tpu.core_type<tc>, window_params = [{transform_indices = @transform_0, window_bounds = array<i64: 32, 512>}, {transform_indices = @transform_1, window_bounds = array<i64: 512, 128>}, {transform_indices = @transform_2, window_bounds = array<i64: 1, 128>}, {transform_indices = @transform_3, window_bounds = array<i64: 32, 128>}]} {
    %c0 = arith.constant 0 : index
    %c0_0 = arith.constant 0 : index
    %0 = vector.load %arg2[%c0, %c0_0] : memref<32x512xbf16, #tpu.memory_space<vmem>>, vector<32x512xbf16>
    %c0_1 = arith.constant 0 : index
    %c0_2 = arith.constant 0 : index
    %1 = vector.load %arg3[%c0_1, %c0_2] : memref<512x128xbf16, #tpu.memory_space<vmem>>, vector<512x128xbf16>
    %cst = arith.constant dense<0.000000e+00> : vector<32x128xf32>
    %2 = tpu.matmul %0, %1, %cst {dimension_numbers = #tpu.dot_dimension_numbers<[1], [0], [0], [1], [0, 0, 1, 1], [], []>} : vector<32x512xbf16>, vector<512x128xbf16>, vector<32x128xf32> -> vector<32x128xf32>
    %c0_3 = arith.constant 0 : index
    %c0_4 = arith.constant 0 : index
    %3 = vector.load %arg4[%c0_3, %c0_4] : memref<1x128xf32, #tpu.memory_space<vmem>>, vector<1x128xf32>
    %4 = vector.broadcast %3 : vector<1x128xf32> to vector<32x128xf32>
    %5 = arith.addf %2, %4 : vector<32x128xf32>
    %6 = arith.truncf %5 : vector<32x128xf32> to vector<32x128xbf16>
    %c0_5 = arith.constant 0 : index
    %c0_6 = arith.constant 0 : index
    %7 = vector.load %arg5[%c0_5, %c0_6] : memref<32x128xbf16, #tpu.memory_space<vmem>>, vector<32x128xbf16>
    tpu.vector_store %arg5[%c0_5, %c0_6], %6 {strides = array<i32>} : memref<32x128xbf16, #tpu.memory_space<vmem>>, vector<32x128xbf16>,
    return
  }
  func.func @transform_0(%arg0: i32, %arg1: i32) -> (i32, i32) {
    %c0_i32 = arith.constant 0 : i32
    %c0_i32_0 = arith.constant 0 : i32
    return %arg0, %c0_i32 : i32, i32
  }
  func.func @transform_1(%arg0: i32, %arg1: i32) -> (i32, i32) {
    %c0_i32 = arith.constant 0 : i32
    %c0_i32_0 = arith.constant 0 : i32
    return %c0_i32, %arg1 : i32, i32
  }
  func.func @transform_2(%arg0: i32, %arg1: i32) -> (i32, i32) {
    %c0_i32 = arith.constant 0 : i32
    %c0_i32_0 = arith.constant 0 : i32
    return %c0_i32, %arg1 : i32, i32
  }
  func.func @transform_3(%arg0: i32, %arg1: i32) -> (i32, i32) {
    %c0_i32 = arith.constant 0 : i32
    return %arg0, %arg1 : i32, i32
  }
}

module attributes {stable_mosaic.version = 11 : i64} {
  func.func @_in_lrelu_kernel(%arg0: i32, %arg1: memref<1x16x64xbf16, #tpu.memory_space<vmem>>, %arg2: memref<1x16x64xbf16, #tpu.memory_space<vmem>>) attributes {dimension_semantics = [#tpu.dimension_semantics<parallel>], iteration_bounds = array<i64: 2>, scalar_prefetch = 0 : i64, scratch_operands = 0 : i64, tpu.core_type = #tpu.core_type<tc>, window_params = [{transform_indices = @transform_0, window_bounds = array<i64: 1, 16, 64>}, {transform_indices = @transform_1, window_bounds = array<i64: 1, 16, 64>}]} {
    %c0 = arith.constant 0 : index
    %c0_0 = arith.constant 0 : index
    %c0_1 = arith.constant 0 : index
    %0 = vector.load %arg1[%c0, %c0_0, %c0_1] : memref<1x16x64xbf16, #tpu.memory_space<vmem>>, vector<1x16x64xbf16>
    %1 = vector.shape_cast %0 : vector<1x16x64xbf16> to vector<16x64xbf16>
    %2 = arith.extf %1 : vector<16x64xbf16> to vector<16x64xf32>
    %cst = arith.constant dense<0.000000e+00> : vector<64xf32>
    %3 = vector.multi_reduction <add>, %2, %cst [0] : vector<16x64xf32> to vector<64xf32>
    %4 = vector.shape_cast %3 : vector<64xf32> to vector<1x64xf32>
    %cst_2 = arith.constant 1.600000e+01 : f32
    %5 = vector.broadcast %cst_2 : f32 to vector<1x64xf32>
    %6 = arith.divf %4, %5 : vector<1x64xf32>
    %7 = vector.broadcast %6 : vector<1x64xf32> to vector<16x64xf32>
    %8 = arith.subf %2, %7 : vector<16x64xf32>
    %9 = arith.mulf %8, %8 : vector<16x64xf32>
    %cst_3 = arith.constant dense<0.000000e+00> : vector<64xf32>
    %10 = vector.multi_reduction <add>, %9, %cst_3 [0] : vector<16x64xf32> to vector<64xf32>
    %11 = vector.shape_cast %10 : vector<64xf32> to vector<1x64xf32>
    %cst_4 = arith.constant 1.600000e+01 : f32
    %12 = vector.broadcast %cst_4 : f32 to vector<1x64xf32>
    %13 = arith.divf %11, %12 : vector<1x64xf32>
    %cst_5 = arith.constant 9.99999974E-6 : f32
    %14 = vector.broadcast %cst_5 : f32 to vector<1x64xf32>
    %15 = arith.addf %13, %14 : vector<1x64xf32>
    %16 = math.rsqrt %15 : vector<1x64xf32>
    %17 = vector.broadcast %16 : vector<1x64xf32> to vector<16x64xf32>
    %18 = arith.mulf %8, %17 : vector<16x64xf32>
    %cst_6 = arith.constant 0.000000e+00 : f32
    %19 = vector.broadcast %cst_6 : f32 to vector<16x64xf32>
    %20 = arith.cmpf oge, %18, %19 : vector<16x64xf32>
    %cst_7 = arith.constant 2.000000e-01 : f32
    %21 = vector.broadcast %cst_7 : f32 to vector<16x64xf32>
    %22 = arith.mulf %21, %18 : vector<16x64xf32>
    %23 = arith.select %20, %18, %22 : vector<16x64xi1>, vector<16x64xf32>
    %24 = arith.truncf %23 : vector<16x64xf32> to vector<16x64xbf16>
    %c0_8 = arith.constant 0 : index
    %c0_9 = arith.constant 0 : index
    %c0_10 = arith.constant 0 : index
    %25 = vector.load %arg2[%c0_8, %c0_9, %c0_10] : memref<1x16x64xbf16, #tpu.memory_space<vmem>>, vector<1x16x64xbf16>
    %26 = vector.shape_cast %25 : vector<1x16x64xbf16> to vector<16x64xbf16>
    %27 = vector.shape_cast %24 : vector<16x64xbf16> to vector<1x16x64xbf16>
    tpu.vector_store %arg2[%c0_8, %c0_9, %c0_10], %27 {strides = array<i32>} : memref<1x16x64xbf16, #tpu.memory_space<vmem>>, vector<1x16x64xbf16>,
    return
  }
  func.func @transform_0(%arg0: i32) -> (i32, i32, i32) {
    %c0_i32 = arith.constant 0 : i32
    %c0_i32_0 = arith.constant 0 : i32
    %c0_i32_1 = arith.constant 0 : i32
    return %arg0, %c0_i32, %c0_i32_0 : i32, i32, i32
  }
  func.func @transform_1(%arg0: i32) -> (i32, i32, i32) {
    %c0_i32 = arith.constant 0 : i32
    %c0_i32_0 = arith.constant 0 : i32
    %c0_i32_1 = arith.constant 0 : i32
    return %arg0, %c0_i32, %c0_i32_0 : i32, i32, i32
  }
}

module attributes {stable_mosaic.version = 11 : i64} {
  func.func @_mm_bias_kernel(%arg0: i32, %arg1: i32, %arg2: memref<32x640xbf16, #tpu.memory_space<vmem>>, %arg3: memref<640x128xbf16, #tpu.memory_space<vmem>>, %arg4: memref<1x128xf32, #tpu.memory_space<vmem>>, %arg5: memref<32x128xbf16, #tpu.memory_space<vmem>>) attributes {dimension_semantics = [#tpu.dimension_semantics<parallel>, #tpu.dimension_semantics<parallel>], iteration_bounds = array<i64: 1, 1>, scalar_prefetch = 0 : i64, scratch_operands = 0 : i64, tpu.core_type = #tpu.core_type<tc>, window_params = [{transform_indices = @transform_0, window_bounds = array<i64: 32, 640>}, {transform_indices = @transform_1, window_bounds = array<i64: 640, 128>}, {transform_indices = @transform_2, window_bounds = array<i64: 1, 128>}, {transform_indices = @transform_3, window_bounds = array<i64: 32, 128>}]} {
    %c0 = arith.constant 0 : index
    %c0_0 = arith.constant 0 : index
    %0 = vector.load %arg2[%c0, %c0_0] : memref<32x640xbf16, #tpu.memory_space<vmem>>, vector<32x640xbf16>
    %c0_1 = arith.constant 0 : index
    %c0_2 = arith.constant 0 : index
    %1 = vector.load %arg3[%c0_1, %c0_2] : memref<640x128xbf16, #tpu.memory_space<vmem>>, vector<640x128xbf16>
    %cst = arith.constant dense<0.000000e+00> : vector<32x128xf32>
    %2 = tpu.matmul %0, %1, %cst {dimension_numbers = #tpu.dot_dimension_numbers<[1], [0], [0], [1], [0, 0, 1, 1], [], []>} : vector<32x640xbf16>, vector<640x128xbf16>, vector<32x128xf32> -> vector<32x128xf32>
    %c0_3 = arith.constant 0 : index
    %c0_4 = arith.constant 0 : index
    %3 = vector.load %arg4[%c0_3, %c0_4] : memref<1x128xf32, #tpu.memory_space<vmem>>, vector<1x128xf32>
    %4 = vector.broadcast %3 : vector<1x128xf32> to vector<32x128xf32>
    %5 = arith.addf %2, %4 : vector<32x128xf32>
    %6 = arith.truncf %5 : vector<32x128xf32> to vector<32x128xbf16>
    %c0_5 = arith.constant 0 : index
    %c0_6 = arith.constant 0 : index
    %7 = vector.load %arg5[%c0_5, %c0_6] : memref<32x128xbf16, #tpu.memory_space<vmem>>, vector<32x128xbf16>
    tpu.vector_store %arg5[%c0_5, %c0_6], %6 {strides = array<i32>} : memref<32x128xbf16, #tpu.memory_space<vmem>>, vector<32x128xbf16>,
    return
  }
  func.func @transform_0(%arg0: i32, %arg1: i32) -> (i32, i32) {
    %c0_i32 = arith.constant 0 : i32
    %c0_i32_0 = arith.constant 0 : i32
    return %arg0, %c0_i32 : i32, i32
  }
  func.func @transform_1(%arg0: i32, %arg1: i32) -> (i32, i32) {
    %c0_i32 = arith.constant 0 : i32
    %c0_i32_0 = arith.constant 0 : i32
    return %c0_i32, %arg1 : i32, i32
  }
  func.func @transform_2(%arg0: i32, %arg1: i32) -> (i32, i32) {
    %c0_i32 = arith.constant 0 : i32
    %c0_i32_0 = arith.constant 0 : i32
    return %c0_i32, %arg1 : i32, i32
  }
  func.func @transform_3(%arg0: i32, %arg1: i32) -> (i32, i32) {
    %c0_i32 = arith.constant 0 : i32
    return %arg0, %arg1 : i32, i32
  }
}

module attributes {stable_mosaic.version = 11 : i64} {
  func.func @_in_lrelu_kernel(%arg0: i32, %arg1: memref<1x4x64xbf16, #tpu.memory_space<vmem>>, %arg2: memref<1x4x64xbf16, #tpu.memory_space<vmem>>) attributes {dimension_semantics = [#tpu.dimension_semantics<parallel>], iteration_bounds = array<i64: 2>, scalar_prefetch = 0 : i64, scratch_operands = 0 : i64, tpu.core_type = #tpu.core_type<tc>, window_params = [{transform_indices = @transform_0, window_bounds = array<i64: 1, 4, 64>}, {transform_indices = @transform_1, window_bounds = array<i64: 1, 4, 64>}]} {
    %c0 = arith.constant 0 : index
    %c0_0 = arith.constant 0 : index
    %c0_1 = arith.constant 0 : index
    %0 = vector.load %arg1[%c0, %c0_0, %c0_1] : memref<1x4x64xbf16, #tpu.memory_space<vmem>>, vector<1x4x64xbf16>
    %1 = vector.shape_cast %0 : vector<1x4x64xbf16> to vector<4x64xbf16>
    %2 = arith.extf %1 : vector<4x64xbf16> to vector<4x64xf32>
    %cst = arith.constant dense<0.000000e+00> : vector<64xf32>
    %3 = vector.multi_reduction <add>, %2, %cst [0] : vector<4x64xf32> to vector<64xf32>
    %4 = vector.shape_cast %3 : vector<64xf32> to vector<1x64xf32>
    %cst_2 = arith.constant 4.000000e+00 : f32
    %5 = vector.broadcast %cst_2 : f32 to vector<1x64xf32>
    %6 = arith.divf %4, %5 : vector<1x64xf32>
    %7 = vector.broadcast %6 : vector<1x64xf32> to vector<4x64xf32>
    %8 = arith.subf %2, %7 : vector<4x64xf32>
    %9 = arith.mulf %8, %8 : vector<4x64xf32>
    %cst_3 = arith.constant dense<0.000000e+00> : vector<64xf32>
    %10 = vector.multi_reduction <add>, %9, %cst_3 [0] : vector<4x64xf32> to vector<64xf32>
    %11 = vector.shape_cast %10 : vector<64xf32> to vector<1x64xf32>
    %cst_4 = arith.constant 4.000000e+00 : f32
    %12 = vector.broadcast %cst_4 : f32 to vector<1x64xf32>
    %13 = arith.divf %11, %12 : vector<1x64xf32>
    %cst_5 = arith.constant 9.99999974E-6 : f32
    %14 = vector.broadcast %cst_5 : f32 to vector<1x64xf32>
    %15 = arith.addf %13, %14 : vector<1x64xf32>
    %16 = math.rsqrt %15 : vector<1x64xf32>
    %17 = vector.broadcast %16 : vector<1x64xf32> to vector<4x64xf32>
    %18 = arith.mulf %8, %17 : vector<4x64xf32>
    %cst_6 = arith.constant 0.000000e+00 : f32
    %19 = vector.broadcast %cst_6 : f32 to vector<4x64xf32>
    %20 = arith.cmpf oge, %18, %19 : vector<4x64xf32>
    %cst_7 = arith.constant 2.000000e-01 : f32
    %21 = vector.broadcast %cst_7 : f32 to vector<4x64xf32>
    %22 = arith.mulf %21, %18 : vector<4x64xf32>
    %23 = arith.select %20, %18, %22 : vector<4x64xi1>, vector<4x64xf32>
    %24 = arith.truncf %23 : vector<4x64xf32> to vector<4x64xbf16>
    %c0_8 = arith.constant 0 : index
    %c0_9 = arith.constant 0 : index
    %c0_10 = arith.constant 0 : index
    %25 = vector.load %arg2[%c0_8, %c0_9, %c0_10] : memref<1x4x64xbf16, #tpu.memory_space<vmem>>, vector<1x4x64xbf16>
    %26 = vector.shape_cast %25 : vector<1x4x64xbf16> to vector<4x64xbf16>
    %27 = vector.shape_cast %24 : vector<4x64xbf16> to vector<1x4x64xbf16>
    tpu.vector_store %arg2[%c0_8, %c0_9, %c0_10], %27 {strides = array<i32>} : memref<1x4x64xbf16, #tpu.memory_space<vmem>>, vector<1x4x64xbf16>,
    return
  }
  func.func @transform_0(%arg0: i32) -> (i32, i32, i32) {
    %c0_i32 = arith.constant 0 : i32
    %c0_i32_0 = arith.constant 0 : i32
    %c0_i32_1 = arith.constant 0 : i32
    return %arg0, %c0_i32, %c0_i32_0 : i32, i32, i32
  }
  func.func @transform_1(%arg0: i32) -> (i32, i32, i32) {
    %c0_i32 = arith.constant 0 : i32
    %c0_i32_0 = arith.constant 0 : i32
    %c0_i32_1 = arith.constant 0 : i32
    return %arg0, %c0_i32, %c0_i32_0 : i32, i32, i32
  }
}

module attributes {stable_mosaic.version = 11 : i64} {
  func.func @_mm_bias_kernel(%arg0: i32, %arg1: i32, %arg2: memref<8x1024xbf16, #tpu.memory_space<vmem>>, %arg3: memref<1024x128xbf16, #tpu.memory_space<vmem>>, %arg4: memref<1x128xf32, #tpu.memory_space<vmem>>, %arg5: memref<8x128xbf16, #tpu.memory_space<vmem>>) attributes {dimension_semantics = [#tpu.dimension_semantics<parallel>, #tpu.dimension_semantics<parallel>], iteration_bounds = array<i64: 1, 1>, scalar_prefetch = 0 : i64, scratch_operands = 0 : i64, tpu.core_type = #tpu.core_type<tc>, window_params = [{transform_indices = @transform_0, window_bounds = array<i64: 8, 1024>}, {transform_indices = @transform_1, window_bounds = array<i64: 1024, 128>}, {transform_indices = @transform_2, window_bounds = array<i64: 1, 128>}, {transform_indices = @transform_3, window_bounds = array<i64: 8, 128>}]} {
    %c0 = arith.constant 0 : index
    %c0_0 = arith.constant 0 : index
    %0 = vector.load %arg2[%c0, %c0_0] : memref<8x1024xbf16, #tpu.memory_space<vmem>>, vector<8x1024xbf16>
    %c0_1 = arith.constant 0 : index
    %c0_2 = arith.constant 0 : index
    %1 = vector.load %arg3[%c0_1, %c0_2] : memref<1024x128xbf16, #tpu.memory_space<vmem>>, vector<1024x128xbf16>
    %cst = arith.constant dense<0.000000e+00> : vector<8x128xf32>
    %2 = tpu.matmul %0, %1, %cst {dimension_numbers = #tpu.dot_dimension_numbers<[1], [0], [0], [1], [0, 0, 1, 1], [], []>} : vector<8x1024xbf16>, vector<1024x128xbf16>, vector<8x128xf32> -> vector<8x128xf32>
    %c0_3 = arith.constant 0 : index
    %c0_4 = arith.constant 0 : index
    %3 = vector.load %arg4[%c0_3, %c0_4] : memref<1x128xf32, #tpu.memory_space<vmem>>, vector<1x128xf32>
    %4 = vector.broadcast %3 : vector<1x128xf32> to vector<8x128xf32>
    %5 = arith.addf %2, %4 : vector<8x128xf32>
    %6 = arith.truncf %5 : vector<8x128xf32> to vector<8x128xbf16>
    %c0_5 = arith.constant 0 : index
    %c0_6 = arith.constant 0 : index
    %7 = vector.load %arg5[%c0_5, %c0_6] : memref<8x128xbf16, #tpu.memory_space<vmem>>, vector<8x128xbf16>
    tpu.vector_store %arg5[%c0_5, %c0_6], %6 {strides = array<i32>} : memref<8x128xbf16, #tpu.memory_space<vmem>>, vector<8x128xbf16>,
    return
  }
  func.func @transform_0(%arg0: i32, %arg1: i32) -> (i32, i32) {
    %c0_i32 = arith.constant 0 : i32
    %c0_i32_0 = arith.constant 0 : i32
    return %arg0, %c0_i32 : i32, i32
  }
  func.func @transform_1(%arg0: i32, %arg1: i32) -> (i32, i32) {
    %c0_i32 = arith.constant 0 : i32
    %c0_i32_0 = arith.constant 0 : i32
    return %c0_i32, %arg1 : i32, i32
  }
  func.func @transform_2(%arg0: i32, %arg1: i32) -> (i32, i32) {
    %c0_i32 = arith.constant 0 : i32
    %c0_i32_0 = arith.constant 0 : i32
    return %c0_i32, %arg1 : i32, i32
  }
  func.func @transform_3(%arg0: i32, %arg1: i32) -> (i32, i32) {
    %c0_i32 = arith.constant 0 : i32
    return %arg0, %arg1 : i32, i32
  }
}

module attributes {stable_mosaic.version = 11 : i64} {
  func.func @_mm_bias_kernel(%arg0: i32, %arg1: i32, %arg2: memref<8x640xbf16, #tpu.memory_space<vmem>>, %arg3: memref<640x128xbf16, #tpu.memory_space<vmem>>, %arg4: memref<1x128xf32, #tpu.memory_space<vmem>>, %arg5: memref<8x128xbf16, #tpu.memory_space<vmem>>) attributes {dimension_semantics = [#tpu.dimension_semantics<parallel>, #tpu.dimension_semantics<parallel>], iteration_bounds = array<i64: 1, 1>, scalar_prefetch = 0 : i64, scratch_operands = 0 : i64, tpu.core_type = #tpu.core_type<tc>, window_params = [{transform_indices = @transform_0, window_bounds = array<i64: 8, 640>}, {transform_indices = @transform_1, window_bounds = array<i64: 640, 128>}, {transform_indices = @transform_2, window_bounds = array<i64: 1, 128>}, {transform_indices = @transform_3, window_bounds = array<i64: 8, 128>}]} {
    %c0 = arith.constant 0 : index
    %c0_0 = arith.constant 0 : index
    %0 = vector.load %arg2[%c0, %c0_0] : memref<8x640xbf16, #tpu.memory_space<vmem>>, vector<8x640xbf16>
    %c0_1 = arith.constant 0 : index
    %c0_2 = arith.constant 0 : index
    %1 = vector.load %arg3[%c0_1, %c0_2] : memref<640x128xbf16, #tpu.memory_space<vmem>>, vector<640x128xbf16>
    %cst = arith.constant dense<0.000000e+00> : vector<8x128xf32>
    %2 = tpu.matmul %0, %1, %cst {dimension_numbers = #tpu.dot_dimension_numbers<[1], [0], [0], [1], [0, 0, 1, 1], [], []>} : vector<8x640xbf16>, vector<640x128xbf16>, vector<8x128xf32> -> vector<8x128xf32>
    %c0_3 = arith.constant 0 : index
    %c0_4 = arith.constant 0 : index
    %3 = vector.load %arg4[%c0_3, %c0_4] : memref<1x128xf32, #tpu.memory_space<vmem>>, vector<1x128xf32>
    %4 = vector.broadcast %3 : vector<1x128xf32> to vector<8x128xf32>
    %5 = arith.addf %2, %4 : vector<8x128xf32>
    %6 = arith.truncf %5 : vector<8x128xf32> to vector<8x128xbf16>
    %c0_5 = arith.constant 0 : index
    %c0_6 = arith.constant 0 : index
    %7 = vector.load %arg5[%c0_5, %c0_6] : memref<8x128xbf16, #tpu.memory_space<vmem>>, vector<8x128xbf16>
    tpu.vector_store %arg5[%c0_5, %c0_6], %6 {strides = array<i32>} : memref<8x128xbf16, #tpu.memory_space<vmem>>, vector<8x128xbf16>,
    return
  }
  func.func @transform_0(%arg0: i32, %arg1: i32) -> (i32, i32) {
    %c0_i32 = arith.constant 0 : i32
    %c0_i32_0 = arith.constant 0 : i32
    return %arg0, %c0_i32 : i32, i32
  }
  func.func @transform_1(%arg0: i32, %arg1: i32) -> (i32, i32) {
    %c0_i32 = arith.constant 0 : i32
    %c0_i32_0 = arith.constant 0 : i32
    return %c0_i32, %arg1 : i32, i32
  }
  func.func @transform_2(%arg0: i32, %arg1: i32) -> (i32, i32) {
    %c0_i32 = arith.constant 0 : i32
    %c0_i32_0 = arith.constant 0 : i32
    return %c0_i32, %arg1 : i32, i32
  }
  func.func @transform_3(%arg0: i32, %arg1: i32) -> (i32, i32) {
    %c0_i32 = arith.constant 0 : i32
    return %arg0, %arg1 : i32, i32
  }
}

module attributes {stable_mosaic.version = 11 : i64} {
  func.func @_in_lrelu_kernel(%arg0: i32, %arg1: memref<1x4x32xbf16, #tpu.memory_space<vmem>>, %arg2: memref<1x4x32xbf16, #tpu.memory_space<vmem>>) attributes {dimension_semantics = [#tpu.dimension_semantics<parallel>], iteration_bounds = array<i64: 2>, scalar_prefetch = 0 : i64, scratch_operands = 0 : i64, tpu.core_type = #tpu.core_type<tc>, window_params = [{transform_indices = @transform_0, window_bounds = array<i64: 1, 4, 32>}, {transform_indices = @transform_1, window_bounds = array<i64: 1, 4, 32>}]} {
    %c0 = arith.constant 0 : index
    %c0_0 = arith.constant 0 : index
    %c0_1 = arith.constant 0 : index
    %0 = vector.load %arg1[%c0, %c0_0, %c0_1] : memref<1x4x32xbf16, #tpu.memory_space<vmem>>, vector<1x4x32xbf16>
    %1 = vector.shape_cast %0 : vector<1x4x32xbf16> to vector<4x32xbf16>
    %2 = arith.extf %1 : vector<4x32xbf16> to vector<4x32xf32>
    %cst = arith.constant dense<0.000000e+00> : vector<32xf32>
    %3 = vector.multi_reduction <add>, %2, %cst [0] : vector<4x32xf32> to vector<32xf32>
    %4 = vector.shape_cast %3 : vector<32xf32> to vector<1x32xf32>
    %cst_2 = arith.constant 4.000000e+00 : f32
    %5 = vector.broadcast %cst_2 : f32 to vector<1x32xf32>
    %6 = arith.divf %4, %5 : vector<1x32xf32>
    %7 = vector.broadcast %6 : vector<1x32xf32> to vector<4x32xf32>
    %8 = arith.subf %2, %7 : vector<4x32xf32>
    %9 = arith.mulf %8, %8 : vector<4x32xf32>
    %cst_3 = arith.constant dense<0.000000e+00> : vector<32xf32>
    %10 = vector.multi_reduction <add>, %9, %cst_3 [0] : vector<4x32xf32> to vector<32xf32>
    %11 = vector.shape_cast %10 : vector<32xf32> to vector<1x32xf32>
    %cst_4 = arith.constant 4.000000e+00 : f32
    %12 = vector.broadcast %cst_4 : f32 to vector<1x32xf32>
    %13 = arith.divf %11, %12 : vector<1x32xf32>
    %cst_5 = arith.constant 9.99999974E-6 : f32
    %14 = vector.broadcast %cst_5 : f32 to vector<1x32xf32>
    %15 = arith.addf %13, %14 : vector<1x32xf32>
    %16 = math.rsqrt %15 : vector<1x32xf32>
    %17 = vector.broadcast %16 : vector<1x32xf32> to vector<4x32xf32>
    %18 = arith.mulf %8, %17 : vector<4x32xf32>
    %cst_6 = arith.constant 0.000000e+00 : f32
    %19 = vector.broadcast %cst_6 : f32 to vector<4x32xf32>
    %20 = arith.cmpf oge, %18, %19 : vector<4x32xf32>
    %cst_7 = arith.constant 2.000000e-01 : f32
    %21 = vector.broadcast %cst_7 : f32 to vector<4x32xf32>
    %22 = arith.mulf %21, %18 : vector<4x32xf32>
    %23 = arith.select %20, %18, %22 : vector<4x32xi1>, vector<4x32xf32>
    %24 = arith.truncf %23 : vector<4x32xf32> to vector<4x32xbf16>
    %c0_8 = arith.constant 0 : index
    %c0_9 = arith.constant 0 : index
    %c0_10 = arith.constant 0 : index
    %25 = vector.load %arg2[%c0_8, %c0_9, %c0_10] : memref<1x4x32xbf16, #tpu.memory_space<vmem>>, vector<1x4x32xbf16>
    %26 = vector.shape_cast %25 : vector<1x4x32xbf16> to vector<4x32xbf16>
    %27 = vector.shape_cast %24 : vector<4x32xbf16> to vector<1x4x32xbf16>
    tpu.vector_store %arg2[%c0_8, %c0_9, %c0_10], %27 {strides = array<i32>} : memref<1x4x32xbf16, #tpu.memory_space<vmem>>, vector<1x4x32xbf16>,
    return
  }
  func.func @transform_0(%arg0: i32) -> (i32, i32, i32) {
    %c0_i32 = arith.constant 0 : i32
    %c0_i32_0 = arith.constant 0 : i32
    %c0_i32_1 = arith.constant 0 : i32
    return %arg0, %c0_i32, %c0_i32_0 : i32, i32, i32
  }
  func.func @transform_1(%arg0: i32) -> (i32, i32, i32) {
    %c0_i32 = arith.constant 0 : i32
    %c0_i32_0 = arith.constant 0 : i32
    %c0_i32_1 = arith.constant 0 : i32
    return %arg0, %c0_i32, %c0_i32_0 : i32, i32, i32
  }
}

module attributes {stable_mosaic.version = 11 : i64} {
  func.func @_mm_bias_kernel(%arg0: i32, %arg1: i32, %arg2: memref<8x384xbf16, #tpu.memory_space<vmem>>, %arg3: memref<384x128xbf16, #tpu.memory_space<vmem>>, %arg4: memref<1x128xf32, #tpu.memory_space<vmem>>, %arg5: memref<8x128xbf16, #tpu.memory_space<vmem>>) attributes {dimension_semantics = [#tpu.dimension_semantics<parallel>, #tpu.dimension_semantics<parallel>], iteration_bounds = array<i64: 1, 1>, scalar_prefetch = 0 : i64, scratch_operands = 0 : i64, tpu.core_type = #tpu.core_type<tc>, window_params = [{transform_indices = @transform_0, window_bounds = array<i64: 8, 384>}, {transform_indices = @transform_1, window_bounds = array<i64: 384, 128>}, {transform_indices = @transform_2, window_bounds = array<i64: 1, 128>}, {transform_indices = @transform_3, window_bounds = array<i64: 8, 128>}]} {
    %c0 = arith.constant 0 : index
    %c0_0 = arith.constant 0 : index
    %0 = vector.load %arg2[%c0, %c0_0] : memref<8x384xbf16, #tpu.memory_space<vmem>>, vector<8x384xbf16>
    %c0_1 = arith.constant 0 : index
    %c0_2 = arith.constant 0 : index
    %1 = vector.load %arg3[%c0_1, %c0_2] : memref<384x128xbf16, #tpu.memory_space<vmem>>, vector<384x128xbf16>
    %cst = arith.constant dense<0.000000e+00> : vector<8x128xf32>
    %2 = tpu.matmul %0, %1, %cst {dimension_numbers = #tpu.dot_dimension_numbers<[1], [0], [0], [1], [0, 0, 1, 1], [], []>} : vector<8x384xbf16>, vector<384x128xbf16>, vector<8x128xf32> -> vector<8x128xf32>
    %c0_3 = arith.constant 0 : index
    %c0_4 = arith.constant 0 : index
    %3 = vector.load %arg4[%c0_3, %c0_4] : memref<1x128xf32, #tpu.memory_space<vmem>>, vector<1x128xf32>
    %4 = vector.broadcast %3 : vector<1x128xf32> to vector<8x128xf32>
    %5 = arith.addf %2, %4 : vector<8x128xf32>
    %6 = arith.truncf %5 : vector<8x128xf32> to vector<8x128xbf16>
    %c0_5 = arith.constant 0 : index
    %c0_6 = arith.constant 0 : index
    %7 = vector.load %arg5[%c0_5, %c0_6] : memref<8x128xbf16, #tpu.memory_space<vmem>>, vector<8x128xbf16>
    tpu.vector_store %arg5[%c0_5, %c0_6], %6 {strides = array<i32>} : memref<8x128xbf16, #tpu.memory_space<vmem>>, vector<8x128xbf16>,
    return
  }
  func.func @transform_0(%arg0: i32, %arg1: i32) -> (i32, i32) {
    %c0_i32 = arith.constant 0 : i32
    %c0_i32_0 = arith.constant 0 : i32
    return %arg0, %c0_i32 : i32, i32
  }
  func.func @transform_1(%arg0: i32, %arg1: i32) -> (i32, i32) {
    %c0_i32 = arith.constant 0 : i32
    %c0_i32_0 = arith.constant 0 : i32
    return %c0_i32, %arg1 : i32, i32
  }
  func.func @transform_2(%arg0: i32, %arg1: i32) -> (i32, i32) {
    %c0_i32 = arith.constant 0 : i32
    %c0_i32_0 = arith.constant 0 : i32
    return %c0_i32, %arg1 : i32, i32
  }
  func.func @transform_3(%arg0: i32, %arg1: i32) -> (i32, i32) {
    %c0_i32 = arith.constant 0 : i32
    return %arg0, %arg1 : i32, i32
  }
}

module attributes {stable_mosaic.version = 11 : i64} {
  func.func @_mm_bias_kernel(%arg0: i32, %arg1: i32, %arg2: memref<8x128xbf16, #tpu.memory_space<vmem>>, %arg3: memref<128x128xbf16, #tpu.memory_space<vmem>>, %arg4: memref<1x128xf32, #tpu.memory_space<vmem>>, %arg5: memref<8x128xbf16, #tpu.memory_space<vmem>>) attributes {dimension_semantics = [#tpu.dimension_semantics<parallel>, #tpu.dimension_semantics<parallel>], iteration_bounds = array<i64: 1, 1>, scalar_prefetch = 0 : i64, scratch_operands = 0 : i64, tpu.core_type = #tpu.core_type<tc>, window_params = [{transform_indices = @transform_0, window_bounds = array<i64: 8, 128>}, {transform_indices = @transform_1, window_bounds = array<i64: 128, 128>}, {transform_indices = @transform_2, window_bounds = array<i64: 1, 128>}, {transform_indices = @transform_3, window_bounds = array<i64: 8, 128>}]} {
    %c0 = arith.constant 0 : index
    %c0_0 = arith.constant 0 : index
    %0 = vector.load %arg2[%c0, %c0_0] : memref<8x128xbf16, #tpu.memory_space<vmem>>, vector<8x128xbf16>
    %c0_1 = arith.constant 0 : index
    %c0_2 = arith.constant 0 : index
    %1 = vector.load %arg3[%c0_1, %c0_2] : memref<128x128xbf16, #tpu.memory_space<vmem>>, vector<128x128xbf16>
    %cst = arith.constant dense<0.000000e+00> : vector<8x128xf32>
    %2 = tpu.matmul %0, %1, %cst {dimension_numbers = #tpu.dot_dimension_numbers<[1], [0], [0], [1], [0, 0, 1, 1], [], []>} : vector<8x128xbf16>, vector<128x128xbf16>, vector<8x128xf32> -> vector<8x128xf32>
    %c0_3 = arith.constant 0 : index
    %c0_4 = arith.constant 0 : index
    %3 = vector.load %arg4[%c0_3, %c0_4] : memref<1x128xf32, #tpu.memory_space<vmem>>, vector<1x128xf32>
    %4 = vector.broadcast %3 : vector<1x128xf32> to vector<8x128xf32>
    %5 = arith.addf %2, %4 : vector<8x128xf32>
    %6 = arith.truncf %5 : vector<8x128xf32> to vector<8x128xbf16>
    %c0_5 = arith.constant 0 : index
    %c0_6 = arith.constant 0 : index
    %7 = vector.load %arg5[%c0_5, %c0_6] : memref<8x128xbf16, #tpu.memory_space<vmem>>, vector<8x128xbf16>
    tpu.vector_store %arg5[%c0_5, %c0_6], %6 {strides = array<i32>} : memref<8x128xbf16, #tpu.memory_space<vmem>>, vector<8x128xbf16>,
    return
  }
  func.func @transform_0(%arg0: i32, %arg1: i32) -> (i32, i32) {
    %c0_i32 = arith.constant 0 : i32
    %c0_i32_0 = arith.constant 0 : i32
    return %arg0, %c0_i32 : i32, i32
  }
  func.func @transform_1(%arg0: i32, %arg1: i32) -> (i32, i32) {
    %c0_i32 = arith.constant 0 : i32
    %c0_i32_0 = arith.constant 0 : i32
    return %c0_i32, %arg1 : i32, i32
  }
  func.func @transform_2(%arg0: i32, %arg1: i32) -> (i32, i32) {
    %c0_i32 = arith.constant 0 : i32
    %c0_i32_0 = arith.constant 0 : i32
    return %c0_i32, %arg1 : i32, i32
  }
  func.func @transform_3(%arg0: i32, %arg1: i32) -> (i32, i32) {
    %c0_i32 = arith.constant 0 : i32
    return %arg0, %arg1 : i32, i32
  }
}

module attributes {stable_mosaic.version = 11 : i64} {
  func.func @_in_add_kernel(%arg0: i32, %arg1: memref<1x4x32xbf16, #tpu.memory_space<vmem>>, %arg2: memref<1x4x32xbf16, #tpu.memory_space<vmem>>, %arg3: memref<1x4x32xbf16, #tpu.memory_space<vmem>>) attributes {dimension_semantics = [#tpu.dimension_semantics<parallel>], iteration_bounds = array<i64: 2>, scalar_prefetch = 0 : i64, scratch_operands = 0 : i64, tpu.core_type = #tpu.core_type<tc>, window_params = [{transform_indices = @transform_0, window_bounds = array<i64: 1, 4, 32>}, {transform_indices = @transform_1, window_bounds = array<i64: 1, 4, 32>}, {transform_indices = @transform_2, window_bounds = array<i64: 1, 4, 32>}]} {
    %c0 = arith.constant 0 : index
    %c0_0 = arith.constant 0 : index
    %c0_1 = arith.constant 0 : index
    %0 = vector.load %arg1[%c0, %c0_0, %c0_1] : memref<1x4x32xbf16, #tpu.memory_space<vmem>>, vector<1x4x32xbf16>
    %1 = vector.shape_cast %0 : vector<1x4x32xbf16> to vector<4x32xbf16>
    %2 = arith.extf %1 : vector<4x32xbf16> to vector<4x32xf32>
    %cst = arith.constant dense<0.000000e+00> : vector<32xf32>
    %3 = vector.multi_reduction <add>, %2, %cst [0] : vector<4x32xf32> to vector<32xf32>
    %4 = vector.shape_cast %3 : vector<32xf32> to vector<1x32xf32>
    %cst_2 = arith.constant 4.000000e+00 : f32
    %5 = vector.broadcast %cst_2 : f32 to vector<1x32xf32>
    %6 = arith.divf %4, %5 : vector<1x32xf32>
    %7 = vector.broadcast %6 : vector<1x32xf32> to vector<4x32xf32>
    %8 = arith.subf %2, %7 : vector<4x32xf32>
    %9 = arith.mulf %8, %8 : vector<4x32xf32>
    %cst_3 = arith.constant dense<0.000000e+00> : vector<32xf32>
    %10 = vector.multi_reduction <add>, %9, %cst_3 [0] : vector<4x32xf32> to vector<32xf32>
    %11 = vector.shape_cast %10 : vector<32xf32> to vector<1x32xf32>
    %cst_4 = arith.constant 4.000000e+00 : f32
    %12 = vector.broadcast %cst_4 : f32 to vector<1x32xf32>
    %13 = arith.divf %11, %12 : vector<1x32xf32>
    %cst_5 = arith.constant 9.99999974E-6 : f32
    %14 = vector.broadcast %cst_5 : f32 to vector<1x32xf32>
    %15 = arith.addf %13, %14 : vector<1x32xf32>
    %16 = math.rsqrt %15 : vector<1x32xf32>
    %17 = vector.broadcast %16 : vector<1x32xf32> to vector<4x32xf32>
    %18 = arith.mulf %8, %17 : vector<4x32xf32>
    %c0_6 = arith.constant 0 : index
    %c0_7 = arith.constant 0 : index
    %c0_8 = arith.constant 0 : index
    %19 = vector.load %arg2[%c0_6, %c0_7, %c0_8] : memref<1x4x32xbf16, #tpu.memory_space<vmem>>, vector<1x4x32xbf16>
    %20 = vector.shape_cast %19 : vector<1x4x32xbf16> to vector<4x32xbf16>
    %21 = arith.extf %20 : vector<4x32xbf16> to vector<4x32xf32>
    %22 = arith.addf %18, %21 : vector<4x32xf32>
    %23 = arith.truncf %22 : vector<4x32xf32> to vector<4x32xbf16>
    %c0_9 = arith.constant 0 : index
    %c0_10 = arith.constant 0 : index
    %c0_11 = arith.constant 0 : index
    %24 = vector.load %arg3[%c0_9, %c0_10, %c0_11] : memref<1x4x32xbf16, #tpu.memory_space<vmem>>, vector<1x4x32xbf16>
    %25 = vector.shape_cast %24 : vector<1x4x32xbf16> to vector<4x32xbf16>
    %26 = vector.shape_cast %23 : vector<4x32xbf16> to vector<1x4x32xbf16>
    tpu.vector_store %arg3[%c0_9, %c0_10, %c0_11], %26 {strides = array<i32>} : memref<1x4x32xbf16, #tpu.memory_space<vmem>>, vector<1x4x32xbf16>,
    return
  }
  func.func @transform_0(%arg0: i32) -> (i32, i32, i32) {
    %c0_i32 = arith.constant 0 : i32
    %c0_i32_0 = arith.constant 0 : i32
    %c0_i32_1 = arith.constant 0 : i32
    return %arg0, %c0_i32, %c0_i32_0 : i32, i32, i32
  }
  func.func @transform_1(%arg0: i32) -> (i32, i32, i32) {
    %c0_i32 = arith.constant 0 : i32
    %c0_i32_0 = arith.constant 0 : i32
    %c0_i32_1 = arith.constant 0 : i32
    return %arg0, %c0_i32, %c0_i32_0 : i32, i32, i32
  }
  func.func @transform_2(%arg0: i32) -> (i32, i32, i32) {
    %c0_i32 = arith.constant 0 : i32
    %c0_i32_0 = arith.constant 0 : i32
    %c0_i32_1 = arith.constant 0 : i32
    return %arg0, %c0_i32, %c0_i32_0 : i32, i32, i32
  }
}

module attributes {stable_mosaic.version = 11 : i64} {
  func.func @_warp_to_rgb_kernel(%arg0: i32, %arg1: i32, %arg2: memref<1x4x32xbf16, #tpu.memory_space<vmem>>, %arg3: memref<1x8x32xbf16, #tpu.memory_space<vmem>>, %arg4: memref<1x8x32xbf16, #tpu.memory_space<vmem>>, %arg5: memref<32x3xf32, #tpu.memory_space<vmem>>, %arg6: memref<1x3xf32, #tpu.memory_space<vmem>>, %arg7: memref<1x4x32xf32, #tpu.memory_space<vmem>>, %arg8: memref<1x4x3xf32, #tpu.memory_space<vmem>>, %arg9: memref<4x32xbf16, #tpu.memory_space<vmem>>, %arg10: memref<1x32xf32, #tpu.memory_space<vmem>>) attributes {dimension_semantics = [#tpu.dimension_semantics<parallel>, #tpu.dimension_semantics<arbitrary>], iteration_bounds = array<i64: 2, 1>, scalar_prefetch = 0 : i64, scratch_operands = 2 : i64, tpu.core_type = #tpu.core_type<tc>, window_params = [{transform_indices = @transform_0, window_bounds = array<i64: 1, 4, 32>}, {transform_indices = @transform_1, window_bounds = array<i64: 1, 8, 32>}, {transform_indices = @transform_2, window_bounds = array<i64: 1, 8, 32>}, {pipeline_mode = #tpu.pipeline_mode<synchronous>, transform_indices = @transform_3, window_bounds = array<i64: 32, 3>}, {pipeline_mode = #tpu.pipeline_mode<synchronous>, transform_indices = @transform_4, window_bounds = array<i64: 1, 3>}, {transform_indices = @transform_5, window_bounds = array<i64: 1, 4, 32>}, {transform_indices = @transform_6, window_bounds = array<i64: 1, 4, 3>}]} {
    %c0_i32 = arith.constant 0 : i32
    %0 = arith.cmpi eq, %arg1, %c0_i32 : i32
    %1 = arith.extui %0 : i1 to i32
    %c0_i32_0 = arith.constant 0 : i32
    %2 = arith.cmpi ne, %1, %c0_i32_0 : i32
    scf.if %2 {
      %cst_21 = arith.constant 0.000000e+00 : f32
      %46 = vector.broadcast %cst_21 : f32 to vector<4x32xf32>
      %c0_22 = arith.constant 0 : index
      %c0_23 = arith.constant 0 : index
      %c0_24 = arith.constant 0 : index
      %47 = vector.load %arg7[%c0_22, %c0_23, %c0_24] : memref<1x4x32xf32, #tpu.memory_space<vmem>>, vector<1x4x32xf32>
      %48 = vector.shape_cast %47 : vector<1x4x32xf32> to vector<4x32xf32>
      %49 = vector.shape_cast %46 : vector<4x32xf32> to vector<1x4x32xf32>
      tpu.vector_store %arg7[%c0_22, %c0_23, %c0_24], %49 {strides = array<i32>} : memref<1x4x32xf32, #tpu.memory_space<vmem>>, vector<1x4x32xf32>,
      %c0_25 = arith.constant 0 : index
      %c0_26 = arith.constant 0 : index
      %c0_27 = arith.constant 0 : index
      %50 = vector.load %arg2[%c0_25, %c0_26, %c0_27] : memref<1x4x32xbf16, #tpu.memory_space<vmem>>, vector<1x4x32xbf16>
      %51 = vector.shape_cast %50 : vector<1x4x32xbf16> to vector<4x32xbf16>
      %52 = arith.extf %51 : vector<4x32xbf16> to vector<4x32xf32>
      %c0_28 = arith.constant 0 : index
      %c0_29 = arith.constant 0 : index
      %c0_30 = arith.constant 0 : index
      %53 = vector.load %arg3[%c0_28, %c0_29, %c0_30] : memref<1x8x32xbf16, #tpu.memory_space<vmem>>, vector<1x8x32xbf16>
      %54 = vector.shape_cast %53 : vector<1x8x32xbf16> to vector<8x32xbf16>
      %55 = arith.extf %54 : vector<8x32xbf16> to vector<8x32xf32>
      %cst_31 = arith.constant dense<0.000000e+00> : vector<32xf32>
      %56 = vector.multi_reduction <add>, %52, %cst_31 [0] : vector<4x32xf32> to vector<32xf32>
      %57 = vector.shape_cast %56 : vector<32xf32> to vector<1x32xf32>
      %cst_32 = arith.constant 4.000000e+00 : f32
      %58 = vector.broadcast %cst_32 : f32 to vector<1x32xf32>
      %59 = arith.divf %57, %58 : vector<1x32xf32>
      %60 = vector.broadcast %59 : vector<1x32xf32> to vector<4x32xf32>
      %61 = arith.subf %52, %60 : vector<4x32xf32>
      %62 = arith.mulf %61, %61 : vector<4x32xf32>
      %cst_33 = arith.constant dense<0.000000e+00> : vector<4xf32>
      %63 = vector.multi_reduction <add>, %62, %cst_33 [1] : vector<4x32xf32> to vector<4xf32>
      %64 = vector.shape_cast %63 : vector<4xf32> to vector<4x1xf32>
      %65 = math.sqrt %64 : vector<4x1xf32>
      %66 = tpu.iota {dimensions = array<i32: 0>} : vector<8x1xi32>
      %c4_i32 = arith.constant 4 : i32
      %67 = vector.broadcast %c4_i32 : i32 to vector<8x1xi32>
      %68 = arith.cmpi slt, %66, %67 : vector<8x1xi32>
      %69 = arith.extui %68 : vector<8x1xi1> to vector<8x1xi32>
      %70 = arith.sitofp %69 : vector<8x1xi32> to vector<8x1xf32>
      %71 = vector.broadcast %70 : vector<8x1xf32> to vector<8x32xf32>
      %72 = arith.mulf %55, %71 : vector<8x32xf32>
      %cst_34 = arith.constant dense<0.000000e+00> : vector<32xf32>
      %73 = vector.multi_reduction <add>, %72, %cst_34 [0] : vector<8x32xf32> to vector<32xf32>
      %74 = vector.shape_cast %73 : vector<32xf32> to vector<1x32xf32>
      %cst_35 = arith.constant 4.000000e+00 : f32
      %75 = vector.broadcast %cst_35 : f32 to vector<1x32xf32>
      %76 = arith.divf %74, %75 : vector<1x32xf32>
      %77 = vector.extract_strided_slice %55 {offsets = [0, 0], sizes = [4, 32], strides = [1, 1]} : vector<8x32xf32> to vector<4x32xf32>
      %c0_36 = arith.constant 0 : index
      %c0_37 = arith.constant 0 : index
      %78 = vector.load %arg10[%c0_36, %c0_37] : memref<1x32xf32, #tpu.memory_space<vmem>>, vector<1x32xf32>
      tpu.vector_store %arg10[%c0_36, %c0_37], %76 {strides = array<i32>} : memref<1x32xf32, #tpu.memory_space<vmem>>, vector<1x32xf32>,
      %79 = vector.broadcast %76 : vector<1x32xf32> to vector<4x32xf32>
      %80 = arith.subf %77, %79 : vector<4x32xf32>
      %81 = vector.broadcast %65 : vector<4x1xf32> to vector<4x32xf32>
      %82 = arith.divf %80, %81 : vector<4x32xf32>
      %83 = arith.truncf %82 : vector<4x32xf32> to vector<4x32xbf16>
      %c0_38 = arith.constant 0 : index
      %c0_39 = arith.constant 0 : index
      %84 = vector.load %arg9[%c0_38, %c0_39] : memref<4x32xbf16, #tpu.memory_space<vmem>>, vector<4x32xbf16>
      tpu.vector_store %arg9[%c0_38, %c0_39], %83 {strides = array<i32>} : memref<4x32xbf16, #tpu.memory_space<vmem>>, vector<4x32xbf16>,
    } else {
    }
    %c0 = arith.constant 0 : index
    %c0_1 = arith.constant 0 : index
    %3 = vector.load %arg10[%c0, %c0_1] : memref<1x32xf32, #tpu.memory_space<vmem>>, vector<1x32xf32>
    %c8_i32 = arith.constant 8 : i32
    %4 = arith.muli %arg1, %c8_i32 : i32
    %5 = tpu.assume_multiple %4, 8 : i32
    %c0_2 = arith.constant 0 : index
    %6 = arith.index_cast %5 : i32 to index
    %c0_3 = arith.constant 0 : index
    %7 = vector.load %arg3[%c0_2, %6, %c0_3] : memref<1x8x32xbf16, #tpu.memory_space<vmem>>, vector<1x8x32xbf16>
    %8 = vector.shape_cast %7 : vector<1x8x32xbf16> to vector<8x32xbf16>
    %9 = arith.extf %8 : vector<8x32xbf16> to vector<8x32xf32>
    %10 = vector.broadcast %3 : vector<1x32xf32> to vector<8x32xf32>
    %11 = arith.subf %9, %10 : vector<8x32xf32>
    %12 = arith.mulf %11, %11 : vector<8x32xf32>
    %cst = arith.constant dense<0.000000e+00> : vector<8xf32>
    %13 = vector.multi_reduction <add>, %12, %cst [1] : vector<8x32xf32> to vector<8xf32>
    %14 = vector.shape_cast %13 : vector<8xf32> to vector<8x1xf32>
    %15 = math.sqrt %14 : vector<8x1xf32>
    %16 = vector.broadcast %15 : vector<8x1xf32> to vector<8x32xf32>
    %17 = arith.divf %11, %16 : vector<8x32xf32>
    %18 = arith.truncf %17 : vector<8x32xf32> to vector<8x32xbf16>
    %c0_4 = arith.constant 0 : index
    %c0_5 = arith.constant 0 : index
    %19 = vector.load %arg9[%c0_4, %c0_5] : memref<4x32xbf16, #tpu.memory_space<vmem>>, vector<4x32xbf16>
    %cst_6 = arith.constant dense<0.000000e+00> : vector<4x8xf32>
    %20 = tpu.matmul %19, %18, %cst_6 {dimension_numbers = #tpu.dot_dimension_numbers<[1], [1], [0], [0], [0, 0, 1, 0], [], []>} : vector<4x32xbf16>, vector<8x32xbf16>, vector<4x8xf32> -> vector<4x8xf32>
    %cst_7 = arith.constant dense<0xFF800000> : vector<8xf32>
    %21 = vector.multi_reduction <maximumf>, %20, %cst_7 [0] : vector<4x8xf32> to vector<8xf32>
    %22 = vector.shape_cast %21 : vector<8xf32> to vector<1x8xf32>
    %23 = vector.broadcast %22 : vector<1x8xf32> to vector<4x8xf32>
    %24 = arith.subf %20, %23 : vector<4x8xf32>
    %25 = math.exp %24 : vector<4x8xf32>
    %cst_8 = arith.constant dense<0.000000e+00> : vector<8xf32>
    %26 = vector.multi_reduction <add>, %25, %cst_8 [0] : vector<4x8xf32> to vector<8xf32>
    %27 = vector.shape_cast %26 : vector<8xf32> to vector<1x8xf32>
    %cst_9 = arith.constant 1.000000e+00 : f32
    %28 = vector.broadcast %cst_9 : f32 to vector<1x8xf32>
    %29 = arith.divf %28, %27 : vector<1x8xf32>
    %30 = vector.broadcast %29 : vector<1x8xf32> to vector<4x8xf32>
    %31 = arith.mulf %25, %30 : vector<4x8xf32>
    %32 = arith.truncf %31 : vector<4x8xf32> to vector<4x8xbf16>
    %c0_10 = arith.constant 0 : index
    %33 = arith.index_cast %5 : i32 to index
    %c0_11 = arith.constant 0 : index
    %34 = vector.load %arg4[%c0_10, %33, %c0_11] : memref<1x8x32xbf16, #tpu.memory_space<vmem>>, vector<1x8x32xbf16>
    %35 = vector.shape_cast %34 : vector<1x8x32xbf16> to vector<8x32xbf16>
    %c0_12 = arith.constant 0 : index
    %c0_13 = arith.constant 0 : index
    %c0_14 = arith.constant 0 : index
    %36 = vector.load %arg7[%c0_12, %c0_13, %c0_14] : memref<1x4x32xf32, #tpu.memory_space<vmem>>, vector<1x4x32xf32>
    %37 = vector.shape_cast %36 : vector<1x4x32xf32> to vector<4x32xf32>
    %cst_15 = arith.constant dense<0.000000e+00> : vector<4x32xf32>
    %38 = tpu.matmul %32, %35, %cst_15 {dimension_numbers = #tpu.dot_dimension_numbers<[1], [0], [0], [1], [0, 0, 1, 1], [], []>} : vector<4x8xbf16>, vector<8x32xbf16>, vector<4x32xf32> -> vector<4x32xf32>
    %39 = arith.addf %37, %38 : vector<4x32xf32>
    %c0_16 = arith.constant 0 : index
    %c0_17 = arith.constant 0 : index
    %c0_18 = arith.constant 0 : index
    %40 = vector.load %arg7[%c0_16, %c0_17, %c0_18] : memref<1x4x32xf32, #tpu.memory_space<vmem>>, vector<1x4x32xf32>
    %41 = vector.shape_cast %40 : vector<1x4x32xf32> to vector<4x32xf32>
    %42 = vector.shape_cast %39 : vector<4x32xf32> to vector<1x4x32xf32>
    tpu.vector_store %arg7[%c0_16, %c0_17, %c0_18], %42 {strides = array<i32>} : memref<1x4x32xf32, #tpu.memory_space<vmem>>, vector<1x4x32xf32>,
    %c0_i32_19 = arith.constant 0 : i32
    %43 = arith.cmpi eq, %arg1, %c0_i32_19 : i32
    %44 = arith.extui %43 : i1 to i32
    %c0_i32_20 = arith.constant 0 : i32
    %45 = arith.cmpi ne, %44, %c0_i32_20 : i32
    scf.if %45 {
      %c0_21 = arith.constant 0 : index
      %c0_22 = arith.constant 0 : index
      %c0_23 = arith.constant 0 : index
      %46 = vector.load %arg7[%c0_21, %c0_22, %c0_23] : memref<1x4x32xf32, #tpu.memory_space<vmem>>, vector<1x4x32xf32>
      %47 = vector.shape_cast %46 : vector<1x4x32xf32> to vector<4x32xf32>
      %c0_24 = arith.constant 0 : index
      %c0_25 = arith.constant 0 : index
      %48 = vector.load %arg5[%c0_24, %c0_25] : memref<32x3xf32, #tpu.memory_space<vmem>>, vector<32x3xf32>
      %cst_26 = arith.constant dense<0.000000e+00> : vector<4x3xf32>
      %49 = tpu.matmul %47, %48, %cst_26 {dimension_numbers = #tpu.dot_dimension_numbers<[1], [0], [0], [1], [0, 0, 1, 1], [], []>} : vector<4x32xf32>, vector<32x3xf32>, vector<4x3xf32> -> vector<4x3xf32>
      %c0_27 = arith.constant 0 : index
      %c0_28 = arith.constant 0 : index
      %50 = vector.load %arg6[%c0_27, %c0_28] : memref<1x3xf32, #tpu.memory_space<vmem>>, vector<1x3xf32>
      %51 = vector.broadcast %50 : vector<1x3xf32> to vector<4x3xf32>
      %52 = arith.addf %49, %51 : vector<4x3xf32>
      %53 = math.tanh %52 : vector<4x3xf32>
      %c0_29 = arith.constant 0 : index
      %c0_30 = arith.constant 0 : index
      %c0_31 = arith.constant 0 : index
      %54 = vector.load %arg8[%c0_29, %c0_30, %c0_31] : memref<1x4x3xf32, #tpu.memory_space<vmem>>, vector<1x4x3xf32>
      %55 = vector.shape_cast %54 : vector<1x4x3xf32> to vector<4x3xf32>
      %56 = vector.shape_cast %53 : vector<4x3xf32> to vector<1x4x3xf32>
      tpu.vector_store %arg8[%c0_29, %c0_30, %c0_31], %56 {strides = array<i32>} : memref<1x4x3xf32, #tpu.memory_space<vmem>>, vector<1x4x3xf32>,
    } else {
    }
    return
  }
  func.func @transform_0(%arg0: i32, %arg1: i32) -> (i32, i32, i32) {
    %c0_i32 = arith.constant 0 : i32
    %c0_i32_0 = arith.constant 0 : i32
    %c0_i32_1 = arith.constant 0 : i32
    return %arg0, %c0_i32, %c0_i32_0 : i32, i32, i32
  }
  func.func @transform_1(%arg0: i32, %arg1: i32) -> (i32, i32, i32) {
    %c0_i32 = arith.constant 0 : i32
    %c0_i32_0 = arith.constant 0 : i32
    %c0_i32_1 = arith.constant 0 : i32
    return %arg0, %c0_i32, %c0_i32_0 : i32, i32, i32
  }
  func.func @transform_2(%arg0: i32, %arg1: i32) -> (i32, i32, i32) {
    %c0_i32 = arith.constant 0 : i32
    %c0_i32_0 = arith.constant 0 : i32
    %c0_i32_1 = arith.constant 0 : i32
    return %arg0, %c0_i32, %c0_i32_0 : i32, i32, i32
  }
  func.func @transform_3(%arg0: i32, %arg1: i32) -> (i32, i32) {
    %c0_i32 = arith.constant 0 : i32
    %c0_i32_0 = arith.constant 0 : i32
    %c0_i32_1 = arith.constant 0 : i32
    return %c0_i32, %c0_i32_0 : i32, i32
  }
  func.func @transform_4(%arg0: i32, %arg1: i32) -> (i32, i32) {
    %c0_i32 = arith.constant 0 : i32
    %c0_i32_0 = arith.constant 0 : i32
    %c0_i32_1 = arith.constant 0 : i32
    return %c0_i32, %c0_i32_0 : i32, i32
  }
  func.func @transform_5(%arg0: i32, %arg1: i32) -> (i32, i32, i32) {
    %c0_i32 = arith.constant 0 : i32
    %c0_i32_0 = arith.constant 0 : i32
    %c0_i32_1 = arith.constant 0 : i32
    return %arg0, %c0_i32, %c0_i32_0 : i32, i32, i32
  }
  func.func @transform_6(%arg0: i32, %arg1: i32) -> (i32, i32, i32) {
    %c0_i32 = arith.constant 0 : i32
    %c0_i32_0 = arith.constant 0 : i32
    %c0_i32_1 = arith.constant 0 : i32
    return %arg0, %c0_i32, %c0_i32_0 : i32, i32, i32
  }
}

</mosaic_0001>

<llo_original>
// kernel: correspondence_net_forward.86
$region0: #{correspondence_net_forward.86}
  #allocation0 [shape = 'u32[]', space=smem, size = 0x4, offset = 0x4, fixed_abs, tag = 'smem constant byte address 0x4 - core index']
  #allocation1 [shape = 'u32[144,128]{1,0:T(1,128)}', space=vmem, size = 0x12000, scoped, tag = 'internal scratch']
  %s0 = inlined_call_operand.vmem [shape: bf16[2,256,8], index: 0, kind: input, shape index: {}]
  %s1 = inlined_call_operand.vmem [shape: bf16[2,256,8], index: 1, kind: output, shape index: {}]
  %s2 = sld [smem:[#allocation0]]
  $region37: #{correspondence_net_forward.86} parent=0
    _
  %s4 = ssub.s32 1, %s2
  %s5 = scalar_select 0, %s4, %s2
  loop: start=0, step=1, limit=4
  $region2: #{correspondence_net_forward.86} parent=0 // loop_pre_header
    _
  $region3: #{correspondence_net_forward.86} parent=0 // loop_header
    %s7 = sphi 0, %s11
    %p8 = scmp.ge.s32.totalorder %s7, 4
    %s17 = sphi 0, %s19
    %s20 = sphi 0, %s17
    %s21 = sphi 0, %s20
    %s37 = sphi 0, %s21
    %s43 = sphi 0, %s45
    %s46 = sphi 0, %s43
    %s47 = sphi 0, %s46
    %s63 = sphi 0, %s47
  $region4: #{correspondence_net_forward.86} parent=0 // loop_header_branch
    %10 = sbr.rel (%p8) target = $region8
  $region5: #{correspondence_net_forward.86} parent=0 // loop_body
    %s12 = ssub.s32 %s7, 1
    %s13 = ssub.s32 %s7, 2
    %s14 = sadd.s32 %s7, 1
    %s15 = ssub.s32 %s7, %s14
    %p16 = scmp.eq.s32.totalorder %s15, 0
    %s18 = sadd.s32 %s17, 1
    %s19 = scalar_select %p16, %s17, %s18
    %p22 = pneg %p16
    %p23 = scmp.eq.s32.totalorder %s7, 1
    %p24 = por %p22, %p23
    %p25 = scmp.ne.s32.totalorder %s17, %s20
    %p26 = scmp.eq.s32.totalorder %s7, 0
    %p27 = por %p25, %p26
    %p28 = scmp.ne.s32.totalorder %s17, %s20
    %p29 = scmp.eq.s32.totalorder %s12, 1
    %p30 = por %p28, %p29
    %p31 = scmp.ne.s32.totalorder %s20, %s21
    %p32 = scmp.eq.s32.totalorder %s12, 0
    %p33 = por %p31, %p32
    %p34 = scmp.ne.s32.totalorder %s20, %s21
    %p35 = scmp.eq.s32.totalorder %s13, 1
    %p36 = por %p34, %p35
    %p38 = scmp.ne.s32.totalorder %s21, %s37
    %p39 = scmp.eq.s32.totalorder %s13, 0
    %p40 = por %p38, %p39
    %s41 = ssub.s32 %s7, %s14
    %p42 = scmp.eq.s32.totalorder %s41, 0
    %s44 = sadd.s32 %s43, 1
    %s45 = scalar_select %p42, %s43, %s44
    %p48 = pneg %p42
    %p49 = scmp.eq.s32.totalorder %s7, 1
    %p50 = por %p48, %p49
    %p51 = scmp.ne.s32.totalorder %s43, %s46
    %p52 = scmp.eq.s32.totalorder %s7, 0
    %p53 = por %p51, %p52
    %p54 = scmp.ne.s32.totalorder %s43, %s46
    %p55 = scmp.eq.s32.totalorder %s12, 1
    %p56 = por %p54, %p55
    %p57 = scmp.ne.s32.totalorder %s46, %s47
    %p58 = scmp.eq.s32.totalorder %s12, 0
    %p59 = por %p57, %p58
    %p60 = scmp.ne.s32.totalorder %s46, %s47
    %p61 = scmp.eq.s32.totalorder %s13, 1
    %p62 = por %p60, %p61
    %p64 = scmp.ne.s32.totalorder %s47, %s63
    %p65 = scmp.eq.s32.totalorder %s13, 0
    %p66 = por %p64, %p65
    %p67 = scmp.le.s32.totalorder 1, %s7
    %p68 = scmp.lt.s32.totalorder %s7, 3
    %p69 = pnand %p67, %p68
    %p70 = pneg %p69
    // Predicated region
    $region9: #{correspondence_net_forward.86} parent=5 // pred_check
      _
    $region10: #{correspondence_net_forward.86} parent=5 // pred_check_branch
      %72 = sbr.rel (%p69) target = $region12
    $region11: #{correspondence_net_forward.86} parent=5 // pred_region
      %s73 = ssub.s32 %s7, 1
    $region12: #{correspondence_net_forward.86} parent=5 // pred_fallthru
      _
    %p74 = scmp.lt.s32.totalorder %s7, 2
    // Predicated region
    $region13: #{correspondence_net_forward.86} parent=5 // pred_check
      %p75 = pneg %p74
    $region14: #{correspondence_net_forward.86} parent=5 // pred_check_branch
      %77 = sbr.rel (%p75) target = $region16
    $region15: #{correspondence_net_forward.86} parent=5 // pred_region
      // Predicated region
      $region17: #{correspondence_net_forward.86} parent=15 // pred_check
        %p78 = pneg %p27
      $region18: #{correspondence_net_forward.86} parent=15 // pred_check_branch
        %80 = sbr.rel (%p78) target = $region20
      $region19: #{correspondence_net_forward.86} parent=15 // pred_region
        %p81 = scmp.lt.s32.totalorder %s7, 1
        %s82 = scalar_select %p81, %s7, 1
        %s83 = smul.addr %s82, 32
        %s84 = smul.addr %s83, 4
        %s85 = scalar_lea.vmem %s0, %s84
      $region20: #{correspondence_net_forward.86} parent=15 // pred_fallthru
        _
    $region16: #{correspondence_net_forward.86} parent=5 // pred_fallthru
      _
    %p86 = scmp.le.s32.totalorder 1, %s7
    %p87 = scmp.lt.s32.totalorder %s7, 3
    %p88 = pnand %p86, %p87
    %p89 = pneg %p88
    // Predicated region
    $region21: #{correspondence_net_forward.86} parent=5 // pred_check
      _
    $region22: #{correspondence_net_forward.86} parent=5 // pred_check_branch
      %91 = sbr.rel (%p88) target = $region24
    $region23: #{correspondence_net_forward.86} parent=5 // pred_region
      %s92 = ssub.s32 %s7, 1
      %p93 = scmp.lt.s32.totalorder %s12, 1
      %s94 = scalar_select %p93, %s12, 1
      %s95 = smul.addr %s94, 32
      %s96 = smul.addr %s95, 4
      %s97 = scalar_lea.vmem %s0, %s96
      %p98 = pneg %p33
      %p99 = pneg %p30
      %p100 = pneg %p59
      %p101 = pneg %p56
      %p102 = scmp.lt.s32.totalorder %s12, 1
      %s103 = scalar_select %p102, %s12, 1
      %s104 = smul.addr %s103, 32
      %s105 = smul.addr %s104, 4
      %s106 = scalar_lea.vmem %s1, %s105
      %p107 = scmp.lt.s32.totalorder %s12, 1
      %s108 = scalar_select %p107, %s12, 1
      %s109 = smul.addr %s108, 32
      %s110 = smul.addr %s109, 4
      %s111 = scalar_lea.vmem %s0, %s110
      %p112 = scmp.lt.s32.totalorder %s12, 1
      %s113 = scalar_select %p112, %s12, 1
      %s114 = smul.addr %s113, 32
      %s115 = smul.addr %s114, 4
      %s116 = scalar_lea.vmem %s1, %s115
      %v117 = vld [vmem:[%s111] sm:$0xf]
      %v118 = vld [vmem:[%s111 + $0x4] sm:$0xf]
      %v119 = vld [vmem:[%s111 + $0x8] sm:$0xf]
      %v120 = vld [vmem:[%s111 + $0xc] sm:$0xf]
      %v121 = vld [vmem:[%s111 + $0x10] sm:$0xf]
      %v122 = vld [vmem:[%s111 + $0x14] sm:$0xf]
      %v123 = vld [vmem:[%s111 + $0x18] sm:$0xf]
      %v124 = vld [vmem:[%s111 + $0x1c] sm:$0xf]
      %v125 = vld [vmem:[%s111 + $0x20] sm:$0xf]
      %v126 = vld [vmem:[%s111 + $0x24] sm:$0xf]
      %v127 = vld [vmem:[%s111 + $0x28] sm:$0xf]
      %v128 = vld [vmem:[%s111 + $0x2c] sm:$0xf]
      %v129 = vld [vmem:[%s111 + $0x30] sm:$0xf]
      %v130 = vld [vmem:[%s111 + $0x34] sm:$0xf]
      %v131 = vld [vmem:[%s111 + $0x38] sm:$0xf]
      %v132 = vld [vmem:[%s111 + $0x3c] sm:$0xf]
      %v133 = vld [vmem:[%s111 + $0x40] sm:$0xf]
      %v134 = vld [vmem:[%s111 + $0x44] sm:$0xf]
      %v135 = vld [vmem:[%s111 + $0x48] sm:$0xf]
      %v136 = vld [vmem:[%s111 + $0x4c] sm:$0xf]
      %v137 = vld [vmem:[%s111 + $0x50] sm:$0xf]
      %v138 = vld [vmem:[%s111 + $0x54] sm:$0xf]
      %v139 = vld [vmem:[%s111 + $0x58] sm:$0xf]
      %v140 = vld [vmem:[%s111 + $0x5c] sm:$0xf]
      %v141 = vld [vmem:[%s111 + $0x60] sm:$0xf]
      %v142 = vld [vmem:[%s111 + $0x64] sm:$0xf]
      %v143 = vld [vmem:[%s111 + $0x68] sm:$0xf]
      %v144 = vld [vmem:[%s111 + $0x6c] sm:$0xf]
      %v145 = vld [vmem:[%s111 + $0x70] sm:$0xf]
      %v146 = vld [vmem:[%s111 + $0x74] sm:$0xf]
      %v147 = vld [vmem:[%s111 + $0x78] sm:$0xf]
      %v148 = vld [vmem:[%s111 + $0x7c] sm:$0xf]
      %v149 = vunpack.c.l.bf16 %v117
      %v150 = vunpack.c.l.bf16 %v118
      %v151 = vunpack.c.l.bf16 %v119
      %v152 = vunpack.c.l.bf16 %v120
      %v153 = vunpack.c.l.bf16 %v121
      %v154 = vunpack.c.l.bf16 %v122
      %v155 = vunpack.c.l.bf16 %v123
      %v156 = vunpack.c.l.bf16 %v124
      %v157 = vunpack.c.l.bf16 %v125
      %v158 = vunpack.c.l.bf16 %v126
      %v159 = vunpack.c.l.bf16 %v127
      %v160 = vunpack.c.l.bf16 %v128
      %v161 = vunpack.c.l.bf16 %v129
      %v162 = vunpack.c.l.bf16 %v130
      %v163 = vunpack.c.l.bf16 %v131
      %v164 = vunpack.c.l.bf16 %v132
      %v165 = vunpack.c.l.bf16 %v133
      %v166 = vunpack.c.l.bf16 %v134
      %v167 = vunpack.c.l.bf16 %v135
      %v168 = vunpack.c.l.bf16 %v136
      %v169 = vunpack.c.l.bf16 %v137
      %v170 = vunpack.c.l.bf16 %v138
      %v171 = vunpack.c.l.bf16 %v139
      %v172 = vunpack.c.l.bf16 %v140
      %v173 = vunpack.c.l.bf16 %v141
      %v174 = vunpack.c.l.bf16 %v142
      %v175 = vunpack.c.l.bf16 %v143
      %v176 = vunpack.c.l.bf16 %v144
      %v177 = vunpack.c.l.bf16 %v145
      %v178 = vunpack.c.l.bf16 %v146
      %v179 = vunpack.c.l.bf16 %v147
      %v180 = vunpack.c.l.bf16 %v148
      %vm181 = vcmask 64512
      %v182 = vsel %vm181, %v149, 0.0
      %v183 = vsel %vm181, %v150, 0.0
      %v184 = vadd.f32 %v182, %v183
      %v185 = vsel %vm181, %v151, 0.0
      %v186 = vadd.f32 %v184, %v185
      %v187 = vsel %vm181, %v152, 0.0
      %v188 = vadd.f32 %v186, %v187
      %v189 = vsel %vm181, %v153, 0.0
      %v190 = vadd.f32 %v188, %v189
      %v191 = vsel %vm181, %v154, 0.0
      %v192 = vadd.f32 %v190, %v191
      %v193 = vsel %vm181, %v155, 0.0
      %v194 = vadd.f32 %v192, %v193
      %v195 = vsel %vm181, %v156, 0.0
      %v196 = vadd.f32 %v194, %v195
      %v197 = vsel %vm181, %v157, 0.0
      %v198 = vadd.f32 %v196, %v197
      %v199 = vsel %vm181, %v158, 0.0
      %v200 = vadd.f32 %v198, %v199
      %v201 = vsel %vm181, %v159, 0.0
      %v202 = vadd.f32 %v200, %v201
      %v203 = vsel %vm181, %v160, 0.0
      %v204 = vadd.f32 %v202, %v203
      %v205 = vsel %vm181, %v161, 0.0
      %v206 = vadd.f32 %v204, %v205
      %v207 = vsel %vm181, %v162, 0.0
      %v208 = vadd.f32 %v206, %v207
      %v209 = vsel %vm181, %v163, 0.0
      %v210 = vadd.f32 %v208, %v209
      %v211 = vsel %vm181, %v164, 0.0
      %v212 = vadd.f32 %v210, %v211
      %v213 = vsel %vm181, %v165, 0.0
      %v214 = vadd.f32 %v212, %v213
      %v215 = vsel %vm181, %v166, 0.0
      %v216 = vadd.f32 %v214, %v215
      %v217 = vsel %vm181, %v167, 0.0
      %v218 = vadd.f32 %v216, %v217
      %v219 = vsel %vm181, %v168, 0.0
      %v220 = vadd.f32 %v218, %v219
      %v221 = vsel %vm181, %v169, 0.0
      %v222 = vadd.f32 %v220, %v221
      %v223 = vsel %vm181, %v170, 0.0
      %v224 = vadd.f32 %v222, %v223
      %v225 = vsel %vm181, %v171, 0.0
      %v226 = vadd.f32 %v224, %v225
      %v227 = vsel %vm181, %v172, 0.0
      %v228 = vadd.f32 %v226, %v227
      %v229 = vsel %vm181, %v173, 0.0
      %v230 = vadd.f32 %v228, %v229
      %v231 = vsel %vm181, %v174, 0.0
      %v232 = vadd.f32 %v230, %v231
      %v233 = vsel %vm181, %v175, 0.0
      %v234 = vadd.f32 %v232, %v233
      %v235 = vsel %vm181, %v176, 0.0
      %v236 = vadd.f32 %v234, %v235
      %v237 = vsel %vm181, %v177, 0.0
      %v238 = vadd.f32 %v236, %v237
      %v239 = vsel %vm181, %v178, 0.0
      %v240 = vadd.f32 %v238, %v239
      %v241 = vsel %vm181, %v179, 0.0
      %v242 = vadd.f32 %v240, %v241
      %v243 = vsel %vm181, %v180, 0.0
      %v244 = vadd.f32 %v242, %v243
      %v245 = vrot.slane %v244, 4
      %v246 = vadd.f32 %v244, %v245
      %v247 = vrot.slane %v246, 2
      %v248 = vadd.f32 %v246, %v247
      %v249 = vrot.slane %v248, 1
      %v250 = vadd.f32 %v248, %v249
      %v251 = vrcp.pop 256.0
      %v252 = vmul.f32 %v250, %v251
      %v253 = vsub.f32 %v149, %v252
      %v254 = vsub.f32 %v150, %v252
      %v255 = vsub.f32 %v151, %v252
      %v256 = vsub.f32 %v152, %v252
      %v257 = vsub.f32 %v153, %v252
      %v258 = vsub.f32 %v154, %v252
      %v259 = vsub.f32 %v155, %v252
      %v260 = vsub.f32 %v156, %v252
      %v261 = vsub.f32 %v157, %v252
      %v262 = vsub.f32 %v158, %v252
      %v263 = vsub.f32 %v159, %v252
      %v264 = vsub.f32 %v160, %v252
      %v265 = vsub.f32 %v161, %v252
      %v266 = vsub.f32 %v162, %v252
      %v267 = vsub.f32 %v163, %v252
      %v268 = vsub.f32 %v164, %v252
      %v269 = vsub.f32 %v165, %v252
      %v270 = vsub.f32 %v166, %v252
      %v271 = vsub.f32 %v167, %v252
      %v272 = vsub.f32 %v168, %v252
      %v273 = vsub.f32 %v169, %v252
      %v274 = vsub.f32 %v170, %v252
      %v275 = vsub.f32 %v171, %v252
      %v276 = vsub.f32 %v172, %v252
      %v277 = vsub.f32 %v173, %v252
      %v278 = vsub.f32 %v174, %v252
      %v279 = vsub.f32 %v175, %v252
      %v280 = vsub.f32 %v176, %v252
      %v281 = vsub.f32 %v177, %v252
      %v282 = vsub.f32 %v178, %v252
      %v283 = vsub.f32 %v179, %v252
      %v284 = vsub.f32 %v180, %v252
      %v285 = vmul.f32 %v253, %v253
      %v286 = vmul.f32 %v254, %v254
      %v287 = vmul.f32 %v255, %v255
      %v288 = vmul.f32 %v256, %v256
      %v289 = vmul.f32 %v257, %v257
      %v290 = vmul.f32 %v258, %v258
      %v291 = vmul.f32 %v259, %v259
      %v292 = vmul.f32 %v260, %v260
      %v293 = vmul.f32 %v261, %v261
      %v294 = vmul.f32 %v262, %v262
      %v295 = vmul.f32 %v263, %v263
      %v296 = vmul.f32 %v264, %v264
      %v297 = vmul.f32 %v265, %v265
      %v298 = vmul.f32 %v266, %v266
      %v299 = vmul.f32 %v267, %v267
      %v300 = vmul.f32 %v268, %v268
      %v301 = vmul.f32 %v269, %v269
      %v302 = vmul.f32 %v270, %v270
      %v303 = vmul.f32 %v271, %v271
      %v304 = vmul.f32 %v272, %v272
      %v305 = vmul.f32 %v273, %v273
      %v306 = vmul.f32 %v274, %v274
      %v307 = vmul.f32 %v275, %v275
      %v308 = vmul.f32 %v276, %v276
      %v309 = vmul.f32 %v277, %v277
      %v310 = vmul.f32 %v278, %v278
      %v311 = vmul.f32 %v279, %v279
      %v312 = vmul.f32 %v280, %v280
      %v313 = vmul.f32 %v281, %v281
      %v314 = vmul.f32 %v282, %v282
      %v315 = vmul.f32 %v283, %v283
      %v316 = vmul.f32 %v284, %v284
      %v317 = vsel %vm181, %v285, 0.0
      %v318 = vsel %vm181, %v286, 0.0
      %v319 = vadd.f32 %v317, %v318
      %v320 = vsel %vm181, %v287, 0.0
      %v321 = vadd.f32 %v319, %v320
      %v322 = vsel %vm181, %v288, 0.0
      %v323 = vadd.f32 %v321, %v322
      %v324 = vsel %vm181, %v289, 0.0
      %v325 = vadd.f32 %v323, %v324
      %v326 = vsel %vm181, %v290, 0.0
      %v327 = vadd.f32 %v325, %v326
      %v328 = vsel %vm181, %v291, 0.0
      %v329 = vadd.f32 %v327, %v328
      %v330 = vsel %vm181, %v292, 0.0
      %v331 = vadd.f32 %v329, %v330
      %v332 = vsel %vm181, %v293, 0.0
      %v333 = vadd.f32 %v331, %v332
      %v334 = vsel %vm181, %v294, 0.0
      %v335 = vadd.f32 %v333, %v334
      %v336 = vsel %vm181, %v295, 0.0
      %v337 = vadd.f32 %v335, %v336
      %v338 = vsel %vm181, %v296, 0.0
      %v339 = vadd.f32 %v337, %v338
      %v340 = vsel %vm181, %v297, 0.0
      %v341 = vadd.f32 %v339, %v340
      %v342 = vsel %vm181, %v298, 0.0
      %v343 = vadd.f32 %v341, %v342
      %v344 = vsel %vm181, %v299, 0.0
      %v345 = vadd.f32 %v343, %v344
      %v346 = vsel %vm181, %v300, 0.0
      %v347 = vadd.f32 %v345, %v346
      %v348 = vsel %vm181, %v301, 0.0
      %v349 = vadd.f32 %v347, %v348
      %v350 = vsel %vm181, %v302, 0.0
      %v351 = vadd.f32 %v349, %v350
      %v352 = vsel %vm181, %v303, 0.0
      %v353 = vadd.f32 %v351, %v352
      %v354 = vsel %vm181, %v304, 0.0
      %v355 = vadd.f32 %v353, %v354
      %v356 = vsel %vm181, %v305, 0.0
      %v357 = vadd.f32 %v355, %v356
      %v358 = vsel %vm181, %v306, 0.0
      %v359 = vadd.f32 %v357, %v358
      %v360 = vsel %vm181, %v307, 0.0
      %v361 = vadd.f32 %v359, %v360
      %v362 = vsel %vm181, %v308, 0.0
      %v363 = vadd.f32 %v361, %v362
      %v364 = vsel %vm181, %v309, 0.0
      %v365 = vadd.f32 %v363, %v364
      %v366 = vsel %vm181, %v310, 0.0
      %v367 = vadd.f32 %v365, %v366
      %v368 = vsel %vm181, %v311, 0.0
      %v369 = vadd.f32 %v367, %v368
      %v370 = vsel %vm181, %v312, 0.0
      %v371 = vadd.f32 %v369, %v370
      %v372 = vsel %vm181, %v313, 0.0
      %v373 = vadd.f32 %v371, %v372
      %v374 = vsel %vm181, %v314, 0.0
      %v375 = vadd.f32 %v373, %v374
      %v376 = vsel %vm181, %v315, 0.0
      %v377 = vadd.f32 %v375, %v376
      %v378 = vsel %vm181, %v316, 0.0
      %v379 = vadd.f32 %v377, %v378
      %v380 = vrot.slane %v379, 4
      %v381 = vadd.f32 %v379, %v380
      %v382 = vrot.slane %v381, 2
      %v383 = vadd.f32 %v381, %v382
      %v384 = vrot.slane %v383, 1
      %v385 = vadd.f32 %v383, %v384
      %v386 = vmul.f32 %v385, %v251
      %v387 = vadd.f32 %v386, 1e-05
      %v388 = vrsqrt.pop %v387
      %v389 = vmul.f32 %v253, %v388
      %v390 = vmul.f32 %v254, %v388
      %v391 = vmul.f32 %v255, %v388
      %v392 = vmul.f32 %v256, %v388
      %v393 = vmul.f32 %v257, %v388
      %v394 = vmul.f32 %v258, %v388
      %v395 = vmul.f32 %v259, %v388
      %v396 = vmul.f32 %v260, %v388
      %v397 = vmul.f32 %v261, %v388
      %v398 = vmul.f32 %v262, %v388
      %v399 = vmul.f32 %v263, %v388
      %v400 = vmul.f32 %v264, %v388
      %v401 = vmul.f32 %v265, %v388
      %v402 = vmul.f32 %v266, %v388
      %v403 = vmul.f32 %v267, %v388
      %v404 = vmul.f32 %v268, %v388
      %v405 = vmul.f32 %v269, %v388
      %v406 = vmul.f32 %v270, %v388
      %v407 = vmul.f32 %v271, %v388
      %v408 = vmul.f32 %v272, %v388
      %v409 = vmul.f32 %v273, %v388
      %v410 = vmul.f32 %v274, %v388
      %v411 = vmul.f32 %v275, %v388
      %v412 = vmul.f32 %v276, %v388
      %v413 = vmul.f32 %v277, %v388
      %v414 = vmul.f32 %v278, %v388
      %v415 = vmul.f32 %v279, %v388
      %v416 = vmul.f32 %v280, %v388
      %v417 = vmul.f32 %v281, %v388
      %v418 = vmul.f32 %v282, %v388
      %v419 = vmul.f32 %v283, %v388
      %v420 = vmul.f32 %v284, %v388
      %vm421 = vcmp.ge.f32.partialorder %v389, 0.0
      %vm422 = vcmp.ge.f32.partialorder %v390, 0.0
      %vm423 = vcmp.ge.f32.partialorder %v391, 0.0
      %vm424 = vcmp.ge.f32.partialorder %v392, 0.0
      %vm425 = vcmp.ge.f32.partialorder %v393, 0.0
      %vm426 = vcmp.ge.f32.partialorder %v394, 0.0
      %vm427 = vcmp.ge.f32.partialorder %v395, 0.0
      %vm428 = vcmp.ge.f32.partialorder %v396, 0.0
      %vm429 = vcmp.ge.f32.partialorder %v397, 0.0
      %vm430 = vcmp.ge.f32.partialorder %v398, 0.0
      %vm431 = vcmp.ge.f32.partialorder %v399, 0.0
      %vm432 = vcmp.ge.f32.partialorder %v400, 0.0
      %vm433 = vcmp.ge.f32.partialorder %v401, 0.0
      %vm434 = vcmp.ge.f32.partialorder %v402, 0.0
      %vm435 = vcmp.ge.f32.partialorder %v403, 0.0
      %vm436 = vcmp.ge.f32.partialorder %v404, 0.0
      %vm437 = vcmp.ge.f32.partialorder %v405, 0.0
      %vm438 = vcmp.ge.f32.partialorder %v406, 0.0
      %vm439 = vcmp.ge.f32.partialorder %v407, 0.0
      %vm440 = vcmp.ge.f32.partialorder %v408, 0.0
      %vm441 = vcmp.ge.f32.partialorder %v409, 0.0
      %vm442 = vcmp.ge.f32.partialorder %v410, 0.0
      %vm443 = vcmp.ge.f32.partialorder %v411, 0.0
      %vm444 = vcmp.ge.f32.partialorder %v412, 0.0
      %vm445 = vcmp.ge.f32.partialorder %v413, 0.0
      %vm446 = vcmp.ge.f32.partialorder %v414, 0.0
      %vm447 = vcmp.ge.f32.partialorder %v415, 0.0
      %vm448 = vcmp.ge.f32.partialorder %v416, 0.0
      %vm449 = vcmp.ge.f32.partialorder %v417, 0.0
      %vm450 = vcmp.ge.f32.partialorder %v418, 0.0
      %vm451 = vcmp.ge.f32.partialorder %v419, 0.0
      %vm452 = vcmp.ge.f32.partialorder %v420, 0.0
      %v453 = vmul.f32 %v389, 0.2
      %v454 = vmul.f32 %v390, 0.2
      %v455 = vmul.f32 %v391, 0.2
      %v456 = vmul.f32 %v392, 0.2
      %v457 = vmul.f32 %v393, 0.2
      %v458 = vmul.f32 %v394, 0.2
      %v459 = vmul.f32 %v395, 0.2
      %v460 = vmul.f32 %v396, 0.2
      %v461 = vmul.f32 %v397, 0.2
      %v462 = vmul.f32 %v398, 0.2
      %v463 = vmul.f32 %v399, 0.2
      %v464 = vmul.f32 %v400, 0.2
      %v465 = vmul.f32 %v401, 0.2
      %v466 = vmul.f32 %v402, 0.2
      %v467 = vmul.f32 %v403, 0.2
      %v468 = vmul.f32 %v404, 0.2
      %v469 = vmul.f32 %v405, 0.2
      %v470 = vmul.f32 %v406, 0.2
      %v471 = vmul.f32 %v407, 0.2
      %v472 = vmul.f32 %v408, 0.2
      %v473 = vmul.f32 %v409, 0.2
      %v474 = vmul.f32 %v410, 0.2
      %v475 = vmul.f32 %v411, 0.2
      %v476 = vmul.f32 %v412, 0.2
      %v477 = vmul.f32 %v413, 0.2
      %v478 = vmul.f32 %v414, 0.2
      %v479 = vmul.f32 %v415, 0.2
      %v480 = vmul.f32 %v416, 0.2
      %v481 = vmul.f32 %v417, 0.2
      %v482 = vmul.f32 %v418, 0.2
      %v483 = vmul.f32 %v419, 0.2
      %v484 = vmul.f32 %v420, 0.2
      %v485 = vsel %vm421, %v389, %v453
      %v486 = vsel %vm422, %v390, %v454
      %v487 = vsel %vm423, %v391, %v455
      %v488 = vsel %vm424, %v392, %v456
      %v489 = vsel %vm425, %v393, %v457
      %v490 = vsel %vm426, %v394, %v458
      %v491 = vsel %vm427, %v395, %v459
      %v492 = vsel %vm428, %v396, %v460
      %v493 = vsel %vm429, %v397, %v461
      %v494 = vsel %vm430, %v398, %v462
      %v495 = vsel %vm431, %v399, %v463
      %v496 = vsel %vm432, %v400, %v464
      %v497 = vsel %vm433, %v401, %v465
      %v498 = vsel %vm434, %v402, %v466
      %v499 = vsel %vm435, %v403, %v467
      %v500 = vsel %vm436, %v404, %v468
      %v501 = vsel %vm437, %v405, %v469
      %v502 = vsel %vm438, %v406, %v470
      %v503 = vsel %vm439, %v407, %v471
      %v504 = vsel %vm440, %v408, %v472
      %v505 = vsel %vm441, %v409, %v473
      %v506 = vsel %vm442, %v410, %v474
      %v507 = vsel %vm443, %v411, %v475
      %v508 = vsel %vm444, %v412, %v476
      %v509 = vsel %vm445, %v413, %v477
      %v510 = vsel %vm446, %v414, %v478
      %v511 = vsel %vm447, %v415, %v479
      %v512 = vsel %vm448, %v416, %v480
      %v513 = vsel %vm449, %v417, %v481
      %v514 = vsel %vm450, %v418, %v482
      %v515 = vsel %vm451, %v419, %v483
      %v516 = vsel %vm452, %v420, %v484
      %v517 = vpack.c.bf16 %v486, %v485
      %v518 = vpack.c.bf16 %v488, %v487
      %v519 = vpack.c.bf16 %v490, %v489
      %v520 = vpack.c.bf16 %v492, %v491
      %v521 = vpack.c.bf16 %v494, %v493
      %v522 = vpack.c.bf16 %v496, %v495
      %v523 = vpack.c.bf16 %v498, %v497
      %v524 = vpack.c.bf16 %v500, %v499
      %v525 = vpack.c.bf16 %v502, %v501
      %v526 = vpack.c.bf16 %v504, %v503
      %v527 = vpack.c.bf16 %v506, %v505
      %v528 = vpack.c.bf16 %v508, %v507
      %v529 = vpack.c.bf16 %v510, %v509
      %v530 = vpack.c.bf16 %v512, %v511
      %v531 = vpack.c.bf16 %v514, %v513
      %v532 = vpack.c.bf16 %v516, %v515
      %v549 = vunpack.c.l.b16 %v517
      %v550 = vunpack.c.h.b16 %v517
      %v551 = vunpack.c.l.b16 %v518
      %v552 = vunpack.c.h.b16 %v518
      %v553 = vunpack.c.l.b16 %v519
      %v554 = vunpack.c.h.b16 %v519
      %v555 = vunpack.c.l.b16 %v520
      %v556 = vunpack.c.h.b16 %v520
      %v557 = vunpack.c.l.b16 %v521
      %v558 = vunpack.c.h.b16 %v521
      %v559 = vunpack.c.l.b16 %v522
      %v560 = vunpack.c.h.b16 %v522
      %v561 = vunpack.c.l.b16 %v523
      %v562 = vunpack.c.h.b16 %v523
      %v563 = vunpack.c.l.b16 %v524
      %v564 = vunpack.c.h.b16 %v524
      %v565 = vunpack.c.l.b16 %v525
      %v566 = vunpack.c.h.b16 %v525
      %v567 = vunpack.c.l.b16 %v526
      %v568 = vunpack.c.h.b16 %v526
      %v569 = vunpack.c.l.b16 %v527
      %v570 = vunpack.c.h.b16 %v527
      %v571 = vunpack.c.l.b16 %v528
      %v572 = vunpack.c.h.b16 %v528
      %v573 = vunpack.c.l.b16 %v529
      %v574 = vunpack.c.h.b16 %v529
      %v575 = vunpack.c.l.b16 %v530
      %v576 = vunpack.c.h.b16 %v530
      %v577 = vunpack.c.l.b16 %v531
      %v578 = vunpack.c.h.b16 %v531
      %v579 = vunpack.c.l.b16 %v532
      %v580 = vunpack.c.h.b16 %v532
      %v581 = vpack.c.b16 %v549, %v549
      %v582 = vpack.c.b16 %v550, %v550
      %v583 = vpack.c.b16 %v551, %v551
      %v584 = vpack.c.b16 %v552, %v552
      %v585 = vpack.c.b16 %v553, %v553
      %v586 = vpack.c.b16 %v554, %v554
      %v587 = vpack.c.b16 %v555, %v555
      %v588 = vpack.c.b16 %v556, %v556
      %v589 = vpack.c.b16 %v557, %v557
      %v590 = vpack.c.b16 %v558, %v558
      %v591 = vpack.c.b16 %v559, %v559
      %v592 = vpack.c.b16 %v560, %v560
      %v593 = vpack.c.b16 %v561, %v561
      %v594 = vpack.c.b16 %v562, %v562
      %v595 = vpack.c.b16 %v563, %v563
      %v596 = vpack.c.b16 %v564, %v564
      %v597 = vpack.c.b16 %v565, %v565
      %v598 = vpack.c.b16 %v566, %v566
      %v599 = vpack.c.b16 %v567, %v567
      %v600 = vpack.c.b16 %v568, %v568
      %v601 = vpack.c.b16 %v569, %v569
      %v602 = vpack.c.b16 %v570, %v570
      %v603 = vpack.c.b16 %v571, %v571
      %v604 = vpack.c.b16 %v572, %v572
      %v605 = vpack.c.b16 %v573, %v573
      %v606 = vpack.c.b16 %v574, %v574
      %v607 = vpack.c.b16 %v575, %v575
      %v608 = vpack.c.b16 %v576, %v576
      %v609 = vpack.c.b16 %v577, %v577
      %v610 = vpack.c.b16 %v578, %v578
      %v611 = vpack.c.b16 %v579, %v579
      %v612 = vpack.c.b16 %v580, %v580
      %vm645 = vcmask 60416
      %646 = vst.msk [vmem:[%s116] sm:$0xf] %vm645, %v581
      %647 = vst.msk [vmem:[%s116 + $0x4] sm:$0xf] %vm645, %v582
      %648 = vst.msk [vmem:[%s116 + $0x8] sm:$0xf] %vm645, %v583
      %649 = vst.msk [vmem:[%s116 + $0xc] sm:$0xf] %vm645, %v584
      %650 = vst.msk [vmem:[%s116 + $0x10] sm:$0xf] %vm645, %v585
      %651 = vst.msk [vmem:[%s116 + $0x14] sm:$0xf] %vm645, %v586
      %652 = vst.msk [vmem:[%s116 + $0x18] sm:$0xf] %vm645, %v587
      %653 = vst.msk [vmem:[%s116 + $0x1c] sm:$0xf] %vm645, %v588
      %654 = vst.msk [vmem:[%s116 + $0x20] sm:$0xf] %vm645, %v589
      %655 = vst.msk [vmem:[%s116 + $0x24] sm:$0xf] %vm645, %v590
      %656 = vst.msk [vmem:[%s116 + $0x28] sm:$0xf] %vm645, %v591
      %657 = vst.msk [vmem:[%s116 + $0x2c] sm:$0xf] %vm645, %v592
      %658 = vst.msk [vmem:[%s116 + $0x30] sm:$0xf] %vm645, %v593
      %659 = vst.msk [vmem:[%s116 + $0x34] sm:$0xf] %vm645, %v594
      %660 = vst.msk [vmem:[%s116 + $0x38] sm:$0xf] %vm645, %v595
      %661 = vst.msk [vmem:[%s116 + $0x3c] sm:$0xf] %vm645, %v596
      %662 = vst.msk [vmem:[%s116 + $0x40] sm:$0xf] %vm645, %v597
      %663 = vst.msk [vmem:[%s116 + $0x44] sm:$0xf] %vm645, %v598
      %664 = vst.msk [vmem:[%s116 + $0x48] sm:$0xf] %vm645, %v599
      %665 = vst.msk [vmem:[%s116 + $0x4c] sm:$0xf] %vm645, %v600
      %666 = vst.msk [vmem:[%s116 + $0x50] sm:$0xf] %vm645, %v601
      %667 = vst.msk [vmem:[%s116 + $0x54] sm:$0xf] %vm645, %v602
      %668 = vst.msk [vmem:[%s116 + $0x58] sm:$0xf] %vm645, %v603
      %669 = vst.msk [vmem:[%s116 + $0x5c] sm:$0xf] %vm645, %v604
      %670 = vst.msk [vmem:[%s116 + $0x60] sm:$0xf] %vm645, %v605
      %671 = vst.msk [vmem:[%s116 + $0x64] sm:$0xf] %vm645, %v606
      %672 = vst.msk [vmem:[%s116 + $0x68] sm:$0xf] %vm645, %v607
      %673 = vst.msk [vmem:[%s116 + $0x6c] sm:$0xf] %vm645, %v608
      %674 = vst.msk [vmem:[%s116 + $0x70] sm:$0xf] %vm645, %v609
      %675 = vst.msk [vmem:[%s116 + $0x74] sm:$0xf] %vm645, %v610
      %676 = vst.msk [vmem:[%s116 + $0x78] sm:$0xf] %vm645, %v611
      %677 = vst.msk [vmem:[%s116 + $0x7c] sm:$0xf] %vm645, %v612
      %p678 = scmp.lt.s32.totalorder %s12, 1
      %s679 = scalar_select %p678, %s12, 1
      %s680 = smul.addr %s679, 32
      %s681 = smul.addr %s680, 4
      %s682 = scalar_lea.vmem %s1, %s681
      // Predicated region
      $region25: #{correspondence_net_forward.86} parent=23 // pred_check
        %p683 = pneg %p56
      $region26: #{correspondence_net_forward.86} parent=23 // pred_check_branch
        %685 = sbr.rel (%p683) target = $region28
      $region27: #{correspondence_net_forward.86} parent=23 // pred_region
        _
      $region28: #{correspondence_net_forward.86} parent=23 // pred_fallthru
        _
    $region24: #{correspondence_net_forward.86} parent=5 // pred_fallthru
      _
    %p686 = scmp.le.s32.totalorder 2, %s7
    // Predicated region
    $region29: #{correspondence_net_forward.86} parent=5 // pred_check
      %p687 = pneg %p686
    $region30: #{correspondence_net_forward.86} parent=5 // pred_check_branch
      %689 = sbr.rel (%p687) target = $region32
    $region31: #{correspondence_net_forward.86} parent=5 // pred_region
      %s690 = ssub.s32 %s7, 2
      // Predicated region
      $region33: #{correspondence_net_forward.86} parent=31 // pred_check
        %p691 = pneg %p62
      $region34: #{correspondence_net_forward.86} parent=31 // pred_check_branch
        %693 = sbr.rel (%p691) target = $region36
      $region35: #{correspondence_net_forward.86} parent=31 // pred_region
        %p694 = scmp.lt.s32.totalorder %s13, 1
        %s695 = scalar_select %p694, %s13, 1
        %s696 = smul.addr %s695, 32
        %s697 = smul.addr %s696, 4
        %s698 = scalar_lea.vmem %s1, %s697
      $region36: #{correspondence_net_forward.86} parent=31 // pred_fallthru
        _
    $region32: #{correspondence_net_forward.86} parent=5 // pred_fallthru
      _
  $region6: #{correspondence_net_forward.86} parent=0 // loop_footer
    %s11 = sadd.s32 1, %s7
  $region7: #{correspondence_net_forward.86} parent=0 // loop_footer_branch
    %6 = sbr.rel target = $region3
  $region8: #{correspondence_net_forward.86} parent=0 // loop_exit
    _

// kernel: correspondence_net_forward.85
$region0: #{correspondence_net_forward.85}
  #allocation0 [shape = 'u32[]', space=smem, size = 0x4, offset = 0x4, fixed_abs, tag = 'smem constant byte address 0x4 - core index']
  #allocation1 [shape = 'u32[144,128]{1,0:T(1,128)}', space=vmem, size = 0x12000, scoped, tag = 'internal scratch']
  %s0 = inlined_call_operand.vmem [shape: bf16[512,128], index: 0, kind: input, shape index: {}]
  %s1 = inlined_call_operand.vmem [shape: bf16[128,128], index: 1, kind: input, shape index: {}]
  %s2 = inlined_call_operand.vmem [shape: f32[1,128], index: 2, kind: input, shape index: {}]
  %s3 = inlined_call_operand.vmem [shape: bf16[512,128], index: 3, kind: output, shape index: {}]
  %s4 = sld [smem:[#allocation0]]
  $region22: #{correspondence_net_forward.85} parent=0
    _
  %s6 = ssub.s32 1, %s4
  %s7 = scalar_select 0, %s6, %s4
  // Predicated region
  $region2: #{correspondence_net_forward.85} parent=0 // pred_check
    _
  $region3: #{correspondence_net_forward.85} parent=0 // pred_check_branch
    %9 = sbr.rel (0) target = $region5
  $region4: #{correspondence_net_forward.85} parent=0 // pred_region
    _
  $region5: #{correspondence_net_forward.85} parent=0 // pred_fallthru
    _
  // Predicated region
  $region6: #{correspondence_net_forward.85} parent=0 // pred_check
    _
  $region7: #{correspondence_net_forward.85} parent=0 // pred_check_branch
    %11 = sbr.rel (0) target = $region9
  $region8: #{correspondence_net_forward.85} parent=0 // pred_region
    _
  $region9: #{correspondence_net_forward.85} parent=0 // pred_fallthru
    _
  // Predicated region
  $region10: #{correspondence_net_forward.85} parent=0 // pred_check
    _
  $region11: #{correspondence_net_forward.85} parent=0 // pred_check_branch
    %13 = sbr.rel (0) target = $region13
  $region12: #{correspondence_net_forward.85} parent=0 // pred_region
    _
  $region13: #{correspondence_net_forward.85} parent=0 // pred_fallthru
    _
  %v15 = vld [vmem:[%s0] sm:$0xf]
  %v16 = vld [vmem:[%s0 + $0x4] sm:$0xf]
  %v17 = vld [vmem:[%s0 + $0x8] sm:$0xf]
  %v18 = vld [vmem:[%s0 + $0xc] sm:$0xf]
  %v19 = vld [vmem:[%s0 + $0x10] sm:$0xf]
  %v20 = vld [vmem:[%s0 + $0x14] sm:$0xf]
  %v21 = vld [vmem:[%s0 + $0x18] sm:$0xf]
  %v22 = vld [vmem:[%s0 + $0x1c] sm:$0xf]
  %v23 = vld [vmem:[%s0 + $0x20] sm:$0xf]
  %v24 = vld [vmem:[%s0 + $0x24] sm:$0xf]
  %v25 = vld [vmem:[%s0 + $0x28] sm:$0xf]
  %v26 = vld [vmem:[%s0 + $0x2c] sm:$0xf]
  %v27 = vld [vmem:[%s0 + $0x30] sm:$0xf]
  %v28 = vld [vmem:[%s0 + $0x34] sm:$0xf]
  %v29 = vld [vmem:[%s0 + $0x38] sm:$0xf]
  %v30 = vld [vmem:[%s0 + $0x3c] sm:$0xf]
  %v31 = vld [vmem:[%s0 + $0x40] sm:$0xf]
  %v32 = vld [vmem:[%s0 + $0x44] sm:$0xf]
  %v33 = vld [vmem:[%s0 + $0x48] sm:$0xf]
  %v34 = vld [vmem:[%s0 + $0x4c] sm:$0xf]
  %v35 = vld [vmem:[%s0 + $0x50] sm:$0xf]
  %v36 = vld [vmem:[%s0 + $0x54] sm:$0xf]
  %v37 = vld [vmem:[%s0 + $0x58] sm:$0xf]
  %v38 = vld [vmem:[%s0 + $0x5c] sm:$0xf]
  %v39 = vld [vmem:[%s0 + $0x60] sm:$0xf]
  %v40 = vld [vmem:[%s0 + $0x64] sm:$0xf]
  %v41 = vld [vmem:[%s0 + $0x68] sm:$0xf]
  %v42 = vld [vmem:[%s0 + $0x6c] sm:$0xf]
  %v43 = vld [vmem:[%s0 + $0x70] sm:$0xf]
  %v44 = vld [vmem:[%s0 + $0x74] sm:$0xf]
  %v45 = vld [vmem:[%s0 + $0x78] sm:$0xf]
  %v46 = vld [vmem:[%s0 + $0x7c] sm:$0xf]
  %v47 = vld [vmem:[%s0 + $0x80] sm:$0xf]
  %v48 = vld [vmem:[%s0 + $0x84] sm:$0xf]
  %v49 = vld [vmem:[%s0 + $0x88] sm:$0xf]
  %v50 = vld [vmem:[%s0 + $0x8c] sm:$0xf]
  %v51 = vld [vmem:[%s0 + $0x90] sm:$0xf]
  %v52 = vld [vmem:[%s0 + $0x94] sm:$0xf]
  %v53 = vld [vmem:[%s0 + $0x98] sm:$0xf]
  %v54 = vld [vmem:[%s0 + $0x9c] sm:$0xf]
  %v55 = vld [vmem:[%s0 + $0xa0] sm:$0xf]
  %v56 = vld [vmem:[%s0 + $0xa4] sm:$0xf]
  %v57 = vld [vmem:[%s0 + $0xa8] sm:$0xf]
  %v58 = vld [vmem:[%s0 + $0xac] sm:$0xf]
  %v59 = vld [vmem:[%s0 + $0xb0] sm:$0xf]
  %v60 = vld [vmem:[%s0 + $0xb4] sm:$0xf]
  %v61 = vld [vmem:[%s0 + $0xb8] sm:$0xf]
  %v62 = vld [vmem:[%s0 + $0xbc] sm:$0xf]
  %v63 = vld [vmem:[%s0 + $0xc0] sm:$0xf]
  %v64 = vld [vmem:[%s0 + $0xc4] sm:$0xf]
  %v65 = vld [vmem:[%s0 + $0xc8] sm:$0xf]
  %v66 = vld [vmem:[%s0 + $0xcc] sm:$0xf]
  %v67 = vld [vmem:[%s0 + $0xd0] sm:$0xf]
  %v68 = vld [vmem:[%s0 + $0xd4] sm:$0xf]
  %v69 = vld [vmem:[%s0 + $0xd8] sm:$0xf]
  %v70 = vld [vmem:[%s0 + $0xdc] sm:$0xf]
  %v71 = vld [vmem:[%s0 + $0xe0] sm:$0xf]
  %v72 = vld [vmem:[%s0 + $0xe4] sm:$0xf]
  %v73 = vld [vmem:[%s0 + $0xe8] sm:$0xf]
  %v74 = vld [vmem:[%s0 + $0xec] sm:$0xf]
  %v75 = vld [vmem:[%s0 + $0xf0] sm:$0xf]
  %v76 = vld [vmem:[%s0 + $0xf4] sm:$0xf]
  %v77 = vld [vmem:[%s0 + $0xf8] sm:$0xf]
  %v78 = vld [vmem:[%s0 + $0xfc] sm:$0xf]
  %v79 = vld [vmem:[%s1] sm:$0xf]
  %v80 = vld [vmem:[%s1 + $0x4] sm:$0xf]
  %v81 = vld [vmem:[%s1 + $0x8] sm:$0xf]
  %v82 = vld [vmem:[%s1 + $0xc] sm:$0xf]
  %v83 = vld [vmem:[%s1 + $0x10] sm:$0xf]
  %v84 = vld [vmem:[%s1 + $0x14] sm:$0xf]
  %v85 = vld [vmem:[%s1 + $0x18] sm:$0xf]
  %v86 = vld [vmem:[%s1 + $0x1c] sm:$0xf]
  %v87 = vld [vmem:[%s1 + $0x20] sm:$0xf]
  %v88 = vld [vmem:[%s1 + $0x24] sm:$0xf]
  %v89 = vld [vmem:[%s1 + $0x28] sm:$0xf]
  %v90 = vld [vmem:[%s1 + $0x2c] sm:$0xf]
  %v91 = vld [vmem:[%s1 + $0x30] sm:$0xf]
  %v92 = vld [vmem:[%s1 + $0x34] sm:$0xf]
  %v93 = vld [vmem:[%s1 + $0x38] sm:$0xf]
  %v94 = vld [vmem:[%s1 + $0x3c] sm:$0xf]
  %v95 = vld [vmem:[%s2] sm:$0x1]
  %v97 = vlaneseq
  %v98 = vshrl.u32 %v97, 7
  %v99 = vsub.s32 0, %v98
  %v100 = vrot.slane %v95, %v99
  %v166 = vunpack.c.l.b16 %v15
  %v167 = vunpack.c.l.b16 %v16
  %v168 = vunpack.c.l.b16 %v17
  %v169 = vunpack.c.l.b16 %v18
  %v170 = vunpack.c.l.b16 %v19
  %v171 = vunpack.c.l.b16 %v20
  %v172 = vunpack.c.l.b16 %v21
  %v173 = vunpack.c.l.b16 %v22
  %v174 = vunpack.c.l.b16 %v23
  %v175 = vunpack.c.l.b16 %v24
  %v176 = vunpack.c.l.b16 %v25
  %v177 = vunpack.c.l.b16 %v26
  %v178 = vunpack.c.l.b16 %v27
  %v179 = vunpack.c.l.b16 %v28
  %v180 = vunpack.c.l.b16 %v29
  %v181 = vunpack.c.l.b16 %v30
  %v182 = vunpack.c.l.b16 %v31
  %v183 = vunpack.c.l.b16 %v32
  %v184 = vunpack.c.l.b16 %v33
  %v185 = vunpack.c.l.b16 %v34
  %v186 = vunpack.c.l.b16 %v35
  %v187 = vunpack.c.l.b16 %v36
  %v188 = vunpack.c.l.b16 %v37
  %v189 = vunpack.c.l.b16 %v38
  %v190 = vunpack.c.l.b16 %v39
  %v191 = vunpack.c.l.b16 %v40
  %v192 = vunpack.c.l.b16 %v41
  %v193 = vunpack.c.l.b16 %v42
  %v194 = vunpack.c.l.b16 %v43
  %v195 = vunpack.c.l.b16 %v44
  %v196 = vunpack.c.l.b16 %v45
  %v197 = vunpack.c.l.b16 %v46
  %v198 = vunpack.c.l.b16 %v47
  %v199 = vunpack.c.l.b16 %v48
  %v200 = vunpack.c.l.b16 %v49
  %v201 = vunpack.c.l.b16 %v50
  %v202 = vunpack.c.l.b16 %v51
  %v203 = vunpack.c.l.b16 %v52
  %v204 = vunpack.c.l.b16 %v53
  %v205 = vunpack.c.l.b16 %v54
  %v206 = vunpack.c.l.b16 %v55
  %v207 = vunpack.c.l.b16 %v56
  %v208 = vunpack.c.l.b16 %v57
  %v209 = vunpack.c.l.b16 %v58
  %v210 = vunpack.c.l.b16 %v59
  %v211 = vunpack.c.l.b16 %v60
  %v212 = vunpack.c.l.b16 %v61
  %v213 = vunpack.c.l.b16 %v62
  %v214 = vunpack.c.l.b16 %v63
  %v215 = vunpack.c.l.b16 %v64
  %v216 = vunpack.c.l.b16 %v65
  %v217 = vunpack.c.l.b16 %v66
  %v218 = vunpack.c.l.b16 %v67
  %v219 = vunpack.c.l.b16 %v68
  %v220 = vunpack.c.l.b16 %v69
  %v221 = vunpack.c.l.b16 %v70
  %v222 = vunpack.c.l.b16 %v71
  %v223 = vunpack.c.l.b16 %v72
  %v224 = vunpack.c.l.b16 %v73
  %v225 = vunpack.c.l.b16 %v74
  %v226 = vunpack.c.l.b16 %v75
  %v227 = vunpack.c.l.b16 %v76
  %v228 = vunpack.c.l.b16 %v77
  %v229 = vunpack.c.l.b16 %v78
  %v230 = vpack.c.b16 %v167, %v166
  %v231 = vpack.c.b16 %v169, %v168
  %v232 = vpack.c.b16 %v171, %v170
  %v233 = vpack.c.b16 %v173, %v172
  %v234 = vpack.c.b16 %v175, %v174
  %v235 = vpack.c.b16 %v177, %v176
  %v236 = vpack.c.b16 %v179, %v178
  %v237 = vpack.c.b16 %v181, %v180
  %v238 = vpack.c.b16 %v183, %v182
  %v239 = vpack.c.b16 %v185, %v184
  %v240 = vpack.c.b16 %v187, %v186
  %v241 = vpack.c.b16 %v189, %v188
  %v242 = vpack.c.b16 %v191, %v190
  %v243 = vpack.c.b16 %v193, %v192
  %v244 = vpack.c.b16 %v195, %v194
  %v245 = vpack.c.b16 %v197, %v196
  %v246 = vpack.c.b16 %v199, %v198
  %v247 = vpack.c.b16 %v201, %v200
  %v248 = vpack.c.b16 %v203, %v202
  %v249 = vpack.c.b16 %v205, %v204
  %v250 = vpack.c.b16 %v207, %v206
  %v251 = vpack.c.b16 %v209, %v208
  %v252 = vpack.c.b16 %v211, %v210
  %v253 = vpack.c.b16 %v213, %v212
  %v254 = vpack.c.b16 %v215, %v214
  %v255 = vpack.c.b16 %v217, %v216
  %v256 = vpack.c.b16 %v219, %v218
  %v257 = vpack.c.b16 %v221, %v220
  %v258 = vpack.c.b16 %v223, %v222
  %v259 = vpack.c.b16 %v225, %v224
  %v260 = vpack.c.b16 %v227, %v226
  %v261 = vpack.c.b16 %v229, %v228
  %v310 = vunpack.c.l.b16 %v79
  %v311 = vunpack.c.l.b16 %v80
  %v312 = vunpack.c.l.b16 %v81
  %v313 = vunpack.c.l.b16 %v82
  %v314 = vunpack.c.l.b16 %v83
  %v315 = vunpack.c.l.b16 %v84
  %v316 = vunpack.c.l.b16 %v85
  %v317 = vunpack.c.l.b16 %v86
  %v318 = vunpack.c.l.b16 %v87
  %v319 = vunpack.c.l.b16 %v88
  %v320 = vunpack.c.l.b16 %v89
  %v321 = vunpack.c.l.b16 %v90
  %v322 = vunpack.c.l.b16 %v91
  %v323 = vunpack.c.l.b16 %v92
  %v324 = vunpack.c.l.b16 %v93
  %v325 = vunpack.c.l.b16 %v94
  %v326 = vpack.c.b16 %v311, %v310
  %v327 = vpack.c.b16 %v313, %v312
  %v328 = vpack.c.b16 %v315, %v314
  %v329 = vpack.c.b16 %v317, %v316
  %v330 = vpack.c.b16 %v319, %v318
  %v331 = vpack.c.b16 %v321, %v320
  %v332 = vpack.c.b16 %v323, %v322
  %v333 = vpack.c.b16 %v325, %v324
  %342 = vmatprep.subr.bf16.mxu0 0
  %343 = vmatpush1.bf16.msra.mxu0 %v326
  %344 = vmatprep.subr.bf16.mxu0 0
  %345 = vmatpush1.bf16.msra.mxu0 %v327
  %346 = vmatprep.subr.bf16.mxu0 0
  %347 = vmatpush1.bf16.msra.mxu0 %v328
  %348 = vmatprep.subr.bf16.mxu0 0
  %349 = vmatpush1.bf16.msra.mxu0 %v329
  %350 = vmatprep.subr.bf16.mxu0 0
  %351 = vmatpush1.bf16.msra.mxu0 %v330
  %352 = vmatprep.subr.bf16.mxu0 0
  %353 = vmatpush1.bf16.msra.mxu0 %v331
  %354 = vmatprep.subr.bf16.mxu0 0
  %355 = vmatpush1.bf16.msra.mxu0 %v332
  %356 = vmatprep.subr.bf16.mxu0 0
  %357 = vmatpush1.bf16.msra.mxu0 %v333
  %358 = vmatprep.subr.bf16.mxu0 0
  %359 = vmatpush1.bf16.msra.mxu0 0
  %360 = vmatprep.subr.bf16.mxu0 0
  %361 = vmatpush1.bf16.msra.mxu0 0
  %362 = vmatprep.subr.bf16.mxu0 0
  %363 = vmatpush1.bf16.msra.mxu0 0
  %364 = vmatprep.subr.bf16.mxu0 0
  %365 = vmatpush1.bf16.msra.mxu0 0
  %366 = vmatprep.subr.bf16.mxu0 0
  %367 = vmatpush1.bf16.msra.mxu0 0
  %368 = vmatprep.subr.bf16.mxu0 0
  %369 = vmatpush1.bf16.msra.mxu0 0
  %370 = vmatprep.subr.bf16.mxu0 0
  %371 = vmatpush1.bf16.msra.mxu0 0
  %372 = vmatprep.subr.bf16.mxu0 0
  %373 = vmatpush1.bf16.msra.mxu0 0
  %374 = vmatprep.mubr.bf16.mxu0 0
  %375 = vmatmul.mubr.bf16.gmra.mrb[0].mxu0 %v230
  %v376 = vpop.f32.mrb[0].mxu0
  %v377 = vadd.f32 %v100, %v376
  %v378 = vpop.f32.mrb[0].mxu0
  %v379 = vpop.f32.mrb[0].mxu0
  %v380 = vadd.f32 %v100, %v379
  %v381 = vpop.f32.mrb[0].mxu0
  %382 = vmatprep.mubr.bf16.mxu0 0
  %383 = vmatmul.mubr.bf16.gmra.mrb[0].mxu0 %v231
  %v384 = vpop.f32.mrb[0].mxu0
  %v385 = vadd.f32 %v100, %v384
  %v386 = vpop.f32.mrb[0].mxu0
  %v387 = vpop.f32.mrb[0].mxu0
  %v388 = vadd.f32 %v100, %v387
  %v389 = vpop.f32.mrb[0].mxu0
  %390 = vmatprep.mubr.bf16.mxu0 0
  %391 = vmatmul.mubr.bf16.gmra.mrb[0].mxu0 %v232
  %v392 = vpop.f32.mrb[0].mxu0
  %v393 = vadd.f32 %v100, %v392
  %v394 = vpop.f32.mrb[0].mxu0
  %v395 = vpop.f32.mrb[0].mxu0
  %v396 = vadd.f32 %v100, %v395
  %v397 = vpop.f32.mrb[0].mxu0
  %398 = vmatprep.mubr.bf16.mxu0 0
  %399 = vmatmul.mubr.bf16.gmra.mrb[0].mxu0 %v233
  %v400 = vpop.f32.mrb[0].mxu0
  %v401 = vadd.f32 %v100, %v400
  %v402 = vpop.f32.mrb[0].mxu0
  %v403 = vpop.f32.mrb[0].mxu0
  %v404 = vadd.f32 %v100, %v403
  %v405 = vpop.f32.mrb[0].mxu0
  %406 = vmatprep.mubr.bf16.mxu0 0
  %407 = vmatmul.mubr.bf16.gmra.mrb[0].mxu0 %v234
  %v408 = vpop.f32.mrb[0].mxu0
  %v409 = vadd.f32 %v100, %v408
  %v410 = vpop.f32.mrb[0].mxu0
  %v411 = vpop.f32.mrb[0].mxu0
  %v412 = vadd.f32 %v100, %v411
  %v413 = vpop.f32.mrb[0].mxu0
  %414 = vmatprep.mubr.bf16.mxu0 0
  %415 = vmatmul.mubr.bf16.gmra.mrb[0].mxu0 %v235
  %v416 = vpop.f32.mrb[0].mxu0
  %v417 = vadd.f32 %v100, %v416
  %v418 = vpop.f32.mrb[0].mxu0
  %v419 = vpop.f32.mrb[0].mxu0
  %v420 = vadd.f32 %v100, %v419
  %v421 = vpop.f32.mrb[0].mxu0
  %422 = vmatprep.mubr.bf16.mxu0 0
  %423 = vmatmul.mubr.bf16.gmra.mrb[0].mxu0 %v236
  %v424 = vpop.f32.mrb[0].mxu0
  %v425 = vadd.f32 %v100, %v424
  %v426 = vpop.f32.mrb[0].mxu0
  %v427 = vpop.f32.mrb[0].mxu0
  %v428 = vadd.f32 %v100, %v427
  %v429 = vpop.f32.mrb[0].mxu0
  %430 = vmatprep.mubr.bf16.mxu0 0
  %431 = vmatmul.mubr.bf16.gmra.mrb[0].mxu0 %v237
  %v432 = vpop.f32.mrb[0].mxu0
  %v433 = vadd.f32 %v100, %v432
  %v434 = vpop.f32.mrb[0].mxu0
  %v435 = vpop.f32.mrb[0].mxu0
  %v436 = vadd.f32 %v100, %v435
  %v437 = vpop.f32.mrb[0].mxu0
  %438 = vmatprep.mubr.bf16.mxu0 0
  %439 = vmatmul.mubr.bf16.gmra.mrb[0].mxu0 %v238
  %v440 = vpop.f32.mrb[0].mxu0
  %v441 = vadd.f32 %v100, %v440
  %v442 = vpop.f32.mrb[0].mxu0
  %v443 = vpop.f32.mrb[0].mxu0
  %v444 = vadd.f32 %v100, %v443
  %v445 = vpop.f32.mrb[0].mxu0
  %446 = vmatprep.mubr.bf16.mxu0 0
  %447 = vmatmul.mubr.bf16.gmra.mrb[0].mxu0 %v239
  %v448 = vpop.f32.mrb[0].mxu0
  %v449 = vadd.f32 %v100, %v448
  %v450 = vpop.f32.mrb[0].mxu0
  %v451 = vpop.f32.mrb[0].mxu0
  %v452 = vadd.f32 %v100, %v451
  %v453 = vpop.f32.mrb[0].mxu0
  %454 = vmatprep.mubr.bf16.mxu0 0
  %455 = vmatmul.mubr.bf16.gmra.mrb[0].mxu0 %v240
  %v456 = vpop.f32.mrb[0].mxu0
  %v457 = vadd.f32 %v100, %v456
  %v458 = vpop.f32.mrb[0].mxu0
  %v459 = vpop.f32.mrb[0].mxu0
  %v460 = vadd.f32 %v100, %v459
  %v461 = vpop.f32.mrb[0].mxu0
  %462 = vmatprep.mubr.bf16.mxu0 0
  %463 = vmatmul.mubr.bf16.gmra.mrb[0].mxu0 %v241
  %v464 = vpop.f32.mrb[0].mxu0
  %v465 = vadd.f32 %v100, %v464
  %v466 = vpop.f32.mrb[0].mxu0
  %v467 = vpop.f32.mrb[0].mxu0
  %v468 = vadd.f32 %v100, %v467
  %v469 = vpop.f32.mrb[0].mxu0
  %470 = vmatprep.mubr.bf16.mxu0 0
  %471 = vmatmul.mubr.bf16.gmra.mrb[0].mxu0 %v242
  %v472 = vpop.f32.mrb[0].mxu0
  %v473 = vadd.f32 %v100, %v472
  %v474 = vpop.f32.mrb[0].mxu0
  %v475 = vpop.f32.mrb[0].mxu0
  %v476 = vadd.f32 %v100, %v475
  %v477 = vpop.f32.mrb[0].mxu0
  %478 = vmatprep.mubr.bf16.mxu0 0
  %479 = vmatmul.mubr.bf16.gmra.mrb[0].mxu0 %v243
  %v480 = vpop.f32.mrb[0].mxu0
  %v481 = vadd.f32 %v100, %v480
  %v482 = vpop.f32.mrb[0].mxu0
  %v483 = vpop.f32.mrb[0].mxu0
  %v484 = vadd.f32 %v100, %v483
  %v485 = vpop.f32.mrb[0].mxu0
  %486 = vmatprep.mubr.bf16.mxu0 0
  %487 = vmatmul.mubr.bf16.gmra.mrb[0].mxu0 %v244
  %v488 = vpop.f32.mrb[0].mxu0
  %v489 = vadd.f32 %v100, %v488
  %v490 = vpop.f32.mrb[0].mxu0
  %v491 = vpop.f32.mrb[0].mxu0
  %v492 = vadd.f32 %v100, %v491
  %v493 = vpop.f32.mrb[0].mxu0
  %494 = vmatprep.mubr.bf16.mxu0 0
  %495 = vmatmul.mubr.bf16.gmra.mrb[0].mxu0 %v245
  %v496 = vpop.f32.mrb[0].mxu0
  %v497 = vadd.f32 %v100, %v496
  %v498 = vpop.f32.mrb[0].mxu0
  %v499 = vpop.f32.mrb[0].mxu0
  %v500 = vadd.f32 %v100, %v499
  %v501 = vpop.f32.mrb[0].mxu0
  %502 = vmatprep.mubr.bf16.mxu0 0
  %503 = vmatmul.mubr.bf16.gmra.mrb[0].mxu0 %v246
  %v504 = vpop.f32.mrb[0].mxu0
  %v505 = vadd.f32 %v100, %v504
  %v506 = vpop.f32.mrb[0].mxu0
  %v507 = vpop.f32.mrb[0].mxu0
  %v508 = vadd.f32 %v100, %v507
  %v509 = vpop.f32.mrb[0].mxu0
  %510 = vmatprep.mubr.bf16.mxu0 0
  %511 = vmatmul.mubr.bf16.gmra.mrb[0].mxu0 %v247
  %v512 = vpop.f32.mrb[0].mxu0
  %v513 = vadd.f32 %v100, %v512
  %v514 = vpop.f32.mrb[0].mxu0
  %v515 = vpop.f32.mrb[0].mxu0
  %v516 = vadd.f32 %v100, %v515
  %v517 = vpop.f32.mrb[0].mxu0
  %518 = vmatprep.mubr.bf16.mxu0 0
  %519 = vmatmul.mubr.bf16.gmra.mrb[0].mxu0 %v248
  %v520 = vpop.f32.mrb[0].mxu0
  %v521 = vadd.f32 %v100, %v520
  %v522 = vpop.f32.mrb[0].mxu0
  %v523 = vpop.f32.mrb[0].mxu0
  %v524 = vadd.f32 %v100, %v523
  %v525 = vpop.f32.mrb[0].mxu0
  %526 = vmatprep.mubr.bf16.mxu0 0
  %527 = vmatmul.mubr.bf16.gmra.mrb[0].mxu0 %v249
  %v528 = vpop.f32.mrb[0].mxu0
  %v529 = vadd.f32 %v100, %v528
  %v530 = vpop.f32.mrb[0].mxu0
  %v531 = vpop.f32.mrb[0].mxu0
  %v532 = vadd.f32 %v100, %v531
  %v533 = vpop.f32.mrb[0].mxu0
  %534 = vmatprep.mubr.bf16.mxu0 0
  %535 = vmatmul.mubr.bf16.gmra.mrb[0].mxu0 %v250
  %v536 = vpop.f32.mrb[0].mxu0
  %v537 = vadd.f32 %v100, %v536
  %v538 = vpop.f32.mrb[0].mxu0
  %v539 = vpop.f32.mrb[0].mxu0
  %v540 = vadd.f32 %v100, %v539
  %v541 = vpop.f32.mrb[0].mxu0
  %542 = vmatprep.mubr.bf16.mxu0 0
  %543 = vmatmul.mubr.bf16.gmra.mrb[0].mxu0 %v251
  %v544 = vpop.f32.mrb[0].mxu0
  %v545 = vadd.f32 %v100, %v544
  %v546 = vpop.f32.mrb[0].mxu0
  %v547 = vpop.f32.mrb[0].mxu0
  %v548 = vadd.f32 %v100, %v547
  %v549 = vpop.f32.mrb[0].mxu0
  %550 = vmatprep.mubr.bf16.mxu0 0
  %551 = vmatmul.mubr.bf16.gmra.mrb[0].mxu0 %v252
  %v552 = vpop.f32.mrb[0].mxu0
  %v553 = vadd.f32 %v100, %v552
  %v554 = vpop.f32.mrb[0].mxu0
  %v555 = vpop.f32.mrb[0].mxu0
  %v556 = vadd.f32 %v100, %v555
  %v557 = vpop.f32.mrb[0].mxu0
  %558 = vmatprep.mubr.bf16.mxu0 0
  %559 = vmatmul.mubr.bf16.gmra.mrb[0].mxu0 %v253
  %v560 = vpop.f32.mrb[0].mxu0
  %v561 = vadd.f32 %v100, %v560
  %v562 = vpop.f32.mrb[0].mxu0
  %v563 = vpop.f32.mrb[0].mxu0
  %v564 = vadd.f32 %v100, %v563
  %v565 = vpop.f32.mrb[0].mxu0
  %566 = vmatprep.mubr.bf16.mxu0 0
  %567 = vmatmul.mubr.bf16.gmra.mrb[0].mxu0 %v254
  %v568 = vpop.f32.mrb[0].mxu0
  %v569 = vadd.f32 %v100, %v568
  %v570 = vpop.f32.mrb[0].mxu0
  %v571 = vpop.f32.mrb[0].mxu0
  %v572 = vadd.f32 %v100, %v571
  %v573 = vpop.f32.mrb[0].mxu0
  %574 = vmatprep.mubr.bf16.mxu0 0
  %575 = vmatmul.mubr.bf16.gmra.mrb[0].mxu0 %v255
  %v576 = vpop.f32.mrb[0].mxu0
  %v577 = vadd.f32 %v100, %v576
  %v578 = vpop.f32.mrb[0].mxu0
  %v579 = vpop.f32.mrb[0].mxu0
  %v580 = vadd.f32 %v100, %v579
  %v581 = vpop.f32.mrb[0].mxu0
  %582 = vmatprep.mubr.bf16.mxu0 0
  %583 = vmatmul.mubr.bf16.gmra.mrb[0].mxu0 %v256
  %v584 = vpop.f32.mrb[0].mxu0
  %v585 = vadd.f32 %v100, %v584
  %v586 = vpop.f32.mrb[0].mxu0
  %v587 = vpop.f32.mrb[0].mxu0
  %v588 = vadd.f32 %v100, %v587
  %v589 = vpop.f32.mrb[0].mxu0
  %590 = vmatprep.mubr.bf16.mxu0 0
  %591 = vmatmul.mubr.bf16.gmra.mrb[0].mxu0 %v257
  %v592 = vpop.f32.mrb[0].mxu0
  %v593 = vadd.f32 %v100, %v592
  %v594 = vpop.f32.mrb[0].mxu0
  %v595 = vpop.f32.mrb[0].mxu0
  %v596 = vadd.f32 %v100, %v595
  %v597 = vpop.f32.mrb[0].mxu0
  %598 = vmatprep.mubr.bf16.mxu0 0
  %599 = vmatmul.mubr.bf16.gmra.mrb[0].mxu0 %v258
  %v600 = vpop.f32.mrb[0].mxu0
  %v601 = vadd.f32 %v100, %v600
  %v602 = vpop.f32.mrb[0].mxu0
  %v603 = vpop.f32.mrb[0].mxu0
  %v604 = vadd.f32 %v100, %v603
  %v605 = vpop.f32.mrb[0].mxu0
  %606 = vmatprep.mubr.bf16.mxu0 0
  %607 = vmatmul.mubr.bf16.gmra.mrb[0].mxu0 %v259
  %v608 = vpop.f32.mrb[0].mxu0
  %v609 = vadd.f32 %v100, %v608
  %v610 = vpop.f32.mrb[0].mxu0
  %v611 = vpop.f32.mrb[0].mxu0
  %v612 = vadd.f32 %v100, %v611
  %v613 = vpop.f32.mrb[0].mxu0
  %614 = vmatprep.mubr.bf16.mxu0 0
  %615 = vmatmul.mubr.bf16.gmra.mrb[0].mxu0 %v260
  %v616 = vpop.f32.mrb[0].mxu0
  %v617 = vadd.f32 %v100, %v616
  %v618 = vpop.f32.mrb[0].mxu0
  %v619 = vpop.f32.mrb[0].mxu0
  %v620 = vadd.f32 %v100, %v619
  %v621 = vpop.f32.mrb[0].mxu0
  %622 = vmatprep.mubr.bf16.mxu0 0
  %623 = vmatmul.mubr.bf16.gmra.mrb[0].mxu0 %v261
  %v624 = vpop.f32.mrb[0].mxu0
  %v625 = vadd.f32 %v100, %v624
  %v626 = vpop.f32.mrb[0].mxu0
  %v627 = vpop.f32.mrb[0].mxu0
  %v628 = vadd.f32 %v100, %v627
  %v629 = vpop.f32.mrb[0].mxu0
  %630 = vdwg.mxu0
  %v631 = vpack.c.bf16 %v380, %v377
  %v632 = vpack.c.bf16 %v388, %v385
  %v633 = vpack.c.bf16 %v396, %v393
  %v634 = vpack.c.bf16 %v404, %v401
  %v635 = vpack.c.bf16 %v412, %v409
  %v636 = vpack.c.bf16 %v420, %v417
  %v637 = vpack.c.bf16 %v428, %v425
  %v638 = vpack.c.bf16 %v436, %v433
  %v639 = vpack.c.bf16 %v444, %v441
  %v640 = vpack.c.bf16 %v452, %v449
  %v641 = vpack.c.bf16 %v460, %v457
  %v642 = vpack.c.bf16 %v468, %v465
  %v643 = vpack.c.bf16 %v476, %v473
  %v644 = vpack.c.bf16 %v484, %v481
  %v645 = vpack.c.bf16 %v492, %v489
  %v646 = vpack.c.bf16 %v500, %v497
  %v647 = vpack.c.bf16 %v508, %v505
  %v648 = vpack.c.bf16 %v516, %v513
  %v649 = vpack.c.bf16 %v524, %v521
  %v650 = vpack.c.bf16 %v532, %v529
  %v651 = vpack.c.bf16 %v540, %v537
  %v652 = vpack.c.bf16 %v548, %v545
  %v653 = vpack.c.bf16 %v556, %v553
  %v654 = vpack.c.bf16 %v564, %v561
  %v655 = vpack.c.bf16 %v572, %v569
  %v656 = vpack.c.bf16 %v580, %v577
  %v657 = vpack.c.bf16 %v588, %v585
  %v658 = vpack.c.bf16 %v596, %v593
  %v659 = vpack.c.bf16 %v604, %v601
  %v660 = vpack.c.bf16 %v612, %v609
  %v661 = vpack.c.bf16 %v620, %v617
  %v662 = vpack.c.bf16 %v628, %v625
  %v695 = vunpack.c.l.b16 %v631
  %v696 = vunpack.c.h.b16 %v631
  %v697 = vunpack.c.l.b16 %v632
  %v698 = vunpack.c.h.b16 %v632
  %v699 = vunpack.c.l.b16 %v633
  %v700 = vunpack.c.h.b16 %v633
  %v701 = vunpack.c.l.b16 %v634
  %v702 = vunpack.c.h.b16 %v634
  %v703 = vunpack.c.l.b16 %v635
  %v704 = vunpack.c.h.b16 %v635
  %v705 = vunpack.c.l.b16 %v636
  %v706 = vunpack.c.h.b16 %v636
  %v707 = vunpack.c.l.b16 %v637
  %v708 = vunpack.c.h.b16 %v637
  %v709 = vunpack.c.l.b16 %v638
  %v710 = vunpack.c.h.b16 %v638
  %v711 = vunpack.c.l.b16 %v639
  %v712 = vunpack.c.h.b16 %v639
  %v713 = vunpack.c.l.b16 %v640
  %v714 = vunpack.c.h.b16 %v640
  %v715 = vunpack.c.l.b16 %v641
  %v716 = vunpack.c.h.b16 %v641
  %v717 = vunpack.c.l.b16 %v642
  %v718 = vunpack.c.h.b16 %v642
  %v719 = vunpack.c.l.b16 %v643
  %v720 = vunpack.c.h.b16 %v643
  %v721 = vunpack.c.l.b16 %v644
  %v722 = vunpack.c.h.b16 %v644
  %v723 = vunpack.c.l.b16 %v645
  %v724 = vunpack.c.h.b16 %v645
  %v725 = vunpack.c.l.b16 %v646
  %v726 = vunpack.c.h.b16 %v646
  %v727 = vunpack.c.l.b16 %v647
  %v728 = vunpack.c.h.b16 %v647
  %v729 = vunpack.c.l.b16 %v648
  %v730 = vunpack.c.h.b16 %v648
  %v731 = vunpack.c.l.b16 %v649
  %v732 = vunpack.c.h.b16 %v649
  %v733 = vunpack.c.l.b16 %v650
  %v734 = vunpack.c.h.b16 %v650
  %v735 = vunpack.c.l.b16 %v651
  %v736 = vunpack.c.h.b16 %v651
  %v737 = vunpack.c.l.b16 %v652
  %v738 = vunpack.c.h.b16 %v652
  %v739 = vunpack.c.l.b16 %v653
  %v740 = vunpack.c.h.b16 %v653
  %v741 = vunpack.c.l.b16 %v654
  %v742 = vunpack.c.h.b16 %v654
  %v743 = vunpack.c.l.b16 %v655
  %v744 = vunpack.c.h.b16 %v655
  %v745 = vunpack.c.l.b16 %v656
  %v746 = vunpack.c.h.b16 %v656
  %v747 = vunpack.c.l.b16 %v657
  %v748 = vunpack.c.h.b16 %v657
  %v749 = vunpack.c.l.b16 %v658
  %v750 = vunpack.c.h.b16 %v658
  %v751 = vunpack.c.l.b16 %v659
  %v752 = vunpack.c.h.b16 %v659
  %v753 = vunpack.c.l.b16 %v660
  %v754 = vunpack.c.h.b16 %v660
  %v755 = vunpack.c.l.b16 %v661
  %v756 = vunpack.c.h.b16 %v661
  %v757 = vunpack.c.l.b16 %v662
  %v758 = vunpack.c.h.b16 %v662
  %v759 = vpack.c.b16 %v695, %v695
  %v760 = vpack.c.b16 %v696, %v696
  %v761 = vpack.c.b16 %v697, %v697
  %v762 = vpack.c.b16 %v698, %v698
  %v763 = vpack.c.b16 %v699, %v699
  %v764 = vpack.c.b16 %v700, %v700
  %v765 = vpack.c.b16 %v701, %v701
  %v766 = vpack.c.b16 %v702, %v702
  %v767 = vpack.c.b16 %v703, %v703
  %v768 = vpack.c.b16 %v704, %v704
  %v769 = vpack.c.b16 %v705, %v705
  %v770 = vpack.c.b16 %v706, %v706
  %v771 = vpack.c.b16 %v707, %v707
  %v772 = vpack.c.b16 %v708, %v708
  %v773 = vpack.c.b16 %v709, %v709
  %v774 = vpack.c.b16 %v710, %v710
  %v775 = vpack.c.b16 %v711, %v711
  %v776 = vpack.c.b16 %v712, %v712
  %v777 = vpack.c.b16 %v713, %v713
  %v778 = vpack.c.b16 %v714, %v714
  %v779 = vpack.c.b16 %v715, %v715
  %v780 = vpack.c.b16 %v716, %v716
  %v781 = vpack.c.b16 %v717, %v717
  %v782 = vpack.c.b16 %v718, %v718
  %v783 = vpack.c.b16 %v719, %v719
  %v784 = vpack.c.b16 %v720, %v720
  %v785 = vpack.c.b16 %v721, %v721
  %v786 = vpack.c.b16 %v722, %v722
  %v787 = vpack.c.b16 %v723, %v723
  %v788 = vpack.c.b16 %v724, %v724
  %v789 = vpack.c.b16 %v725, %v725
  %v790 = vpack.c.b16 %v726, %v726
  %v791 = vpack.c.b16 %v727, %v727
  %v792 = vpack.c.b16 %v728, %v728
  %v793 = vpack.c.b16 %v729, %v729
  %v794 = vpack.c.b16 %v730, %v730
  %v795 = vpack.c.b16 %v731, %v731
  %v796 = vpack.c.b16 %v732, %v732
  %v797 = vpack.c.b16 %v733, %v733
  %v798 = vpack.c.b16 %v734, %v734
  %v799 = vpack.c.b16 %v735, %v735
  %v800 = vpack.c.b16 %v736, %v736
  %v801 = vpack.c.b16 %v737, %v737
  %v802 = vpack.c.b16 %v738, %v738
  %v803 = vpack.c.b16 %v739, %v739
  %v804 = vpack.c.b16 %v740, %v740
  %v805 = vpack.c.b16 %v741, %v741
  %v806 = vpack.c.b16 %v742, %v742
  %v807 = vpack.c.b16 %v743, %v743
  %v808 = vpack.c.b16 %v744, %v744
  %v809 = vpack.c.b16 %v745, %v745
  %v810 = vpack.c.b16 %v746, %v746
  %v811 = vpack.c.b16 %v747, %v747
  %v812 = vpack.c.b16 %v748, %v748
  %v813 = vpack.c.b16 %v749, %v749
  %v814 = vpack.c.b16 %v750, %v750
  %v815 = vpack.c.b16 %v751, %v751
  %v816 = vpack.c.b16 %v752, %v752
  %v817 = vpack.c.b16 %v753, %v753
  %v818 = vpack.c.b16 %v754, %v754
  %v819 = vpack.c.b16 %v755, %v755
  %v820 = vpack.c.b16 %v756, %v756
  %v821 = vpack.c.b16 %v757, %v757
  %v822 = vpack.c.b16 %v758, %v758
  %887 = vst [vmem:[%s3] sm:$0xf] %v759
  %888 = vst [vmem:[%s3 + $0x4] sm:$0xf] %v760
  %889 = vst [vmem:[%s3 + $0x8] sm:$0xf] %v761
  %890 = vst [vmem:[%s3 + $0xc] sm:$0xf] %v762
  %891 = vst [vmem:[%s3 + $0x10] sm:$0xf] %v763
  %892 = vst [vmem:[%s3 + $0x14] sm:$0xf] %v764
  %893 = vst [vmem:[%s3 + $0x18] sm:$0xf] %v765
  %894 = vst [vmem:[%s3 + $0x1c] sm:$0xf] %v766
  %895 = vst [vmem:[%s3 + $0x20] sm:$0xf] %v767
  %896 = vst [vmem:[%s3 + $0x24] sm:$0xf] %v768
  %897 = vst [vmem:[%s3 + $0x28] sm:$0xf] %v769
  %898 = vst [vmem:[%s3 + $0x2c] sm:$0xf] %v770
  %899 = vst [vmem:[%s3 + $0x30] sm:$0xf] %v771
  %900 = vst [vmem:[%s3 + $0x34] sm:$0xf] %v772
  %901 = vst [vmem:[%s3 + $0x38] sm:$0xf] %v773
  %902 = vst [vmem:[%s3 + $0x3c] sm:$0xf] %v774
  %903 = vst [vmem:[%s3 + $0x40] sm:$0xf] %v775
  %904 = vst [vmem:[%s3 + $0x44] sm:$0xf] %v776
  %905 = vst [vmem:[%s3 + $0x48] sm:$0xf] %v777
  %906 = vst [vmem:[%s3 + $0x4c] sm:$0xf] %v778
  %907 = vst [vmem:[%s3 + $0x50] sm:$0xf] %v779
  %908 = vst [vmem:[%s3 + $0x54] sm:$0xf] %v780
  %909 = vst [vmem:[%s3 + $0x58] sm:$0xf] %v781
  %910 = vst [vmem:[%s3 + $0x5c] sm:$0xf] %v782
  %911 = vst [vmem:[%s3 + $0x60] sm:$0xf] %v783
  %912 = vst [vmem:[%s3 + $0x64] sm:$0xf] %v784
  %913 = vst [vmem:[%s3 + $0x68] sm:$0xf] %v785
  %914 = vst [vmem:[%s3 + $0x6c] sm:$0xf] %v786
  %915 = vst [vmem:[%s3 + $0x70] sm:$0xf] %v787
  %916 = vst [vmem:[%s3 + $0x74] sm:$0xf] %v788
  %917 = vst [vmem:[%s3 + $0x78] sm:$0xf] %v789
  %918 = vst [vmem:[%s3 + $0x7c] sm:$0xf] %v790
  %919 = vst [vmem:[%s3 + $0x80] sm:$0xf] %v791
  %920 = vst [vmem:[%s3 + $0x84] sm:$0xf] %v792
  %921 = vst [vmem:[%s3 + $0x88] sm:$0xf] %v793
  %922 = vst [vmem:[%s3 + $0x8c] sm:$0xf] %v794
  %923 = vst [vmem:[%s3 + $0x90] sm:$0xf] %v795
  %924 = vst [vmem:[%s3 + $0x94] sm:$0xf] %v796
  %925 = vst [vmem:[%s3 + $0x98] sm:$0xf] %v797
  %926 = vst [vmem:[%s3 + $0x9c] sm:$0xf] %v798
  %927 = vst [vmem:[%s3 + $0xa0] sm:$0xf] %v799
  %928 = vst [vmem:[%s3 + $0xa4] sm:$0xf] %v800
  %929 = vst [vmem:[%s3 + $0xa8] sm:$0xf] %v801
  %930 = vst [vmem:[%s3 + $0xac] sm:$0xf] %v802
  %931 = vst [vmem:[%s3 + $0xb0] sm:$0xf] %v803
  %932 = vst [vmem:[%s3 + $0xb4] sm:$0xf] %v804
  %933 = vst [vmem:[%s3 + $0xb8] sm:$0xf] %v805
  %934 = vst [vmem:[%s3 + $0xbc] sm:$0xf] %v806
  %935 = vst [vmem:[%s3 + $0xc0] sm:$0xf] %v807
  %936 = vst [vmem:[%s3 + $0xc4] sm:$0xf] %v808
  %937 = vst [vmem:[%s3 + $0xc8] sm:$0xf] %v809
  %938 = vst [vmem:[%s3 + $0xcc] sm:$0xf] %v810
  %939 = vst [vmem:[%s3 + $0xd0] sm:$0xf] %v811
  %940 = vst [vmem:[%s3 + $0xd4] sm:$0xf] %v812
  %941 = vst [vmem:[%s3 + $0xd8] sm:$0xf] %v813
  %942 = vst [vmem:[%s3 + $0xdc] sm:$0xf] %v814
  %943 = vst [vmem:[%s3 + $0xe0] sm:$0xf] %v815
  %944 = vst [vmem:[%s3 + $0xe4] sm:$0xf] %v816
  %945 = vst [vmem:[%s3 + $0xe8] sm:$0xf] %v817
  %946 = vst [vmem:[%s3 + $0xec] sm:$0xf] %v818
  %947 = vst [vmem:[%s3 + $0xf0] sm:$0xf] %v819
  %948 = vst [vmem:[%s3 + $0xf4] sm:$0xf] %v820
  %949 = vst [vmem:[%s3 + $0xf8] sm:$0xf] %v821
  %950 = vst [vmem:[%s3 + $0xfc] sm:$0xf] %v822
  // Predicated region
  $region14: #{correspondence_net_forward.85} parent=0 // pred_check
    _
  $region15: #{correspondence_net_forward.85} parent=0 // pred_check_branch
    %952 = sbr.rel (0) target = $region17
  $region16: #{correspondence_net_forward.85} parent=0 // pred_region
    _
  $region17: #{correspondence_net_forward.85} parent=0 // pred_fallthru
    _
  // Predicated region
  $region18: #{correspondence_net_forward.85} parent=0 // pred_check
    _
  $region19: #{correspondence_net_forward.85} parent=0 // pred_check_branch
    %954 = sbr.rel (0) target = $region21
  $region20: #{correspondence_net_forward.85} parent=0 // pred_region
    _
  $region21: #{correspondence_net_forward.85} parent=0 // pred_fallthru
    _

// kernel: correspondence_net_forward.88
$region0: #{correspondence_net_forward.88}
  #allocation0 [shape = 'u32[]', space=smem, size = 0x4, offset = 0x4, fixed_abs, tag = 'smem constant byte address 0x4 - core index']
  #allocation1 [shape = 'u32[144,128]{1,0:T(1,128)}', space=vmem, size = 0x12000, scoped, tag = 'internal scratch']
  %s0 = inlined_call_operand.vmem [shape: bf16[2,64,16], index: 0, kind: input, shape index: {}]
  %s1 = inlined_call_operand.vmem [shape: bf16[2,64,16], index: 1, kind: output, shape index: {}]
  %s2 = sld [smem:[#allocation0]]
  $region37: #{correspondence_net_forward.88} parent=0
    _
  %s4 = ssub.s32 1, %s2
  %s5 = scalar_select 0, %s4, %s2
  loop: start=0, step=1, limit=4
  $region2: #{correspondence_net_forward.88} parent=0 // loop_pre_header
    _
  $region3: #{correspondence_net_forward.88} parent=0 // loop_header
    %s7 = sphi 0, %s11
    %p8 = scmp.ge.s32.totalorder %s7, 4
    %s17 = sphi 0, %s19
    %s20 = sphi 0, %s17
    %s21 = sphi 0, %s20
    %s37 = sphi 0, %s21
    %s43 = sphi 0, %s45
    %s46 = sphi 0, %s43
    %s47 = sphi 0, %s46
    %s63 = sphi 0, %s47
  $region4: #{correspondence_net_forward.88} parent=0 // loop_header_branch
    %10 = sbr.rel (%p8) target = $region8
  $region5: #{correspondence_net_forward.88} parent=0 // loop_body
    %s12 = ssub.s32 %s7, 1
    %s13 = ssub.s32 %s7, 2
    %s14 = sadd.s32 %s7, 1
    %s15 = ssub.s32 %s7, %s14
    %p16 = scmp.eq.s32.totalorder %s15, 0
    %s18 = sadd.s32 %s17, 1
    %s19 = scalar_select %p16, %s17, %s18
    %p22 = pneg %p16
    %p23 = scmp.eq.s32.totalorder %s7, 1
    %p24 = por %p22, %p23
    %p25 = scmp.ne.s32.totalorder %s17, %s20
    %p26 = scmp.eq.s32.totalorder %s7, 0
    %p27 = por %p25, %p26
    %p28 = scmp.ne.s32.totalorder %s17, %s20
    %p29 = scmp.eq.s32.totalorder %s12, 1
    %p30 = por %p28, %p29
    %p31 = scmp.ne.s32.totalorder %s20, %s21
    %p32 = scmp.eq.s32.totalorder %s12, 0
    %p33 = por %p31, %p32
    %p34 = scmp.ne.s32.totalorder %s20, %s21
    %p35 = scmp.eq.s32.totalorder %s13, 1
    %p36 = por %p34, %p35
    %p38 = scmp.ne.s32.totalorder %s21, %s37
    %p39 = scmp.eq.s32.totalorder %s13, 0
    %p40 = por %p38, %p39
    %s41 = ssub.s32 %s7, %s14
    %p42 = scmp.eq.s32.totalorder %s41, 0
    %s44 = sadd.s32 %s43, 1
    %s45 = scalar_select %p42, %s43, %s44
    %p48 = pneg %p42
    %p49 = scmp.eq.s32.totalorder %s7, 1
    %p50 = por %p48, %p49
    %p51 = scmp.ne.s32.totalorder %s43, %s46
    %p52 = scmp.eq.s32.totalorder %s7, 0
    %p53 = por %p51, %p52
    %p54 = scmp.ne.s32.totalorder %s43, %s46
    %p55 = scmp.eq.s32.totalorder %s12, 1
    %p56 = por %p54, %p55
    %p57 = scmp.ne.s32.totalorder %s46, %s47
    %p58 = scmp.eq.s32.totalorder %s12, 0
    %p59 = por %p57, %p58
    %p60 = scmp.ne.s32.totalorder %s46, %s47
    %p61 = scmp.eq.s32.totalorder %s13, 1
    %p62 = por %p60, %p61
    %p64 = scmp.ne.s32.totalorder %s47, %s63
    %p65 = scmp.eq.s32.totalorder %s13, 0
    %p66 = por %p64, %p65
    %p67 = scmp.le.s32.totalorder 1, %s7
    %p68 = scmp.lt.s32.totalorder %s7, 3
    %p69 = pnand %p67, %p68
    %p70 = pneg %p69
    // Predicated region
    $region9: #{correspondence_net_forward.88} parent=5 // pred_check
      _
    $region10: #{correspondence_net_forward.88} parent=5 // pred_check_branch
      %72 = sbr.rel (%p69) target = $region12
    $region11: #{correspondence_net_forward.88} parent=5 // pred_region
      %s73 = ssub.s32 %s7, 1
    $region12: #{correspondence_net_forward.88} parent=5 // pred_fallthru
      _
    %p74 = scmp.lt.s32.totalorder %s7, 2
    // Predicated region
    $region13: #{correspondence_net_forward.88} parent=5 // pred_check
      %p75 = pneg %p74
    $region14: #{correspondence_net_forward.88} parent=5 // pred_check_branch
      %77 = sbr.rel (%p75) target = $region16
    $region15: #{correspondence_net_forward.88} parent=5 // pred_region
      // Predicated region
      $region17: #{correspondence_net_forward.88} parent=15 // pred_check
        %p78 = pneg %p27
      $region18: #{correspondence_net_forward.88} parent=15 // pred_check_branch
        %80 = sbr.rel (%p78) target = $region20
      $region19: #{correspondence_net_forward.88} parent=15 // pred_region
        %p81 = scmp.lt.s32.totalorder %s7, 1
        %s82 = scalar_select %p81, %s7, 1
        %s83 = smul.addr %s82, 8
        %s84 = smul.addr %s83, 4
        %s85 = scalar_lea.vmem %s0, %s84
      $region20: #{correspondence_net_forward.88} parent=15 // pred_fallthru
        _
    $region16: #{correspondence_net_forward.88} parent=5 // pred_fallthru
      _
    %p86 = scmp.le.s32.totalorder 1, %s7
    %p87 = scmp.lt.s32.totalorder %s7, 3
    %p88 = pnand %p86, %p87
    %p89 = pneg %p88
    // Predicated region
    $region21: #{correspondence_net_forward.88} parent=5 // pred_check
      _
    $region22: #{correspondence_net_forward.88} parent=5 // pred_check_branch
      %91 = sbr.rel (%p88) target = $region24
    $region23: #{correspondence_net_forward.88} parent=5 // pred_region
      %s92 = ssub.s32 %s7, 1
      %p93 = scmp.lt.s32.totalorder %s12, 1
      %s94 = scalar_select %p93, %s12, 1
      %s95 = smul.addr %s94, 8
      %s96 = smul.addr %s95, 4
      %s97 = scalar_lea.vmem %s0, %s96
      %p98 = pneg %p33
      %p99 = pneg %p30
      %p100 = pneg %p59
      %p101 = pneg %p56
      %p102 = scmp.lt.s32.totalorder %s12, 1
      %s103 = scalar_select %p102, %s12, 1
      %s104 = smul.addr %s103, 8
      %s105 = smul.addr %s104, 4
      %s106 = scalar_lea.vmem %s1, %s105
      %p107 = scmp.lt.s32.totalorder %s12, 1
      %s108 = scalar_select %p107, %s12, 1
      %s109 = smul.addr %s108, 8
      %s110 = smul.addr %s109, 4
      %s111 = scalar_lea.vmem %s0, %s110
      %p112 = scmp.lt.s32.totalorder %s12, 1
      %s113 = scalar_select %p112, %s12, 1
      %s114 = smul.addr %s113, 8
      %s115 = smul.addr %s114, 4
      %s116 = scalar_lea.vmem %s1, %s115
      %v117 = vld [vmem:[%s111] sm:$0xf]
      %v118 = vld [vmem:[%s111 + $0x4] sm:$0xf]
      %v119 = vld [vmem:[%s111 + $0x8] sm:$0xf]
      %v120 = vld [vmem:[%s111 + $0xc] sm:$0xf]
      %v121 = vld [vmem:[%s111 + $0x10] sm:$0xf]
      %v122 = vld [vmem:[%s111 + $0x14] sm:$0xf]
      %v123 = vld [vmem:[%s111 + $0x18] sm:$0xf]
      %v124 = vld [vmem:[%s111 + $0x1c] sm:$0xf]
      %v125 = vunpack.c.l.bf16 %v117
      %v126 = vunpack.c.l.bf16 %v118
      %v127 = vunpack.c.l.bf16 %v119
      %v128 = vunpack.c.l.bf16 %v120
      %v129 = vunpack.c.l.bf16 %v121
      %v130 = vunpack.c.l.bf16 %v122
      %v131 = vunpack.c.l.bf16 %v123
      %v132 = vunpack.c.l.bf16 %v124
      %vm133 = vcmask 130048
      %v134 = vsel %vm133, %v125, 0.0
      %v135 = vsel %vm133, %v126, 0.0
      %v136 = vadd.f32 %v134, %v135
      %v137 = vsel %vm133, %v127, 0.0
      %v138 = vadd.f32 %v136, %v137
      %v139 = vsel %vm133, %v128, 0.0
      %v140 = vadd.f32 %v138, %v139
      %v141 = vsel %vm133, %v129, 0.0
      %v142 = vadd.f32 %v140, %v141
      %v143 = vsel %vm133, %v130, 0.0
      %v144 = vadd.f32 %v142, %v143
      %v145 = vsel %vm133, %v131, 0.0
      %v146 = vadd.f32 %v144, %v145
      %v147 = vsel %vm133, %v132, 0.0
      %v148 = vadd.f32 %v146, %v147
      %v149 = vrot.slane %v148, 4
      %v150 = vadd.f32 %v148, %v149
      %v151 = vrot.slane %v150, 2
      %v152 = vadd.f32 %v150, %v151
      %v153 = vrot.slane %v152, 1
      %v154 = vadd.f32 %v152, %v153
      %v155 = vrcp.pop 64.0
      %v156 = vmul.f32 %v154, %v155
      %v157 = vsub.f32 %v125, %v156
      %v158 = vsub.f32 %v126, %v156
      %v159 = vsub.f32 %v127, %v156
      %v160 = vsub.f32 %v128, %v156
      %v161 = vsub.f32 %v129, %v156
      %v162 = vsub.f32 %v130, %v156
      %v163 = vsub.f32 %v131, %v156
      %v164 = vsub.f32 %v132, %v156
      %v165 = vmul.f32 %v157, %v157
      %v166 = vmul.f32 %v158, %v158
      %v167 = vmul.f32 %v159, %v159
      %v168 = vmul.f32 %v160, %v160
      %v169 = vmul.f32 %v161, %v161
      %v170 = vmul.f32 %v162, %v162
      %v171 = vmul.f32 %v163, %v163
      %v172 = vmul.f32 %v164, %v164
      %v173 = vsel %vm133, %v165, 0.0
      %v174 = vsel %vm133, %v166, 0.0
      %v175 = vadd.f32 %v173, %v174
      %v176 = vsel %vm133, %v167, 0.0
      %v177 = vadd.f32 %v175, %v176
      %v178 = vsel %vm133, %v168, 0.0
      %v179 = vadd.f32 %v177, %v178
      %v180 = vsel %vm133, %v169, 0.0
      %v181 = vadd.f32 %v179, %v180
      %v182 = vsel %vm133, %v170, 0.0
      %v183 = vadd.f32 %v181, %v182
      %v184 = vsel %vm133, %v171, 0.0
      %v185 = vadd.f32 %v183, %v184
      %v186 = vsel %vm133, %v172, 0.0
      %v187 = vadd.f32 %v185, %v186
      %v188 = vrot.slane %v187, 4
      %v189 = vadd.f32 %v187, %v188
      %v190 = vrot.slane %v189, 2
      %v191 = vadd.f32 %v189, %v190
      %v192 = vrot.slane %v191, 1
      %v193 = vadd.f32 %v191, %v192
      %v194 = vmul.f32 %v193, %v155
      %v195 = vadd.f32 %v194, 1e-05
      %v196 = vrsqrt.pop %v195
      %v197 = vmul.f32 %v157, %v196
      %v198 = vmul.f32 %v158, %v196
      %v199 = vmul.f32 %v159, %v196
      %v200 = vmul.f32 %v160, %v196
      %v201 = vmul.f32 %v161, %v196
      %v202 = vmul.f32 %v162, %v196
      %v203 = vmul.f32 %v163, %v196
      %v204 = vmul.f32 %v164, %v196
      %vm205 = vcmp.ge.f32.partialorder %v197, 0.0
      %vm206 = vcmp.ge.f32.partialorder %v198, 0.0
      %vm207 = vcmp.ge.f32.partialorder %v199, 0.0
      %vm208 = vcmp.ge.f32.partialorder %v200, 0.0
      %vm209 = vcmp.ge.f32.partialorder %v201, 0.0
      %vm210 = vcmp.ge.f32.partialorder %v202, 0.0
      %vm211 = vcmp.ge.f32.partialorder %v203, 0.0
      %vm212 = vcmp.ge.f32.partialorder %v204, 0.0
      %v213 = vmul.f32 %v197, 0.2
      %v214 = vmul.f32 %v198, 0.2
      %v215 = vmul.f32 %v199, 0.2
      %v216 = vmul.f32 %v200, 0.2
      %v217 = vmul.f32 %v201, 0.2
      %v218 = vmul.f32 %v202, 0.2
      %v219 = vmul.f32 %v203, 0.2
      %v220 = vmul.f32 %v204, 0.2
      %v221 = vsel %vm205, %v197, %v213
      %v222 = vsel %vm206, %v198, %v214
      %v223 = vsel %vm207, %v199, %v215
      %v224 = vsel %vm208, %v200, %v216
      %v225 = vsel %vm209, %v201, %v217
      %v226 = vsel %vm210, %v202, %v218
      %v227 = vsel %vm211, %v203, %v219
      %v228 = vsel %vm212, %v204, %v220
      %v229 = vpack.c.bf16 %v222, %v221
      %v230 = vpack.c.bf16 %v224, %v223
      %v231 = vpack.c.bf16 %v226, %v225
      %v232 = vpack.c.bf16 %v228, %v227
      %v237 = vunpack.c.l.b16 %v229
      %v238 = vunpack.c.h.b16 %v229
      %v239 = vunpack.c.l.b16 %v230
      %v240 = vunpack.c.h.b16 %v230
      %v241 = vunpack.c.l.b16 %v231
      %v242 = vunpack.c.h.b16 %v231
      %v243 = vunpack.c.l.b16 %v232
      %v244 = vunpack.c.h.b16 %v232
      %v245 = vpack.c.b16 %v237, %v237
      %v246 = vpack.c.b16 %v238, %v238
      %v247 = vpack.c.b16 %v239, %v239
      %v248 = vpack.c.b16 %v240, %v240
      %v249 = vpack.c.b16 %v241, %v241
      %v250 = vpack.c.b16 %v242, %v242
      %v251 = vpack.c.b16 %v243, %v243
      %v252 = vpack.c.b16 %v244, %v244
      %vm261 = vcmask 125952
      %262 = vst.msk [vmem:[%s116] sm:$0xf] %vm261, %v245
      %263 = vst.msk [vmem:[%s116 + $0x4] sm:$0xf] %vm261, %v246
      %264 = vst.msk [vmem:[%s116 + $0x8] sm:$0xf] %vm261, %v247
      %265 = vst.msk [vmem:[%s116 + $0xc] sm:$0xf] %vm261, %v248
      %266 = vst.msk [vmem:[%s116 + $0x10] sm:$0xf] %vm261, %v249
      %267 = vst.msk [vmem:[%s116 + $0x14] sm:$0xf] %vm261, %v250
      %268 = vst.msk [vmem:[%s116 + $0x18] sm:$0xf] %vm261, %v251
      %269 = vst.msk [vmem:[%s116 + $0x1c] sm:$0xf] %vm261, %v252
      %p270 = scmp.lt.s32.totalorder %s12, 1
      %s271 = scalar_select %p270, %s12, 1
      %s272 = smul.addr %s271, 8
      %s273 = smul.addr %s272, 4
      %s274 = scalar_lea.vmem %s1, %s273
      // Predicated region
      $region25: #{correspondence_net_forward.88} parent=23 // pred_check
        %p275 = pneg %p56
      $region26: #{correspondence_net_forward.88} parent=23 // pred_check_branch
        %277 = sbr.rel (%p275) target = $region28
      $region27: #{correspondence_net_forward.88} parent=23 // pred_region
        _
      $region28: #{correspondence_net_forward.88} parent=23 // pred_fallthru
        _
    $region24: #{correspondence_net_forward.88} parent=5 // pred_fallthru
      _
    %p278 = scmp.le.s32.totalorder 2, %s7
    // Predicated region
    $region29: #{correspondence_net_forward.88} parent=5 // pred_check
      %p279 = pneg %p278
    $region30: #{correspondence_net_forward.88} parent=5 // pred_check_branch
      %281 = sbr.rel (%p279) target = $region32
    $region31: #{correspondence_net_forward.88} parent=5 // pred_region
      %s282 = ssub.s32 %s7, 2
      // Predicated region
      $region33: #{correspondence_net_forward.88} parent=31 // pred_check
        %p283 = pneg %p62
      $region34: #{correspondence_net_forward.88} parent=31 // pred_check_branch
        %285 = sbr.rel (%p283) target = $region36
      $region35: #{correspondence_net_forward.88} parent=31 // pred_region
        %p286 = scmp.lt.s32.totalorder %s13, 1
        %s287 = scalar_select %p286, %s13, 1
        %s288 = smul.addr %s287, 8
        %s289 = smul.addr %s288, 4
        %s290 = scalar_lea.vmem %s1, %s289
      $region36: #{correspondence_net_forward.88} parent=31 // pred_fallthru
        _
    $region32: #{correspondence_net_forward.88} parent=5 // pred_fallthru
      _
  $region6: #{correspondence_net_forward.88} parent=0 // loop_footer
    %s11 = sadd.s32 1, %s7
  $region7: #{correspondence_net_forward.88} parent=0 // loop_footer_branch
    %6 = sbr.rel target = $region3
  $region8: #{correspondence_net_forward.88} parent=0 // loop_exit
    _

// kernel: correspondence_net_forward.87
$region0: #{correspondence_net_forward.87}
  #allocation0 [shape = 'u32[]', space=smem, size = 0x4, offset = 0x4, fixed_abs, tag = 'smem constant byte address 0x4 - core index']
  #allocation1 [shape = 'u32[144,128]{1,0:T(1,128)}', space=vmem, size = 0x12000, scoped, tag = 'internal scratch']
  %s0 = inlined_call_operand.vmem [shape: bf16[128,128], index: 0, kind: input, shape index: {}]
  %s1 = inlined_call_operand.vmem [shape: bf16[128,128], index: 1, kind: input, shape index: {}]
  %s2 = inlined_call_operand.vmem [shape: f32[1,128], index: 2, kind: input, shape index: {}]
  %s3 = inlined_call_operand.vmem [shape: bf16[128,128], index: 3, kind: output, shape index: {}]
  %s4 = sld [smem:[#allocation0]]
  $region22: #{correspondence_net_forward.87} parent=0
    _
  %s6 = ssub.s32 1, %s4
  %s7 = scalar_select 0, %s6, %s4
  // Predicated region
  $region2: #{correspondence_net_forward.87} parent=0 // pred_check
    _
  $region3: #{correspondence_net_forward.87} parent=0 // pred_check_branch
    %9 = sbr.rel (0) target = $region5
  $region4: #{correspondence_net_forward.87} parent=0 // pred_region
    _
  $region5: #{correspondence_net_forward.87} parent=0 // pred_fallthru
    _
  // Predicated region
  $region6: #{correspondence_net_forward.87} parent=0 // pred_check
    _
  $region7: #{correspondence_net_forward.87} parent=0 // pred_check_branch
    %11 = sbr.rel (0) target = $region9
  $region8: #{correspondence_net_forward.87} parent=0 // pred_region
    _
  $region9: #{correspondence_net_forward.87} parent=0 // pred_fallthru
    _
  // Predicated region
  $region10: #{correspondence_net_forward.87} parent=0 // pred_check
    _
  $region11: #{correspondence_net_forward.87} parent=0 // pred_check_branch
    %13 = sbr.rel (0) target = $region13
  $region12: #{correspondence_net_forward.87} parent=0 // pred_region
    _
  $region13: #{correspondence_net_forward.87} parent=0 // pred_fallthru
    _
  %v15 = vld [vmem:[%s0] sm:$0xf]
  %v16 = vld [vmem:[%s0 + $0x4] sm:$0xf]
  %v17 = vld [vmem:[%s0 + $0x8] sm:$0xf]
  %v18 = vld [vmem:[%s0 + $0xc] sm:$0xf]
  %v19 = vld [vmem:[%s0 + $0x10] sm:$0xf]
  %v20 = vld [vmem:[%s0 + $0x14] sm:$0xf]
  %v21 = vld [vmem:[%s0 + $0x18] sm:$0xf]
  %v22 = vld [vmem:[%s0 + $0x1c] sm:$0xf]
  %v23 = vld [vmem:[%s0 + $0x20] sm:$0xf]
  %v24 = vld [vmem:[%s0 + $0x24] sm:$0xf]
  %v25 = vld [vmem:[%s0 + $0x28] sm:$0xf]
  %v26 = vld [vmem:[%s0 + $0x2c] sm:$0xf]
  %v27 = vld [vmem:[%s0 + $0x30] sm:$0xf]
  %v28 = vld [vmem:[%s0 + $0x34] sm:$0xf]
  %v29 = vld [vmem:[%s0 + $0x38] sm:$0xf]
  %v30 = vld [vmem:[%s0 + $0x3c] sm:$0xf]
  %v31 = vld [vmem:[%s1] sm:$0xf]
  %v32 = vld [vmem:[%s1 + $0x4] sm:$0xf]
  %v33 = vld [vmem:[%s1 + $0x8] sm:$0xf]
  %v34 = vld [vmem:[%s1 + $0xc] sm:$0xf]
  %v35 = vld [vmem:[%s1 + $0x10] sm:$0xf]
  %v36 = vld [vmem:[%s1 + $0x14] sm:$0xf]
  %v37 = vld [vmem:[%s1 + $0x18] sm:$0xf]
  %v38 = vld [vmem:[%s1 + $0x1c] sm:$0xf]
  %v39 = vld [vmem:[%s1 + $0x20] sm:$0xf]
  %v40 = vld [vmem:[%s1 + $0x24] sm:$0xf]
  %v41 = vld [vmem:[%s1 + $0x28] sm:$0xf]
  %v42 = vld [vmem:[%s1 + $0x2c] sm:$0xf]
  %v43 = vld [vmem:[%s1 + $0x30] sm:$0xf]
  %v44 = vld [vmem:[%s1 + $0x34] sm:$0xf]
  %v45 = vld [vmem:[%s1 + $0x38] sm:$0xf]
  %v46 = vld [vmem:[%s1 + $0x3c] sm:$0xf]
  %v47 = vld [vmem:[%s2] sm:$0x1]
  %v49 = vlaneseq
  %v50 = vshrl.u32 %v49, 7
  %v51 = vsub.s32 0, %v50
  %v52 = vrot.slane %v47, %v51
  %v70 = vunpack.c.l.b16 %v15
  %v71 = vunpack.c.l.b16 %v16
  %v72 = vunpack.c.l.b16 %v17
  %v73 = vunpack.c.l.b16 %v18
  %v74 = vunpack.c.l.b16 %v19
  %v75 = vunpack.c.l.b16 %v20
  %v76 = vunpack.c.l.b16 %v21
  %v77 = vunpack.c.l.b16 %v22
  %v78 = vunpack.c.l.b16 %v23
  %v79 = vunpack.c.l.b16 %v24
  %v80 = vunpack.c.l.b16 %v25
  %v81 = vunpack.c.l.b16 %v26
  %v82 = vunpack.c.l.b16 %v27
  %v83 = vunpack.c.l.b16 %v28
  %v84 = vunpack.c.l.b16 %v29
  %v85 = vunpack.c.l.b16 %v30
  %v86 = vpack.c.b16 %v71, %v70
  %v87 = vpack.c.b16 %v73, %v72
  %v88 = vpack.c.b16 %v75, %v74
  %v89 = vpack.c.b16 %v77, %v76
  %v90 = vpack.c.b16 %v79, %v78
  %v91 = vpack.c.b16 %v81, %v80
  %v92 = vpack.c.b16 %v83, %v82
  %v93 = vpack.c.b16 %v85, %v84
  %v118 = vunpack.c.l.b16 %v31
  %v119 = vunpack.c.l.b16 %v32
  %v120 = vunpack.c.l.b16 %v33
  %v121 = vunpack.c.l.b16 %v34
  %v122 = vunpack.c.l.b16 %v35
  %v123 = vunpack.c.l.b16 %v36
  %v124 = vunpack.c.l.b16 %v37
  %v125 = vunpack.c.l.b16 %v38
  %v126 = vunpack.c.l.b16 %v39
  %v127 = vunpack.c.l.b16 %v40
  %v128 = vunpack.c.l.b16 %v41
  %v129 = vunpack.c.l.b16 %v42
  %v130 = vunpack.c.l.b16 %v43
  %v131 = vunpack.c.l.b16 %v44
  %v132 = vunpack.c.l.b16 %v45
  %v133 = vunpack.c.l.b16 %v46
  %v134 = vpack.c.b16 %v119, %v118
  %v135 = vpack.c.b16 %v121, %v120
  %v136 = vpack.c.b16 %v123, %v122
  %v137 = vpack.c.b16 %v125, %v124
  %v138 = vpack.c.b16 %v127, %v126
  %v139 = vpack.c.b16 %v129, %v128
  %v140 = vpack.c.b16 %v131, %v130
  %v141 = vpack.c.b16 %v133, %v132
  %150 = vmatprep.subr.bf16.mxu0 0
  %151 = vmatpush1.bf16.msra.mxu0 %v134
  %152 = vmatprep.subr.bf16.mxu0 0
  %153 = vmatpush1.bf16.msra.mxu0 %v135
  %154 = vmatprep.subr.bf16.mxu0 0
  %155 = vmatpush1.bf16.msra.mxu0 %v136
  %156 = vmatprep.subr.bf16.mxu0 0
  %157 = vmatpush1.bf16.msra.mxu0 %v137
  %158 = vmatprep.subr.bf16.mxu0 0
  %159 = vmatpush1.bf16.msra.mxu0 %v138
  %160 = vmatprep.subr.bf16.mxu0 0
  %161 = vmatpush1.bf16.msra.mxu0 %v139
  %162 = vmatprep.subr.bf16.mxu0 0
  %163 = vmatpush1.bf16.msra.mxu0 %v140
  %164 = vmatprep.subr.bf16.mxu0 0
  %165 = vmatpush1.bf16.msra.mxu0 %v141
  %166 = vmatprep.subr.bf16.mxu0 0
  %167 = vmatpush1.bf16.msra.mxu0 0
  %168 = vmatprep.subr.bf16.mxu0 0
  %169 = vmatpush1.bf16.msra.mxu0 0
  %170 = vmatprep.subr.bf16.mxu0 0
  %171 = vmatpush1.bf16.msra.mxu0 0
  %172 = vmatprep.subr.bf16.mxu0 0
  %173 = vmatpush1.bf16.msra.mxu0 0
  %174 = vmatprep.subr.bf16.mxu0 0
  %175 = vmatpush1.bf16.msra.mxu0 0
  %176 = vmatprep.subr.bf16.mxu0 0
  %177 = vmatpush1.bf16.msra.mxu0 0
  %178 = vmatprep.subr.bf16.mxu0 0
  %179 = vmatpush1.bf16.msra.mxu0 0
  %180 = vmatprep.subr.bf16.mxu0 0
  %181 = vmatpush1.bf16.msra.mxu0 0
  %182 = vmatprep.mubr.bf16.mxu0 0
  %183 = vmatmul.mubr.bf16.gmra.mrb[0].mxu0 %v86
  %v184 = vpop.f32.mrb[0].mxu0
  %v185 = vadd.f32 %v52, %v184
  %v186 = vpop.f32.mrb[0].mxu0
  %v187 = vpop.f32.mrb[0].mxu0
  %v188 = vadd.f32 %v52, %v187
  %v189 = vpop.f32.mrb[0].mxu0
  %190 = vmatprep.mubr.bf16.mxu0 0
  %191 = vmatmul.mubr.bf16.gmra.mrb[0].mxu0 %v87
  %v192 = vpop.f32.mrb[0].mxu0
  %v193 = vadd.f32 %v52, %v192
  %v194 = vpop.f32.mrb[0].mxu0
  %v195 = vpop.f32.mrb[0].mxu0
  %v196 = vadd.f32 %v52, %v195
  %v197 = vpop.f32.mrb[0].mxu0
  %198 = vmatprep.mubr.bf16.mxu0 0
  %199 = vmatmul.mubr.bf16.gmra.mrb[0].mxu0 %v88
  %v200 = vpop.f32.mrb[0].mxu0
  %v201 = vadd.f32 %v52, %v200
  %v202 = vpop.f32.mrb[0].mxu0
  %v203 = vpop.f32.mrb[0].mxu0
  %v204 = vadd.f32 %v52, %v203
  %v205 = vpop.f32.mrb[0].mxu0
  %206 = vmatprep.mubr.bf16.mxu0 0
  %207 = vmatmul.mubr.bf16.gmra.mrb[0].mxu0 %v89
  %v208 = vpop.f32.mrb[0].mxu0
  %v209 = vadd.f32 %v52, %v208
  %v210 = vpop.f32.mrb[0].mxu0
  %v211 = vpop.f32.mrb[0].mxu0
  %v212 = vadd.f32 %v52, %v211
  %v213 = vpop.f32.mrb[0].mxu0
  %214 = vmatprep.mubr.bf16.mxu0 0
  %215 = vmatmul.mubr.bf16.gmra.mrb[0].mxu0 %v90
  %v216 = vpop.f32.mrb[0].mxu0
  %v217 = vadd.f32 %v52, %v216
  %v218 = vpop.f32.mrb[0].mxu0
  %v219 = vpop.f32.mrb[0].mxu0
  %v220 = vadd.f32 %v52, %v219
  %v221 = vpop.f32.mrb[0].mxu0
  %222 = vmatprep.mubr.bf16.mxu0 0
  %223 = vmatmul.mubr.bf16.gmra.mrb[0].mxu0 %v91
  %v224 = vpop.f32.mrb[0].mxu0
  %v225 = vadd.f32 %v52, %v224
  %v226 = vpop.f32.mrb[0].mxu0
  %v227 = vpop.f32.mrb[0].mxu0
  %v228 = vadd.f32 %v52, %v227
  %v229 = vpop.f32.mrb[0].mxu0
  %230 = vmatprep.mubr.bf16.mxu0 0
  %231 = vmatmul.mubr.bf16.gmra.mrb[0].mxu0 %v92
  %v232 = vpop.f32.mrb[0].mxu0
  %v233 = vadd.f32 %v52, %v232
  %v234 = vpop.f32.mrb[0].mxu0
  %v235 = vpop.f32.mrb[0].mxu0
  %v236 = vadd.f32 %v52, %v235
  %v237 = vpop.f32.mrb[0].mxu0
  %238 = vmatprep.mubr.bf16.mxu0 0
  %239 = vmatmul.mubr.bf16.gmra.mrb[0].mxu0 %v93
  %v240 = vpop.f32.mrb[0].mxu0
  %v241 = vadd.f32 %v52, %v240
  %v242 = vpop.f32.mrb[0].mxu0
  %v243 = vpop.f32.mrb[0].mxu0
  %v244 = vadd.f32 %v52, %v243
  %v245 = vpop.f32.mrb[0].mxu0
  %246 = vdwg.mxu0
  %v247 = vpack.c.bf16 %v188, %v185
  %v248 = vpack.c.bf16 %v196, %v193
  %v249 = vpack.c.bf16 %v204, %v201
  %v250 = vpack.c.bf16 %v212, %v209
  %v251 = vpack.c.bf16 %v220, %v217
  %v252 = vpack.c.bf16 %v228, %v225
  %v253 = vpack.c.bf16 %v236, %v233
  %v254 = vpack.c.bf16 %v244, %v241
  %v263 = vunpack.c.l.b16 %v247
  %v264 = vunpack.c.h.b16 %v247
  %v265 = vunpack.c.l.b16 %v248
  %v266 = vunpack.c.h.b16 %v248
  %v267 = vunpack.c.l.b16 %v249
  %v268 = vunpack.c.h.b16 %v249
  %v269 = vunpack.c.l.b16 %v250
  %v270 = vunpack.c.h.b16 %v250
  %v271 = vunpack.c.l.b16 %v251
  %v272 = vunpack.c.h.b16 %v251
  %v273 = vunpack.c.l.b16 %v252
  %v274 = vunpack.c.h.b16 %v252
  %v275 = vunpack.c.l.b16 %v253
  %v276 = vunpack.c.h.b16 %v253
  %v277 = vunpack.c.l.b16 %v254
  %v278 = vunpack.c.h.b16 %v254
  %v279 = vpack.c.b16 %v263, %v263
  %v280 = vpack.c.b16 %v264, %v264
  %v281 = vpack.c.b16 %v265, %v265
  %v282 = vpack.c.b16 %v266, %v266
  %v283 = vpack.c.b16 %v267, %v267
  %v284 = vpack.c.b16 %v268, %v268
  %v285 = vpack.c.b16 %v269, %v269
  %v286 = vpack.c.b16 %v270, %v270
  %v287 = vpack.c.b16 %v271, %v271
  %v288 = vpack.c.b16 %v272, %v272
  %v289 = vpack.c.b16 %v273, %v273
  %v290 = vpack.c.b16 %v274, %v274
  %v291 = vpack.c.b16 %v275, %v275
  %v292 = vpack.c.b16 %v276, %v276
  %v293 = vpack.c.b16 %v277, %v277
  %v294 = vpack.c.b16 %v278, %v278
  %311 = vst [vmem:[%s3] sm:$0xf] %v279
  %312 = vst [vmem:[%s3 + $0x4] sm:$0xf] %v280
  %313 = vst [vmem:[%s3 + $0x8] sm:$0xf] %v281
  %314 = vst [vmem:[%s3 + $0xc] sm:$0xf] %v282
  %315 = vst [vmem:[%s3 + $0x10] sm:$0xf] %v283
  %316 = vst [vmem:[%s3 + $0x14] sm:$0xf] %v284
  %317 = vst [vmem:[%s3 + $0x18] sm:$0xf] %v285
  %318 = vst [vmem:[%s3 + $0x1c] sm:$0xf] %v286
  %319 = vst [vmem:[%s3 + $0x20] sm:$0xf] %v287
  %320 = vst [vmem:[%s3 + $0x24] sm:$0xf] %v288
  %321 = vst [vmem:[%s3 + $0x28] sm:$0xf] %v289
  %322 = vst [vmem:[%s3 + $0x2c] sm:$0xf] %v290
  %323 = vst [vmem:[%s3 + $0x30] sm:$0xf] %v291
  %324 = vst [vmem:[%s3 + $0x34] sm:$0xf] %v292
  %325 = vst [vmem:[%s3 + $0x38] sm:$0xf] %v293
  %326 = vst [vmem:[%s3 + $0x3c] sm:$0xf] %v294
  // Predicated region
  $region14: #{correspondence_net_forward.87} parent=0 // pred_check
    _
  $region15: #{correspondence_net_forward.87} parent=0 // pred_check_branch
    %328 = sbr.rel (0) target = $region17
  $region16: #{correspondence_net_forward.87} parent=0 // pred_region
    _
  $region17: #{correspondence_net_forward.87} parent=0 // pred_fallthru
    _
  // Predicated region
  $region18: #{correspondence_net_forward.87} parent=0 // pred_check
    _
  $region19: #{correspondence_net_forward.87} parent=0 // pred_check_branch
    %330 = sbr.rel (0) target = $region21
  $region20: #{correspondence_net_forward.87} parent=0 // pred_region
    _
  $region21: #{correspondence_net_forward.87} parent=0 // pred_fallthru
    _

// kernel: correspondence_net_forward.90
$region0: #{correspondence_net_forward.90}
  #allocation0 [shape = 'u32[]', space=smem, size = 0x4, offset = 0x4, fixed_abs, tag = 'smem constant byte address 0x4 - core index']
  #allocation1 [shape = 'u32[144,128]{1,0:T(1,128)}', space=vmem, size = 0x12000, scoped, tag = 'internal scratch']
  %s0 = inlined_call_operand.vmem [shape: bf16[2,64,32], index: 0, kind: input, shape index: {}]
  %s1 = inlined_call_operand.vmem [shape: bf16[2,64,32], index: 1, kind: output, shape index: {}]
  %s2 = sld [smem:[#allocation0]]
  $region37: #{correspondence_net_forward.90} parent=0
    _
  %s4 = ssub.s32 1, %s2
  %s5 = scalar_select 0, %s4, %s2
  loop: start=0, step=1, limit=4
  $region2: #{correspondence_net_forward.90} parent=0 // loop_pre_header
    _
  $region3: #{correspondence_net_forward.90} parent=0 // loop_header
    %s7 = sphi 0, %s11
    %p8 = scmp.ge.s32.totalorder %s7, 4
    %s17 = sphi 0, %s19
    %s20 = sphi 0, %s17
    %s21 = sphi 0, %s20
    %s37 = sphi 0, %s21
    %s43 = sphi 0, %s45
    %s46 = sphi 0, %s43
    %s47 = sphi 0, %s46
    %s63 = sphi 0, %s47
  $region4: #{correspondence_net_forward.90} parent=0 // loop_header_branch
    %10 = sbr.rel (%p8) target = $region8
  $region5: #{correspondence_net_forward.90} parent=0 // loop_body
    %s12 = ssub.s32 %s7, 1
    %s13 = ssub.s32 %s7, 2
    %s14 = sadd.s32 %s7, 1
    %s15 = ssub.s32 %s7, %s14
    %p16 = scmp.eq.s32.totalorder %s15, 0
    %s18 = sadd.s32 %s17, 1
    %s19 = scalar_select %p16, %s17, %s18
    %p22 = pneg %p16
    %p23 = scmp.eq.s32.totalorder %s7, 1
    %p24 = por %p22, %p23
    %p25 = scmp.ne.s32.totalorder %s17, %s20
    %p26 = scmp.eq.s32.totalorder %s7, 0
    %p27 = por %p25, %p26
    %p28 = scmp.ne.s32.totalorder %s17, %s20
    %p29 = scmp.eq.s32.totalorder %s12, 1
    %p30 = por %p28, %p29
    %p31 = scmp.ne.s32.totalorder %s20, %s21
    %p32 = scmp.eq.s32.totalorder %s12, 0
    %p33 = por %p31, %p32
    %p34 = scmp.ne.s32.totalorder %s20, %s21
    %p35 = scmp.eq.s32.totalorder %s13, 1
    %p36 = por %p34, %p35
    %p38 = scmp.ne.s32.totalorder %s21, %s37
    %p39 = scmp.eq.s32.totalorder %s13, 0
    %p40 = por %p38, %p39
    %s41 = ssub.s32 %s7, %s14
    %p42 = scmp.eq.s32.totalorder %s41, 0
    %s44 = sadd.s32 %s43, 1
    %s45 = scalar_select %p42, %s43, %s44
    %p48 = pneg %p42
    %p49 = scmp.eq.s32.totalorder %s7, 1
    %p50 = por %p48, %p49
    %p51 = scmp.ne.s32.totalorder %s43, %s46
    %p52 = scmp.eq.s32.totalorder %s7, 0
    %p53 = por %p51, %p52
    %p54 = scmp.ne.s32.totalorder %s43, %s46
    %p55 = scmp.eq.s32.totalorder %s12, 1
    %p56 = por %p54, %p55
    %p57 = scmp.ne.s32.totalorder %s46, %s47
    %p58 = scmp.eq.s32.totalorder %s12, 0
    %p59 = por %p57, %p58
    %p60 = scmp.ne.s32.totalorder %s46, %s47
    %p61 = scmp.eq.s32.totalorder %s13, 1
    %p62 = por %p60, %p61
    %p64 = scmp.ne.s32.totalorder %s47, %s63
    %p65 = scmp.eq.s32.totalorder %s13, 0
    %p66 = por %p64, %p65
    %p67 = scmp.le.s32.totalorder 1, %s7
    %p68 = scmp.lt.s32.totalorder %s7, 3
    %p69 = pnand %p67, %p68
    %p70 = pneg %p69
    // Predicated region
    $region9: #{correspondence_net_forward.90} parent=5 // pred_check
      _
    $region10: #{correspondence_net_forward.90} parent=5 // pred_check_branch
      %72 = sbr.rel (%p69) target = $region12
    $region11: #{correspondence_net_forward.90} parent=5 // pred_region
      %s73 = ssub.s32 %s7, 1
    $region12: #{correspondence_net_forward.90} parent=5 // pred_fallthru
      _
    %p74 = scmp.lt.s32.totalorder %s7, 2
    // Predicated region
    $region13: #{correspondence_net_forward.90} parent=5 // pred_check
      %p75 = pneg %p74
    $region14: #{correspondence_net_forward.90} parent=5 // pred_check_branch
      %77 = sbr.rel (%p75) target = $region16
    $region15: #{correspondence_net_forward.90} parent=5 // pred_region
      // Predicated region
      $region17: #{correspondence_net_forward.90} parent=15 // pred_check
        %p78 = pneg %p27
      $region18: #{correspondence_net_forward.90} parent=15 // pred_check_branch
        %80 = sbr.rel (%p78) target = $region20
      $region19: #{correspondence_net_forward.90} parent=15 // pred_region
        %p81 = scmp.lt.s32.totalorder %s7, 1
        %s82 = scalar_select %p81, %s7, 1
        %s83 = smul.addr %s82, 8
        %s84 = smul.addr %s83, 4
        %s85 = scalar_lea.vmem %s0, %s84
      $region20: #{correspondence_net_forward.90} parent=15 // pred_fallthru
        _
    $region16: #{correspondence_net_forward.90} parent=5 // pred_fallthru
      _
    %p86 = scmp.le.s32.totalorder 1, %s7
    %p87 = scmp.lt.s32.totalorder %s7, 3
    %p88 = pnand %p86, %p87
    %p89 = pneg %p88
    // Predicated region
    $region21: #{correspondence_net_forward.90} parent=5 // pred_check
      _
    $region22: #{correspondence_net_forward.90} parent=5 // pred_check_branch
      %91 = sbr.rel (%p88) target = $region24
    $region23: #{correspondence_net_forward.90} parent=5 // pred_region
      %s92 = ssub.s32 %s7, 1
      %p93 = scmp.lt.s32.totalorder %s12, 1
      %s94 = scalar_select %p93, %s12, 1
      %s95 = smul.addr %s94, 8
      %s96 = smul.addr %s95, 4
      %s97 = scalar_lea.vmem %s0, %s96
      %p98 = pneg %p33
      %p99 = pneg %p30
      %p100 = pneg %p59
      %p101 = pneg %p56
      %p102 = scmp.lt.s32.totalorder %s12, 1
      %s103 = scalar_select %p102, %s12, 1
      %s104 = smul.addr %s103, 8
      %s105 = smul.addr %s104, 4
      %s106 = scalar_lea.vmem %s1, %s105
      %p107 = scmp.lt.s32.totalorder %s12, 1
      %s108 = scalar_select %p107, %s12, 1
      %s109 = smul.addr %s108, 8
      %s110 = smul.addr %s109, 4
      %s111 = scalar_lea.vmem %s0, %s110
      %p112 = scmp.lt.s32.totalorder %s12, 1
      %s113 = scalar_select %p112, %s12, 1
      %s114 = smul.addr %s113, 8
      %s115 = smul.addr %s114, 4
      %s116 = scalar_lea.vmem %s1, %s115
      %v117 = vld [vmem:[%s111] sm:$0xf]
      %v118 = vld [vmem:[%s111 + $0x4] sm:$0xf]
      %v119 = vld [vmem:[%s111 + $0x8] sm:$0xf]
      %v120 = vld [vmem:[%s111 + $0xc] sm:$0xf]
      %v121 = vld [vmem:[%s111 + $0x10] sm:$0xf]
      %v122 = vld [vmem:[%s111 + $0x14] sm:$0xf]
      %v123 = vld [vmem:[%s111 + $0x18] sm:$0xf]
      %v124 = vld [vmem:[%s111 + $0x1c] sm:$0xf]
      %v125 = vunpack.c.l.bf16 %v117
      %v126 = vunpack.c.l.bf16 %v118
      %v127 = vunpack.c.l.bf16 %v119
      %v128 = vunpack.c.l.bf16 %v120
      %v129 = vunpack.c.l.bf16 %v121
      %v130 = vunpack.c.l.bf16 %v122
      %v131 = vunpack.c.l.bf16 %v123
      %v132 = vunpack.c.l.bf16 %v124
      %vm133 = vcmask 261120
      %v134 = vsel %vm133, %v125, 0.0
      %v135 = vsel %vm133, %v126, 0.0
      %v136 = vadd.f32 %v134, %v135
      %v137 = vsel %vm133, %v127, 0.0
      %v138 = vadd.f32 %v136, %v137
      %v139 = vsel %vm133, %v128, 0.0
      %v140 = vadd.f32 %v138, %v139
      %v141 = vsel %vm133, %v129, 0.0
      %v142 = vadd.f32 %v140, %v141
      %v143 = vsel %vm133, %v130, 0.0
      %v144 = vadd.f32 %v142, %v143
      %v145 = vsel %vm133, %v131, 0.0
      %v146 = vadd.f32 %v144, %v145
      %v147 = vsel %vm133, %v132, 0.0
      %v148 = vadd.f32 %v146, %v147
      %v149 = vrot.slane %v148, 4
      %v150 = vadd.f32 %v148, %v149
      %v151 = vrot.slane %v150, 2
      %v152 = vadd.f32 %v150, %v151
      %v153 = vrot.slane %v152, 1
      %v154 = vadd.f32 %v152, %v153
      %v155 = vrcp.pop 64.0
      %v156 = vmul.f32 %v154, %v155
      %v157 = vsub.f32 %v125, %v156
      %v158 = vsub.f32 %v126, %v156
      %v159 = vsub.f32 %v127, %v156
      %v160 = vsub.f32 %v128, %v156
      %v161 = vsub.f32 %v129, %v156
      %v162 = vsub.f32 %v130, %v156
      %v163 = vsub.f32 %v131, %v156
      %v164 = vsub.f32 %v132, %v156
      %v165 = vmul.f32 %v157, %v157
      %v166 = vmul.f32 %v158, %v158
      %v167 = vmul.f32 %v159, %v159
      %v168 = vmul.f32 %v160, %v160
      %v169 = vmul.f32 %v161, %v161
      %v170 = vmul.f32 %v162, %v162
      %v171 = vmul.f32 %v163, %v163
      %v172 = vmul.f32 %v164, %v164
      %v173 = vsel %vm133, %v165, 0.0
      %v174 = vsel %vm133, %v166, 0.0
      %v175 = vadd.f32 %v173, %v174
      %v176 = vsel %vm133, %v167, 0.0
      %v177 = vadd.f32 %v175, %v176
      %v178 = vsel %vm133, %v168, 0.0
      %v179 = vadd.f32 %v177, %v178
      %v180 = vsel %vm133, %v169, 0.0
      %v181 = vadd.f32 %v179, %v180
      %v182 = vsel %vm133, %v170, 0.0
      %v183 = vadd.f32 %v181, %v182
      %v184 = vsel %vm133, %v171, 0.0
      %v185 = vadd.f32 %v183, %v184
      %v186 = vsel %vm133, %v172, 0.0
      %v187 = vadd.f32 %v185, %v186
      %v188 = vrot.slane %v187, 4
      %v189 = vadd.f32 %v187, %v188
      %v190 = vrot.slane %v189, 2
      %v191 = vadd.f32 %v189, %v190
      %v192 = vrot.slane %v191, 1
      %v193 = vadd.f32 %v191, %v192
      %v194 = vmul.f32 %v193, %v155
      %v195 = vadd.f32 %v194, 1e-05
      %v196 = vrsqrt.pop %v195
      %v197 = vmul.f32 %v157, %v196
      %v198 = vmul.f32 %v158, %v196
      %v199 = vmul.f32 %v159, %v196
      %v200 = vmul.f32 %v160, %v196
      %v201 = vmul.f32 %v161, %v196
      %v202 = vmul.f32 %v162, %v196
      %v203 = vmul.f32 %v163, %v196
      %v204 = vmul.f32 %v164, %v196
      %vm205 = vcmp.ge.f32.partialorder %v197, 0.0
      %vm206 = vcmp.ge.f32.partialorder %v198, 0.0
      %vm207 = vcmp.ge.f32.partialorder %v199, 0.0
      %vm208 = vcmp.ge.f32.partialorder %v200, 0.0
      %vm209 = vcmp.ge.f32.partialorder %v201, 0.0
      %vm210 = vcmp.ge.f32.partialorder %v202, 0.0
      %vm211 = vcmp.ge.f32.partialorder %v203, 0.0
      %vm212 = vcmp.ge.f32.partialorder %v204, 0.0
      %v213 = vmul.f32 %v197, 0.2
      %v214 = vmul.f32 %v198, 0.2
      %v215 = vmul.f32 %v199, 0.2
      %v216 = vmul.f32 %v200, 0.2
      %v217 = vmul.f32 %v201, 0.2
      %v218 = vmul.f32 %v202, 0.2
      %v219 = vmul.f32 %v203, 0.2
      %v220 = vmul.f32 %v204, 0.2
      %v221 = vsel %vm205, %v197, %v213
      %v222 = vsel %vm206, %v198, %v214
      %v223 = vsel %vm207, %v199, %v215
      %v224 = vsel %vm208, %v200, %v216
      %v225 = vsel %vm209, %v201, %v217
      %v226 = vsel %vm210, %v202, %v218
      %v227 = vsel %vm211, %v203, %v219
      %v228 = vsel %vm212, %v204, %v220
      %v229 = vpack.c.bf16 %v222, %v221
      %v230 = vpack.c.bf16 %v224, %v223
      %v231 = vpack.c.bf16 %v226, %v225
      %v232 = vpack.c.bf16 %v228, %v227
      %v237 = vunpack.c.l.b16 %v229
      %v238 = vunpack.c.h.b16 %v229
      %v239 = vunpack.c.l.b16 %v230
      %v240 = vunpack.c.h.b16 %v230
      %v241 = vunpack.c.l.b16 %v231
      %v242 = vunpack.c.h.b16 %v231
      %v243 = vunpack.c.l.b16 %v232
      %v244 = vunpack.c.h.b16 %v232
      %v245 = vpack.c.b16 %v237, %v237
      %v246 = vpack.c.b16 %v238, %v238
      %v247 = vpack.c.b16 %v239, %v239
      %v248 = vpack.c.b16 %v240, %v240
      %v249 = vpack.c.b16 %v241, %v241
      %v250 = vpack.c.b16 %v242, %v242
      %v251 = vpack.c.b16 %v243, %v243
      %v252 = vpack.c.b16 %v244, %v244
      %vm261 = vcmask 257024
      %262 = vst.msk [vmem:[%s116] sm:$0xf] %vm261, %v245
      %263 = vst.msk [vmem:[%s116 + $0x4] sm:$0xf] %vm261, %v246
      %264 = vst.msk [vmem:[%s116 + $0x8] sm:$0xf] %vm261, %v247
      %265 = vst.msk [vmem:[%s116 + $0xc] sm:$0xf] %vm261, %v248
      %266 = vst.msk [vmem:[%s116 + $0x10] sm:$0xf] %vm261, %v249
      %267 = vst.msk [vmem:[%s116 + $0x14] sm:$0xf] %vm261, %v250
      %268 = vst.msk [vmem:[%s116 + $0x18] sm:$0xf] %vm261, %v251
      %269 = vst.msk [vmem:[%s116 + $0x1c] sm:$0xf] %vm261, %v252
      %p270 = scmp.lt.s32.totalorder %s12, 1
      %s271 = scalar_select %p270, %s12, 1
      %s272 = smul.addr %s271, 8
      %s273 = smul.addr %s272, 4
      %s274 = scalar_lea.vmem %s1, %s273
      // Predicated region
      $region25: #{correspondence_net_forward.90} parent=23 // pred_check
        %p275 = pneg %p56
      $region26: #{correspondence_net_forward.90} parent=23 // pred_check_branch
        %277 = sbr.rel (%p275) target = $region28
      $region27: #{correspondence_net_forward.90} parent=23 // pred_region
        _
      $region28: #{correspondence_net_forward.90} parent=23 // pred_fallthru
        _
    $region24: #{correspondence_net_forward.90} parent=5 // pred_fallthru
      _
    %p278 = scmp.le.s32.totalorder 2, %s7
    // Predicated region
    $region29: #{correspondence_net_forward.90} parent=5 // pred_check
      %p279 = pneg %p278
    $region30: #{correspondence_net_forward.90} parent=5 // pred_check_branch
      %281 = sbr.rel (%p279) target = $region32
    $region31: #{correspondence_net_forward.90} parent=5 // pred_region
      %s282 = ssub.s32 %s7, 2
      // Predicated region
      $region33: #{correspondence_net_forward.90} parent=31 // pred_check
        %p283 = pneg %p62
      $region34: #{correspondence_net_forward.90} parent=31 // pred_check_branch
        %285 = sbr.rel (%p283) target = $region36
      $region35: #{correspondence_net_forward.90} parent=31 // pred_region
        %p286 = scmp.lt.s32.totalorder %s13, 1
        %s287 = scalar_select %p286, %s13, 1
        %s288 = smul.addr %s287, 8
        %s289 = smul.addr %s288, 4
        %s290 = scalar_lea.vmem %s1, %s289
      $region36: #{correspondence_net_forward.90} parent=31 // pred_fallthru
        _
    $region32: #{correspondence_net_forward.90} parent=5 // pred_fallthru
      _
  $region6: #{correspondence_net_forward.90} parent=0 // loop_footer
    %s11 = sadd.s32 1, %s7
  $region7: #{correspondence_net_forward.90} parent=0 // loop_footer_branch
    %6 = sbr.rel target = $region3
  $region8: #{correspondence_net_forward.90} parent=0 // loop_exit
    _

// kernel: correspondence_net_forward.89
$region0: #{correspondence_net_forward.89}
  #allocation0 [shape = 'u32[]', space=smem, size = 0x4, offset = 0x4, fixed_abs, tag = 'smem constant byte address 0x4 - core index']
  #allocation1 [shape = 'u32[144,128]{1,0:T(1,128)}', space=vmem, size = 0x12000, scoped, tag = 'internal scratch']
  %s0 = inlined_call_operand.vmem [shape: bf16[128,256], index: 0, kind: input, shape index: {}]
  %s1 = inlined_call_operand.vmem [shape: bf16[256,128], index: 1, kind: input, shape index: {}]
  %s2 = inlined_call_operand.vmem [shape: f32[1,128], index: 2, kind: input, shape index: {}]
  %s3 = inlined_call_operand.vmem [shape: bf16[128,128], index: 3, kind: output, shape index: {}]
  %s4 = sld [smem:[#allocation0]]
  $region22: #{correspondence_net_forward.89} parent=0
    _
  %s6 = ssub.s32 1, %s4
  %s7 = scalar_select 0, %s6, %s4
  // Predicated region
  $region2: #{correspondence_net_forward.89} parent=0 // pred_check
    _
  $region3: #{correspondence_net_forward.89} parent=0 // pred_check_branch
    %9 = sbr.rel (0) target = $region5
  $region4: #{correspondence_net_forward.89} parent=0 // pred_region
    _
  $region5: #{correspondence_net_forward.89} parent=0 // pred_fallthru
    _
  // Predicated region
  $region6: #{correspondence_net_forward.89} parent=0 // pred_check
    _
  $region7: #{correspondence_net_forward.89} parent=0 // pred_check_branch
    %11 = sbr.rel (0) target = $region9
  $region8: #{correspondence_net_forward.89} parent=0 // pred_region
    _
  $region9: #{correspondence_net_forward.89} parent=0 // pred_fallthru
    _
  // Predicated region
  $region10: #{correspondence_net_forward.89} parent=0 // pred_check
    _
  $region11: #{correspondence_net_forward.89} parent=0 // pred_check_branch
    %13 = sbr.rel (0) target = $region13
  $region12: #{correspondence_net_forward.89} parent=0 // pred_region
    _
  $region13: #{correspondence_net_forward.89} parent=0 // pred_fallthru
    _
  %v15 = vld [vmem:[%s0] sm:$0xff]
  %v16 = vld [vmem:[%s0 + $0x8] sm:$0xff]
  %v17 = vld [vmem:[%s0 + $0x10] sm:$0xff]
  %v18 = vld [vmem:[%s0 + $0x18] sm:$0xff]
  %v19 = vld [vmem:[%s0 + $0x20] sm:$0xff]
  %v20 = vld [vmem:[%s0 + $0x28] sm:$0xff]
  %v21 = vld [vmem:[%s0 + $0x30] sm:$0xff]
  %v22 = vld [vmem:[%s0 + $0x38] sm:$0xff]
  %v23 = vld [vmem:[%s0 + $0x40] sm:$0xff]
  %v24 = vld [vmem:[%s0 + $0x48] sm:$0xff]
  %v25 = vld [vmem:[%s0 + $0x50] sm:$0xff]
  %v26 = vld [vmem:[%s0 + $0x58] sm:$0xff]
  %v27 = vld [vmem:[%s0 + $0x60] sm:$0xff]
  %v28 = vld [vmem:[%s0 + $0x68] sm:$0xff]
  %v29 = vld [vmem:[%s0 + $0x70] sm:$0xff]
  %v30 = vld [vmem:[%s0 + $0x78] sm:$0xff]
  %v31 = vld [vmem:[%s1] sm:$0xf]
  %v32 = vld [vmem:[%s1 + $0x4] sm:$0xf]
  %v33 = vld [vmem:[%s1 + $0x8] sm:$0xf]
  %v34 = vld [vmem:[%s1 + $0xc] sm:$0xf]
  %v35 = vld [vmem:[%s1 + $0x10] sm:$0xf]
  %v36 = vld [vmem:[%s1 + $0x14] sm:$0xf]
  %v37 = vld [vmem:[%s1 + $0x18] sm:$0xf]
  %v38 = vld [vmem:[%s1 + $0x1c] sm:$0xf]
  %v39 = vld [vmem:[%s1 + $0x20] sm:$0xf]
  %v40 = vld [vmem:[%s1 + $0x24] sm:$0xf]
  %v41 = vld [vmem:[%s1 + $0x28] sm:$0xf]
  %v42 = vld [vmem:[%s1 + $0x2c] sm:$0xf]
  %v43 = vld [vmem:[%s1 + $0x30] sm:$0xf]
  %v44 = vld [vmem:[%s1 + $0x34] sm:$0xf]
  %v45 = vld [vmem:[%s1 + $0x38] sm:$0xf]
  %v46 = vld [vmem:[%s1 + $0x3c] sm:$0xf]
  %v47 = vld [vmem:[%s1 + $0x40] sm:$0xf]
  %v48 = vld [vmem:[%s1 + $0x44] sm:$0xf]
  %v49 = vld [vmem:[%s1 + $0x48] sm:$0xf]
  %v50 = vld [vmem:[%s1 + $0x4c] sm:$0xf]
  %v51 = vld [vmem:[%s1 + $0x50] sm:$0xf]
  %v52 = vld [vmem:[%s1 + $0x54] sm:$0xf]
  %v53 = vld [vmem:[%s1 + $0x58] sm:$0xf]
  %v54 = vld [vmem:[%s1 + $0x5c] sm:$0xf]
  %v55 = vld [vmem:[%s1 + $0x60] sm:$0xf]
  %v56 = vld [vmem:[%s1 + $0x64] sm:$0xf]
  %v57 = vld [vmem:[%s1 + $0x68] sm:$0xf]
  %v58 = vld [vmem:[%s1 + $0x6c] sm:$0xf]
  %v59 = vld [vmem:[%s1 + $0x70] sm:$0xf]
  %v60 = vld [vmem:[%s1 + $0x74] sm:$0xf]
  %v61 = vld [vmem:[%s1 + $0x78] sm:$0xf]
  %v62 = vld [vmem:[%s1 + $0x7c] sm:$0xf]
  %v63 = vld [vmem:[%s2] sm:$0x1]
  %v65 = vlaneseq
  %v66 = vshrl.u32 %v65, 7
  %v67 = vsub.s32 0, %v66
  %v68 = vrot.slane %v63, %v67
  %v86 = vunpack.c.l.b16 %v15
  %v87 = vunpack.c.h.b16 %v15
  %v88 = vunpack.c.l.b16 %v16
  %v89 = vunpack.c.h.b16 %v16
  %v90 = vunpack.c.l.b16 %v17
  %v91 = vunpack.c.h.b16 %v17
  %v92 = vunpack.c.l.b16 %v18
  %v93 = vunpack.c.h.b16 %v18
  %v94 = vunpack.c.l.b16 %v19
  %v95 = vunpack.c.h.b16 %v19
  %v96 = vunpack.c.l.b16 %v20
  %v97 = vunpack.c.h.b16 %v20
  %v98 = vunpack.c.l.b16 %v21
  %v99 = vunpack.c.h.b16 %v21
  %v100 = vunpack.c.l.b16 %v22
  %v101 = vunpack.c.h.b16 %v22
  %v102 = vunpack.c.l.b16 %v23
  %v103 = vunpack.c.h.b16 %v23
  %v104 = vunpack.c.l.b16 %v24
  %v105 = vunpack.c.h.b16 %v24
  %v106 = vunpack.c.l.b16 %v25
  %v107 = vunpack.c.h.b16 %v25
  %v108 = vunpack.c.l.b16 %v26
  %v109 = vunpack.c.h.b16 %v26
  %v110 = vunpack.c.l.b16 %v27
  %v111 = vunpack.c.h.b16 %v27
  %v112 = vunpack.c.l.b16 %v28
  %v113 = vunpack.c.h.b16 %v28
  %v114 = vunpack.c.l.b16 %v29
  %v115 = vunpack.c.h.b16 %v29
  %v116 = vunpack.c.l.b16 %v30
  %v117 = vunpack.c.h.b16 %v30
  %v118 = vpack.c.b16 %v88, %v86
  %v119 = vpack.c.b16 %v89, %v87
  %v120 = vpack.c.b16 %v92, %v90
  %v121 = vpack.c.b16 %v93, %v91
  %v122 = vpack.c.b16 %v96, %v94
  %v123 = vpack.c.b16 %v97, %v95
  %v124 = vpack.c.b16 %v100, %v98
  %v125 = vpack.c.b16 %v101, %v99
  %v126 = vpack.c.b16 %v104, %v102
  %v127 = vpack.c.b16 %v105, %v103
  %v128 = vpack.c.b16 %v108, %v106
  %v129 = vpack.c.b16 %v109, %v107
  %v130 = vpack.c.b16 %v112, %v110
  %v131 = vpack.c.b16 %v113, %v111
  %v132 = vpack.c.b16 %v116, %v114
  %v133 = vpack.c.b16 %v117, %v115
  %v182 = vunpack.c.l.b16 %v31
  %v183 = vunpack.c.l.b16 %v32
  %v184 = vunpack.c.l.b16 %v33
  %v185 = vunpack.c.l.b16 %v34
  %v186 = vunpack.c.l.b16 %v35
  %v187 = vunpack.c.l.b16 %v36
  %v188 = vunpack.c.l.b16 %v37
  %v189 = vunpack.c.l.b16 %v38
  %v190 = vunpack.c.l.b16 %v39
  %v191 = vunpack.c.l.b16 %v40
  %v192 = vunpack.c.l.b16 %v41
  %v193 = vunpack.c.l.b16 %v42
  %v194 = vunpack.c.l.b16 %v43
  %v195 = vunpack.c.l.b16 %v44
  %v196 = vunpack.c.l.b16 %v45
  %v197 = vunpack.c.l.b16 %v46
  %v198 = vunpack.c.l.b16 %v47
  %v199 = vunpack.c.l.b16 %v48
  %v200 = vunpack.c.l.b16 %v49
  %v201 = vunpack.c.l.b16 %v50
  %v202 = vunpack.c.l.b16 %v51
  %v203 = vunpack.c.l.b16 %v52
  %v204 = vunpack.c.l.b16 %v53
  %v205 = vunpack.c.l.b16 %v54
  %v206 = vunpack.c.l.b16 %v55
  %v207 = vunpack.c.l.b16 %v56
  %v208 = vunpack.c.l.b16 %v57
  %v209 = vunpack.c.l.b16 %v58
  %v210 = vunpack.c.l.b16 %v59
  %v211 = vunpack.c.l.b16 %v60
  %v212 = vunpack.c.l.b16 %v61
  %v213 = vunpack.c.l.b16 %v62
  %v214 = vpack.c.b16 %v183, %v182
  %v215 = vpack.c.b16 %v185, %v184
  %v216 = vpack.c.b16 %v187, %v186
  %v217 = vpack.c.b16 %v189, %v188
  %v218 = vpack.c.b16 %v191, %v190
  %v219 = vpack.c.b16 %v193, %v192
  %v220 = vpack.c.b16 %v195, %v194
  %v221 = vpack.c.b16 %v197, %v196
  %v222 = vpack.c.b16 %v199, %v198
  %v223 = vpack.c.b16 %v201, %v200
  %v224 = vpack.c.b16 %v203, %v202
  %v225 = vpack.c.b16 %v205, %v204
  %v226 = vpack.c.b16 %v207, %v206
  %v227 = vpack.c.b16 %v209, %v208
  %v228 = vpack.c.b16 %v211, %v210
  %v229 = vpack.c.b16 %v213, %v212
  %246 = vmatprep.subr.bf16.mxu0 0
  %247 = vmatpush1.bf16.msra.mxu0 %v214
  %248 = vmatprep.subr.bf16.mxu0 0
  %249 = vmatpush1.bf16.msra.mxu0 %v215
  %250 = vmatprep.subr.bf16.mxu0 0
  %251 = vmatpush1.bf16.msra.mxu0 %v216
  %252 = vmatprep.subr.bf16.mxu0 0
  %253 = vmatpush1.bf16.msra.mxu0 %v217
  %254 = vmatprep.subr.bf16.mxu0 0
  %255 = vmatpush1.bf16.msra.mxu0 %v218
  %256 = vmatprep.subr.bf16.mxu0 0
  %257 = vmatpush1.bf16.msra.mxu0 %v219
  %258 = vmatprep.subr.bf16.mxu0 0
  %259 = vmatpush1.bf16.msra.mxu0 %v220
  %260 = vmatprep.subr.bf16.mxu0 0
  %261 = vmatpush1.bf16.msra.mxu0 %v221
  %262 = vmatprep.subr.bf16.mxu0 0
  %263 = vmatpush1.bf16.msra.mxu0 %v222
  %264 = vmatprep.subr.bf16.mxu0 0
  %265 = vmatpush1.bf16.msra.mxu0 %v223
  %266 = vmatprep.subr.bf16.mxu0 0
  %267 = vmatpush1.bf16.msra.mxu0 %v224
  %268 = vmatprep.subr.bf16.mxu0 0
  %269 = vmatpush1.bf16.msra.mxu0 %v225
  %270 = vmatprep.subr.bf16.mxu0 0
  %271 = vmatpush1.bf16.msra.mxu0 %v226
  %272 = vmatprep.subr.bf16.mxu0 0
  %273 = vmatpush1.bf16.msra.mxu0 %v227
  %274 = vmatprep.subr.bf16.mxu0 0
  %275 = vmatpush1.bf16.msra.mxu0 %v228
  %276 = vmatprep.subr.bf16.mxu0 0
  %277 = vmatpush1.bf16.msra.mxu0 %v229
  %278 = vmatprep.mubr.bf16.mxu0 %v119
  %279 = vmatmul.mubr.bf16.gmra.mrb[0].mxu0 %v118
  %v280 = vpop.f32.mrb[0].mxu0
  %v281 = vadd.f32 %v68, %v280
  %v282 = vpop.f32.mrb[0].mxu0
  %v283 = vpop.f32.mrb[0].mxu0
  %v284 = vadd.f32 %v68, %v283
  %v285 = vpop.f32.mrb[0].mxu0
  %286 = vmatprep.mubr.bf16.mxu0 %v121
  %287 = vmatmul.mubr.bf16.gmra.mrb[0].mxu0 %v120
  %v288 = vpop.f32.mrb[0].mxu0
  %v289 = vadd.f32 %v68, %v288
  %v290 = vpop.f32.mrb[0].mxu0
  %v291 = vpop.f32.mrb[0].mxu0
  %v292 = vadd.f32 %v68, %v291
  %v293 = vpop.f32.mrb[0].mxu0
  %294 = vmatprep.mubr.bf16.mxu0 %v123
  %295 = vmatmul.mubr.bf16.gmra.mrb[0].mxu0 %v122
  %v296 = vpop.f32.mrb[0].mxu0
  %v297 = vadd.f32 %v68, %v296
  %v298 = vpop.f32.mrb[0].mxu0
  %v299 = vpop.f32.mrb[0].mxu0
  %v300 = vadd.f32 %v68, %v299
  %v301 = vpop.f32.mrb[0].mxu0
  %302 = vmatprep.mubr.bf16.mxu0 %v125
  %303 = vmatmul.mubr.bf16.gmra.mrb[0].mxu0 %v124
  %v304 = vpop.f32.mrb[0].mxu0
  %v305 = vadd.f32 %v68, %v304
  %v306 = vpop.f32.mrb[0].mxu0
  %v307 = vpop.f32.mrb[0].mxu0
  %v308 = vadd.f32 %v68, %v307
  %v309 = vpop.f32.mrb[0].mxu0
  %310 = vmatprep.mubr.bf16.mxu0 %v127
  %311 = vmatmul.mubr.bf16.gmra.mrb[0].mxu0 %v126
  %v312 = vpop.f32.mrb[0].mxu0
  %v313 = vadd.f32 %v68, %v312
  %v314 = vpop.f32.mrb[0].mxu0
  %v315 = vpop.f32.mrb[0].mxu0
  %v316 = vadd.f32 %v68, %v315
  %v317 = vpop.f32.mrb[0].mxu0
  %318 = vmatprep.mubr.bf16.mxu0 %v129
  %319 = vmatmul.mubr.bf16.gmra.mrb[0].mxu0 %v128
  %v320 = vpop.f32.mrb[0].mxu0
  %v321 = vadd.f32 %v68, %v320
  %v322 = vpop.f32.mrb[0].mxu0
  %v323 = vpop.f32.mrb[0].mxu0
  %v324 = vadd.f32 %v68, %v323
  %v325 = vpop.f32.mrb[0].mxu0
  %326 = vmatprep.mubr.bf16.mxu0 %v131
  %327 = vmatmul.mubr.bf16.gmra.mrb[0].mxu0 %v130
  %v328 = vpop.f32.mrb[0].mxu0
  %v329 = vadd.f32 %v68, %v328
  %v330 = vpop.f32.mrb[0].mxu0
  %v331 = vpop.f32.mrb[0].mxu0
  %v332 = vadd.f32 %v68, %v331
  %v333 = vpop.f32.mrb[0].mxu0
  %334 = vmatprep.mubr.bf16.mxu0 %v133
  %335 = vmatmul.mubr.bf16.gmra.mrb[0].mxu0 %v132
  %v336 = vpop.f32.mrb[0].mxu0
  %v337 = vadd.f32 %v68, %v336
  %v338 = vpop.f32.mrb[0].mxu0
  %v339 = vpop.f32.mrb[0].mxu0
  %v340 = vadd.f32 %v68, %v339
  %v341 = vpop.f32.mrb[0].mxu0
  %342 = vdwg.mxu0
  %v343 = vpack.c.bf16 %v284, %v281
  %v344 = vpack.c.bf16 %v292, %v289
  %v345 = vpack.c.bf16 %v300, %v297
  %v346 = vpack.c.bf16 %v308, %v305
  %v347 = vpack.c.bf16 %v316, %v313
  %v348 = vpack.c.bf16 %v324, %v321
  %v349 = vpack.c.bf16 %v332, %v329
  %v350 = vpack.c.bf16 %v340, %v337
  %v359 = vunpack.c.l.b16 %v343
  %v360 = vunpack.c.h.b16 %v343
  %v361 = vunpack.c.l.b16 %v344
  %v362 = vunpack.c.h.b16 %v344
  %v363 = vunpack.c.l.b16 %v345
  %v364 = vunpack.c.h.b16 %v345
  %v365 = vunpack.c.l.b16 %v346
  %v366 = vunpack.c.h.b16 %v346
  %v367 = vunpack.c.l.b16 %v347
  %v368 = vunpack.c.h.b16 %v347
  %v369 = vunpack.c.l.b16 %v348
  %v370 = vunpack.c.h.b16 %v348
  %v371 = vunpack.c.l.b16 %v349
  %v372 = vunpack.c.h.b16 %v349
  %v373 = vunpack.c.l.b16 %v350
  %v374 = vunpack.c.h.b16 %v350
  %v375 = vpack.c.b16 %v359, %v359
  %v376 = vpack.c.b16 %v360, %v360
  %v377 = vpack.c.b16 %v361, %v361
  %v378 = vpack.c.b16 %v362, %v362
  %v379 = vpack.c.b16 %v363, %v363
  %v380 = vpack.c.b16 %v364, %v364
  %v381 = vpack.c.b16 %v365, %v365
  %v382 = vpack.c.b16 %v366, %v366
  %v383 = vpack.c.b16 %v367, %v367
  %v384 = vpack.c.b16 %v368, %v368
  %v385 = vpack.c.b16 %v369, %v369
  %v386 = vpack.c.b16 %v370, %v370
  %v387 = vpack.c.b16 %v371, %v371
  %v388 = vpack.c.b16 %v372, %v372
  %v389 = vpack.c.b16 %v373, %v373
  %v390 = vpack.c.b16 %v374, %v374
  %407 = vst [vmem:[%s3] sm:$0xf] %v375
  %408 = vst [vmem:[%s3 + $0x4] sm:$0xf] %v376
  %409 = vst [vmem:[%s3 + $0x8] sm:$0xf] %v377
  %410 = vst [vmem:[%s3 + $0xc] sm:$0xf] %v378
  %411 = vst [vmem:[%s3 + $0x10] sm:$0xf] %v379
  %412 = vst [vmem:[%s3 + $0x14] sm:$0xf] %v380
  %413 = vst [vmem:[%s3 + $0x18] sm:$0xf] %v381
  %414 = vst [vmem:[%s3 + $0x1c] sm:$0xf] %v382
  %415 = vst [vmem:[%s3 + $0x20] sm:$0xf] %v383
  %416 = vst [vmem:[%s3 + $0x24] sm:$0xf] %v384
  %417 = vst [vmem:[%s3 + $0x28] sm:$0xf] %v385
  %418 = vst [vmem:[%s3 + $0x2c] sm:$0xf] %v386
  %419 = vst [vmem:[%s3 + $0x30] sm:$0xf] %v387
  %420 = vst [vmem:[%s3 + $0x34] sm:$0xf] %v388
  %421 = vst [vmem:[%s3 + $0x38] sm:$0xf] %v389
  %422 = vst [vmem:[%s3 + $0x3c] sm:$0xf] %v390
  // Predicated region
  $region14: #{correspondence_net_forward.89} parent=0 // pred_check
    _
  $region15: #{correspondence_net_forward.89} parent=0 // pred_check_branch
    %424 = sbr.rel (0) target = $region17
  $region16: #{correspondence_net_forward.89} parent=0 // pred_region
    _
  $region17: #{correspondence_net_forward.89} parent=0 // pred_fallthru
    _
  // Predicated region
  $region18: #{correspondence_net_forward.89} parent=0 // pred_check
    _
  $region19: #{correspondence_net_forward.89} parent=0 // pred_check_branch
    %426 = sbr.rel (0) target = $region21
  $region20: #{correspondence_net_forward.89} parent=0 // pred_region
    _
  $region21: #{correspondence_net_forward.89} parent=0 // pred_fallthru
    _

// kernel: correspondence_net_forward.92
$region0: #{correspondence_net_forward.92}
  #allocation0 [shape = 'u32[]', space=smem, size = 0x4, offset = 0x4, fixed_abs, tag = 'smem constant byte address 0x4 - core index']
  #allocation1 [shape = 'u32[144,128]{1,0:T(1,128)}', space=vmem, size = 0x12000, scoped, tag = 'internal scratch']
  %s0 = inlined_call_operand.vmem [shape: bf16[2,16,64], index: 0, kind: input, shape index: {}]
  %s1 = inlined_call_operand.vmem [shape: bf16[2,16,64], index: 1, kind: output, shape index: {}]
  %s2 = sld [smem:[#allocation0]]
  $region37: #{correspondence_net_forward.92} parent=0
    _
  %s4 = ssub.s32 1, %s2
  %s5 = scalar_select 0, %s4, %s2
  loop: start=0, step=1, limit=4
  $region2: #{correspondence_net_forward.92} parent=0 // loop_pre_header
    _
  $region3: #{correspondence_net_forward.92} parent=0 // loop_header
    %s7 = sphi 0, %s11
    %p8 = scmp.ge.s32.totalorder %s7, 4
    %s17 = sphi 0, %s19
    %s20 = sphi 0, %s17
    %s21 = sphi 0, %s20
    %s37 = sphi 0, %s21
    %s43 = sphi 0, %s45
    %s46 = sphi 0, %s43
    %s47 = sphi 0, %s46
    %s63 = sphi 0, %s47
  $region4: #{correspondence_net_forward.92} parent=0 // loop_header_branch
    %10 = sbr.rel (%p8) target = $region8
  $region5: #{correspondence_net_forward.92} parent=0 // loop_body
    %s12 = ssub.s32 %s7, 1
    %s13 = ssub.s32 %s7, 2
    %s14 = sadd.s32 %s7, 1
    %s15 = ssub.s32 %s7, %s14
    %p16 = scmp.eq.s32.totalorder %s15, 0
    %s18 = sadd.s32 %s17, 1
    %s19 = scalar_select %p16, %s17, %s18
    %p22 = pneg %p16
    %p23 = scmp.eq.s32.totalorder %s7, 1
    %p24 = por %p22, %p23
    %p25 = scmp.ne.s32.totalorder %s17, %s20
    %p26 = scmp.eq.s32.totalorder %s7, 0
    %p27 = por %p25, %p26
    %p28 = scmp.ne.s32.totalorder %s17, %s20
    %p29 = scmp.eq.s32.totalorder %s12, 1
    %p30 = por %p28, %p29
    %p31 = scmp.ne.s32.totalorder %s20, %s21
    %p32 = scmp.eq.s32.totalorder %s12, 0
    %p33 = por %p31, %p32
    %p34 = scmp.ne.s32.totalorder %s20, %s21
    %p35 = scmp.eq.s32.totalorder %s13, 1
    %p36 = por %p34, %p35
    %p38 = scmp.ne.s32.totalorder %s21, %s37
    %p39 = scmp.eq.s32.totalorder %s13, 0
    %p40 = por %p38, %p39
    %s41 = ssub.s32 %s7, %s14
    %p42 = scmp.eq.s32.totalorder %s41, 0
    %s44 = sadd.s32 %s43, 1
    %s45 = scalar_select %p42, %s43, %s44
    %p48 = pneg %p42
    %p49 = scmp.eq.s32.totalorder %s7, 1
    %p50 = por %p48, %p49
    %p51 = scmp.ne.s32.totalorder %s43, %s46
    %p52 = scmp.eq.s32.totalorder %s7, 0
    %p53 = por %p51, %p52
    %p54 = scmp.ne.s32.totalorder %s43, %s46
    %p55 = scmp.eq.s32.totalorder %s12, 1
    %p56 = por %p54, %p55
    %p57 = scmp.ne.s32.totalorder %s46, %s47
    %p58 = scmp.eq.s32.totalorder %s12, 0
    %p59 = por %p57, %p58
    %p60 = scmp.ne.s32.totalorder %s46, %s47
    %p61 = scmp.eq.s32.totalorder %s13, 1
    %p62 = por %p60, %p61
    %p64 = scmp.ne.s32.totalorder %s47, %s63
    %p65 = scmp.eq.s32.totalorder %s13, 0
    %p66 = por %p64, %p65
    %p67 = scmp.le.s32.totalorder 1, %s7
    %p68 = scmp.lt.s32.totalorder %s7, 3
    %p69 = pnand %p67, %p68
    %p70 = pneg %p69
    // Predicated region
    $region9: #{correspondence_net_forward.92} parent=5 // pred_check
      _
    $region10: #{correspondence_net_forward.92} parent=5 // pred_check_branch
      %72 = sbr.rel (%p69) target = $region12
    $region11: #{correspondence_net_forward.92} parent=5 // pred_region
      %s73 = ssub.s32 %s7, 1
    $region12: #{correspondence_net_forward.92} parent=5 // pred_fallthru
      _
    %p74 = scmp.lt.s32.totalorder %s7, 2
    // Predicated region
    $region13: #{correspondence_net_forward.92} parent=5 // pred_check
      %p75 = pneg %p74
    $region14: #{correspondence_net_forward.92} parent=5 // pred_check_branch
      %77 = sbr.rel (%p75) target = $region16
    $region15: #{correspondence_net_forward.92} parent=5 // pred_region
      // Predicated region
      $region17: #{correspondence_net_forward.92} parent=15 // pred_check
        %p78 = pneg %p27
      $region18: #{correspondence_net_forward.92} parent=15 // pred_check_branch
        %80 = sbr.rel (%p78) target = $region20
      $region19: #{correspondence_net_forward.92} parent=15 // pred_region
        %p81 = scmp.lt.s32.totalorder %s7, 1
        %s82 = scalar_select %p81, %s7, 1
        %s83 = smul.addr %s82, 2
        %s84 = smul.addr %s83, 4
        %s85 = scalar_lea.vmem %s0, %s84
      $region20: #{correspondence_net_forward.92} parent=15 // pred_fallthru
        _
    $region16: #{correspondence_net_forward.92} parent=5 // pred_fallthru
      _
    %p86 = scmp.le.s32.totalorder 1, %s7
    %p87 = scmp.lt.s32.totalorder %s7, 3
    %p88 = pnand %p86, %p87
    %p89 = pneg %p88
    // Predicated region
    $region21: #{correspondence_net_forward.92} parent=5 // pred_check
      _
    $region22: #{correspondence_net_forward.92} parent=5 // pred_check_branch
      %91 = sbr.rel (%p88) target = $region24
    $region23: #{correspondence_net_forward.92} parent=5 // pred_region
      %s92 = ssub.s32 %s7, 1
      %p93 = scmp.lt.s32.totalorder %s12, 1
      %s94 = scalar_select %p93, %s12, 1
      %s95 = smul.addr %s94, 2
      %s96 = smul.addr %s95, 4
      %s97 = scalar_lea.vmem %s0, %s96
      %p98 = pneg %p33
      %p99 = pneg %p30
      %p100 = pneg %p59
      %p101 = pneg %p56
      %p102 = scmp.lt.s32.totalorder %s12, 1
      %s103 = scalar_select %p102, %s12, 1
      %s104 = smul.addr %s103, 2
      %s105 = smul.addr %s104, 4
      %s106 = scalar_lea.vmem %s1, %s105
      %p107 = scmp.lt.s32.totalorder %s12, 1
      %s108 = scalar_select %p107, %s12, 1
      %s109 = smul.addr %s108, 2
      %s110 = smul.addr %s109, 4
      %s111 = scalar_lea.vmem %s0, %s110
      %p112 = scmp.lt.s32.totalorder %s12, 1
      %s113 = scalar_select %p112, %s12, 1
      %s114 = smul.addr %s113, 2
      %s115 = smul.addr %s114, 4
      %s116 = scalar_lea.vmem %s1, %s115
      %v117 = vld [vmem:[%s111] sm:$0xf]
      %v118 = vld [vmem:[%s111 + $0x4] sm:$0xf]
      %v119 = vunpack.c.l.bf16 %v117
      %v120 = vunpack.c.l.bf16 %v118
      %vm121 = vcmask 523264
      %v122 = vsel %vm121, %v119, 0.0
      %v123 = vsel %vm121, %v120, 0.0
      %v124 = vadd.f32 %v122, %v123
      %v125 = vrot.slane %v124, 4
      %v126 = vadd.f32 %v124, %v125
      %v127 = vrot.slane %v126, 2
      %v128 = vadd.f32 %v126, %v127
      %v129 = vrot.slane %v128, 1
      %v130 = vadd.f32 %v128, %v129
      %v131 = vrcp.pop 16.0
      %v132 = vmul.f32 %v130, %v131
      %v133 = vsub.f32 %v119, %v132
      %v134 = vsub.f32 %v120, %v132
      %v135 = vmul.f32 %v133, %v133
      %v136 = vmul.f32 %v134, %v134
      %v137 = vsel %vm121, %v135, 0.0
      %v138 = vsel %vm121, %v136, 0.0
      %v139 = vadd.f32 %v137, %v138
      %v140 = vrot.slane %v139, 4
      %v141 = vadd.f32 %v139, %v140
      %v142 = vrot.slane %v141, 2
      %v143 = vadd.f32 %v141, %v142
      %v144 = vrot.slane %v143, 1
      %v145 = vadd.f32 %v143, %v144
      %v146 = vmul.f32 %v145, %v131
      %v147 = vadd.f32 %v146, 1e-05
      %v148 = vrsqrt.pop %v147
      %v149 = vmul.f32 %v133, %v148
      %v150 = vmul.f32 %v134, %v148
      %vm151 = vcmp.ge.f32.partialorder %v149, 0.0
      %vm152 = vcmp.ge.f32.partialorder %v150, 0.0
      %v153 = vmul.f32 %v149, 0.2
      %v154 = vmul.f32 %v150, 0.2
      %v155 = vsel %vm151, %v149, %v153
      %v156 = vsel %vm152, %v150, %v154
      %v157 = vpack.c.bf16 %v156, %v155
      %v159 = vunpack.c.l.b16 %v157
      %v160 = vunpack.c.h.b16 %v157
      %v161 = vpack.c.b16 %v159, %v159
      %v162 = vpack.c.b16 %v160, %v160
      %vm165 = vcmask 519168
      %166 = vst.msk [vmem:[%s116] sm:$0xf] %vm165, %v161
      %167 = vst.msk [vmem:[%s116 + $0x4] sm:$0xf] %vm165, %v162
      %p168 = scmp.lt.s32.totalorder %s12, 1
      %s169 = scalar_select %p168, %s12, 1
      %s170 = smul.addr %s169, 2
      %s171 = smul.addr %s170, 4
      %s172 = scalar_lea.vmem %s1, %s171
      // Predicated region
      $region25: #{correspondence_net_forward.92} parent=23 // pred_check
        %p173 = pneg %p56
      $region26: #{correspondence_net_forward.92} parent=23 // pred_check_branch
        %175 = sbr.rel (%p173) target = $region28
      $region27: #{correspondence_net_forward.92} parent=23 // pred_region
        _
      $region28: #{correspondence_net_forward.92} parent=23 // pred_fallthru
        _
    $region24: #{correspondence_net_forward.92} parent=5 // pred_fallthru
      _
    %p176 = scmp.le.s32.totalorder 2, %s7
    // Predicated region
    $region29: #{correspondence_net_forward.92} parent=5 // pred_check
      %p177 = pneg %p176
    $region30: #{correspondence_net_forward.92} parent=5 // pred_check_branch
      %179 = sbr.rel (%p177) target = $region32
    $region31: #{correspondence_net_forward.92} parent=5 // pred_region
      %s180 = ssub.s32 %s7, 2
      // Predicated region
      $region33: #{correspondence_net_forward.92} parent=31 // pred_check
        %p181 = pneg %p62
      $region34: #{correspondence_net_forward.92} parent=31 // pred_check_branch
        %183 = sbr.rel (%p181) target = $region36
      $region35: #{correspondence_net_forward.92} parent=31 // pred_region
        %p184 = scmp.lt.s32.totalorder %s13, 1
        %s185 = scalar_select %p184, %s13, 1
        %s186 = smul.addr %s185, 2
        %s187 = smul.addr %s186, 4
        %s188 = scalar_lea.vmem %s1, %s187
      $region36: #{correspondence_net_forward.92} parent=31 // pred_fallthru
        _
    $region32: #{correspondence_net_forward.92} parent=5 // pred_fallthru
      _
  $region6: #{correspondence_net_forward.92} parent=0 // loop_footer
    %s11 = sadd.s32 1, %s7
  $region7: #{correspondence_net_forward.92} parent=0 // loop_footer_branch
    %6 = sbr.rel target = $region3
  $region8: #{correspondence_net_forward.92} parent=0 // loop_exit
    _

// kernel: correspondence_net_forward.91
$region0: #{correspondence_net_forward.91}
  #allocation0 [shape = 'u32[]', space=smem, size = 0x4, offset = 0x4, fixed_abs, tag = 'smem constant byte address 0x4 - core index']
  #allocation1 [shape = 'u32[144,128]{1,0:T(1,128)}', space=vmem, size = 0x12000, scoped, tag = 'internal scratch']
  %s0 = inlined_call_operand.vmem [shape: bf16[32,512], index: 0, kind: input, shape index: {}]
  %s1 = inlined_call_operand.vmem [shape: bf16[512,128], index: 1, kind: input, shape index: {}]
  %s2 = inlined_call_operand.vmem [shape: f32[1,128], index: 2, kind: input, shape index: {}]
  %s3 = inlined_call_operand.vmem [shape: bf16[32,128], index: 3, kind: output, shape index: {}]
  %s4 = sld [smem:[#allocation0]]
  $region22: #{correspondence_net_forward.91} parent=0
    _
  %s6 = ssub.s32 1, %s4
  %s7 = scalar_select 0, %s6, %s4
  // Predicated region
  $region2: #{correspondence_net_forward.91} parent=0 // pred_check
    _
  $region3: #{correspondence_net_forward.91} parent=0 // pred_check_branch
    %9 = sbr.rel (0) target = $region5
  $region4: #{correspondence_net_forward.91} parent=0 // pred_region
    _
  $region5: #{correspondence_net_forward.91} parent=0 // pred_fallthru
    _
  // Predicated region
  $region6: #{correspondence_net_forward.91} parent=0 // pred_check
    _
  $region7: #{correspondence_net_forward.91} parent=0 // pred_check_branch
    %11 = sbr.rel (0) target = $region9
  $region8: #{correspondence_net_forward.91} parent=0 // pred_region
    _
  $region9: #{correspondence_net_forward.91} parent=0 // pred_fallthru
    _
  // Predicated region
  $region10: #{correspondence_net_forward.91} parent=0 // pred_check
    _
  $region11: #{correspondence_net_forward.91} parent=0 // pred_check_branch
    %13 = sbr.rel (0) target = $region13
  $region12: #{correspondence_net_forward.91} parent=0 // pred_region
    _
  $region13: #{correspondence_net_forward.91} parent=0 // pred_fallthru
    _
  %v15 = vld [vmem:[%s0] sm:$0xff]
  %v16 = vld [vmem:[%s0 + $0x8] sm:$0xff]
  %v17 = vld [vmem:[%s0 + $0x10] sm:$0xff]
  %v18 = vld [vmem:[%s0 + $0x18] sm:$0xff]
  %v19 = vld [vmem:[%s0 + $0x20] sm:$0xff]
  %v20 = vld [vmem:[%s0 + $0x28] sm:$0xff]
  %v21 = vld [vmem:[%s0 + $0x30] sm:$0xff]
  %v22 = vld [vmem:[%s0 + $0x38] sm:$0xff]
  %v23 = vld [vmem:[%s1] sm:$0xf]
  %v24 = vld [vmem:[%s1 + $0x4] sm:$0xf]
  %v25 = vld [vmem:[%s1 + $0x8] sm:$0xf]
  %v26 = vld [vmem:[%s1 + $0xc] sm:$0xf]
  %v27 = vld [vmem:[%s1 + $0x10] sm:$0xf]
  %v28 = vld [vmem:[%s1 + $0x14] sm:$0xf]
  %v29 = vld [vmem:[%s1 + $0x18] sm:$0xf]
  %v30 = vld [vmem:[%s1 + $0x1c] sm:$0xf]
  %v31 = vld [vmem:[%s1 + $0x20] sm:$0xf]
  %v32 = vld [vmem:[%s1 + $0x24] sm:$0xf]
  %v33 = vld [vmem:[%s1 + $0x28] sm:$0xf]
  %v34 = vld [vmem:[%s1 + $0x2c] sm:$0xf]
  %v35 = vld [vmem:[%s1 + $0x30] sm:$0xf]
  %v36 = vld [vmem:[%s1 + $0x34] sm:$0xf]
  %v37 = vld [vmem:[%s1 + $0x38] sm:$0xf]
  %v38 = vld [vmem:[%s1 + $0x3c] sm:$0xf]
  %v39 = vld [vmem:[%s1 + $0x40] sm:$0xf]
  %v40 = vld [vmem:[%s1 + $0x44] sm:$0xf]
  %v41 = vld [vmem:[%s1 + $0x48] sm:$0xf]
  %v42 = vld [vmem:[%s1 + $0x4c] sm:$0xf]
  %v43 = vld [vmem:[%s1 + $0x50] sm:$0xf]
  %v44 = vld [vmem:[%s1 + $0x54] sm:$0xf]
  %v45 = vld [vmem:[%s1 + $0x58] sm:$0xf]
  %v46 = vld [vmem:[%s1 + $0x5c] sm:$0xf]
  %v47 = vld [vmem:[%s1 + $0x60] sm:$0xf]
  %v48 = vld [vmem:[%s1 + $0x64] sm:$0xf]
  %v49 = vld [vmem:[%s1 + $0x68] sm:$0xf]
  %v50 = vld [vmem:[%s1 + $0x6c] sm:$0xf]
  %v51 = vld [vmem:[%s1 + $0x70] sm:$0xf]
  %v52 = vld [vmem:[%s1 + $0x74] sm:$0xf]
  %v53 = vld [vmem:[%s1 + $0x78] sm:$0xf]
  %v54 = vld [vmem:[%s1 + $0x7c] sm:$0xf]
  %v55 = vld [vmem:[%s1 + $0x80] sm:$0xf]
  %v56 = vld [vmem:[%s1 + $0x84] sm:$0xf]
  %v57 = vld [vmem:[%s1 + $0x88] sm:$0xf]
  %v58 = vld [vmem:[%s1 + $0x8c] sm:$0xf]
  %v59 = vld [vmem:[%s1 + $0x90] sm:$0xf]
  %v60 = vld [vmem:[%s1 + $0x94] sm:$0xf]
  %v61 = vld [vmem:[%s1 + $0x98] sm:$0xf]
  %v62 = vld [vmem:[%s1 + $0x9c] sm:$0xf]
  %v63 = vld [vmem:[%s1 + $0xa0] sm:$0xf]
  %v64 = vld [vmem:[%s1 + $0xa4] sm:$0xf]
  %v65 = vld [vmem:[%s1 + $0xa8] sm:$0xf]
  %v66 = vld [vmem:[%s1 + $0xac] sm:$0xf]
  %v67 = vld [vmem:[%s1 + $0xb0] sm:$0xf]
  %v68 = vld [vmem:[%s1 + $0xb4] sm:$0xf]
  %v69 = vld [vmem:[%s1 + $0xb8] sm:$0xf]
  %v70 = vld [vmem:[%s1 + $0xbc] sm:$0xf]
  %v71 = vld [vmem:[%s1 + $0xc0] sm:$0xf]
  %v72 = vld [vmem:[%s1 + $0xc4] sm:$0xf]
  %v73 = vld [vmem:[%s1 + $0xc8] sm:$0xf]
  %v74 = vld [vmem:[%s1 + $0xcc] sm:$0xf]
  %v75 = vld [vmem:[%s1 + $0xd0] sm:$0xf]
  %v76 = vld [vmem:[%s1 + $0xd4] sm:$0xf]
  %v77 = vld [vmem:[%s1 + $0xd8] sm:$0xf]
  %v78 = vld [vmem:[%s1 + $0xdc] sm:$0xf]
  %v79 = vld [vmem:[%s1 + $0xe0] sm:$0xf]
  %v80 = vld [vmem:[%s1 + $0xe4] sm:$0xf]
  %v81 = vld [vmem:[%s1 + $0xe8] sm:$0xf]
  %v82 = vld [vmem:[%s1 + $0xec] sm:$0xf]
  %v83 = vld [vmem:[%s1 + $0xf0] sm:$0xf]
  %v84 = vld [vmem:[%s1 + $0xf4] sm:$0xf]
  %v85 = vld [vmem:[%s1 + $0xf8] sm:$0xf]
  %v86 = vld [vmem:[%s1 + $0xfc] sm:$0xf]
  %v87 = vld [vmem:[%s2] sm:$0x1]
  %v89 = vlaneseq
  %v90 = vshrl.u32 %v89, 7
  %v91 = vsub.s32 0, %v90
  %v92 = vrot.slane %v87, %v91
  %v102 = vunpack.c.l.b16 %v15
  %v103 = vunpack.c.h.b16 %v15
  %v104 = vunpack.c.l.b16 %v16
  %v105 = vunpack.c.h.b16 %v16
  %v106 = vunpack.c.l.b16 %v17
  %v107 = vunpack.c.h.b16 %v17
  %v108 = vunpack.c.l.b16 %v18
  %v109 = vunpack.c.h.b16 %v18
  %v110 = vunpack.c.l.b16 %v19
  %v111 = vunpack.c.h.b16 %v19
  %v112 = vunpack.c.l.b16 %v20
  %v113 = vunpack.c.h.b16 %v20
  %v114 = vunpack.c.l.b16 %v21
  %v115 = vunpack.c.h.b16 %v21
  %v116 = vunpack.c.l.b16 %v22
  %v117 = vunpack.c.h.b16 %v22
  %v118 = vpack.c.b16 %v106, %v102
  %v119 = vpack.c.b16 %v107, %v103
  %v120 = vpack.c.b16 %v108, %v104
  %v121 = vpack.c.b16 %v109, %v105
  %v122 = vpack.c.b16 %v114, %v110
  %v123 = vpack.c.b16 %v115, %v111
  %v124 = vpack.c.b16 %v116, %v112
  %v125 = vpack.c.b16 %v117, %v113
  %v198 = vunpack.c.l.b16 %v23
  %v199 = vunpack.c.l.b16 %v24
  %v200 = vunpack.c.l.b16 %v25
  %v201 = vunpack.c.l.b16 %v26
  %v202 = vunpack.c.l.b16 %v27
  %v203 = vunpack.c.l.b16 %v28
  %v204 = vunpack.c.l.b16 %v29
  %v205 = vunpack.c.l.b16 %v30
  %v206 = vunpack.c.l.b16 %v31
  %v207 = vunpack.c.l.b16 %v32
  %v208 = vunpack.c.l.b16 %v33
  %v209 = vunpack.c.l.b16 %v34
  %v210 = vunpack.c.l.b16 %v35
  %v211 = vunpack.c.l.b16 %v36
  %v212 = vunpack.c.l.b16 %v37
  %v213 = vunpack.c.l.b16 %v38
  %v214 = vunpack.c.l.b16 %v39
  %v215 = vunpack.c.l.b16 %v40
  %v216 = vunpack.c.l.b16 %v41
  %v217 = vunpack.c.l.b16 %v42
  %v218 = vunpack.c.l.b16 %v43
  %v219 = vunpack.c.l.b16 %v44
  %v220 = vunpack.c.l.b16 %v45
  %v221 = vunpack.c.l.b16 %v46
  %v222 = vunpack.c.l.b16 %v47
  %v223 = vunpack.c.l.b16 %v48
  %v224 = vunpack.c.l.b16 %v49
  %v225 = vunpack.c.l.b16 %v50
  %v226 = vunpack.c.l.b16 %v51
  %v227 = vunpack.c.l.b16 %v52
  %v228 = vunpack.c.l.b16 %v53
  %v229 = vunpack.c.l.b16 %v54
  %v230 = vunpack.c.l.b16 %v55
  %v231 = vunpack.c.l.b16 %v56
  %v232 = vunpack.c.l.b16 %v57
  %v233 = vunpack.c.l.b16 %v58
  %v234 = vunpack.c.l.b16 %v59
  %v235 = vunpack.c.l.b16 %v60
  %v236 = vunpack.c.l.b16 %v61
  %v237 = vunpack.c.l.b16 %v62
  %v238 = vunpack.c.l.b16 %v63
  %v239 = vunpack.c.l.b16 %v64
  %v240 = vunpack.c.l.b16 %v65
  %v241 = vunpack.c.l.b16 %v66
  %v242 = vunpack.c.l.b16 %v67
  %v243 = vunpack.c.l.b16 %v68
  %v244 = vunpack.c.l.b16 %v69
  %v245 = vunpack.c.l.b16 %v70
  %v246 = vunpack.c.l.b16 %v71
  %v247 = vunpack.c.l.b16 %v72
  %v248 = vunpack.c.l.b16 %v73
  %v249 = vunpack.c.l.b16 %v74
  %v250 = vunpack.c.l.b16 %v75
  %v251 = vunpack.c.l.b16 %v76
  %v252 = vunpack.c.l.b16 %v77
  %v253 = vunpack.c.l.b16 %v78
  %v254 = vunpack.c.l.b16 %v79
  %v255 = vunpack.c.l.b16 %v80
  %v256 = vunpack.c.l.b16 %v81
  %v257 = vunpack.c.l.b16 %v82
  %v258 = vunpack.c.l.b16 %v83
  %v259 = vunpack.c.l.b16 %v84
  %v260 = vunpack.c.l.b16 %v85
  %v261 = vunpack.c.l.b16 %v86
  %v262 = vpack.c.b16 %v199, %v198
  %v263 = vpack.c.b16 %v201, %v200
  %v264 = vpack.c.b16 %v203, %v202
  %v265 = vpack.c.b16 %v205, %v204
  %v266 = vpack.c.b16 %v207, %v206
  %v267 = vpack.c.b16 %v209, %v208
  %v268 = vpack.c.b16 %v211, %v210
  %v269 = vpack.c.b16 %v213, %v212
  %v270 = vpack.c.b16 %v215, %v214
  %v271 = vpack.c.b16 %v217, %v216
  %v272 = vpack.c.b16 %v219, %v218
  %v273 = vpack.c.b16 %v221, %v220
  %v274 = vpack.c.b16 %v223, %v222
  %v275 = vpack.c.b16 %v225, %v224
  %v276 = vpack.c.b16 %v227, %v226
  %v277 = vpack.c.b16 %v229, %v228
  %v278 = vpack.c.b16 %v231, %v230
  %v279 = vpack.c.b16 %v233, %v232
  %v280 = vpack.c.b16 %v235, %v234
  %v281 = vpack.c.b16 %v237, %v236
  %v282 = vpack.c.b16 %v239, %v238
  %v283 = vpack.c.b16 %v241, %v240
  %v284 = vpack.c.b16 %v243, %v242
  %v285 = vpack.c.b16 %v245, %v244
  %v286 = vpack.c.b16 %v247, %v246
  %v287 = vpack.c.b16 %v249, %v248
  %v288 = vpack.c.b16 %v251, %v250
  %v289 = vpack.c.b16 %v253, %v252
  %v290 = vpack.c.b16 %v255, %v254
  %v291 = vpack.c.b16 %v257, %v256
  %v292 = vpack.c.b16 %v259, %v258
  %v293 = vpack.c.b16 %v261, %v260
  %326 = vmatprep.subr.bf16.mxu0 0
  %327 = vmatpush1.bf16.msra.mxu0 %v262
  %328 = vmatprep.subr.bf16.mxu0 0
  %329 = vmatpush1.bf16.msra.mxu0 %v263
  %330 = vmatprep.subr.bf16.mxu0 0
  %331 = vmatpush1.bf16.msra.mxu0 %v264
  %332 = vmatprep.subr.bf16.mxu0 0
  %333 = vmatpush1.bf16.msra.mxu0 %v265
  %334 = vmatprep.subr.bf16.mxu0 0
  %335 = vmatpush1.bf16.msra.mxu0 %v266
  %336 = vmatprep.subr.bf16.mxu0 0
  %337 = vmatpush1.bf16.msra.mxu0 %v267
  %338 = vmatprep.subr.bf16.mxu0 0
  %339 = vmatpush1.bf16.msra.mxu0 %v268
  %340 = vmatprep.subr.bf16.mxu0 0
  %341 = vmatpush1.bf16.msra.mxu0 %v269
  %342 = vmatprep.subr.bf16.mxu0 0
  %343 = vmatpush1.bf16.msra.mxu0 %v270
  %344 = vmatprep.subr.bf16.mxu0 0
  %345 = vmatpush1.bf16.msra.mxu0 %v271
  %346 = vmatprep.subr.bf16.mxu0 0
  %347 = vmatpush1.bf16.msra.mxu0 %v272
  %348 = vmatprep.subr.bf16.mxu0 0
  %349 = vmatpush1.bf16.msra.mxu0 %v273
  %350 = vmatprep.subr.bf16.mxu0 0
  %351 = vmatpush1.bf16.msra.mxu0 %v274
  %352 = vmatprep.subr.bf16.mxu0 0
  %353 = vmatpush1.bf16.msra.mxu0 %v275
  %354 = vmatprep.subr.bf16.mxu0 0
  %355 = vmatpush1.bf16.msra.mxu0 %v276
  %356 = vmatprep.subr.bf16.mxu0 0
  %357 = vmatpush1.bf16.msra.mxu0 %v277
  %358 = vmatprep.mubr.bf16.mxu0 %v119
  %359 = vmatmul.mubr.bf16.gmra.mrb[0].mxu0 %v118
  %v360 = vpop.f32.mrb[0].mxu0
  %v361 = vadd.f32 %v92, %v360
  %v362 = vpop.f32.mrb[0].mxu0
  %v363 = vpop.f32.mrb[0].mxu0
  %v364 = vadd.f32 %v92, %v363
  %v365 = vpop.f32.mrb[0].mxu0
  %366 = vmatprep.mubr.bf16.mxu0 %v123
  %367 = vmatmul.mubr.bf16.gmra.mrb[0].mxu0 %v122
  %v368 = vpop.f32.mrb[0].mxu0
  %v369 = vadd.f32 %v92, %v368
  %v370 = vpop.f32.mrb[0].mxu0
  %v371 = vpop.f32.mrb[0].mxu0
  %v372 = vadd.f32 %v92, %v371
  %v373 = vpop.f32.mrb[0].mxu0
  %374 = vdwg.mxu0
  %375 = vmatprep.subr.bf16.mxu0 0
  %376 = vmatpush1.bf16.msra.mxu0 %v278
  %377 = vmatprep.subr.bf16.mxu0 0
  %378 = vmatpush1.bf16.msra.mxu0 %v279
  %379 = vmatprep.subr.bf16.mxu0 0
  %380 = vmatpush1.bf16.msra.mxu0 %v280
  %381 = vmatprep.subr.bf16.mxu0 0
  %382 = vmatpush1.bf16.msra.mxu0 %v281
  %383 = vmatprep.subr.bf16.mxu0 0
  %384 = vmatpush1.bf16.msra.mxu0 %v282
  %385 = vmatprep.subr.bf16.mxu0 0
  %386 = vmatpush1.bf16.msra.mxu0 %v283
  %387 = vmatprep.subr.bf16.mxu0 0
  %388 = vmatpush1.bf16.msra.mxu0 %v284
  %389 = vmatprep.subr.bf16.mxu0 0
  %390 = vmatpush1.bf16.msra.mxu0 %v285
  %391 = vmatprep.subr.bf16.mxu0 0
  %392 = vmatpush1.bf16.msra.mxu0 %v286
  %393 = vmatprep.subr.bf16.mxu0 0
  %394 = vmatpush1.bf16.msra.mxu0 %v287
  %395 = vmatprep.subr.bf16.mxu0 0
  %396 = vmatpush1.bf16.msra.mxu0 %v288
  %397 = vmatprep.subr.bf16.mxu0 0
  %398 = vmatpush1.bf16.msra.mxu0 %v289
  %399 = vmatprep.subr.bf16.mxu0 0
  %400 = vmatpush1.bf16.msra.mxu0 %v290
  %401 = vmatprep.subr.bf16.mxu0 0
  %402 = vmatpush1.bf16.msra.mxu0 %v291
  %403 = vmatprep.subr.bf16.mxu0 0
  %404 = vmatpush1.bf16.msra.mxu0 %v292
  %405 = vmatprep.subr.bf16.mxu0 0
  %406 = vmatpush1.bf16.msra.mxu0 %v293
  %407 = vmatprep.mubr.bf16.mxu0 %v121
  %408 = vmatmul.mubr.bf16.gmra.mrb[0].mxu0 %v120
  %v409 = vpop.f32.mrb[0].mxu0
  %v410 = vadd.f32 %v361, %v409
  %v411 = vpop.f32.mrb[0].mxu0
  %v412 = vpop.f32.mrb[0].mxu0
  %v413 = vadd.f32 %v364, %v412
  %v414 = vpop.f32.mrb[0].mxu0
  %415 = vmatprep.mubr.bf16.mxu0 %v125
  %416 = vmatmul.mubr.bf16.gmra.mrb[0].mxu0 %v124
  %v417 = vpop.f32.mrb[0].mxu0
  %v418 = vadd.f32 %v369, %v417
  %v419 = vpop.f32.mrb[0].mxu0
  %v420 = vpop.f32.mrb[0].mxu0
  %v421 = vadd.f32 %v372, %v420
  %v422 = vpop.f32.mrb[0].mxu0
  %423 = vdwg.mxu0
  %v424 = vpack.c.bf16 %v413, %v410
  %v425 = vpack.c.bf16 %v421, %v418
  %v428 = vunpack.c.l.b16 %v424
  %v429 = vunpack.c.h.b16 %v424
  %v430 = vunpack.c.l.b16 %v425
  %v431 = vunpack.c.h.b16 %v425
  %v432 = vpack.c.b16 %v428, %v428
  %v433 = vpack.c.b16 %v429, %v429
  %v434 = vpack.c.b16 %v430, %v430
  %v435 = vpack.c.b16 %v431, %v431
  %440 = vst [vmem:[%s3] sm:$0xf] %v432
  %441 = vst [vmem:[%s3 + $0x4] sm:$0xf] %v433
  %442 = vst [vmem:[%s3 + $0x8] sm:$0xf] %v434
  %443 = vst [vmem:[%s3 + $0xc] sm:$0xf] %v435
  // Predicated region
  $region14: #{correspondence_net_forward.91} parent=0 // pred_check
    _
  $region15: #{correspondence_net_forward.91} parent=0 // pred_check_branch
    %445 = sbr.rel (0) target = $region17
  $region16: #{correspondence_net_forward.91} parent=0 // pred_region
    _
  $region17: #{correspondence_net_forward.91} parent=0 // pred_fallthru
    _
  // Predicated region
  $region18: #{correspondence_net_forward.91} parent=0 // pred_check
    _
  $region19: #{correspondence_net_forward.91} parent=0 // pred_check_branch
    %447 = sbr.rel (0) target = $region21
  $region20: #{correspondence_net_forward.91} parent=0 // pred_region
    _
  $region21: #{correspondence_net_forward.91} parent=0 // pred_fallthru
    _

// kernel: correspondence_net_forward.93
$region0: #{correspondence_net_forward.93}
  #allocation0 [shape = 'u32[]', space=smem, size = 0x4, offset = 0x4, fixed_abs, tag = 'smem constant byte address 0x4 - core index']
  #allocation1 [shape = 'u32[144,128]{1,0:T(1,128)}', space=vmem, size = 0x12000, scoped, tag = 'internal scratch']
  %s0 = inlined_call_operand.vmem [shape: bf16[32,640], index: 0, kind: input, shape index: {}]
  %s1 = inlined_call_operand.vmem [shape: bf16[640,128], index: 1, kind: input, shape index: {}]
  %s2 = inlined_call_operand.vmem [shape: f32[1,128], index: 2, kind: input, shape index: {}]
  %s3 = inlined_call_operand.vmem [shape: bf16[32,128], index: 3, kind: output, shape index: {}]
  %s4 = sld [smem:[#allocation0]]
  $region22: #{correspondence_net_forward.93} parent=0
    _
  %s6 = ssub.s32 1, %s4
  %s7 = scalar_select 0, %s6, %s4
  // Predicated region
  $region2: #{correspondence_net_forward.93} parent=0 // pred_check
    _
  $region3: #{correspondence_net_forward.93} parent=0 // pred_check_branch
    %9 = sbr.rel (0) target = $region5
  $region4: #{correspondence_net_forward.93} parent=0 // pred_region
    _
  $region5: #{correspondence_net_forward.93} parent=0 // pred_fallthru
    _
  // Predicated region
  $region6: #{correspondence_net_forward.93} parent=0 // pred_check
    _
  $region7: #{correspondence_net_forward.93} parent=0 // pred_check_branch
    %11 = sbr.rel (0) target = $region9
  $region8: #{correspondence_net_forward.93} parent=0 // pred_region
    _
  $region9: #{correspondence_net_forward.93} parent=0 // pred_fallthru
    _
  // Predicated region
  $region10: #{correspondence_net_forward.93} parent=0 // pred_check
    _
  $region11: #{correspondence_net_forward.93} parent=0 // pred_check_branch
    %13 = sbr.rel (0) target = $region13
  $region12: #{correspondence_net_forward.93} parent=0 // pred_region
    _
  $region13: #{correspondence_net_forward.93} parent=0 // pred_fallthru
    _
  %v15 = vld [vmem:[%s0] sm:$0xff]
  %v16 = vld [vmem:[%s0 + $0x8] sm:$0xff]
  %v17 = vld [vmem:[%s0 + $0x10] sm:$0xf]
  %v18 = vld [vmem:[%s0 + $0x14] sm:$0xff]
  %v19 = vld [vmem:[%s0 + $0x1c] sm:$0xff]
  %v20 = vld [vmem:[%s0 + $0x24] sm:$0xf]
  %v21 = vld [vmem:[%s0 + $0x28] sm:$0xff]
  %v22 = vld [vmem:[%s0 + $0x30] sm:$0xff]
  %v23 = vld [vmem:[%s0 + $0x38] sm:$0xf]
  %v24 = vld [vmem:[%s0 + $0x3c] sm:$0xff]
  %v25 = vld [vmem:[%s0 + $0x44] sm:$0xff]
  %v26 = vld [vmem:[%s0 + $0x4c] sm:$0xf]
  %v27 = vld [vmem:[%s1] sm:$0xf]
  %v28 = vld [vmem:[%s1 + $0x4] sm:$0xf]
  %v29 = vld [vmem:[%s1 + $0x8] sm:$0xf]
  %v30 = vld [vmem:[%s1 + $0xc] sm:$0xf]
  %v31 = vld [vmem:[%s1 + $0x10] sm:$0xf]
  %v32 = vld [vmem:[%s1 + $0x14] sm:$0xf]
  %v33 = vld [vmem:[%s1 + $0x18] sm:$0xf]
  %v34 = vld [vmem:[%s1 + $0x1c] sm:$0xf]
  %v35 = vld [vmem:[%s1 + $0x20] sm:$0xf]
  %v36 = vld [vmem:[%s1 + $0x24] sm:$0xf]
  %v37 = vld [vmem:[%s1 + $0x28] sm:$0xf]
  %v38 = vld [vmem:[%s1 + $0x2c] sm:$0xf]
  %v39 = vld [vmem:[%s1 + $0x30] sm:$0xf]
  %v40 = vld [vmem:[%s1 + $0x34] sm:$0xf]
  %v41 = vld [vmem:[%s1 + $0x38] sm:$0xf]
  %v42 = vld [vmem:[%s1 + $0x3c] sm:$0xf]
  %v43 = vld [vmem:[%s1 + $0x40] sm:$0xf]
  %v44 = vld [vmem:[%s1 + $0x44] sm:$0xf]
  %v45 = vld [vmem:[%s1 + $0x48] sm:$0xf]
  %v46 = vld [vmem:[%s1 + $0x4c] sm:$0xf]
  %v47 = vld [vmem:[%s1 + $0x50] sm:$0xf]
  %v48 = vld [vmem:[%s1 + $0x54] sm:$0xf]
  %v49 = vld [vmem:[%s1 + $0x58] sm:$0xf]
  %v50 = vld [vmem:[%s1 + $0x5c] sm:$0xf]
  %v51 = vld [vmem:[%s1 + $0x60] sm:$0xf]
  %v52 = vld [vmem:[%s1 + $0x64] sm:$0xf]
  %v53 = vld [vmem:[%s1 + $0x68] sm:$0xf]
  %v54 = vld [vmem:[%s1 + $0x6c] sm:$0xf]
  %v55 = vld [vmem:[%s1 + $0x70] sm:$0xf]
  %v56 = vld [vmem:[%s1 + $0x74] sm:$0xf]
  %v57 = vld [vmem:[%s1 + $0x78] sm:$0xf]
  %v58 = vld [vmem:[%s1 + $0x7c] sm:$0xf]
  %v59 = vld [vmem:[%s1 + $0x80] sm:$0xf]
  %v60 = vld [vmem:[%s1 + $0x84] sm:$0xf]
  %v61 = vld [vmem:[%s1 + $0x88] sm:$0xf]
  %v62 = vld [vmem:[%s1 + $0x8c] sm:$0xf]
  %v63 = vld [vmem:[%s1 + $0x90] sm:$0xf]
  %v64 = vld [vmem:[%s1 + $0x94] sm:$0xf]
  %v65 = vld [vmem:[%s1 + $0x98] sm:$0xf]
  %v66 = vld [vmem:[%s1 + $0x9c] sm:$0xf]
  %v67 = vld [vmem:[%s1 + $0xa0] sm:$0xf]
  %v68 = vld [vmem:[%s1 + $0xa4] sm:$0xf]
  %v69 = vld [vmem:[%s1 + $0xa8] sm:$0xf]
  %v70 = vld [vmem:[%s1 + $0xac] sm:$0xf]
  %v71 = vld [vmem:[%s1 + $0xb0] sm:$0xf]
  %v72 = vld [vmem:[%s1 + $0xb4] sm:$0xf]
  %v73 = vld [vmem:[%s1 + $0xb8] sm:$0xf]
  %v74 = vld [vmem:[%s1 + $0xbc] sm:$0xf]
  %v75 = vld [vmem:[%s1 + $0xc0] sm:$0xf]
  %v76 = vld [vmem:[%s1 + $0xc4] sm:$0xf]
  %v77 = vld [vmem:[%s1 + $0xc8] sm:$0xf]
  %v78 = vld [vmem:[%s1 + $0xcc] sm:$0xf]
  %v79 = vld [vmem:[%s1 + $0xd0] sm:$0xf]
  %v80 = vld [vmem:[%s1 + $0xd4] sm:$0xf]
  %v81 = vld [vmem:[%s1 + $0xd8] sm:$0xf]
  %v82 = vld [vmem:[%s1 + $0xdc] sm:$0xf]
  %v83 = vld [vmem:[%s1 + $0xe0] sm:$0xf]
  %v84 = vld [vmem:[%s1 + $0xe4] sm:$0xf]
  %v85 = vld [vmem:[%s1 + $0xe8] sm:$0xf]
  %v86 = vld [vmem:[%s1 + $0xec] sm:$0xf]
  %v87 = vld [vmem:[%s1 + $0xf0] sm:$0xf]
  %v88 = vld [vmem:[%s1 + $0xf4] sm:$0xf]
  %v89 = vld [vmem:[%s1 + $0xf8] sm:$0xf]
  %v90 = vld [vmem:[%s1 + $0xfc] sm:$0xf]
  %v91 = vld [vmem:[%s1 + $0x100] sm:$0xf]
  %v92 = vld [vmem:[%s1 + $0x104] sm:$0xf]
  %v93 = vld [vmem:[%s1 + $0x108] sm:$0xf]
  %v94 = vld [vmem:[%s1 + $0x10c] sm:$0xf]
  %v95 = vld [vmem:[%s1 + $0x110] sm:$0xf]
  %v96 = vld [vmem:[%s1 + $0x114] sm:$0xf]
  %v97 = vld [vmem:[%s1 + $0x118] sm:$0xf]
  %v98 = vld [vmem:[%s1 + $0x11c] sm:$0xf]
  %v99 = vld [vmem:[%s1 + $0x120] sm:$0xf]
  %v100 = vld [vmem:[%s1 + $0x124] sm:$0xf]
  %v101 = vld [vmem:[%s1 + $0x128] sm:$0xf]
  %v102 = vld [vmem:[%s1 + $0x12c] sm:$0xf]
  %v103 = vld [vmem:[%s1 + $0x130] sm:$0xf]
  %v104 = vld [vmem:[%s1 + $0x134] sm:$0xf]
  %v105 = vld [vmem:[%s1 + $0x138] sm:$0xf]
  %v106 = vld [vmem:[%s1 + $0x13c] sm:$0xf]
  %v107 = vld [vmem:[%s2] sm:$0x1]
  %v109 = vlaneseq
  %v110 = vshrl.u32 %v109, 7
  %v111 = vsub.s32 0, %v110
  %v112 = vrot.slane %v107, %v111
  %v126 = vunpack.c.l.b16 %v15
  %v127 = vunpack.c.h.b16 %v15
  %v128 = vunpack.c.l.b16 %v16
  %v129 = vunpack.c.h.b16 %v16
  %v130 = vunpack.c.l.b16 %v17
  %v131 = vunpack.c.l.b16 %v18
  %v132 = vunpack.c.h.b16 %v18
  %v133 = vunpack.c.l.b16 %v19
  %v134 = vunpack.c.h.b16 %v19
  %v135 = vunpack.c.l.b16 %v20
  %v136 = vunpack.c.l.b16 %v21
  %v137 = vunpack.c.h.b16 %v21
  %v138 = vunpack.c.l.b16 %v22
  %v139 = vunpack.c.h.b16 %v22
  %v140 = vunpack.c.l.b16 %v23
  %v141 = vunpack.c.l.b16 %v24
  %v142 = vunpack.c.h.b16 %v24
  %v143 = vunpack.c.l.b16 %v25
  %v144 = vunpack.c.h.b16 %v25
  %v145 = vunpack.c.l.b16 %v26
  %v146 = vpack.c.b16 %v131, %v126
  %v147 = vpack.c.b16 %v132, %v127
  %v148 = vpack.c.b16 %v133, %v128
  %v149 = vpack.c.b16 %v134, %v129
  %v150 = vpack.c.b16 %v135, %v130
  %v151 = vpack.c.b16 %v141, %v136
  %v152 = vpack.c.b16 %v142, %v137
  %v153 = vpack.c.b16 %v143, %v138
  %v154 = vpack.c.b16 %v144, %v139
  %v155 = vpack.c.b16 %v145, %v140
  %v246 = vunpack.c.l.b16 %v27
  %v247 = vunpack.c.l.b16 %v28
  %v248 = vunpack.c.l.b16 %v29
  %v249 = vunpack.c.l.b16 %v30
  %v250 = vunpack.c.l.b16 %v31
  %v251 = vunpack.c.l.b16 %v32
  %v252 = vunpack.c.l.b16 %v33
  %v253 = vunpack.c.l.b16 %v34
  %v254 = vunpack.c.l.b16 %v35
  %v255 = vunpack.c.l.b16 %v36
  %v256 = vunpack.c.l.b16 %v37
  %v257 = vunpack.c.l.b16 %v38
  %v258 = vunpack.c.l.b16 %v39
  %v259 = vunpack.c.l.b16 %v40
  %v260 = vunpack.c.l.b16 %v41
  %v261 = vunpack.c.l.b16 %v42
  %v262 = vunpack.c.l.b16 %v43
  %v263 = vunpack.c.l.b16 %v44
  %v264 = vunpack.c.l.b16 %v45
  %v265 = vunpack.c.l.b16 %v46
  %v266 = vunpack.c.l.b16 %v47
  %v267 = vunpack.c.l.b16 %v48
  %v268 = vunpack.c.l.b16 %v49
  %v269 = vunpack.c.l.b16 %v50
  %v270 = vunpack.c.l.b16 %v51
  %v271 = vunpack.c.l.b16 %v52
  %v272 = vunpack.c.l.b16 %v53
  %v273 = vunpack.c.l.b16 %v54
  %v274 = vunpack.c.l.b16 %v55
  %v275 = vunpack.c.l.b16 %v56
  %v276 = vunpack.c.l.b16 %v57
  %v277 = vunpack.c.l.b16 %v58
  %v278 = vunpack.c.l.b16 %v59
  %v279 = vunpack.c.l.b16 %v60
  %v280 = vunpack.c.l.b16 %v61
  %v281 = vunpack.c.l.b16 %v62
  %v282 = vunpack.c.l.b16 %v63
  %v283 = vunpack.c.l.b16 %v64
  %v284 = vunpack.c.l.b16 %v65
  %v285 = vunpack.c.l.b16 %v66
  %v286 = vunpack.c.l.b16 %v67
  %v287 = vunpack.c.l.b16 %v68
  %v288 = vunpack.c.l.b16 %v69
  %v289 = vunpack.c.l.b16 %v70
  %v290 = vunpack.c.l.b16 %v71
  %v291 = vunpack.c.l.b16 %v72
  %v292 = vunpack.c.l.b16 %v73
  %v293 = vunpack.c.l.b16 %v74
  %v294 = vunpack.c.l.b16 %v75
  %v295 = vunpack.c.l.b16 %v76
  %v296 = vunpack.c.l.b16 %v77
  %v297 = vunpack.c.l.b16 %v78
  %v298 = vunpack.c.l.b16 %v79
  %v299 = vunpack.c.l.b16 %v80
  %v300 = vunpack.c.l.b16 %v81
  %v301 = vunpack.c.l.b16 %v82
  %v302 = vunpack.c.l.b16 %v83
  %v303 = vunpack.c.l.b16 %v84
  %v304 = vunpack.c.l.b16 %v85
  %v305 = vunpack.c.l.b16 %v86
  %v306 = vunpack.c.l.b16 %v87
  %v307 = vunpack.c.l.b16 %v88
  %v308 = vunpack.c.l.b16 %v89
  %v309 = vunpack.c.l.b16 %v90
  %v310 = vunpack.c.l.b16 %v91
  %v311 = vunpack.c.l.b16 %v92
  %v312 = vunpack.c.l.b16 %v93
  %v313 = vunpack.c.l.b16 %v94
  %v314 = vunpack.c.l.b16 %v95
  %v315 = vunpack.c.l.b16 %v96
  %v316 = vunpack.c.l.b16 %v97
  %v317 = vunpack.c.l.b16 %v98
  %v318 = vunpack.c.l.b16 %v99
  %v319 = vunpack.c.l.b16 %v100
  %v320 = vunpack.c.l.b16 %v101
  %v321 = vunpack.c.l.b16 %v102
  %v322 = vunpack.c.l.b16 %v103
  %v323 = vunpack.c.l.b16 %v104
  %v324 = vunpack.c.l.b16 %v105
  %v325 = vunpack.c.l.b16 %v106
  %v326 = vpack.c.b16 %v247, %v246
  %v327 = vpack.c.b16 %v249, %v248
  %v328 = vpack.c.b16 %v251, %v250
  %v329 = vpack.c.b16 %v253, %v252
  %v330 = vpack.c.b16 %v255, %v254
  %v331 = vpack.c.b16 %v257, %v256
  %v332 = vpack.c.b16 %v259, %v258
  %v333 = vpack.c.b16 %v261, %v260
  %v334 = vpack.c.b16 %v263, %v262
  %v335 = vpack.c.b16 %v265, %v264
  %v336 = vpack.c.b16 %v267, %v266
  %v337 = vpack.c.b16 %v269, %v268
  %v338 = vpack.c.b16 %v271, %v270
  %v339 = vpack.c.b16 %v273, %v272
  %v340 = vpack.c.b16 %v275, %v274
  %v341 = vpack.c.b16 %v277, %v276
  %v342 = vpack.c.b16 %v279, %v278
  %v343 = vpack.c.b16 %v281, %v280
  %v344 = vpack.c.b16 %v283, %v282
  %v345 = vpack.c.b16 %v285, %v284
  %v346 = vpack.c.b16 %v287, %v286
  %v347 = vpack.c.b16 %v289, %v288
  %v348 = vpack.c.b16 %v291, %v290
  %v349 = vpack.c.b16 %v293, %v292
  %v350 = vpack.c.b16 %v295, %v294
  %v351 = vpack.c.b16 %v297, %v296
  %v352 = vpack.c.b16 %v299, %v298
  %v353 = vpack.c.b16 %v301, %v300
  %v354 = vpack.c.b16 %v303, %v302
  %v355 = vpack.c.b16 %v305, %v304
  %v356 = vpack.c.b16 %v307, %v306
  %v357 = vpack.c.b16 %v309, %v308
  %v358 = vpack.c.b16 %v311, %v310
  %v359 = vpack.c.b16 %v313, %v312
  %v360 = vpack.c.b16 %v315, %v314
  %v361 = vpack.c.b16 %v317, %v316
  %v362 = vpack.c.b16 %v319, %v318
  %v363 = vpack.c.b16 %v321, %v320
  %v364 = vpack.c.b16 %v323, %v322
  %v365 = vpack.c.b16 %v325, %v324
  %406 = vmatprep.subr.bf16.mxu0 0
  %407 = vmatpush1.bf16.msra.mxu0 %v326
  %408 = vmatprep.subr.bf16.mxu0 0
  %409 = vmatpush1.bf16.msra.mxu0 %v327
  %410 = vmatprep.subr.bf16.mxu0 0
  %411 = vmatpush1.bf16.msra.mxu0 %v328
  %412 = vmatprep.subr.bf16.mxu0 0
  %413 = vmatpush1.bf16.msra.mxu0 %v329
  %414 = vmatprep.subr.bf16.mxu0 0
  %415 = vmatpush1.bf16.msra.mxu0 %v330
  %416 = vmatprep.subr.bf16.mxu0 0
  %417 = vmatpush1.bf16.msra.mxu0 %v331
  %418 = vmatprep.subr.bf16.mxu0 0
  %419 = vmatpush1.bf16.msra.mxu0 %v332
  %420 = vmatprep.subr.bf16.mxu0 0
  %421 = vmatpush1.bf16.msra.mxu0 %v333
  %422 = vmatprep.subr.bf16.mxu0 0
  %423 = vmatpush1.bf16.msra.mxu0 %v334
  %424 = vmatprep.subr.bf16.mxu0 0
  %425 = vmatpush1.bf16.msra.mxu0 %v335
  %426 = vmatprep.subr.bf16.mxu0 0
  %427 = vmatpush1.bf16.msra.mxu0 %v336
  %428 = vmatprep.subr.bf16.mxu0 0
  %429 = vmatpush1.bf16.msra.mxu0 %v337
  %430 = vmatprep.subr.bf16.mxu0 0
  %431 = vmatpush1.bf16.msra.mxu0 %v338
  %432 = vmatprep.subr.bf16.mxu0 0
  %433 = vmatpush1.bf16.msra.mxu0 %v339
  %434 = vmatprep.subr.bf16.mxu0 0
  %435 = vmatpush1.bf16.msra.mxu0 %v340
  %436 = vmatprep.subr.bf16.mxu0 0
  %437 = vmatpush1.bf16.msra.mxu0 %v341
  %438 = vmatprep.mubr.bf16.mxu0 %v147
  %439 = vmatmul.mubr.bf16.gmra.mrb[0].mxu0 %v146
  %v440 = vpop.f32.mrb[0].mxu0
  %v441 = vadd.f32 %v112, %v440
  %v442 = vpop.f32.mrb[0].mxu0
  %v443 = vpop.f32.mrb[0].mxu0
  %v444 = vadd.f32 %v112, %v443
  %v445 = vpop.f32.mrb[0].mxu0
  %446 = vmatprep.mubr.bf16.mxu0 %v152
  %447 = vmatmul.mubr.bf16.gmra.mrb[0].mxu0 %v151
  %v448 = vpop.f32.mrb[0].mxu0
  %v449 = vadd.f32 %v112, %v448
  %v450 = vpop.f32.mrb[0].mxu0
  %v451 = vpop.f32.mrb[0].mxu0
  %v452 = vadd.f32 %v112, %v451
  %v453 = vpop.f32.mrb[0].mxu0
  %454 = vdwg.mxu0
  %455 = vmatprep.subr.bf16.mxu0 0
  %456 = vmatpush1.bf16.msra.mxu0 %v342
  %457 = vmatprep.subr.bf16.mxu0 0
  %458 = vmatpush1.bf16.msra.mxu0 %v343
  %459 = vmatprep.subr.bf16.mxu0 0
  %460 = vmatpush1.bf16.msra.mxu0 %v344
  %461 = vmatprep.subr.bf16.mxu0 0
  %462 = vmatpush1.bf16.msra.mxu0 %v345
  %463 = vmatprep.subr.bf16.mxu0 0
  %464 = vmatpush1.bf16.msra.mxu0 %v346
  %465 = vmatprep.subr.bf16.mxu0 0
  %466 = vmatpush1.bf16.msra.mxu0 %v347
  %467 = vmatprep.subr.bf16.mxu0 0
  %468 = vmatpush1.bf16.msra.mxu0 %v348
  %469 = vmatprep.subr.bf16.mxu0 0
  %470 = vmatpush1.bf16.msra.mxu0 %v349
  %471 = vmatprep.subr.bf16.mxu0 0
  %472 = vmatpush1.bf16.msra.mxu0 %v350
  %473 = vmatprep.subr.bf16.mxu0 0
  %474 = vmatpush1.bf16.msra.mxu0 %v351
  %475 = vmatprep.subr.bf16.mxu0 0
  %476 = vmatpush1.bf16.msra.mxu0 %v352
  %477 = vmatprep.subr.bf16.mxu0 0
  %478 = vmatpush1.bf16.msra.mxu0 %v353
  %479 = vmatprep.subr.bf16.mxu0 0
  %480 = vmatpush1.bf16.msra.mxu0 %v354
  %481 = vmatprep.subr.bf16.mxu0 0
  %482 = vmatpush1.bf16.msra.mxu0 %v355
  %483 = vmatprep.subr.bf16.mxu0 0
  %484 = vmatpush1.bf16.msra.mxu0 %v356
  %485 = vmatprep.subr.bf16.mxu0 0
  %486 = vmatpush1.bf16.msra.mxu0 %v357
  %487 = vmatprep.mubr.bf16.mxu0 %v149
  %488 = vmatmul.mubr.bf16.gmra.mrb[0].mxu0 %v148
  %v489 = vpop.f32.mrb[0].mxu0
  %v490 = vadd.f32 %v441, %v489
  %v491 = vpop.f32.mrb[0].mxu0
  %v492 = vpop.f32.mrb[0].mxu0
  %v493 = vadd.f32 %v444, %v492
  %v494 = vpop.f32.mrb[0].mxu0
  %495 = vmatprep.mubr.bf16.mxu0 %v154
  %496 = vmatmul.mubr.bf16.gmra.mrb[0].mxu0 %v153
  %v497 = vpop.f32.mrb[0].mxu0
  %v498 = vadd.f32 %v449, %v497
  %v499 = vpop.f32.mrb[0].mxu0
  %v500 = vpop.f32.mrb[0].mxu0
  %v501 = vadd.f32 %v452, %v500
  %v502 = vpop.f32.mrb[0].mxu0
  %503 = vdwg.mxu0
  %504 = vmatprep.subr.bf16.mxu0 0
  %505 = vmatpush1.bf16.msra.mxu0 %v358
  %506 = vmatprep.subr.bf16.mxu0 0
  %507 = vmatpush1.bf16.msra.mxu0 %v359
  %508 = vmatprep.subr.bf16.mxu0 0
  %509 = vmatpush1.bf16.msra.mxu0 %v360
  %510 = vmatprep.subr.bf16.mxu0 0
  %511 = vmatpush1.bf16.msra.mxu0 %v361
  %512 = vmatprep.subr.bf16.mxu0 0
  %513 = vmatpush1.bf16.msra.mxu0 %v362
  %514 = vmatprep.subr.bf16.mxu0 0
  %515 = vmatpush1.bf16.msra.mxu0 %v363
  %516 = vmatprep.subr.bf16.mxu0 0
  %517 = vmatpush1.bf16.msra.mxu0 %v364
  %518 = vmatprep.subr.bf16.mxu0 0
  %519 = vmatpush1.bf16.msra.mxu0 %v365
  %520 = vmatprep.subr.bf16.mxu0 0
  %521 = vmatpush1.bf16.msra.mxu0 0
  %522 = vmatprep.subr.bf16.mxu0 0
  %523 = vmatpush1.bf16.msra.mxu0 0
  %524 = vmatprep.subr.bf16.mxu0 0
  %525 = vmatpush1.bf16.msra.mxu0 0
  %526 = vmatprep.subr.bf16.mxu0 0
  %527 = vmatpush1.bf16.msra.mxu0 0
  %528 = vmatprep.subr.bf16.mxu0 0
  %529 = vmatpush1.bf16.msra.mxu0 0
  %530 = vmatprep.subr.bf16.mxu0 0
  %531 = vmatpush1.bf16.msra.mxu0 0
  %532 = vmatprep.subr.bf16.mxu0 0
  %533 = vmatpush1.bf16.msra.mxu0 0
  %534 = vmatprep.subr.bf16.mxu0 0
  %535 = vmatpush1.bf16.msra.mxu0 0
  %536 = vmatprep.mubr.bf16.mxu0 0
  %537 = vmatmul.mubr.bf16.gmra.mrb[0].mxu0 %v150
  %v538 = vpop.f32.mrb[0].mxu0
  %v539 = vadd.f32 %v490, %v538
  %v540 = vpop.f32.mrb[0].mxu0
  %v541 = vpop.f32.mrb[0].mxu0
  %v542 = vadd.f32 %v493, %v541
  %v543 = vpop.f32.mrb[0].mxu0
  %544 = vmatprep.mubr.bf16.mxu0 0
  %545 = vmatmul.mubr.bf16.gmra.mrb[0].mxu0 %v155
  %v546 = vpop.f32.mrb[0].mxu0
  %v547 = vadd.f32 %v498, %v546
  %v548 = vpop.f32.mrb[0].mxu0
  %v549 = vpop.f32.mrb[0].mxu0
  %v550 = vadd.f32 %v501, %v549
  %v551 = vpop.f32.mrb[0].mxu0
  %552 = vdwg.mxu0
  %v553 = vpack.c.bf16 %v542, %v539
  %v554 = vpack.c.bf16 %v550, %v547
  %v557 = vunpack.c.l.b16 %v553
  %v558 = vunpack.c.h.b16 %v553
  %v559 = vunpack.c.l.b16 %v554
  %v560 = vunpack.c.h.b16 %v554
  %v561 = vpack.c.b16 %v557, %v557
  %v562 = vpack.c.b16 %v558, %v558
  %v563 = vpack.c.b16 %v559, %v559
  %v564 = vpack.c.b16 %v560, %v560
  %569 = vst [vmem:[%s3] sm:$0xf] %v561
  %570 = vst [vmem:[%s3 + $0x4] sm:$0xf] %v562
  %571 = vst [vmem:[%s3 + $0x8] sm:$0xf] %v563
  %572 = vst [vmem:[%s3 + $0xc] sm:$0xf] %v564
  // Predicated region
  $region14: #{correspondence_net_forward.93} parent=0 // pred_check
    _
  $region15: #{correspondence_net_forward.93} parent=0 // pred_check_branch
    %574 = sbr.rel (0) target = $region17
  $region16: #{correspondence_net_forward.93} parent=0 // pred_region
    _
  $region17: #{correspondence_net_forward.93} parent=0 // pred_fallthru
    _
  // Predicated region
  $region18: #{correspondence_net_forward.93} parent=0 // pred_check
    _
  $region19: #{correspondence_net_forward.93} parent=0 // pred_check_branch
    %576 = sbr.rel (0) target = $region21
  $region20: #{correspondence_net_forward.93} parent=0 // pred_region
    _
  $region21: #{correspondence_net_forward.93} parent=0 // pred_fallthru
    _

// kernel: correspondence_net_forward.96
$region0: #{correspondence_net_forward.96}
  #allocation0 [shape = 'u32[]', space=smem, size = 0x4, offset = 0x4, fixed_abs, tag = 'smem constant byte address 0x4 - core index']
  #allocation1 [shape = 'u32[144,128]{1,0:T(1,128)}', space=vmem, size = 0x12000, scoped, tag = 'internal scratch']
  %s0 = inlined_call_operand.vmem [shape: bf16[2,4,64], index: 0, kind: input, shape index: {}]
  %s1 = inlined_call_operand.vmem [shape: bf16[2,4,64], index: 1, kind: output, shape index: {}]
  %s2 = sld [smem:[#allocation0]]
  $region37: #{correspondence_net_forward.96} parent=0
    _
  %s4 = ssub.s32 1, %s2
  %s5 = scalar_select 0, %s4, %s2
  loop: start=0, step=1, limit=4
  $region2: #{correspondence_net_forward.96} parent=0 // loop_pre_header
    _
  $region3: #{correspondence_net_forward.96} parent=0 // loop_header
    %s7 = sphi 0, %s11
    %p8 = scmp.ge.s32.totalorder %s7, 4
    %s17 = sphi 0, %s19
    %s20 = sphi 0, %s17
    %s21 = sphi 0, %s20
    %s37 = sphi 0, %s21
    %s43 = sphi 0, %s45
    %s46 = sphi 0, %s43
    %s47 = sphi 0, %s46
    %s63 = sphi 0, %s47
  $region4: #{correspondence_net_forward.96} parent=0 // loop_header_branch
    %10 = sbr.rel (%p8) target = $region8
  $region5: #{correspondence_net_forward.96} parent=0 // loop_body
    %s12 = ssub.s32 %s7, 1
    %s13 = ssub.s32 %s7, 2
    %s14 = sadd.s32 %s7, 1
    %s15 = ssub.s32 %s7, %s14
    %p16 = scmp.eq.s32.totalorder %s15, 0
    %s18 = sadd.s32 %s17, 1
    %s19 = scalar_select %p16, %s17, %s18
    %p22 = pneg %p16
    %p23 = scmp.eq.s32.totalorder %s7, 1
    %p24 = por %p22, %p23
    %p25 = scmp.ne.s32.totalorder %s17, %s20
    %p26 = scmp.eq.s32.totalorder %s7, 0
    %p27 = por %p25, %p26
    %p28 = scmp.ne.s32.totalorder %s17, %s20
    %p29 = scmp.eq.s32.totalorder %s12, 1
    %p30 = por %p28, %p29
    %p31 = scmp.ne.s32.totalorder %s20, %s21
    %p32 = scmp.eq.s32.totalorder %s12, 0
    %p33 = por %p31, %p32
    %p34 = scmp.ne.s32.totalorder %s20, %s21
    %p35 = scmp.eq.s32.totalorder %s13, 1
    %p36 = por %p34, %p35
    %p38 = scmp.ne.s32.totalorder %s21, %s37
    %p39 = scmp.eq.s32.totalorder %s13, 0
    %p40 = por %p38, %p39
    %s41 = ssub.s32 %s7, %s14
    %p42 = scmp.eq.s32.totalorder %s41, 0
    %s44 = sadd.s32 %s43, 1
    %s45 = scalar_select %p42, %s43, %s44
    %p48 = pneg %p42
    %p49 = scmp.eq.s32.totalorder %s7, 1
    %p50 = por %p48, %p49
    %p51 = scmp.ne.s32.totalorder %s43, %s46
    %p52 = scmp.eq.s32.totalorder %s7, 0
    %p53 = por %p51, %p52
    %p54 = scmp.ne.s32.totalorder %s43, %s46
    %p55 = scmp.eq.s32.totalorder %s12, 1
    %p56 = por %p54, %p55
    %p57 = scmp.ne.s32.totalorder %s46, %s47
    %p58 = scmp.eq.s32.totalorder %s12, 0
    %p59 = por %p57, %p58
    %p60 = scmp.ne.s32.totalorder %s46, %s47
    %p61 = scmp.eq.s32.totalorder %s13, 1
    %p62 = por %p60, %p61
    %p64 = scmp.ne.s32.totalorder %s47, %s63
    %p65 = scmp.eq.s32.totalorder %s13, 0
    %p66 = por %p64, %p65
    %p67 = scmp.le.s32.totalorder 1, %s7
    %p68 = scmp.lt.s32.totalorder %s7, 3
    %p69 = pnand %p67, %p68
    %p70 = pneg %p69
    // Predicated region
    $region9: #{correspondence_net_forward.96} parent=5 // pred_check
      _
    $region10: #{correspondence_net_forward.96} parent=5 // pred_check_branch
      %72 = sbr.rel (%p69) target = $region12
    $region11: #{correspondence_net_forward.96} parent=5 // pred_region
      %s73 = ssub.s32 %s7, 1
    $region12: #{correspondence_net_forward.96} parent=5 // pred_fallthru
      _
    %p74 = scmp.lt.s32.totalorder %s7, 2
    // Predicated region
    $region13: #{correspondence_net_forward.96} parent=5 // pred_check
      %p75 = pneg %p74
    $region14: #{correspondence_net_forward.96} parent=5 // pred_check_branch
      %77 = sbr.rel (%p75) target = $region16
    $region15: #{correspondence_net_forward.96} parent=5 // pred_region
      // Predicated region
      $region17: #{correspondence_net_forward.96} parent=15 // pred_check
        %p78 = pneg %p27
      $region18: #{correspondence_net_forward.96} parent=15 // pred_check_branch
        %80 = sbr.rel (%p78) target = $region20
      $region19: #{correspondence_net_forward.96} parent=15 // pred_region
        %p81 = scmp.lt.s32.totalorder %s7, 1
        %s82 = scalar_select %p81, %s7, 1
        %s83 = smul.addr %s82, 2
        %s84 = scalar_lea.vmem %s0, %s83
      $region20: #{correspondence_net_forward.96} parent=15 // pred_fallthru
        _
    $region16: #{correspondence_net_forward.96} parent=5 // pred_fallthru
      _
    %p85 = scmp.le.s32.totalorder 1, %s7
    %p86 = scmp.lt.s32.totalorder %s7, 3
    %p87 = pnand %p85, %p86
    %p88 = pneg %p87
    // Predicated region
    $region21: #{correspondence_net_forward.96} parent=5 // pred_check
      _
    $region22: #{correspondence_net_forward.96} parent=5 // pred_check_branch
      %90 = sbr.rel (%p87) target = $region24
    $region23: #{correspondence_net_forward.96} parent=5 // pred_region
      %s91 = ssub.s32 %s7, 1
      %p92 = scmp.lt.s32.totalorder %s12, 1
      %s93 = scalar_select %p92, %s12, 1
      %s94 = smul.addr %s93, 2
      %s95 = scalar_lea.vmem %s0, %s94
      %p96 = pneg %p33
      %p97 = pneg %p30
      %p98 = pneg %p59
      %p99 = pneg %p56
      %p100 = scmp.lt.s32.totalorder %s12, 1
      %s101 = scalar_select %p100, %s12, 1
      %s102 = smul.addr %s101, 2
      %s103 = scalar_lea.vmem %s1, %s102
      %p104 = scmp.lt.s32.totalorder %s12, 1
      %s105 = scalar_select %p104, %s12, 1
      %s106 = smul.addr %s105, 2
      %s107 = scalar_lea.vmem %s0, %s106
      %p108 = scmp.lt.s32.totalorder %s12, 1
      %s109 = scalar_select %p108, %s12, 1
      %s110 = smul.addr %s109, 2
      %s111 = scalar_lea.vmem %s1, %s110
      %v112 = vld [vmem:[%s107] sm:$0x3]
      %v113 = vunpack.c.l.bf16 %v112
      %vm114 = vcmask 519168
      %v115 = vsel %vm114, %v113, 0.0
      %v116 = vrot.slane %v115, 4
      %v117 = vadd.f32 %v115, %v116
      %v118 = vrot.slane %v117, 2
      %v119 = vadd.f32 %v117, %v118
      %v120 = vrot.slane %v119, 1
      %v121 = vadd.f32 %v119, %v120
      %v122 = vrcp.pop 4.0
      %v123 = vmul.f32 %v121, %v122
      %v124 = vsub.f32 %v113, %v123
      %v125 = vmul.f32 %v124, %v124
      %v126 = vsel %vm114, %v125, 0.0
      %v127 = vrot.slane %v126, 4
      %v128 = vadd.f32 %v126, %v127
      %v129 = vrot.slane %v128, 2
      %v130 = vadd.f32 %v128, %v129
      %v131 = vrot.slane %v130, 1
      %v132 = vadd.f32 %v130, %v131
      %v133 = vmul.f32 %v132, %v122
      %v134 = vadd.f32 %v133, 1e-05
      %v135 = vrsqrt.pop %v134
      %v136 = vmul.f32 %v124, %v135
      %vm137 = vcmp.ge.f32.partialorder %v136, 0.0
      %v138 = vmul.f32 %v136, 0.2
      %v139 = vsel %vm137, %v136, %v138
      %v140 = vpack.c.bf16 %v139, %v139
      %vm141 = vcmask 517120
      %142 = vst.msk [vmem:[%s111] sm:$0x3] %vm141, %v140
      %p143 = scmp.lt.s32.totalorder %s12, 1
      %s144 = scalar_select %p143, %s12, 1
      %s145 = smul.addr %s144, 2
      %s146 = scalar_lea.vmem %s1, %s145
      // Predicated region
      $region25: #{correspondence_net_forward.96} parent=23 // pred_check
        %p147 = pneg %p56
      $region26: #{correspondence_net_forward.96} parent=23 // pred_check_branch
        %149 = sbr.rel (%p147) target = $region28
      $region27: #{correspondence_net_forward.96} parent=23 // pred_region
        _
      $region28: #{correspondence_net_forward.96} parent=23 // pred_fallthru
        _
    $region24: #{correspondence_net_forward.96} parent=5 // pred_fallthru
      _
    %p150 = scmp.le.s32.totalorder 2, %s7
    // Predicated region
    $region29: #{correspondence_net_forward.96} parent=5 // pred_check
      %p151 = pneg %p150
    $region30: #{correspondence_net_forward.96} parent=5 // pred_check_branch
      %153 = sbr.rel (%p151) target = $region32
    $region31: #{correspondence_net_forward.96} parent=5 // pred_region
      %s154 = ssub.s32 %s7, 2
      // Predicated region
      $region33: #{correspondence_net_forward.96} parent=31 // pred_check
        %p155 = pneg %p62
      $region34: #{correspondence_net_forward.96} parent=31 // pred_check_branch
        %157 = sbr.rel (%p155) target = $region36
      $region35: #{correspondence_net_forward.96} parent=31 // pred_region
        %p158 = scmp.lt.s32.totalorder %s13, 1
        %s159 = scalar_select %p158, %s13, 1
        %s160 = smul.addr %s159, 2
        %s161 = scalar_lea.vmem %s1, %s160
      $region36: #{correspondence_net_forward.96} parent=31 // pred_fallthru
        _
    $region32: #{correspondence_net_forward.96} parent=5 // pred_fallthru
      _
  $region6: #{correspondence_net_forward.96} parent=0 // loop_footer
    %s11 = sadd.s32 1, %s7
  $region7: #{correspondence_net_forward.96} parent=0 // loop_footer_branch
    %6 = sbr.rel target = $region3
  $region8: #{correspondence_net_forward.96} parent=0 // loop_exit
    _

// kernel: correspondence_net_forward.97
$region0: #{correspondence_net_forward.97}
  #allocation0 [shape = 'u32[]', space=smem, size = 0x4, offset = 0x4, fixed_abs, tag = 'smem constant byte address 0x4 - core index']
  #allocation1 [shape = 'u32[144,128]{1,0:T(1,128)}', space=vmem, size = 0x12000, scoped, tag = 'internal scratch']
  %s0 = inlined_call_operand.vmem [shape: bf16[8,640], index: 0, kind: input, shape index: {}]
  %s1 = inlined_call_operand.vmem [shape: bf16[640,128], index: 1, kind: input, shape index: {}]
  %s2 = inlined_call_operand.vmem [shape: f32[1,128], index: 2, kind: input, shape index: {}]
  %s3 = inlined_call_operand.vmem [shape: bf16[8,128], index: 3, kind: output, shape index: {}]
  %s4 = sld [smem:[#allocation0]]
  $region22: #{correspondence_net_forward.97} parent=0
    _
  %s6 = ssub.s32 1, %s4
  %s7 = scalar_select 0, %s6, %s4
  // Predicated region
  $region2: #{correspondence_net_forward.97} parent=0 // pred_check
    _
  $region3: #{correspondence_net_forward.97} parent=0 // pred_check_branch
    %9 = sbr.rel (0) target = $region5
  $region4: #{correspondence_net_forward.97} parent=0 // pred_region
    _
  $region5: #{correspondence_net_forward.97} parent=0 // pred_fallthru
    _
  // Predicated region
  $region6: #{correspondence_net_forward.97} parent=0 // pred_check
    _
  $region7: #{correspondence_net_forward.97} parent=0 // pred_check_branch
    %11 = sbr.rel (0) target = $region9
  $region8: #{correspondence_net_forward.97} parent=0 // pred_region
    _
  $region9: #{correspondence_net_forward.97} parent=0 // pred_fallthru
    _
  // Predicated region
  $region10: #{correspondence_net_forward.97} parent=0 // pred_check
    _
  $region11: #{correspondence_net_forward.97} parent=0 // pred_check_branch
    %13 = sbr.rel (0) target = $region13
  $region12: #{correspondence_net_forward.97} parent=0 // pred_region
    _
  $region13: #{correspondence_net_forward.97} parent=0 // pred_fallthru
    _
  %v15 = vld [vmem:[%s0] sm:$0xff]
  %v16 = vld [vmem:[%s0 + $0x8] sm:$0xff]
  %v17 = vld [vmem:[%s0 + $0x10] sm:$0xf]
  %v18 = vld [vmem:[%s1] sm:$0xf]
  %v19 = vld [vmem:[%s1 + $0x4] sm:$0xf]
  %v20 = vld [vmem:[%s1 + $0x8] sm:$0xf]
  %v21 = vld [vmem:[%s1 + $0xc] sm:$0xf]
  %v22 = vld [vmem:[%s1 + $0x10] sm:$0xf]
  %v23 = vld [vmem:[%s1 + $0x14] sm:$0xf]
  %v24 = vld [vmem:[%s1 + $0x18] sm:$0xf]
  %v25 = vld [vmem:[%s1 + $0x1c] sm:$0xf]
  %v26 = vld [vmem:[%s1 + $0x20] sm:$0xf]
  %v27 = vld [vmem:[%s1 + $0x24] sm:$0xf]
  %v28 = vld [vmem:[%s1 + $0x28] sm:$0xf]
  %v29 = vld [vmem:[%s1 + $0x2c] sm:$0xf]
  %v30 = vld [vmem:[%s1 + $0x30] sm:$0xf]
  %v31 = vld [vmem:[%s1 + $0x34] sm:$0xf]
  %v32 = vld [vmem:[%s1 + $0x38] sm:$0xf]
  %v33 = vld [vmem:[%s1 + $0x3c] sm:$0xf]
  %v34 = vld [vmem:[%s1 + $0x40] sm:$0xf]
  %v35 = vld [vmem:[%s1 + $0x44] sm:$0xf]
  %v36 = vld [vmem:[%s1 + $0x48] sm:$0xf]
  %v37 = vld [vmem:[%s1 + $0x4c] sm:$0xf]
  %v38 = vld [vmem:[%s1 + $0x50] sm:$0xf]
  %v39 = vld [vmem:[%s1 + $0x54] sm:$0xf]
  %v40 = vld [vmem:[%s1 + $0x58] sm:$0xf]
  %v41 = vld [vmem:[%s1 + $0x5c] sm:$0xf]
  %v42 = vld [vmem:[%s1 + $0x60] sm:$0xf]
  %v43 = vld [vmem:[%s1 + $0x64] sm:$0xf]
  %v44 = vld [vmem:[%s1 + $0x68] sm:$0xf]
  %v45 = vld [vmem:[%s1 + $0x6c] sm:$0xf]
  %v46 = vld [vmem:[%s1 + $0x70] sm:$0xf]
  %v47 = vld [vmem:[%s1 + $0x74] sm:$0xf]
  %v48 = vld [vmem:[%s1 + $0x78] sm:$0xf]
  %v49 = vld [vmem:[%s1 + $0x7c] sm:$0xf]
  %v50 = vld [vmem:[%s1 + $0x80] sm:$0xf]
  %v51 = vld [vmem:[%s1 + $0x84] sm:$0xf]
  %v52 = vld [vmem:[%s1 + $0x88] sm:$0xf]
  %v53 = vld [vmem:[%s1 + $0x8c] sm:$0xf]
  %v54 = vld [vmem:[%s1 + $0x90] sm:$0xf]
  %v55 = vld [vmem:[%s1 + $0x94] sm:$0xf]
  %v56 = vld [vmem:[%s1 + $0x98] sm:$0xf]
  %v57 = vld [vmem:[%s1 + $0x9c] sm:$0xf]
  %v58 = vld [vmem:[%s1 + $0xa0] sm:$0xf]
  %v59 = vld [vmem:[%s1 + $0xa4] sm:$0xf]
  %v60 = vld [vmem:[%s1 + $0xa8] sm:$0xf]
  %v61 = vld [vmem:[%s1 + $0xac] sm:$0xf]
  %v62 = vld [vmem:[%s1 + $0xb0] sm:$0xf]
  %v63 = vld [vmem:[%s1 + $0xb4] sm:$0xf]
  %v64 = vld [vmem:[%s1 + $0xb8] sm:$0xf]
  %v65 = vld [vmem:[%s1 + $0xbc] sm:$0xf]
  %v66 = vld [vmem:[%s1 + $0xc0] sm:$0xf]
  %v67 = vld [vmem:[%s1 + $0xc4] sm:$0xf]
  %v68 = vld [vmem:[%s1 + $0xc8] sm:$0xf]
  %v69 = vld [vmem:[%s1 + $0xcc] sm:$0xf]
  %v70 = vld [vmem:[%s1 + $0xd0] sm:$0xf]
  %v71 = vld [vmem:[%s1 + $0xd4] sm:$0xf]
  %v72 = vld [vmem:[%s1 + $0xd8] sm:$0xf]
  %v73 = vld [vmem:[%s1 + $0xdc] sm:$0xf]
  %v74 = vld [vmem:[%s1 + $0xe0] sm:$0xf]
  %v75 = vld [vmem:[%s1 + $0xe4] sm:$0xf]
  %v76 = vld [vmem:[%s1 + $0xe8] sm:$0xf]
  %v77 = vld [vmem:[%s1 + $0xec] sm:$0xf]
  %v78 = vld [vmem:[%s1 + $0xf0] sm:$0xf]
  %v79 = vld [vmem:[%s1 + $0xf4] sm:$0xf]
  %v80 = vld [vmem:[%s1 + $0xf8] sm:$0xf]
  %v81 = vld [vmem:[%s1 + $0xfc] sm:$0xf]
  %v82 = vld [vmem:[%s1 + $0x100] sm:$0xf]
  %v83 = vld [vmem:[%s1 + $0x104] sm:$0xf]
  %v84 = vld [vmem:[%s1 + $0x108] sm:$0xf]
  %v85 = vld [vmem:[%s1 + $0x10c] sm:$0xf]
  %v86 = vld [vmem:[%s1 + $0x110] sm:$0xf]
  %v87 = vld [vmem:[%s1 + $0x114] sm:$0xf]
  %v88 = vld [vmem:[%s1 + $0x118] sm:$0xf]
  %v89 = vld [vmem:[%s1 + $0x11c] sm:$0xf]
  %v90 = vld [vmem:[%s1 + $0x120] sm:$0xf]
  %v91 = vld [vmem:[%s1 + $0x124] sm:$0xf]
  %v92 = vld [vmem:[%s1 + $0x128] sm:$0xf]
  %v93 = vld [vmem:[%s1 + $0x12c] sm:$0xf]
  %v94 = vld [vmem:[%s1 + $0x130] sm:$0xf]
  %v95 = vld [vmem:[%s1 + $0x134] sm:$0xf]
  %v96 = vld [vmem:[%s1 + $0x138] sm:$0xf]
  %v97 = vld [vmem:[%s1 + $0x13c] sm:$0xf]
  %v98 = vld [vmem:[%s2] sm:$0x1]
  %v100 = vlaneseq
  %v101 = vshrl.u32 %v100, 7
  %v102 = vsub.s32 0, %v101
  %v103 = vrot.slane %v98, %v102
  %v108 = vunpack.c.l.b16 %v15
  %v109 = vunpack.c.h.b16 %v15
  %v110 = vunpack.c.l.b16 %v16
  %v111 = vunpack.c.h.b16 %v16
  %v112 = vunpack.c.l.b16 %v17
  %v113 = vpack.c.b16 %v108, %v108
  %v114 = vpack.c.b16 %v109, %v109
  %v115 = vpack.c.b16 %v110, %v110
  %v116 = vpack.c.b16 %v111, %v111
  %v117 = vpack.c.b16 %v112, %v112
  %v203 = vunpack.c.l.b16 %v18
  %v204 = vunpack.c.l.b16 %v19
  %v205 = vunpack.c.l.b16 %v20
  %v206 = vunpack.c.l.b16 %v21
  %v207 = vunpack.c.l.b16 %v22
  %v208 = vunpack.c.l.b16 %v23
  %v209 = vunpack.c.l.b16 %v24
  %v210 = vunpack.c.l.b16 %v25
  %v211 = vunpack.c.l.b16 %v26
  %v212 = vunpack.c.l.b16 %v27
  %v213 = vunpack.c.l.b16 %v28
  %v214 = vunpack.c.l.b16 %v29
  %v215 = vunpack.c.l.b16 %v30
  %v216 = vunpack.c.l.b16 %v31
  %v217 = vunpack.c.l.b16 %v32
  %v218 = vunpack.c.l.b16 %v33
  %v219 = vunpack.c.l.b16 %v34
  %v220 = vunpack.c.l.b16 %v35
  %v221 = vunpack.c.l.b16 %v36
  %v222 = vunpack.c.l.b16 %v37
  %v223 = vunpack.c.l.b16 %v38
  %v224 = vunpack.c.l.b16 %v39
  %v225 = vunpack.c.l.b16 %v40
  %v226 = vunpack.c.l.b16 %v41
  %v227 = vunpack.c.l.b16 %v42
  %v228 = vunpack.c.l.b16 %v43
  %v229 = vunpack.c.l.b16 %v44
  %v230 = vunpack.c.l.b16 %v45
  %v231 = vunpack.c.l.b16 %v46
  %v232 = vunpack.c.l.b16 %v47
  %v233 = vunpack.c.l.b16 %v48
  %v234 = vunpack.c.l.b16 %v49
  %v235 = vunpack.c.l.b16 %v50
  %v236 = vunpack.c.l.b16 %v51
  %v237 = vunpack.c.l.b16 %v52
  %v238 = vunpack.c.l.b16 %v53
  %v239 = vunpack.c.l.b16 %v54
  %v240 = vunpack.c.l.b16 %v55
  %v241 = vunpack.c.l.b16 %v56
  %v242 = vunpack.c.l.b16 %v57
  %v243 = vunpack.c.l.b16 %v58
  %v244 = vunpack.c.l.b16 %v59
  %v245 = vunpack.c.l.b16 %v60
  %v246 = vunpack.c.l.b16 %v61
  %v247 = vunpack.c.l.b16 %v62
  %v248 = vunpack.c.l.b16 %v63
  %v249 = vunpack.c.l.b16 %v64
  %v250 = vunpack.c.l.b16 %v65
  %v251 = vunpack.c.l.b16 %v66
  %v252 = vunpack.c.l.b16 %v67
  %v253 = vunpack.c.l.b16 %v68
  %v254 = vunpack.c.l.b16 %v69
  %v255 = vunpack.c.l.b16 %v70
  %v256 = vunpack.c.l.b16 %v71
  %v257 = vunpack.c.l.b16 %v72
  %v258 = vunpack.c.l.b16 %v73
  %v259 = vunpack.c.l.b16 %v74
  %v260 = vunpack.c.l.b16 %v75
  %v261 = vunpack.c.l.b16 %v76
  %v262 = vunpack.c.l.b16 %v77
  %v263 = vunpack.c.l.b16 %v78
  %v264 = vunpack.c.l.b16 %v79
  %v265 = vunpack.c.l.b16 %v80
  %v266 = vunpack.c.l.b16 %v81
  %v267 = vunpack.c.l.b16 %v82
  %v268 = vunpack.c.l.b16 %v83
  %v269 = vunpack.c.l.b16 %v84
  %v270 = vunpack.c.l.b16 %v85
  %v271 = vunpack.c.l.b16 %v86
  %v272 = vunpack.c.l.b16 %v87
  %v273 = vunpack.c.l.b16 %v88
  %v274 = vunpack.c.l.b16 %v89
  %v275 = vunpack.c.l.b16 %v90
  %v276 = vunpack.c.l.b16 %v91
  %v277 = vunpack.c.l.b16 %v92
  %v278 = vunpack.c.l.b16 %v93
  %v279 = vunpack.c.l.b16 %v94
  %v280 = vunpack.c.l.b16 %v95
  %v281 = vunpack.c.l.b16 %v96
  %v282 = vunpack.c.l.b16 %v97
  %v283 = vpack.c.b16 %v204, %v203
  %v284 = vpack.c.b16 %v206, %v205
  %v285 = vpack.c.b16 %v208, %v207
  %v286 = vpack.c.b16 %v210, %v209
  %v287 = vpack.c.b16 %v212, %v211
  %v288 = vpack.c.b16 %v214, %v213
  %v289 = vpack.c.b16 %v216, %v215
  %v290 = vpack.c.b16 %v218, %v217
  %v291 = vpack.c.b16 %v220, %v219
  %v292 = vpack.c.b16 %v222, %v221
  %v293 = vpack.c.b16 %v224, %v223
  %v294 = vpack.c.b16 %v226, %v225
  %v295 = vpack.c.b16 %v228, %v227
  %v296 = vpack.c.b16 %v230, %v229
  %v297 = vpack.c.b16 %v232, %v231
  %v298 = vpack.c.b16 %v234, %v233
  %v299 = vpack.c.b16 %v236, %v235
  %v300 = vpack.c.b16 %v238, %v237
  %v301 = vpack.c.b16 %v240, %v239
  %v302 = vpack.c.b16 %v242, %v241
  %v303 = vpack.c.b16 %v244, %v243
  %v304 = vpack.c.b16 %v246, %v245
  %v305 = vpack.c.b16 %v248, %v247
  %v306 = vpack.c.b16 %v250, %v249
  %v307 = vpack.c.b16 %v252, %v251
  %v308 = vpack.c.b16 %v254, %v253
  %v309 = vpack.c.b16 %v256, %v255
  %v310 = vpack.c.b16 %v258, %v257
  %v311 = vpack.c.b16 %v260, %v259
  %v312 = vpack.c.b16 %v262, %v261
  %v313 = vpack.c.b16 %v264, %v263
  %v314 = vpack.c.b16 %v266, %v265
  %v315 = vpack.c.b16 %v268, %v267
  %v316 = vpack.c.b16 %v270, %v269
  %v317 = vpack.c.b16 %v272, %v271
  %v318 = vpack.c.b16 %v274, %v273
  %v319 = vpack.c.b16 %v276, %v275
  %v320 = vpack.c.b16 %v278, %v277
  %v321 = vpack.c.b16 %v280, %v279
  %v322 = vpack.c.b16 %v282, %v281
  %363 = vmatprep.subr.bf16.mxu0 0
  %364 = vmatpush1.bf16.msra.mxu0 %v283
  %365 = vmatprep.subr.bf16.mxu0 0
  %366 = vmatpush1.bf16.msra.mxu0 %v284
  %367 = vmatprep.subr.bf16.mxu0 0
  %368 = vmatpush1.bf16.msra.mxu0 %v285
  %369 = vmatprep.subr.bf16.mxu0 0
  %370 = vmatpush1.bf16.msra.mxu0 %v286
  %371 = vmatprep.subr.bf16.mxu0 0
  %372 = vmatpush1.bf16.msra.mxu0 %v287
  %373 = vmatprep.subr.bf16.mxu0 0
  %374 = vmatpush1.bf16.msra.mxu0 %v288
  %375 = vmatprep.subr.bf16.mxu0 0
  %376 = vmatpush1.bf16.msra.mxu0 %v289
  %377 = vmatprep.subr.bf16.mxu0 0
  %378 = vmatpush1.bf16.msra.mxu0 %v290
  %379 = vmatprep.subr.bf16.mxu0 0
  %380 = vmatpush1.bf16.msra.mxu0 %v291
  %381 = vmatprep.subr.bf16.mxu0 0
  %382 = vmatpush1.bf16.msra.mxu0 %v292
  %383 = vmatprep.subr.bf16.mxu0 0
  %384 = vmatpush1.bf16.msra.mxu0 %v293
  %385 = vmatprep.subr.bf16.mxu0 0
  %386 = vmatpush1.bf16.msra.mxu0 %v294
  %387 = vmatprep.subr.bf16.mxu0 0
  %388 = vmatpush1.bf16.msra.mxu0 %v295
  %389 = vmatprep.subr.bf16.mxu0 0
  %390 = vmatpush1.bf16.msra.mxu0 %v296
  %391 = vmatprep.subr.bf16.mxu0 0
  %392 = vmatpush1.bf16.msra.mxu0 %v297
  %393 = vmatprep.subr.bf16.mxu0 0
  %394 = vmatpush1.bf16.msra.mxu0 %v298
  %395 = vmatprep.mubr.bf16.mxu0 %v114
  %396 = vmatmul.mubr.bf16.gmra.mrb[0].mxu0 %v113
  %v397 = vpop.f32.mrb[0].mxu0
  %v398 = vadd.f32 %v103, %v397
  %v399 = vpop.f32.mrb[0].mxu0
  %v400 = vpop.f32.mrb[0].mxu0
  %v401 = vpop.f32.mrb[0].mxu0
  %402 = vdwg.mxu0
  %403 = vmatprep.subr.bf16.mxu0 0
  %404 = vmatpush1.bf16.msra.mxu0 %v299
  %405 = vmatprep.subr.bf16.mxu0 0
  %406 = vmatpush1.bf16.msra.mxu0 %v300
  %407 = vmatprep.subr.bf16.mxu0 0
  %408 = vmatpush1.bf16.msra.mxu0 %v301
  %409 = vmatprep.subr.bf16.mxu0 0
  %410 = vmatpush1.bf16.msra.mxu0 %v302
  %411 = vmatprep.subr.bf16.mxu0 0
  %412 = vmatpush1.bf16.msra.mxu0 %v303
  %413 = vmatprep.subr.bf16.mxu0 0
  %414 = vmatpush1.bf16.msra.mxu0 %v304
  %415 = vmatprep.subr.bf16.mxu0 0
  %416 = vmatpush1.bf16.msra.mxu0 %v305
  %417 = vmatprep.subr.bf16.mxu0 0
  %418 = vmatpush1.bf16.msra.mxu0 %v306
  %419 = vmatprep.subr.bf16.mxu0 0
  %420 = vmatpush1.bf16.msra.mxu0 %v307
  %421 = vmatprep.subr.bf16.mxu0 0
  %422 = vmatpush1.bf16.msra.mxu0 %v308
  %423 = vmatprep.subr.bf16.mxu0 0
  %424 = vmatpush1.bf16.msra.mxu0 %v309
  %425 = vmatprep.subr.bf16.mxu0 0
  %426 = vmatpush1.bf16.msra.mxu0 %v310
  %427 = vmatprep.subr.bf16.mxu0 0
  %428 = vmatpush1.bf16.msra.mxu0 %v311
  %429 = vmatprep.subr.bf16.mxu0 0
  %430 = vmatpush1.bf16.msra.mxu0 %v312
  %431 = vmatprep.subr.bf16.mxu0 0
  %432 = vmatpush1.bf16.msra.mxu0 %v313
  %433 = vmatprep.subr.bf16.mxu0 0
  %434 = vmatpush1.bf16.msra.mxu0 %v314
  %435 = vmatprep.mubr.bf16.mxu0 %v116
  %436 = vmatmul.mubr.bf16.gmra.mrb[0].mxu0 %v115
  %v437 = vpop.f32.mrb[0].mxu0
  %v438 = vadd.f32 %v398, %v437
  %v439 = vpop.f32.mrb[0].mxu0
  %v440 = vpop.f32.mrb[0].mxu0
  %v441 = vpop.f32.mrb[0].mxu0
  %442 = vdwg.mxu0
  %443 = vmatprep.subr.bf16.mxu0 0
  %444 = vmatpush1.bf16.msra.mxu0 %v315
  %445 = vmatprep.subr.bf16.mxu0 0
  %446 = vmatpush1.bf16.msra.mxu0 %v316
  %447 = vmatprep.subr.bf16.mxu0 0
  %448 = vmatpush1.bf16.msra.mxu0 %v317
  %449 = vmatprep.subr.bf16.mxu0 0
  %450 = vmatpush1.bf16.msra.mxu0 %v318
  %451 = vmatprep.subr.bf16.mxu0 0
  %452 = vmatpush1.bf16.msra.mxu0 %v319
  %453 = vmatprep.subr.bf16.mxu0 0
  %454 = vmatpush1.bf16.msra.mxu0 %v320
  %455 = vmatprep.subr.bf16.mxu0 0
  %456 = vmatpush1.bf16.msra.mxu0 %v321
  %457 = vmatprep.subr.bf16.mxu0 0
  %458 = vmatpush1.bf16.msra.mxu0 %v322
  %459 = vmatprep.subr.bf16.mxu0 0
  %460 = vmatpush1.bf16.msra.mxu0 0
  %461 = vmatprep.subr.bf16.mxu0 0
  %462 = vmatpush1.bf16.msra.mxu0 0
  %463 = vmatprep.subr.bf16.mxu0 0
  %464 = vmatpush1.bf16.msra.mxu0 0
  %465 = vmatprep.subr.bf16.mxu0 0
  %466 = vmatpush1.bf16.msra.mxu0 0
  %467 = vmatprep.subr.bf16.mxu0 0
  %468 = vmatpush1.bf16.msra.mxu0 0
  %469 = vmatprep.subr.bf16.mxu0 0
  %470 = vmatpush1.bf16.msra.mxu0 0
  %471 = vmatprep.subr.bf16.mxu0 0
  %472 = vmatpush1.bf16.msra.mxu0 0
  %473 = vmatprep.subr.bf16.mxu0 0
  %474 = vmatpush1.bf16.msra.mxu0 0
  %475 = vmatprep.mubr.bf16.mxu0 0
  %476 = vmatmul.mubr.bf16.gmra.mrb[0].mxu0 %v117
  %v477 = vpop.f32.mrb[0].mxu0
  %v478 = vadd.f32 %v438, %v477
  %v479 = vpop.f32.mrb[0].mxu0
  %v480 = vpop.f32.mrb[0].mxu0
  %v481 = vpop.f32.mrb[0].mxu0
  %482 = vdwg.mxu0
  %v483 = vpack.c.bf16 %v478, %v478
  %484 = vst [vmem:[%s3] sm:$0xf] %v483
  // Predicated region
  $region14: #{correspondence_net_forward.97} parent=0 // pred_check
    _
  $region15: #{correspondence_net_forward.97} parent=0 // pred_check_branch
    %486 = sbr.rel (0) target = $region17
  $region16: #{correspondence_net_forward.97} parent=0 // pred_region
    _
  $region17: #{correspondence_net_forward.97} parent=0 // pred_fallthru
    _
  // Predicated region
  $region18: #{correspondence_net_forward.97} parent=0 // pred_check
    _
  $region19: #{correspondence_net_forward.97} parent=0 // pred_check_branch
    %488 = sbr.rel (0) target = $region21
  $region20: #{correspondence_net_forward.97} parent=0 // pred_region
    _
  $region21: #{correspondence_net_forward.97} parent=0 // pred_fallthru
    _

// kernel: correspondence_net_forward.95
$region0: #{correspondence_net_forward.95}
  #allocation0 [shape = 'u32[]', space=smem, size = 0x4, offset = 0x4, fixed_abs, tag = 'smem constant byte address 0x4 - core index']
  #allocation1 [shape = 'u32[144,128]{1,0:T(1,128)}', space=vmem, size = 0x12000, scoped, tag = 'internal scratch']
  %s0 = inlined_call_operand.vmem [shape: bf16[8,1024], index: 0, kind: input, shape index: {}]
  %s1 = inlined_call_operand.vmem [shape: bf16[1024,128], index: 1, kind: input, shape index: {}]
  %s2 = inlined_call_operand.vmem [shape: f32[1,128], index: 2, kind: input, shape index: {}]
  %s3 = inlined_call_operand.vmem [shape: bf16[8,128], index: 3, kind: output, shape index: {}]
  %s4 = sld [smem:[#allocation0]]
  $region22: #{correspondence_net_forward.95} parent=0
    _
  %s6 = ssub.s32 1, %s4
  %s7 = scalar_select 0, %s6, %s4
  // Predicated region
  $region2: #{correspondence_net_forward.95} parent=0 // pred_check
    _
  $region3: #{correspondence_net_forward.95} parent=0 // pred_check_branch
    %9 = sbr.rel (0) target = $region5
  $region4: #{correspondence_net_forward.95} parent=0 // pred_region
    _
  $region5: #{correspondence_net_forward.95} parent=0 // pred_fallthru
    _
  // Predicated region
  $region6: #{correspondence_net_forward.95} parent=0 // pred_check
    _
  $region7: #{correspondence_net_forward.95} parent=0 // pred_check_branch
    %11 = sbr.rel (0) target = $region9
  $region8: #{correspondence_net_forward.95} parent=0 // pred_region
    _
  $region9: #{correspondence_net_forward.95} parent=0 // pred_fallthru
    _
  // Predicated region
  $region10: #{correspondence_net_forward.95} parent=0 // pred_check
    _
  $region11: #{correspondence_net_forward.95} parent=0 // pred_check_branch
    %13 = sbr.rel (0) target = $region13
  $region12: #{correspondence_net_forward.95} parent=0 // pred_region
    _
  $region13: #{correspondence_net_forward.95} parent=0 // pred_fallthru
    _
  %v15 = vld [vmem:[%s0] sm:$0xff]
  %v16 = vld [vmem:[%s0 + $0x8] sm:$0xff]
  %v17 = vld [vmem:[%s0 + $0x10] sm:$0xff]
  %v18 = vld [vmem:[%s0 + $0x18] sm:$0xff]
  %v19 = vld [vmem:[%s1] sm:$0xf]
  %v20 = vld [vmem:[%s1 + $0x4] sm:$0xf]
  %v21 = vld [vmem:[%s1 + $0x8] sm:$0xf]
  %v22 = vld [vmem:[%s1 + $0xc] sm:$0xf]
  %v23 = vld [vmem:[%s1 + $0x10] sm:$0xf]
  %v24 = vld [vmem:[%s1 + $0x14] sm:$0xf]
  %v25 = vld [vmem:[%s1 + $0x18] sm:$0xf]
  %v26 = vld [vmem:[%s1 + $0x1c] sm:$0xf]
  %v27 = vld [vmem:[%s1 + $0x20] sm:$0xf]
  %v28 = vld [vmem:[%s1 + $0x24] sm:$0xf]
  %v29 = vld [vmem:[%s1 + $0x28] sm:$0xf]
  %v30 = vld [vmem:[%s1 + $0x2c] sm:$0xf]
  %v31 = vld [vmem:[%s1 + $0x30] sm:$0xf]
  %v32 = vld [vmem:[%s1 + $0x34] sm:$0xf]
  %v33 = vld [vmem:[%s1 + $0x38] sm:$0xf]
  %v34 = vld [vmem:[%s1 + $0x3c] sm:$0xf]
  %v35 = vld [vmem:[%s1 + $0x40] sm:$0xf]
  %v36 = vld [vmem:[%s1 + $0x44] sm:$0xf]
  %v37 = vld [vmem:[%s1 + $0x48] sm:$0xf]
  %v38 = vld [vmem:[%s1 + $0x4c] sm:$0xf]
  %v39 = vld [vmem:[%s1 + $0x50] sm:$0xf]
  %v40 = vld [vmem:[%s1 + $0x54] sm:$0xf]
  %v41 = vld [vmem:[%s1 + $0x58] sm:$0xf]
  %v42 = vld [vmem:[%s1 + $0x5c] sm:$0xf]
  %v43 = vld [vmem:[%s1 + $0x60] sm:$0xf]
  %v44 = vld [vmem:[%s1 + $0x64] sm:$0xf]
  %v45 = vld [vmem:[%s1 + $0x68] sm:$0xf]
  %v46 = vld [vmem:[%s1 + $0x6c] sm:$0xf]
  %v47 = vld [vmem:[%s1 + $0x70] sm:$0xf]
  %v48 = vld [vmem:[%s1 + $0x74] sm:$0xf]
  %v49 = vld [vmem:[%s1 + $0x78] sm:$0xf]
  %v50 = vld [vmem:[%s1 + $0x7c] sm:$0xf]
  %v51 = vld [vmem:[%s1 + $0x80] sm:$0xf]
  %v52 = vld [vmem:[%s1 + $0x84] sm:$0xf]
  %v53 = vld [vmem:[%s1 + $0x88] sm:$0xf]
  %v54 = vld [vmem:[%s1 + $0x8c] sm:$0xf]
  %v55 = vld [vmem:[%s1 + $0x90] sm:$0xf]
  %v56 = vld [vmem:[%s1 + $0x94] sm:$0xf]
  %v57 = vld [vmem:[%s1 + $0x98] sm:$0xf]
  %v58 = vld [vmem:[%s1 + $0x9c] sm:$0xf]
  %v59 = vld [vmem:[%s1 + $0xa0] sm:$0xf]
  %v60 = vld [vmem:[%s1 + $0xa4] sm:$0xf]
  %v61 = vld [vmem:[%s1 + $0xa8] sm:$0xf]
  %v62 = vld [vmem:[%s1 + $0xac] sm:$0xf]
  %v63 = vld [vmem:[%s1 + $0xb0] sm:$0xf]
  %v64 = vld [vmem:[%s1 + $0xb4] sm:$0xf]
  %v65 = vld [vmem:[%s1 + $0xb8] sm:$0xf]
  %v66 = vld [vmem:[%s1 + $0xbc] sm:$0xf]
  %v67 = vld [vmem:[%s1 + $0xc0] sm:$0xf]
  %v68 = vld [vmem:[%s1 + $0xc4] sm:$0xf]
  %v69 = vld [vmem:[%s1 + $0xc8] sm:$0xf]
  %v70 = vld [vmem:[%s1 + $0xcc] sm:$0xf]
  %v71 = vld [vmem:[%s1 + $0xd0] sm:$0xf]
  %v72 = vld [vmem:[%s1 + $0xd4] sm:$0xf]
  %v73 = vld [vmem:[%s1 + $0xd8] sm:$0xf]
  %v74 = vld [vmem:[%s1 + $0xdc] sm:$0xf]
  %v75 = vld [vmem:[%s1 + $0xe0] sm:$0xf]
  %v76 = vld [vmem:[%s1 + $0xe4] sm:$0xf]
  %v77 = vld [vmem:[%s1 + $0xe8] sm:$0xf]
  %v78 = vld [vmem:[%s1 + $0xec] sm:$0xf]
  %v79 = vld [vmem:[%s1 + $0xf0] sm:$0xf]
  %v80 = vld [vmem:[%s1 + $0xf4] sm:$0xf]
  %v81 = vld [vmem:[%s1 + $0xf8] sm:$0xf]
  %v82 = vld [vmem:[%s1 + $0xfc] sm:$0xf]
  %v83 = vld [vmem:[%s1 + $0x100] sm:$0xf]
  %v84 = vld [vmem:[%s1 + $0x104] sm:$0xf]
  %v85 = vld [vmem:[%s1 + $0x108] sm:$0xf]
  %v86 = vld [vmem:[%s1 + $0x10c] sm:$0xf]
  %v87 = vld [vmem:[%s1 + $0x110] sm:$0xf]
  %v88 = vld [vmem:[%s1 + $0x114] sm:$0xf]
  %v89 = vld [vmem:[%s1 + $0x118] sm:$0xf]
  %v90 = vld [vmem:[%s1 + $0x11c] sm:$0xf]
  %v91 = vld [vmem:[%s1 + $0x120] sm:$0xf]
  %v92 = vld [vmem:[%s1 + $0x124] sm:$0xf]
  %v93 = vld [vmem:[%s1 + $0x128] sm:$0xf]
  %v94 = vld [vmem:[%s1 + $0x12c] sm:$0xf]
  %v95 = vld [vmem:[%s1 + $0x130] sm:$0xf]
  %v96 = vld [vmem:[%s1 + $0x134] sm:$0xf]
  %v97 = vld [vmem:[%s1 + $0x138] sm:$0xf]
  %v98 = vld [vmem:[%s1 + $0x13c] sm:$0xf]
  %v99 = vld [vmem:[%s1 + $0x140] sm:$0xf]
  %v100 = vld [vmem:[%s1 + $0x144] sm:$0xf]
  %v101 = vld [vmem:[%s1 + $0x148] sm:$0xf]
  %v102 = vld [vmem:[%s1 + $0x14c] sm:$0xf]
  %v103 = vld [vmem:[%s1 + $0x150] sm:$0xf]
  %v104 = vld [vmem:[%s1 + $0x154] sm:$0xf]
  %v105 = vld [vmem:[%s1 + $0x158] sm:$0xf]
  %v106 = vld [vmem:[%s1 + $0x15c] sm:$0xf]
  %v107 = vld [vmem:[%s1 + $0x160] sm:$0xf]
  %v108 = vld [vmem:[%s1 + $0x164] sm:$0xf]
  %v109 = vld [vmem:[%s1 + $0x168] sm:$0xf]
  %v110 = vld [vmem:[%s1 + $0x16c] sm:$0xf]
  %v111 = vld [vmem:[%s1 + $0x170] sm:$0xf]
  %v112 = vld [vmem:[%s1 + $0x174] sm:$0xf]
  %v113 = vld [vmem:[%s1 + $0x178] sm:$0xf]
  %v114 = vld [vmem:[%s1 + $0x17c] sm:$0xf]
  %v115 = vld [vmem:[%s1 + $0x180] sm:$0xf]
  %v116 = vld [vmem:[%s1 + $0x184] sm:$0xf]
  %v117 = vld [vmem:[%s1 + $0x188] sm:$0xf]
  %v118 = vld [vmem:[%s1 + $0x18c] sm:$0xf]
  %v119 = vld [vmem:[%s1 + $0x190] sm:$0xf]
  %v120 = vld [vmem:[%s1 + $0x194] sm:$0xf]
  %v121 = vld [vmem:[%s1 + $0x198] sm:$0xf]
  %v122 = vld [vmem:[%s1 + $0x19c] sm:$0xf]
  %v123 = vld [vmem:[%s1 + $0x1a0] sm:$0xf]
  %v124 = vld [vmem:[%s1 + $0x1a4] sm:$0xf]
  %v125 = vld [vmem:[%s1 + $0x1a8] sm:$0xf]
  %v126 = vld [vmem:[%s1 + $0x1ac] sm:$0xf]
  %v127 = vld [vmem:[%s1 + $0x1b0] sm:$0xf]
  %v128 = vld [vmem:[%s1 + $0x1b4] sm:$0xf]
  %v129 = vld [vmem:[%s1 + $0x1b8] sm:$0xf]
  %v130 = vld [vmem:[%s1 + $0x1bc] sm:$0xf]
  %v131 = vld [vmem:[%s1 + $0x1c0] sm:$0xf]
  %v132 = vld [vmem:[%s1 + $0x1c4] sm:$0xf]
  %v133 = vld [vmem:[%s1 + $0x1c8] sm:$0xf]
  %v134 = vld [vmem:[%s1 + $0x1cc] sm:$0xf]
  %v135 = vld [vmem:[%s1 + $0x1d0] sm:$0xf]
  %v136 = vld [vmem:[%s1 + $0x1d4] sm:$0xf]
  %v137 = vld [vmem:[%s1 + $0x1d8] sm:$0xf]
  %v138 = vld [vmem:[%s1 + $0x1dc] sm:$0xf]
  %v139 = vld [vmem:[%s1 + $0x1e0] sm:$0xf]
  %v140 = vld [vmem:[%s1 + $0x1e4] sm:$0xf]
  %v141 = vld [vmem:[%s1 + $0x1e8] sm:$0xf]
  %v142 = vld [vmem:[%s1 + $0x1ec] sm:$0xf]
  %v143 = vld [vmem:[%s1 + $0x1f0] sm:$0xf]
  %v144 = vld [vmem:[%s1 + $0x1f4] sm:$0xf]
  %v145 = vld [vmem:[%s1 + $0x1f8] sm:$0xf]
  %v146 = vld [vmem:[%s1 + $0x1fc] sm:$0xf]
  %v147 = vld [vmem:[%s2] sm:$0x1]
  %v149 = vlaneseq
  %v150 = vshrl.u32 %v149, 7
  %v151 = vsub.s32 0, %v150
  %v152 = vrot.slane %v147, %v151
  %v158 = vunpack.c.l.b16 %v15
  %v159 = vunpack.c.h.b16 %v15
  %v160 = vunpack.c.l.b16 %v16
  %v161 = vunpack.c.h.b16 %v16
  %v162 = vunpack.c.l.b16 %v17
  %v163 = vunpack.c.h.b16 %v17
  %v164 = vunpack.c.l.b16 %v18
  %v165 = vunpack.c.h.b16 %v18
  %v166 = vpack.c.b16 %v158, %v158
  %v167 = vpack.c.b16 %v159, %v159
  %v168 = vpack.c.b16 %v160, %v160
  %v169 = vpack.c.b16 %v161, %v161
  %v170 = vpack.c.b16 %v162, %v162
  %v171 = vpack.c.b16 %v163, %v163
  %v172 = vpack.c.b16 %v164, %v164
  %v173 = vpack.c.b16 %v165, %v165
  %v310 = vunpack.c.l.b16 %v19
  %v311 = vunpack.c.l.b16 %v20
  %v312 = vunpack.c.l.b16 %v21
  %v313 = vunpack.c.l.b16 %v22
  %v314 = vunpack.c.l.b16 %v23
  %v315 = vunpack.c.l.b16 %v24
  %v316 = vunpack.c.l.b16 %v25
  %v317 = vunpack.c.l.b16 %v26
  %v318 = vunpack.c.l.b16 %v27
  %v319 = vunpack.c.l.b16 %v28
  %v320 = vunpack.c.l.b16 %v29
  %v321 = vunpack.c.l.b16 %v30
  %v322 = vunpack.c.l.b16 %v31
  %v323 = vunpack.c.l.b16 %v32
  %v324 = vunpack.c.l.b16 %v33
  %v325 = vunpack.c.l.b16 %v34
  %v326 = vunpack.c.l.b16 %v35
  %v327 = vunpack.c.l.b16 %v36
  %v328 = vunpack.c.l.b16 %v37
  %v329 = vunpack.c.l.b16 %v38
  %v330 = vunpack.c.l.b16 %v39
  %v331 = vunpack.c.l.b16 %v40
  %v332 = vunpack.c.l.b16 %v41
  %v333 = vunpack.c.l.b16 %v42
  %v334 = vunpack.c.l.b16 %v43
  %v335 = vunpack.c.l.b16 %v44
  %v336 = vunpack.c.l.b16 %v45
  %v337 = vunpack.c.l.b16 %v46
  %v338 = vunpack.c.l.b16 %v47
  %v339 = vunpack.c.l.b16 %v48
  %v340 = vunpack.c.l.b16 %v49
  %v341 = vunpack.c.l.b16 %v50
  %v342 = vunpack.c.l.b16 %v51
  %v343 = vunpack.c.l.b16 %v52
  %v344 = vunpack.c.l.b16 %v53
  %v345 = vunpack.c.l.b16 %v54
  %v346 = vunpack.c.l.b16 %v55
  %v347 = vunpack.c.l.b16 %v56
  %v348 = vunpack.c.l.b16 %v57
  %v349 = vunpack.c.l.b16 %v58
  %v350 = vunpack.c.l.b16 %v59
  %v351 = vunpack.c.l.b16 %v60
  %v352 = vunpack.c.l.b16 %v61
  %v353 = vunpack.c.l.b16 %v62
  %v354 = vunpack.c.l.b16 %v63
  %v355 = vunpack.c.l.b16 %v64
  %v356 = vunpack.c.l.b16 %v65
  %v357 = vunpack.c.l.b16 %v66
  %v358 = vunpack.c.l.b16 %v67
  %v359 = vunpack.c.l.b16 %v68
  %v360 = vunpack.c.l.b16 %v69
  %v361 = vunpack.c.l.b16 %v70
  %v362 = vunpack.c.l.b16 %v71
  %v363 = vunpack.c.l.b16 %v72
  %v364 = vunpack.c.l.b16 %v73
  %v365 = vunpack.c.l.b16 %v74
  %v366 = vunpack.c.l.b16 %v75
  %v367 = vunpack.c.l.b16 %v76
  %v368 = vunpack.c.l.b16 %v77
  %v369 = vunpack.c.l.b16 %v78
  %v370 = vunpack.c.l.b16 %v79
  %v371 = vunpack.c.l.b16 %v80
  %v372 = vunpack.c.l.b16 %v81
  %v373 = vunpack.c.l.b16 %v82
  %v374 = vunpack.c.l.b16 %v83
  %v375 = vunpack.c.l.b16 %v84
  %v376 = vunpack.c.l.b16 %v85
  %v377 = vunpack.c.l.b16 %v86
  %v378 = vunpack.c.l.b16 %v87
  %v379 = vunpack.c.l.b16 %v88
  %v380 = vunpack.c.l.b16 %v89
  %v381 = vunpack.c.l.b16 %v90
  %v382 = vunpack.c.l.b16 %v91
  %v383 = vunpack.c.l.b16 %v92
  %v384 = vunpack.c.l.b16 %v93
  %v385 = vunpack.c.l.b16 %v94
  %v386 = vunpack.c.l.b16 %v95
  %v387 = vunpack.c.l.b16 %v96
  %v388 = vunpack.c.l.b16 %v97
  %v389 = vunpack.c.l.b16 %v98
  %v390 = vunpack.c.l.b16 %v99
  %v391 = vunpack.c.l.b16 %v100
  %v392 = vunpack.c.l.b16 %v101
  %v393 = vunpack.c.l.b16 %v102
  %v394 = vunpack.c.l.b16 %v103
  %v395 = vunpack.c.l.b16 %v104
  %v396 = vunpack.c.l.b16 %v105
  %v397 = vunpack.c.l.b16 %v106
  %v398 = vunpack.c.l.b16 %v107
  %v399 = vunpack.c.l.b16 %v108
  %v400 = vunpack.c.l.b16 %v109
  %v401 = vunpack.c.l.b16 %v110
  %v402 = vunpack.c.l.b16 %v111
  %v403 = vunpack.c.l.b16 %v112
  %v404 = vunpack.c.l.b16 %v113
  %v405 = vunpack.c.l.b16 %v114
  %v406 = vunpack.c.l.b16 %v115
  %v407 = vunpack.c.l.b16 %v116
  %v408 = vunpack.c.l.b16 %v117
  %v409 = vunpack.c.l.b16 %v118
  %v410 = vunpack.c.l.b16 %v119
  %v411 = vunpack.c.l.b16 %v120
  %v412 = vunpack.c.l.b16 %v121
  %v413 = vunpack.c.l.b16 %v122
  %v414 = vunpack.c.l.b16 %v123
  %v415 = vunpack.c.l.b16 %v124
  %v416 = vunpack.c.l.b16 %v125
  %v417 = vunpack.c.l.b16 %v126
  %v418 = vunpack.c.l.b16 %v127
  %v419 = vunpack.c.l.b16 %v128
  %v420 = vunpack.c.l.b16 %v129
  %v421 = vunpack.c.l.b16 %v130
  %v422 = vunpack.c.l.b16 %v131
  %v423 = vunpack.c.l.b16 %v132
  %v424 = vunpack.c.l.b16 %v133
  %v425 = vunpack.c.l.b16 %v134
  %v426 = vunpack.c.l.b16 %v135
  %v427 = vunpack.c.l.b16 %v136
  %v428 = vunpack.c.l.b16 %v137
  %v429 = vunpack.c.l.b16 %v138
  %v430 = vunpack.c.l.b16 %v139
  %v431 = vunpack.c.l.b16 %v140
  %v432 = vunpack.c.l.b16 %v141
  %v433 = vunpack.c.l.b16 %v142
  %v434 = vunpack.c.l.b16 %v143
  %v435 = vunpack.c.l.b16 %v144
  %v436 = vunpack.c.l.b16 %v145
  %v437 = vunpack.c.l.b16 %v146
  %v438 = vpack.c.b16 %v311, %v310
  %v439 = vpack.c.b16 %v313, %v312
  %v440 = vpack.c.b16 %v315, %v314
  %v441 = vpack.c.b16 %v317, %v316
  %v442 = vpack.c.b16 %v319, %v318
  %v443 = vpack.c.b16 %v321, %v320
  %v444 = vpack.c.b16 %v323, %v322
  %v445 = vpack.c.b16 %v325, %v324
  %v446 = vpack.c.b16 %v327, %v326
  %v447 = vpack.c.b16 %v329, %v328
  %v448 = vpack.c.b16 %v331, %v330
  %v449 = vpack.c.b16 %v333, %v332
  %v450 = vpack.c.b16 %v335, %v334
  %v451 = vpack.c.b16 %v337, %v336
  %v452 = vpack.c.b16 %v339, %v338
  %v453 = vpack.c.b16 %v341, %v340
  %v454 = vpack.c.b16 %v343, %v342
  %v455 = vpack.c.b16 %v345, %v344
  %v456 = vpack.c.b16 %v347, %v346
  %v457 = vpack.c.b16 %v349, %v348
  %v458 = vpack.c.b16 %v351, %v350
  %v459 = vpack.c.b16 %v353, %v352
  %v460 = vpack.c.b16 %v355, %v354
  %v461 = vpack.c.b16 %v357, %v356
  %v462 = vpack.c.b16 %v359, %v358
  %v463 = vpack.c.b16 %v361, %v360
  %v464 = vpack.c.b16 %v363, %v362
  %v465 = vpack.c.b16 %v365, %v364
  %v466 = vpack.c.b16 %v367, %v366
  %v467 = vpack.c.b16 %v369, %v368
  %v468 = vpack.c.b16 %v371, %v370
  %v469 = vpack.c.b16 %v373, %v372
  %v470 = vpack.c.b16 %v375, %v374
  %v471 = vpack.c.b16 %v377, %v376
  %v472 = vpack.c.b16 %v379, %v378
  %v473 = vpack.c.b16 %v381, %v380
  %v474 = vpack.c.b16 %v383, %v382
  %v475 = vpack.c.b16 %v385, %v384
  %v476 = vpack.c.b16 %v387, %v386
  %v477 = vpack.c.b16 %v389, %v388
  %v478 = vpack.c.b16 %v391, %v390
  %v479 = vpack.c.b16 %v393, %v392
  %v480 = vpack.c.b16 %v395, %v394
  %v481 = vpack.c.b16 %v397, %v396
  %v482 = vpack.c.b16 %v399, %v398
  %v483 = vpack.c.b16 %v401, %v400
  %v484 = vpack.c.b16 %v403, %v402
  %v485 = vpack.c.b16 %v405, %v404
  %v486 = vpack.c.b16 %v407, %v406
  %v487 = vpack.c.b16 %v409, %v408
  %v488 = vpack.c.b16 %v411, %v410
  %v489 = vpack.c.b16 %v413, %v412
  %v490 = vpack.c.b16 %v415, %v414
  %v491 = vpack.c.b16 %v417, %v416
  %v492 = vpack.c.b16 %v419, %v418
  %v493 = vpack.c.b16 %v421, %v420
  %v494 = vpack.c.b16 %v423, %v422
  %v495 = vpack.c.b16 %v425, %v424
  %v496 = vpack.c.b16 %v427, %v426
  %v497 = vpack.c.b16 %v429, %v428
  %v498 = vpack.c.b16 %v431, %v430
  %v499 = vpack.c.b16 %v433, %v432
  %v500 = vpack.c.b16 %v435, %v434
  %v501 = vpack.c.b16 %v437, %v436
  %566 = vmatprep.subr.bf16.mxu0 0
  %567 = vmatpush1.bf16.msra.mxu0 %v438
  %568 = vmatprep.subr.bf16.mxu0 0
  %569 = vmatpush1.bf16.msra.mxu0 %v439
  %570 = vmatprep.subr.bf16.mxu0 0
  %571 = vmatpush1.bf16.msra.mxu0 %v440
  %572 = vmatprep.subr.bf16.mxu0 0
  %573 = vmatpush1.bf16.msra.mxu0 %v441
  %574 = vmatprep.subr.bf16.mxu0 0
  %575 = vmatpush1.bf16.msra.mxu0 %v442
  %576 = vmatprep.subr.bf16.mxu0 0
  %577 = vmatpush1.bf16.msra.mxu0 %v443
  %578 = vmatprep.subr.bf16.mxu0 0
  %579 = vmatpush1.bf16.msra.mxu0 %v444
  %580 = vmatprep.subr.bf16.mxu0 0
  %581 = vmatpush1.bf16.msra.mxu0 %v445
  %582 = vmatprep.subr.bf16.mxu0 0
  %583 = vmatpush1.bf16.msra.mxu0 %v446
  %584 = vmatprep.subr.bf16.mxu0 0
  %585 = vmatpush1.bf16.msra.mxu0 %v447
  %586 = vmatprep.subr.bf16.mxu0 0
  %587 = vmatpush1.bf16.msra.mxu0 %v448
  %588 = vmatprep.subr.bf16.mxu0 0
  %589 = vmatpush1.bf16.msra.mxu0 %v449
  %590 = vmatprep.subr.bf16.mxu0 0
  %591 = vmatpush1.bf16.msra.mxu0 %v450
  %592 = vmatprep.subr.bf16.mxu0 0
  %593 = vmatpush1.bf16.msra.mxu0 %v451
  %594 = vmatprep.subr.bf16.mxu0 0
  %595 = vmatpush1.bf16.msra.mxu0 %v452
  %596 = vmatprep.subr.bf16.mxu0 0
  %597 = vmatpush1.bf16.msra.mxu0 %v453
  %598 = vmatprep.mubr.bf16.mxu0 %v167
  %599 = vmatmul.mubr.bf16.gmra.mrb[0].mxu0 %v166
  %v600 = vpop.f32.mrb[0].mxu0
  %v601 = vadd.f32 %v152, %v600
  %v602 = vpop.f32.mrb[0].mxu0
  %v603 = vpop.f32.mrb[0].mxu0
  %v604 = vpop.f32.mrb[0].mxu0
  %605 = vdwg.mxu0
  %606 = vmatprep.subr.bf16.mxu0 0
  %607 = vmatpush1.bf16.msra.mxu0 %v454
  %608 = vmatprep.subr.bf16.mxu0 0
  %609 = vmatpush1.bf16.msra.mxu0 %v455
  %610 = vmatprep.subr.bf16.mxu0 0
  %611 = vmatpush1.bf16.msra.mxu0 %v456
  %612 = vmatprep.subr.bf16.mxu0 0
  %613 = vmatpush1.bf16.msra.mxu0 %v457
  %614 = vmatprep.subr.bf16.mxu0 0
  %615 = vmatpush1.bf16.msra.mxu0 %v458
  %616 = vmatprep.subr.bf16.mxu0 0
  %617 = vmatpush1.bf16.msra.mxu0 %v459
  %618 = vmatprep.subr.bf16.mxu0 0
  %619 = vmatpush1.bf16.msra.mxu0 %v460
  %620 = vmatprep.subr.bf16.mxu0 0
  %621 = vmatpush1.bf16.msra.mxu0 %v461
  %622 = vmatprep.subr.bf16.mxu0 0
  %623 = vmatpush1.bf16.msra.mxu0 %v462
  %624 = vmatprep.subr.bf16.mxu0 0
  %625 = vmatpush1.bf16.msra.mxu0 %v463
  %626 = vmatprep.subr.bf16.mxu0 0
  %627 = vmatpush1.bf16.msra.mxu0 %v464
  %628 = vmatprep.subr.bf16.mxu0 0
  %629 = vmatpush1.bf16.msra.mxu0 %v465
  %630 = vmatprep.subr.bf16.mxu0 0
  %631 = vmatpush1.bf16.msra.mxu0 %v466
  %632 = vmatprep.subr.bf16.mxu0 0
  %633 = vmatpush1.bf16.msra.mxu0 %v467
  %634 = vmatprep.subr.bf16.mxu0 0
  %635 = vmatpush1.bf16.msra.mxu0 %v468
  %636 = vmatprep.subr.bf16.mxu0 0
  %637 = vmatpush1.bf16.msra.mxu0 %v469
  %638 = vmatprep.mubr.bf16.mxu0 %v169
  %639 = vmatmul.mubr.bf16.gmra.mrb[0].mxu0 %v168
  %v640 = vpop.f32.mrb[0].mxu0
  %v641 = vadd.f32 %v601, %v640
  %v642 = vpop.f32.mrb[0].mxu0
  %v643 = vpop.f32.mrb[0].mxu0
  %v644 = vpop.f32.mrb[0].mxu0
  %645 = vdwg.mxu0
  %646 = vmatprep.subr.bf16.mxu0 0
  %647 = vmatpush1.bf16.msra.mxu0 %v470
  %648 = vmatprep.subr.bf16.mxu0 0
  %649 = vmatpush1.bf16.msra.mxu0 %v471
  %650 = vmatprep.subr.bf16.mxu0 0
  %651 = vmatpush1.bf16.msra.mxu0 %v472
  %652 = vmatprep.subr.bf16.mxu0 0
  %653 = vmatpush1.bf16.msra.mxu0 %v473
  %654 = vmatprep.subr.bf16.mxu0 0
  %655 = vmatpush1.bf16.msra.mxu0 %v474
  %656 = vmatprep.subr.bf16.mxu0 0
  %657 = vmatpush1.bf16.msra.mxu0 %v475
  %658 = vmatprep.subr.bf16.mxu0 0
  %659 = vmatpush1.bf16.msra.mxu0 %v476
  %660 = vmatprep.subr.bf16.mxu0 0
  %661 = vmatpush1.bf16.msra.mxu0 %v477
  %662 = vmatprep.subr.bf16.mxu0 0
  %663 = vmatpush1.bf16.msra.mxu0 %v478
  %664 = vmatprep.subr.bf16.mxu0 0
  %665 = vmatpush1.bf16.msra.mxu0 %v479
  %666 = vmatprep.subr.bf16.mxu0 0
  %667 = vmatpush1.bf16.msra.mxu0 %v480
  %668 = vmatprep.subr.bf16.mxu0 0
  %669 = vmatpush1.bf16.msra.mxu0 %v481
  %670 = vmatprep.subr.bf16.mxu0 0
  %671 = vmatpush1.bf16.msra.mxu0 %v482
  %672 = vmatprep.subr.bf16.mxu0 0
  %673 = vmatpush1.bf16.msra.mxu0 %v483
  %674 = vmatprep.subr.bf16.mxu0 0
  %675 = vmatpush1.bf16.msra.mxu0 %v484
  %676 = vmatprep.subr.bf16.mxu0 0
  %677 = vmatpush1.bf16.msra.mxu0 %v485
  %678 = vmatprep.mubr.bf16.mxu0 %v171
  %679 = vmatmul.mubr.bf16.gmra.mrb[0].mxu0 %v170
  %v680 = vpop.f32.mrb[0].mxu0
  %v681 = vadd.f32 %v641, %v680
  %v682 = vpop.f32.mrb[0].mxu0
  %v683 = vpop.f32.mrb[0].mxu0
  %v684 = vpop.f32.mrb[0].mxu0
  %685 = vdwg.mxu0
  %686 = vmatprep.subr.bf16.mxu0 0
  %687 = vmatpush1.bf16.msra.mxu0 %v486
  %688 = vmatprep.subr.bf16.mxu0 0
  %689 = vmatpush1.bf16.msra.mxu0 %v487
  %690 = vmatprep.subr.bf16.mxu0 0
  %691 = vmatpush1.bf16.msra.mxu0 %v488
  %692 = vmatprep.subr.bf16.mxu0 0
  %693 = vmatpush1.bf16.msra.mxu0 %v489
  %694 = vmatprep.subr.bf16.mxu0 0
  %695 = vmatpush1.bf16.msra.mxu0 %v490
  %696 = vmatprep.subr.bf16.mxu0 0
  %697 = vmatpush1.bf16.msra.mxu0 %v491
  %698 = vmatprep.subr.bf16.mxu0 0
  %699 = vmatpush1.bf16.msra.mxu0 %v492
  %700 = vmatprep.subr.bf16.mxu0 0
  %701 = vmatpush1.bf16.msra.mxu0 %v493
  %702 = vmatprep.subr.bf16.mxu0 0
  %703 = vmatpush1.bf16.msra.mxu0 %v494
  %704 = vmatprep.subr.bf16.mxu0 0
  %705 = vmatpush1.bf16.msra.mxu0 %v495
  %706 = vmatprep.subr.bf16.mxu0 0
  %707 = vmatpush1.bf16.msra.mxu0 %v496
  %708 = vmatprep.subr.bf16.mxu0 0
  %709 = vmatpush1.bf16.msra.mxu0 %v497
  %710 = vmatprep.subr.bf16.mxu0 0
  %711 = vmatpush1.bf16.msra.mxu0 %v498
  %712 = vmatprep.subr.bf16.mxu0 0
  %713 = vmatpush1.bf16.msra.mxu0 %v499
  %714 = vmatprep.subr.bf16.mxu0 0
  %715 = vmatpush1.bf16.msra.mxu0 %v500
  %716 = vmatprep.subr.bf16.mxu0 0
  %717 = vmatpush1.bf16.msra.mxu0 %v501
  %718 = vmatprep.mubr.bf16.mxu0 %v173
  %719 = vmatmul.mubr.bf16.gmra.mrb[0].mxu0 %v172
  %v720 = vpop.f32.mrb[0].mxu0
  %v721 = vadd.f32 %v681, %v720
  %v722 = vpop.f32.mrb[0].mxu0
  %v723 = vpop.f32.mrb[0].mxu0
  %v724 = vpop.f32.mrb[0].mxu0
  %725 = vdwg.mxu0
  %v726 = vpack.c.bf16 %v721, %v721
  %727 = vst [vmem:[%s3] sm:$0xf] %v726
  // Predicated region
  $region14: #{correspondence_net_forward.95} parent=0 // pred_check
    _
  $region15: #{correspondence_net_forward.95} parent=0 // pred_check_branch
    %729 = sbr.rel (0) target = $region17
  $region16: #{correspondence_net_forward.95} parent=0 // pred_region
    _
  $region17: #{correspondence_net_forward.95} parent=0 // pred_fallthru
    _
  // Predicated region
  $region18: #{correspondence_net_forward.95} parent=0 // pred_check
    _
  $region19: #{correspondence_net_forward.95} parent=0 // pred_check_branch
    %731 = sbr.rel (0) target = $region21
  $region20: #{correspondence_net_forward.95} parent=0 // pred_region
    _
  $region21: #{correspondence_net_forward.95} parent=0 // pred_fallthru
    _

// kernel: correspondence_net_forward.98
$region0: #{correspondence_net_forward.98}
  #allocation0 [shape = 'u32[]', space=smem, size = 0x4, offset = 0x4, fixed_abs, tag = 'smem constant byte address 0x4 - core index']
  #allocation1 [shape = 'u32[144,128]{1,0:T(1,128)}', space=vmem, size = 0x12000, scoped, tag = 'internal scratch']
  %s0 = inlined_call_operand.vmem [shape: bf16[2,4,32], index: 0, kind: input, shape index: {}]
  %s1 = inlined_call_operand.vmem [shape: bf16[2,4,32], index: 1, kind: output, shape index: {}]
  %s2 = sld [smem:[#allocation0]]
  $region37: #{correspondence_net_forward.98} parent=0
    _
  %s4 = ssub.s32 1, %s2
  %s5 = scalar_select 0, %s4, %s2
  loop: start=0, step=1, limit=4
  $region2: #{correspondence_net_forward.98} parent=0 // loop_pre_header
    _
  $region3: #{correspondence_net_forward.98} parent=0 // loop_header
    %s7 = sphi 0, %s11
    %p8 = scmp.ge.s32.totalorder %s7, 4
    %s17 = sphi 0, %s19
    %s20 = sphi 0, %s17
    %s21 = sphi 0, %s20
    %s37 = sphi 0, %s21
    %s43 = sphi 0, %s45
    %s46 = sphi 0, %s43
    %s47 = sphi 0, %s46
    %s63 = sphi 0, %s47
  $region4: #{correspondence_net_forward.98} parent=0 // loop_header_branch
    %10 = sbr.rel (%p8) target = $region8
  $region5: #{correspondence_net_forward.98} parent=0 // loop_body
    %s12 = ssub.s32 %s7, 1
    %s13 = ssub.s32 %s7, 2
    %s14 = sadd.s32 %s7, 1
    %s15 = ssub.s32 %s7, %s14
    %p16 = scmp.eq.s32.totalorder %s15, 0
    %s18 = sadd.s32 %s17, 1
    %s19 = scalar_select %p16, %s17, %s18
    %p22 = pneg %p16
    %p23 = scmp.eq.s32.totalorder %s7, 1
    %p24 = por %p22, %p23
    %p25 = scmp.ne.s32.totalorder %s17, %s20
    %p26 = scmp.eq.s32.totalorder %s7, 0
    %p27 = por %p25, %p26
    %p28 = scmp.ne.s32.totalorder %s17, %s20
    %p29 = scmp.eq.s32.totalorder %s12, 1
    %p30 = por %p28, %p29
    %p31 = scmp.ne.s32.totalorder %s20, %s21
    %p32 = scmp.eq.s32.totalorder %s12, 0
    %p33 = por %p31, %p32
    %p34 = scmp.ne.s32.totalorder %s20, %s21
    %p35 = scmp.eq.s32.totalorder %s13, 1
    %p36 = por %p34, %p35
    %p38 = scmp.ne.s32.totalorder %s21, %s37
    %p39 = scmp.eq.s32.totalorder %s13, 0
    %p40 = por %p38, %p39
    %s41 = ssub.s32 %s7, %s14
    %p42 = scmp.eq.s32.totalorder %s41, 0
    %s44 = sadd.s32 %s43, 1
    %s45 = scalar_select %p42, %s43, %s44
    %p48 = pneg %p42
    %p49 = scmp.eq.s32.totalorder %s7, 1
    %p50 = por %p48, %p49
    %p51 = scmp.ne.s32.totalorder %s43, %s46
    %p52 = scmp.eq.s32.totalorder %s7, 0
    %p53 = por %p51, %p52
    %p54 = scmp.ne.s32.totalorder %s43, %s46
    %p55 = scmp.eq.s32.totalorder %s12, 1
    %p56 = por %p54, %p55
    %p57 = scmp.ne.s32.totalorder %s46, %s47
    %p58 = scmp.eq.s32.totalorder %s12, 0
    %p59 = por %p57, %p58
    %p60 = scmp.ne.s32.totalorder %s46, %s47
    %p61 = scmp.eq.s32.totalorder %s13, 1
    %p62 = por %p60, %p61
    %p64 = scmp.ne.s32.totalorder %s47, %s63
    %p65 = scmp.eq.s32.totalorder %s13, 0
    %p66 = por %p64, %p65
    %p67 = scmp.le.s32.totalorder 1, %s7
    %p68 = scmp.lt.s32.totalorder %s7, 3
    %p69 = pnand %p67, %p68
    %p70 = pneg %p69
    // Predicated region
    $region9: #{correspondence_net_forward.98} parent=5 // pred_check
      _
    $region10: #{correspondence_net_forward.98} parent=5 // pred_check_branch
      %72 = sbr.rel (%p69) target = $region12
    $region11: #{correspondence_net_forward.98} parent=5 // pred_region
      %s73 = ssub.s32 %s7, 1
    $region12: #{correspondence_net_forward.98} parent=5 // pred_fallthru
      _
    %p74 = scmp.lt.s32.totalorder %s7, 2
    // Predicated region
    $region13: #{correspondence_net_forward.98} parent=5 // pred_check
      %p75 = pneg %p74
    $region14: #{correspondence_net_forward.98} parent=5 // pred_check_branch
      %77 = sbr.rel (%p75) target = $region16
    $region15: #{correspondence_net_forward.98} parent=5 // pred_region
      // Predicated region
      $region17: #{correspondence_net_forward.98} parent=15 // pred_check
        %p78 = pneg %p27
      $region18: #{correspondence_net_forward.98} parent=15 // pred_check_branch
        %80 = sbr.rel (%p78) target = $region20
      $region19: #{correspondence_net_forward.98} parent=15 // pred_region
        %p81 = scmp.lt.s32.totalorder %s7, 1
        %s82 = scalar_select %p81, %s7, 1
        %s83 = smul.addr %s82, 2
        %s84 = scalar_lea.vmem %s0, %s83
      $region20: #{correspondence_net_forward.98} parent=15 // pred_fallthru
        _
    $region16: #{correspondence_net_forward.98} parent=5 // pred_fallthru
      _
    %p85 = scmp.le.s32.totalorder 1, %s7
    %p86 = scmp.lt.s32.totalorder %s7, 3
    %p87 = pnand %p85, %p86
    %p88 = pneg %p87
    // Predicated region
    $region21: #{correspondence_net_forward.98} parent=5 // pred_check
      _
    $region22: #{correspondence_net_forward.98} parent=5 // pred_check_branch
      %90 = sbr.rel (%p87) target = $region24
    $region23: #{correspondence_net_forward.98} parent=5 // pred_region
      %s91 = ssub.s32 %s7, 1
      %p92 = scmp.lt.s32.totalorder %s12, 1
      %s93 = scalar_select %p92, %s12, 1
      %s94 = smul.addr %s93, 2
      %s95 = scalar_lea.vmem %s0, %s94
      %p96 = pneg %p33
      %p97 = pneg %p30
      %p98 = pneg %p59
      %p99 = pneg %p56
      %p100 = scmp.lt.s32.totalorder %s12, 1
      %s101 = scalar_select %p100, %s12, 1
      %s102 = smul.addr %s101, 2
      %s103 = scalar_lea.vmem %s1, %s102
      %p104 = scmp.lt.s32.totalorder %s12, 1
      %s105 = scalar_select %p104, %s12, 1
      %s106 = smul.addr %s105, 2
      %s107 = scalar_lea.vmem %s0, %s106
      %p108 = scmp.lt.s32.totalorder %s12, 1
      %s109 = scalar_select %p108, %s12, 1
      %s110 = smul.addr %s109, 2
      %s111 = scalar_lea.vmem %s1, %s110
      %v112 = vld [vmem:[%s107] sm:$0x3]
      %v113 = vunpack.c.l.bf16 %v112
      %vm114 = vcmask 257024
      %v115 = vsel %vm114, %v113, 0.0
      %v116 = vrot.slane %v115, 4
      %v117 = vadd.f32 %v115, %v116
      %v118 = vrot.slane %v117, 2
      %v119 = vadd.f32 %v117, %v118
      %v120 = vrot.slane %v119, 1
      %v121 = vadd.f32 %v119, %v120
      %v122 = vrcp.pop 4.0
      %v123 = vmul.f32 %v121, %v122
      %v124 = vsub.f32 %v113, %v123
      %v125 = vmul.f32 %v124, %v124
      %v126 = vsel %vm114, %v125, 0.0
      %v127 = vrot.slane %v126, 4
      %v128 = vadd.f32 %v126, %v127
      %v129 = vrot.slane %v128, 2
      %v130 = vadd.f32 %v128, %v129
      %v131 = vrot.slane %v130, 1
      %v132 = vadd.f32 %v130, %v131
      %v133 = vmul.f32 %v132, %v122
      %v134 = vadd.f32 %v133, 1e-05
      %v135 = vrsqrt.pop %v134
      %v136 = vmul.f32 %v124, %v135
      %vm137 = vcmp.ge.f32.partialorder %v136, 0.0
      %v138 = vmul.f32 %v136, 0.2
      %v139 = vsel %vm137, %v136, %v138
      %v140 = vpack.c.bf16 %v139, %v139
      %vm141 = vcmask 254976
      %142 = vst.msk [vmem:[%s111] sm:$0x3] %vm141, %v140
      %p143 = scmp.lt.s32.totalorder %s12, 1
      %s144 = scalar_select %p143, %s12, 1
      %s145 = smul.addr %s144, 2
      %s146 = scalar_lea.vmem %s1, %s145
      // Predicated region
      $region25: #{correspondence_net_forward.98} parent=23 // pred_check
        %p147 = pneg %p56
      $region26: #{correspondence_net_forward.98} parent=23 // pred_check_branch
        %149 = sbr.rel (%p147) target = $region28
      $region27: #{correspondence_net_forward.98} parent=23 // pred_region
        _
      $region28: #{correspondence_net_forward.98} parent=23 // pred_fallthru
        _
    $region24: #{correspondence_net_forward.98} parent=5 // pred_fallthru
      _
    %p150 = scmp.le.s32.totalorder 2, %s7
    // Predicated region
    $region29: #{correspondence_net_forward.98} parent=5 // pred_check
      %p151 = pneg %p150
    $region30: #{correspondence_net_forward.98} parent=5 // pred_check_branch
      %153 = sbr.rel (%p151) target = $region32
    $region31: #{correspondence_net_forward.98} parent=5 // pred_region
      %s154 = ssub.s32 %s7, 2
      // Predicated region
      $region33: #{correspondence_net_forward.98} parent=31 // pred_check
        %p155 = pneg %p62
      $region34: #{correspondence_net_forward.98} parent=31 // pred_check_branch
        %157 = sbr.rel (%p155) target = $region36
      $region35: #{correspondence_net_forward.98} parent=31 // pred_region
        %p158 = scmp.lt.s32.totalorder %s13, 1
        %s159 = scalar_select %p158, %s13, 1
        %s160 = smul.addr %s159, 2
        %s161 = scalar_lea.vmem %s1, %s160
      $region36: #{correspondence_net_forward.98} parent=31 // pred_fallthru
        _
    $region32: #{correspondence_net_forward.98} parent=5 // pred_fallthru
      _
  $region6: #{correspondence_net_forward.98} parent=0 // loop_footer
    %s11 = sadd.s32 1, %s7
  $region7: #{correspondence_net_forward.98} parent=0 // loop_footer_branch
    %6 = sbr.rel target = $region3
  $region8: #{correspondence_net_forward.98} parent=0 // loop_exit
    _

// kernel: correspondence_net_forward.99
$region0: #{correspondence_net_forward.99}
  #allocation0 [shape = 'u32[]', space=smem, size = 0x4, offset = 0x4, fixed_abs, tag = 'smem constant byte address 0x4 - core index']
  #allocation1 [shape = 'u32[144,128]{1,0:T(1,128)}', space=vmem, size = 0x12000, scoped, tag = 'internal scratch']
  %s0 = inlined_call_operand.vmem [shape: bf16[8,384], index: 0, kind: input, shape index: {}]
  %s1 = inlined_call_operand.vmem [shape: bf16[384,128], index: 1, kind: input, shape index: {}]
  %s2 = inlined_call_operand.vmem [shape: f32[1,128], index: 2, kind: input, shape index: {}]
  %s3 = inlined_call_operand.vmem [shape: bf16[8,128], index: 3, kind: output, shape index: {}]
  %s4 = sld [smem:[#allocation0]]
  $region22: #{correspondence_net_forward.99} parent=0
    _
  %s6 = ssub.s32 1, %s4
  %s7 = scalar_select 0, %s6, %s4
  // Predicated region
  $region2: #{correspondence_net_forward.99} parent=0 // pred_check
    _
  $region3: #{correspondence_net_forward.99} parent=0 // pred_check_branch
    %9 = sbr.rel (0) target = $region5
  $region4: #{correspondence_net_forward.99} parent=0 // pred_region
    _
  $region5: #{correspondence_net_forward.99} parent=0 // pred_fallthru
    _
  // Predicated region
  $region6: #{correspondence_net_forward.99} parent=0 // pred_check
    _
  $region7: #{correspondence_net_forward.99} parent=0 // pred_check_branch
    %11 = sbr.rel (0) target = $region9
  $region8: #{correspondence_net_forward.99} parent=0 // pred_region
    _
  $region9: #{correspondence_net_forward.99} parent=0 // pred_fallthru
    _
  // Predicated region
  $region10: #{correspondence_net_forward.99} parent=0 // pred_check
    _
  $region11: #{correspondence_net_forward.99} parent=0 // pred_check_branch
    %13 = sbr.rel (0) target = $region13
  $region12: #{correspondence_net_forward.99} parent=0 // pred_region
    _
  $region13: #{correspondence_net_forward.99} parent=0 // pred_fallthru
    _
  %v15 = vld [vmem:[%s0] sm:$0xff]
  %v16 = vld [vmem:[%s0 + $0x8] sm:$0xf]
  %v17 = vld [vmem:[%s1] sm:$0xf]
  %v18 = vld [vmem:[%s1 + $0x4] sm:$0xf]
  %v19 = vld [vmem:[%s1 + $0x8] sm:$0xf]
  %v20 = vld [vmem:[%s1 + $0xc] sm:$0xf]
  %v21 = vld [vmem:[%s1 + $0x10] sm:$0xf]
  %v22 = vld [vmem:[%s1 + $0x14] sm:$0xf]
  %v23 = vld [vmem:[%s1 + $0x18] sm:$0xf]
  %v24 = vld [vmem:[%s1 + $0x1c] sm:$0xf]
  %v25 = vld [vmem:[%s1 + $0x20] sm:$0xf]
  %v26 = vld [vmem:[%s1 + $0x24] sm:$0xf]
  %v27 = vld [vmem:[%s1 + $0x28] sm:$0xf]
  %v28 = vld [vmem:[%s1 + $0x2c] sm:$0xf]
  %v29 = vld [vmem:[%s1 + $0x30] sm:$0xf]
  %v30 = vld [vmem:[%s1 + $0x34] sm:$0xf]
  %v31 = vld [vmem:[%s1 + $0x38] sm:$0xf]
  %v32 = vld [vmem:[%s1 + $0x3c] sm:$0xf]
  %v33 = vld [vmem:[%s1 + $0x40] sm:$0xf]
  %v34 = vld [vmem:[%s1 + $0x44] sm:$0xf]
  %v35 = vld [vmem:[%s1 + $0x48] sm:$0xf]
  %v36 = vld [vmem:[%s1 + $0x4c] sm:$0xf]
  %v37 = vld [vmem:[%s1 + $0x50] sm:$0xf]
  %v38 = vld [vmem:[%s1 + $0x54] sm:$0xf]
  %v39 = vld [vmem:[%s1 + $0x58] sm:$0xf]
  %v40 = vld [vmem:[%s1 + $0x5c] sm:$0xf]
  %v41 = vld [vmem:[%s1 + $0x60] sm:$0xf]
  %v42 = vld [vmem:[%s1 + $0x64] sm:$0xf]
  %v43 = vld [vmem:[%s1 + $0x68] sm:$0xf]
  %v44 = vld [vmem:[%s1 + $0x6c] sm:$0xf]
  %v45 = vld [vmem:[%s1 + $0x70] sm:$0xf]
  %v46 = vld [vmem:[%s1 + $0x74] sm:$0xf]
  %v47 = vld [vmem:[%s1 + $0x78] sm:$0xf]
  %v48 = vld [vmem:[%s1 + $0x7c] sm:$0xf]
  %v49 = vld [vmem:[%s1 + $0x80] sm:$0xf]
  %v50 = vld [vmem:[%s1 + $0x84] sm:$0xf]
  %v51 = vld [vmem:[%s1 + $0x88] sm:$0xf]
  %v52 = vld [vmem:[%s1 + $0x8c] sm:$0xf]
  %v53 = vld [vmem:[%s1 + $0x90] sm:$0xf]
  %v54 = vld [vmem:[%s1 + $0x94] sm:$0xf]
  %v55 = vld [vmem:[%s1 + $0x98] sm:$0xf]
  %v56 = vld [vmem:[%s1 + $0x9c] sm:$0xf]
  %v57 = vld [vmem:[%s1 + $0xa0] sm:$0xf]
  %v58 = vld [vmem:[%s1 + $0xa4] sm:$0xf]
  %v59 = vld [vmem:[%s1 + $0xa8] sm:$0xf]
  %v60 = vld [vmem:[%s1 + $0xac] sm:$0xf]
  %v61 = vld [vmem:[%s1 + $0xb0] sm:$0xf]
  %v62 = vld [vmem:[%s1 + $0xb4] sm:$0xf]
  %v63 = vld [vmem:[%s1 + $0xb8] sm:$0xf]
  %v64 = vld [vmem:[%s1 + $0xbc] sm:$0xf]
  %v65 = vld [vmem:[%s2] sm:$0x1]
  %v67 = vlaneseq
  %v68 = vshrl.u32 %v67, 7
  %v69 = vsub.s32 0, %v68
  %v70 = vrot.slane %v65, %v69
  %v74 = vunpack.c.l.b16 %v15
  %v75 = vunpack.c.h.b16 %v15
  %v76 = vunpack.c.l.b16 %v16
  %v77 = vpack.c.b16 %v74, %v74
  %v78 = vpack.c.b16 %v75, %v75
  %v79 = vpack.c.b16 %v76, %v76
  %v131 = vunpack.c.l.b16 %v17
  %v132 = vunpack.c.l.b16 %v18
  %v133 = vunpack.c.l.b16 %v19
  %v134 = vunpack.c.l.b16 %v20
  %v135 = vunpack.c.l.b16 %v21
  %v136 = vunpack.c.l.b16 %v22
  %v137 = vunpack.c.l.b16 %v23
  %v138 = vunpack.c.l.b16 %v24
  %v139 = vunpack.c.l.b16 %v25
  %v140 = vunpack.c.l.b16 %v26
  %v141 = vunpack.c.l.b16 %v27
  %v142 = vunpack.c.l.b16 %v28
  %v143 = vunpack.c.l.b16 %v29
  %v144 = vunpack.c.l.b16 %v30
  %v145 = vunpack.c.l.b16 %v31
  %v146 = vunpack.c.l.b16 %v32
  %v147 = vunpack.c.l.b16 %v33
  %v148 = vunpack.c.l.b16 %v34
  %v149 = vunpack.c.l.b16 %v35
  %v150 = vunpack.c.l.b16 %v36
  %v151 = vunpack.c.l.b16 %v37
  %v152 = vunpack.c.l.b16 %v38
  %v153 = vunpack.c.l.b16 %v39
  %v154 = vunpack.c.l.b16 %v40
  %v155 = vunpack.c.l.b16 %v41
  %v156 = vunpack.c.l.b16 %v42
  %v157 = vunpack.c.l.b16 %v43
  %v158 = vunpack.c.l.b16 %v44
  %v159 = vunpack.c.l.b16 %v45
  %v160 = vunpack.c.l.b16 %v46
  %v161 = vunpack.c.l.b16 %v47
  %v162 = vunpack.c.l.b16 %v48
  %v163 = vunpack.c.l.b16 %v49
  %v164 = vunpack.c.l.b16 %v50
  %v165 = vunpack.c.l.b16 %v51
  %v166 = vunpack.c.l.b16 %v52
  %v167 = vunpack.c.l.b16 %v53
  %v168 = vunpack.c.l.b16 %v54
  %v169 = vunpack.c.l.b16 %v55
  %v170 = vunpack.c.l.b16 %v56
  %v171 = vunpack.c.l.b16 %v57
  %v172 = vunpack.c.l.b16 %v58
  %v173 = vunpack.c.l.b16 %v59
  %v174 = vunpack.c.l.b16 %v60
  %v175 = vunpack.c.l.b16 %v61
  %v176 = vunpack.c.l.b16 %v62
  %v177 = vunpack.c.l.b16 %v63
  %v178 = vunpack.c.l.b16 %v64
  %v179 = vpack.c.b16 %v132, %v131
  %v180 = vpack.c.b16 %v134, %v133
  %v181 = vpack.c.b16 %v136, %v135
  %v182 = vpack.c.b16 %v138, %v137
  %v183 = vpack.c.b16 %v140, %v139
  %v184 = vpack.c.b16 %v142, %v141
  %v185 = vpack.c.b16 %v144, %v143
  %v186 = vpack.c.b16 %v146, %v145
  %v187 = vpack.c.b16 %v148, %v147
  %v188 = vpack.c.b16 %v150, %v149
  %v189 = vpack.c.b16 %v152, %v151
  %v190 = vpack.c.b16 %v154, %v153
  %v191 = vpack.c.b16 %v156, %v155
  %v192 = vpack.c.b16 %v158, %v157
  %v193 = vpack.c.b16 %v160, %v159
  %v194 = vpack.c.b16 %v162, %v161
  %v195 = vpack.c.b16 %v164, %v163
  %v196 = vpack.c.b16 %v166, %v165
  %v197 = vpack.c.b16 %v168, %v167
  %v198 = vpack.c.b16 %v170, %v169
  %v199 = vpack.c.b16 %v172, %v171
  %v200 = vpack.c.b16 %v174, %v173
  %v201 = vpack.c.b16 %v176, %v175
  %v202 = vpack.c.b16 %v178, %v177
  %227 = vmatprep.subr.bf16.mxu0 0
  %228 = vmatpush1.bf16.msra.mxu0 %v179
  %229 = vmatprep.subr.bf16.mxu0 0
  %230 = vmatpush1.bf16.msra.mxu0 %v180
  %231 = vmatprep.subr.bf16.mxu0 0
  %232 = vmatpush1.bf16.msra.mxu0 %v181
  %233 = vmatprep.subr.bf16.mxu0 0
  %234 = vmatpush1.bf16.msra.mxu0 %v182
  %235 = vmatprep.subr.bf16.mxu0 0
  %236 = vmatpush1.bf16.msra.mxu0 %v183
  %237 = vmatprep.subr.bf16.mxu0 0
  %238 = vmatpush1.bf16.msra.mxu0 %v184
  %239 = vmatprep.subr.bf16.mxu0 0
  %240 = vmatpush1.bf16.msra.mxu0 %v185
  %241 = vmatprep.subr.bf16.mxu0 0
  %242 = vmatpush1.bf16.msra.mxu0 %v186
  %243 = vmatprep.subr.bf16.mxu0 0
  %244 = vmatpush1.bf16.msra.mxu0 %v187
  %245 = vmatprep.subr.bf16.mxu0 0
  %246 = vmatpush1.bf16.msra.mxu0 %v188
  %247 = vmatprep.subr.bf16.mxu0 0
  %248 = vmatpush1.bf16.msra.mxu0 %v189
  %249 = vmatprep.subr.bf16.mxu0 0
  %250 = vmatpush1.bf16.msra.mxu0 %v190
  %251 = vmatprep.subr.bf16.mxu0 0
  %252 = vmatpush1.bf16.msra.mxu0 %v191
  %253 = vmatprep.subr.bf16.mxu0 0
  %254 = vmatpush1.bf16.msra.mxu0 %v192
  %255 = vmatprep.subr.bf16.mxu0 0
  %256 = vmatpush1.bf16.msra.mxu0 %v193
  %257 = vmatprep.subr.bf16.mxu0 0
  %258 = vmatpush1.bf16.msra.mxu0 %v194
  %259 = vmatprep.mubr.bf16.mxu0 %v78
  %260 = vmatmul.mubr.bf16.gmra.mrb[0].mxu0 %v77
  %v261 = vpop.f32.mrb[0].mxu0
  %v262 = vadd.f32 %v70, %v261
  %v263 = vpop.f32.mrb[0].mxu0
  %v264 = vpop.f32.mrb[0].mxu0
  %v265 = vpop.f32.mrb[0].mxu0
  %266 = vdwg.mxu0
  %267 = vmatprep.subr.bf16.mxu0 0
  %268 = vmatpush1.bf16.msra.mxu0 %v195
  %269 = vmatprep.subr.bf16.mxu0 0
  %270 = vmatpush1.bf16.msra.mxu0 %v196
  %271 = vmatprep.subr.bf16.mxu0 0
  %272 = vmatpush1.bf16.msra.mxu0 %v197
  %273 = vmatprep.subr.bf16.mxu0 0
  %274 = vmatpush1.bf16.msra.mxu0 %v198
  %275 = vmatprep.subr.bf16.mxu0 0
  %276 = vmatpush1.bf16.msra.mxu0 %v199
  %277 = vmatprep.subr.bf16.mxu0 0
  %278 = vmatpush1.bf16.msra.mxu0 %v200
  %279 = vmatprep.subr.bf16.mxu0 0
  %280 = vmatpush1.bf16.msra.mxu0 %v201
  %281 = vmatprep.subr.bf16.mxu0 0
  %282 = vmatpush1.bf16.msra.mxu0 %v202
  %283 = vmatprep.subr.bf16.mxu0 0
  %284 = vmatpush1.bf16.msra.mxu0 0
  %285 = vmatprep.subr.bf16.mxu0 0
  %286 = vmatpush1.bf16.msra.mxu0 0
  %287 = vmatprep.subr.bf16.mxu0 0
  %288 = vmatpush1.bf16.msra.mxu0 0
  %289 = vmatprep.subr.bf16.mxu0 0
  %290 = vmatpush1.bf16.msra.mxu0 0
  %291 = vmatprep.subr.bf16.mxu0 0
  %292 = vmatpush1.bf16.msra.mxu0 0
  %293 = vmatprep.subr.bf16.mxu0 0
  %294 = vmatpush1.bf16.msra.mxu0 0
  %295 = vmatprep.subr.bf16.mxu0 0
  %296 = vmatpush1.bf16.msra.mxu0 0
  %297 = vmatprep.subr.bf16.mxu0 0
  %298 = vmatpush1.bf16.msra.mxu0 0
  %299 = vmatprep.mubr.bf16.mxu0 0
  %300 = vmatmul.mubr.bf16.gmra.mrb[0].mxu0 %v79
  %v301 = vpop.f32.mrb[0].mxu0
  %v302 = vadd.f32 %v262, %v301
  %v303 = vpop.f32.mrb[0].mxu0
  %v304 = vpop.f32.mrb[0].mxu0
  %v305 = vpop.f32.mrb[0].mxu0
  %306 = vdwg.mxu0
  %v307 = vpack.c.bf16 %v302, %v302
  %308 = vst [vmem:[%s3] sm:$0xf] %v307
  // Predicated region
  $region14: #{correspondence_net_forward.99} parent=0 // pred_check
    _
  $region15: #{correspondence_net_forward.99} parent=0 // pred_check_branch
    %310 = sbr.rel (0) target = $region17
  $region16: #{correspondence_net_forward.99} parent=0 // pred_region
    _
  $region17: #{correspondence_net_forward.99} parent=0 // pred_fallthru
    _
  // Predicated region
  $region18: #{correspondence_net_forward.99} parent=0 // pred_check
    _
  $region19: #{correspondence_net_forward.99} parent=0 // pred_check_branch
    %312 = sbr.rel (0) target = $region21
  $region20: #{correspondence_net_forward.99} parent=0 // pred_region
    _
  $region21: #{correspondence_net_forward.99} parent=0 // pred_fallthru
    _

// kernel: correspondence_net_forward.101
$region0: #{correspondence_net_forward.101}
  #allocation0 [shape = 'u32[]', space=smem, size = 0x4, offset = 0x4, fixed_abs, tag = 'smem constant byte address 0x4 - core index']
  #allocation1 [shape = 'u32[144,128]{1,0:T(1,128)}', space=vmem, size = 0x12000, scoped, tag = 'internal scratch']
  %s0 = inlined_call_operand.vmem [shape: bf16[2,4,32], index: 0, kind: input, shape index: {}]
  %s1 = inlined_call_operand.vmem [shape: bf16[2,4,32], index: 1, kind: input, shape index: {}]
  %s2 = inlined_call_operand.vmem [shape: bf16[2,4,32], index: 2, kind: output, shape index: {}]
  %s3 = sld [smem:[#allocation0]]
  $region41: #{correspondence_net_forward.101} parent=0
    _
  %s5 = ssub.s32 1, %s3
  %s6 = scalar_select 0, %s5, %s3
  loop: start=0, step=1, limit=4
  $region2: #{correspondence_net_forward.101} parent=0 // loop_pre_header
    _
  $region3: #{correspondence_net_forward.101} parent=0 // loop_header
    %s8 = sphi 0, %s12
    %p9 = scmp.ge.s32.totalorder %s8, 4
    %s18 = sphi 0, %s20
    %s21 = sphi 0, %s18
    %s22 = sphi 0, %s21
    %s38 = sphi 0, %s22
    %s44 = sphi 0, %s46
    %s47 = sphi 0, %s44
    %s48 = sphi 0, %s47
    %s64 = sphi 0, %s48
    %s70 = sphi 0, %s72
    %s73 = sphi 0, %s70
    %s74 = sphi 0, %s73
    %s90 = sphi 0, %s74
  $region4: #{correspondence_net_forward.101} parent=0 // loop_header_branch
    %11 = sbr.rel (%p9) target = $region8
  $region5: #{correspondence_net_forward.101} parent=0 // loop_body
    %s13 = ssub.s32 %s8, 1
    %s14 = ssub.s32 %s8, 2
    %s15 = sadd.s32 %s8, 1
    %s16 = ssub.s32 %s8, %s15
    %p17 = scmp.eq.s32.totalorder %s16, 0
    %s19 = sadd.s32 %s18, 1
    %s20 = scalar_select %p17, %s18, %s19
    %p23 = pneg %p17
    %p24 = scmp.eq.s32.totalorder %s8, 1
    %p25 = por %p23, %p24
    %p26 = scmp.ne.s32.totalorder %s18, %s21
    %p27 = scmp.eq.s32.totalorder %s8, 0
    %p28 = por %p26, %p27
    %p29 = scmp.ne.s32.totalorder %s18, %s21
    %p30 = scmp.eq.s32.totalorder %s13, 1
    %p31 = por %p29, %p30
    %p32 = scmp.ne.s32.totalorder %s21, %s22
    %p33 = scmp.eq.s32.totalorder %s13, 0
    %p34 = por %p32, %p33
    %p35 = scmp.ne.s32.totalorder %s21, %s22
    %p36 = scmp.eq.s32.totalorder %s14, 1
    %p37 = por %p35, %p36
    %p39 = scmp.ne.s32.totalorder %s22, %s38
    %p40 = scmp.eq.s32.totalorder %s14, 0
    %p41 = por %p39, %p40
    %s42 = ssub.s32 %s8, %s15
    %p43 = scmp.eq.s32.totalorder %s42, 0
    %s45 = sadd.s32 %s44, 1
    %s46 = scalar_select %p43, %s44, %s45
    %p49 = pneg %p43
    %p50 = scmp.eq.s32.totalorder %s8, 1
    %p51 = por %p49, %p50
    %p52 = scmp.ne.s32.totalorder %s44, %s47
    %p53 = scmp.eq.s32.totalorder %s8, 0
    %p54 = por %p52, %p53
    %p55 = scmp.ne.s32.totalorder %s44, %s47
    %p56 = scmp.eq.s32.totalorder %s13, 1
    %p57 = por %p55, %p56
    %p58 = scmp.ne.s32.totalorder %s47, %s48
    %p59 = scmp.eq.s32.totalorder %s13, 0
    %p60 = por %p58, %p59
    %p61 = scmp.ne.s32.totalorder %s47, %s48
    %p62 = scmp.eq.s32.totalorder %s14, 1
    %p63 = por %p61, %p62
    %p65 = scmp.ne.s32.totalorder %s48, %s64
    %p66 = scmp.eq.s32.totalorder %s14, 0
    %p67 = por %p65, %p66
    %s68 = ssub.s32 %s8, %s15
    %p69 = scmp.eq.s32.totalorder %s68, 0
    %s71 = sadd.s32 %s70, 1
    %s72 = scalar_select %p69, %s70, %s71
    %p75 = pneg %p69
    %p76 = scmp.eq.s32.totalorder %s8, 1
    %p77 = por %p75, %p76
    %p78 = scmp.ne.s32.totalorder %s70, %s73
    %p79 = scmp.eq.s32.totalorder %s8, 0
    %p80 = por %p78, %p79
    %p81 = scmp.ne.s32.totalorder %s70, %s73
    %p82 = scmp.eq.s32.totalorder %s13, 1
    %p83 = por %p81, %p82
    %p84 = scmp.ne.s32.totalorder %s73, %s74
    %p85 = scmp.eq.s32.totalorder %s13, 0
    %p86 = por %p84, %p85
    %p87 = scmp.ne.s32.totalorder %s73, %s74
    %p88 = scmp.eq.s32.totalorder %s14, 1
    %p89 = por %p87, %p88
    %p91 = scmp.ne.s32.totalorder %s74, %s90
    %p92 = scmp.eq.s32.totalorder %s14, 0
    %p93 = por %p91, %p92
    %p94 = scmp.le.s32.totalorder 1, %s8
    %p95 = scmp.lt.s32.totalorder %s8, 3
    %p96 = pnand %p94, %p95
    %p97 = pneg %p96
    // Predicated region
    $region9: #{correspondence_net_forward.101} parent=5 // pred_check
      _
    $region10: #{correspondence_net_forward.101} parent=5 // pred_check_branch
      %99 = sbr.rel (%p96) target = $region12
    $region11: #{correspondence_net_forward.101} parent=5 // pred_region
      %s100 = ssub.s32 %s8, 1
    $region12: #{correspondence_net_forward.101} parent=5 // pred_fallthru
      _
    %p101 = scmp.lt.s32.totalorder %s8, 2
    // Predicated region
    $region13: #{correspondence_net_forward.101} parent=5 // pred_check
      %p102 = pneg %p101
    $region14: #{correspondence_net_forward.101} parent=5 // pred_check_branch
      %104 = sbr.rel (%p102) target = $region16
    $region15: #{correspondence_net_forward.101} parent=5 // pred_region
      // Predicated region
      $region17: #{correspondence_net_forward.101} parent=15 // pred_check
        %p105 = pneg %p28
      $region18: #{correspondence_net_forward.101} parent=15 // pred_check_branch
        %107 = sbr.rel (%p105) target = $region20
      $region19: #{correspondence_net_forward.101} parent=15 // pred_region
        %p108 = scmp.lt.s32.totalorder %s8, 1
        %s109 = scalar_select %p108, %s8, 1
        %s110 = smul.addr %s109, 2
        %s111 = scalar_lea.vmem %s0, %s110
      $region20: #{correspondence_net_forward.101} parent=15 // pred_fallthru
        _
      // Predicated region
      $region21: #{correspondence_net_forward.101} parent=15 // pred_check
        %p112 = pneg %p54
      $region22: #{correspondence_net_forward.101} parent=15 // pred_check_branch
        %114 = sbr.rel (%p112) target = $region24
      $region23: #{correspondence_net_forward.101} parent=15 // pred_region
        %p115 = scmp.lt.s32.totalorder %s8, 1
        %s116 = scalar_select %p115, %s8, 1
        %s117 = smul.addr %s116, 2
        %s118 = scalar_lea.vmem %s1, %s117
      $region24: #{correspondence_net_forward.101} parent=15 // pred_fallthru
        _
    $region16: #{correspondence_net_forward.101} parent=5 // pred_fallthru
      _
    %p119 = scmp.le.s32.totalorder 1, %s8
    %p120 = scmp.lt.s32.totalorder %s8, 3
    %p121 = pnand %p119, %p120
    %p122 = pneg %p121
    // Predicated region
    $region25: #{correspondence_net_forward.101} parent=5 // pred_check
      _
    $region26: #{correspondence_net_forward.101} parent=5 // pred_check_branch
      %124 = sbr.rel (%p121) target = $region28
    $region27: #{correspondence_net_forward.101} parent=5 // pred_region
      %s125 = ssub.s32 %s8, 1
      %p126 = scmp.lt.s32.totalorder %s13, 1
      %s127 = scalar_select %p126, %s13, 1
      %s128 = smul.addr %s127, 2
      %s129 = scalar_lea.vmem %s0, %s128
      %p130 = pneg %p34
      %p131 = pneg %p31
      %p132 = scmp.lt.s32.totalorder %s13, 1
      %s133 = scalar_select %p132, %s13, 1
      %s134 = smul.addr %s133, 2
      %s135 = scalar_lea.vmem %s1, %s134
      %p136 = pneg %p60
      %p137 = pneg %p57
      %p138 = pneg %p86
      %p139 = pneg %p83
      %p140 = scmp.lt.s32.totalorder %s13, 1
      %s141 = scalar_select %p140, %s13, 1
      %s142 = smul.addr %s141, 2
      %s143 = scalar_lea.vmem %s2, %s142
      %p144 = scmp.lt.s32.totalorder %s13, 1
      %s145 = scalar_select %p144, %s13, 1
      %s146 = smul.addr %s145, 2
      %s147 = scalar_lea.vmem %s0, %s146
      %p148 = scmp.lt.s32.totalorder %s13, 1
      %s149 = scalar_select %p148, %s13, 1
      %s150 = smul.addr %s149, 2
      %s151 = scalar_lea.vmem %s1, %s150
      %p152 = scmp.lt.s32.totalorder %s13, 1
      %s153 = scalar_select %p152, %s13, 1
      %s154 = smul.addr %s153, 2
      %s155 = scalar_lea.vmem %s2, %s154
      %v156 = vld [vmem:[%s147] sm:$0x3]
      %v157 = vunpack.c.l.bf16 %v156
      %vm158 = vcmask 257024
      %v159 = vsel %vm158, %v157, 0.0
      %v160 = vrot.slane %v159, 4
      %v161 = vadd.f32 %v159, %v160
      %v162 = vrot.slane %v161, 2
      %v163 = vadd.f32 %v161, %v162
      %v164 = vrot.slane %v163, 1
      %v165 = vadd.f32 %v163, %v164
      %v166 = vrcp.pop 4.0
      %v167 = vmul.f32 %v165, %v166
      %v168 = vsub.f32 %v157, %v167
      %v169 = vmul.f32 %v168, %v168
      %v170 = vsel %vm158, %v169, 0.0
      %v171 = vrot.slane %v170, 4
      %v172 = vadd.f32 %v170, %v171
      %v173 = vrot.slane %v172, 2
      %v174 = vadd.f32 %v172, %v173
      %v175 = vrot.slane %v174, 1
      %v176 = vadd.f32 %v174, %v175
      %v177 = vmul.f32 %v176, %v166
      %v178 = vadd.f32 %v177, 1e-05
      %v179 = vrsqrt.pop %v178
      %v180 = vmul.f32 %v168, %v179
      %v181 = vld [vmem:[%s151] sm:$0x3]
      %v182 = vunpack.c.l.bf16 %v181
      %v183 = vadd.f32 %v180, %v182
      %v184 = vpack.c.bf16 %v183, %v183
      %vm185 = vcmask 254976
      %186 = vst.msk [vmem:[%s155] sm:$0x3] %vm185, %v184
      %p187 = scmp.lt.s32.totalorder %s13, 1
      %s188 = scalar_select %p187, %s13, 1
      %s189 = smul.addr %s188, 2
      %s190 = scalar_lea.vmem %s2, %s189
      // Predicated region
      $region29: #{correspondence_net_forward.101} parent=27 // pred_check
        %p191 = pneg %p83
      $region30: #{correspondence_net_forward.101} parent=27 // pred_check_branch
        %193 = sbr.rel (%p191) target = $region32
      $region31: #{correspondence_net_forward.101} parent=27 // pred_region
        _
      $region32: #{correspondence_net_forward.101} parent=27 // pred_fallthru
        _
    $region28: #{correspondence_net_forward.101} parent=5 // pred_fallthru
      _
    %p194 = scmp.le.s32.totalorder 2, %s8
    // Predicated region
    $region33: #{correspondence_net_forward.101} parent=5 // pred_check
      %p195 = pneg %p194
    $region34: #{correspondence_net_forward.101} parent=5 // pred_check_branch
      %197 = sbr.rel (%p195) target = $region36
    $region35: #{correspondence_net_forward.101} parent=5 // pred_region
      %s198 = ssub.s32 %s8, 2
      // Predicated region
      $region37: #{correspondence_net_forward.101} parent=35 // pred_check
        %p199 = pneg %p89
      $region38: #{correspondence_net_forward.101} parent=35 // pred_check_branch
        %201 = sbr.rel (%p199) target = $region40
      $region39: #{correspondence_net_forward.101} parent=35 // pred_region
        %p202 = scmp.lt.s32.totalorder %s14, 1
        %s203 = scalar_select %p202, %s14, 1
        %s204 = smul.addr %s203, 2
        %s205 = scalar_lea.vmem %s2, %s204
      $region40: #{correspondence_net_forward.101} parent=35 // pred_fallthru
        _
    $region36: #{correspondence_net_forward.101} parent=5 // pred_fallthru
      _
  $region6: #{correspondence_net_forward.101} parent=0 // loop_footer
    %s12 = sadd.s32 1, %s8
  $region7: #{correspondence_net_forward.101} parent=0 // loop_footer_branch
    %7 = sbr.rel target = $region3
  $region8: #{correspondence_net_forward.101} parent=0 // loop_exit
    _

// kernel: correspondence_net_forward.100
$region0: #{correspondence_net_forward.100}
  #allocation0 [shape = 'u32[]', space=smem, size = 0x4, offset = 0x4, fixed_abs, tag = 'smem constant byte address 0x4 - core index']
  #allocation1 [shape = 'u32[144,128]{1,0:T(1,128)}', space=vmem, size = 0x12000, scoped, tag = 'internal scratch']
  %s0 = inlined_call_operand.vmem [shape: bf16[8,128], index: 0, kind: input, shape index: {}]
  %s1 = inlined_call_operand.vmem [shape: bf16[128,128], index: 1, kind: input, shape index: {}]
  %s2 = inlined_call_operand.vmem [shape: f32[1,128], index: 2, kind: input, shape index: {}]
  %s3 = inlined_call_operand.vmem [shape: bf16[8,128], index: 3, kind: output, shape index: {}]
  %s4 = sld [smem:[#allocation0]]
  $region22: #{correspondence_net_forward.100} parent=0
    _
  %s6 = ssub.s32 1, %s4
  %s7 = scalar_select 0, %s6, %s4
  // Predicated region
  $region2: #{correspondence_net_forward.100} parent=0 // pred_check
    _
  $region3: #{correspondence_net_forward.100} parent=0 // pred_check_branch
    %9 = sbr.rel (0) target = $region5
  $region4: #{correspondence_net_forward.100} parent=0 // pred_region
    _
  $region5: #{correspondence_net_forward.100} parent=0 // pred_fallthru
    _
  // Predicated region
  $region6: #{correspondence_net_forward.100} parent=0 // pred_check
    _
  $region7: #{correspondence_net_forward.100} parent=0 // pred_check_branch
    %11 = sbr.rel (0) target = $region9
  $region8: #{correspondence_net_forward.100} parent=0 // pred_region
    _
  $region9: #{correspondence_net_forward.100} parent=0 // pred_fallthru
    _
  // Predicated region
  $region10: #{correspondence_net_forward.100} parent=0 // pred_check
    _
  $region11: #{correspondence_net_forward.100} parent=0 // pred_check_branch
    %13 = sbr.rel (0) target = $region13
  $region12: #{correspondence_net_forward.100} parent=0 // pred_region
    _
  $region13: #{correspondence_net_forward.100} parent=0 // pred_fallthru
    _
  %v15 = vld [vmem:[%s0] sm:$0xf]
  %v16 = vld [vmem:[%s1] sm:$0xf]
  %v17 = vld [vmem:[%s1 + $0x4] sm:$0xf]
  %v18 = vld [vmem:[%s1 + $0x8] sm:$0xf]
  %v19 = vld [vmem:[%s1 + $0xc] sm:$0xf]
  %v20 = vld [vmem:[%s1 + $0x10] sm:$0xf]
  %v21 = vld [vmem:[%s1 + $0x14] sm:$0xf]
  %v22 = vld [vmem:[%s1 + $0x18] sm:$0xf]
  %v23 = vld [vmem:[%s1 + $0x1c] sm:$0xf]
  %v24 = vld [vmem:[%s1 + $0x20] sm:$0xf]
  %v25 = vld [vmem:[%s1 + $0x24] sm:$0xf]
  %v26 = vld [vmem:[%s1 + $0x28] sm:$0xf]
  %v27 = vld [vmem:[%s1 + $0x2c] sm:$0xf]
  %v28 = vld [vmem:[%s1 + $0x30] sm:$0xf]
  %v29 = vld [vmem:[%s1 + $0x34] sm:$0xf]
  %v30 = vld [vmem:[%s1 + $0x38] sm:$0xf]
  %v31 = vld [vmem:[%s1 + $0x3c] sm:$0xf]
  %v32 = vld [vmem:[%s2] sm:$0x1]
  %v34 = vlaneseq
  %v35 = vshrl.u32 %v34, 7
  %v36 = vsub.s32 0, %v35
  %v37 = vrot.slane %v32, %v36
  %v55 = vunpack.c.l.b16 %v16
  %v56 = vunpack.c.l.b16 %v17
  %v57 = vunpack.c.l.b16 %v18
  %v58 = vunpack.c.l.b16 %v19
  %v59 = vunpack.c.l.b16 %v20
  %v60 = vunpack.c.l.b16 %v21
  %v61 = vunpack.c.l.b16 %v22
  %v62 = vunpack.c.l.b16 %v23
  %v63 = vunpack.c.l.b16 %v24
  %v64 = vunpack.c.l.b16 %v25
  %v65 = vunpack.c.l.b16 %v26
  %v66 = vunpack.c.l.b16 %v27
  %v67 = vunpack.c.l.b16 %v28
  %v68 = vunpack.c.l.b16 %v29
  %v69 = vunpack.c.l.b16 %v30
  %v70 = vunpack.c.l.b16 %v31
  %v71 = vpack.c.b16 %v56, %v55
  %v72 = vpack.c.b16 %v58, %v57
  %v73 = vpack.c.b16 %v60, %v59
  %v74 = vpack.c.b16 %v62, %v61
  %v75 = vpack.c.b16 %v64, %v63
  %v76 = vpack.c.b16 %v66, %v65
  %v77 = vpack.c.b16 %v68, %v67
  %v78 = vpack.c.b16 %v70, %v69
  %87 = vmatprep.subr.bf16.mxu0 0
  %88 = vmatpush1.bf16.msra.mxu0 %v71
  %89 = vmatprep.subr.bf16.mxu0 0
  %90 = vmatpush1.bf16.msra.mxu0 %v72
  %91 = vmatprep.subr.bf16.mxu0 0
  %92 = vmatpush1.bf16.msra.mxu0 %v73
  %93 = vmatprep.subr.bf16.mxu0 0
  %94 = vmatpush1.bf16.msra.mxu0 %v74
  %95 = vmatprep.subr.bf16.mxu0 0
  %96 = vmatpush1.bf16.msra.mxu0 %v75
  %97 = vmatprep.subr.bf16.mxu0 0
  %98 = vmatpush1.bf16.msra.mxu0 %v76
  %99 = vmatprep.subr.bf16.mxu0 0
  %100 = vmatpush1.bf16.msra.mxu0 %v77
  %101 = vmatprep.subr.bf16.mxu0 0
  %102 = vmatpush1.bf16.msra.mxu0 %v78
  %103 = vmatprep.subr.bf16.mxu0 0
  %104 = vmatpush1.bf16.msra.mxu0 0
  %105 = vmatprep.subr.bf16.mxu0 0
  %106 = vmatpush1.bf16.msra.mxu0 0
  %107 = vmatprep.subr.bf16.mxu0 0
  %108 = vmatpush1.bf16.msra.mxu0 0
  %109 = vmatprep.subr.bf16.mxu0 0
  %110 = vmatpush1.bf16.msra.mxu0 0
  %111 = vmatprep.subr.bf16.mxu0 0
  %112 = vmatpush1.bf16.msra.mxu0 0
  %113 = vmatprep.subr.bf16.mxu0 0
  %114 = vmatpush1.bf16.msra.mxu0 0
  %115 = vmatprep.subr.bf16.mxu0 0
  %116 = vmatpush1.bf16.msra.mxu0 0
  %117 = vmatprep.subr.bf16.mxu0 0
  %118 = vmatpush1.bf16.msra.mxu0 0
  %119 = vmatprep.mubr.bf16.mxu0 0
  %120 = vmatmul.mubr.bf16.gmra.mrb[0].mxu0 %v15
  %v121 = vpop.f32.mrb[0].mxu0
  %v122 = vadd.f32 %v37, %v121
  %v123 = vpop.f32.mrb[0].mxu0
  %v124 = vpop.f32.mrb[0].mxu0
  %v125 = vpop.f32.mrb[0].mxu0
  %126 = vdwg.mxu0
  %v127 = vpack.c.bf16 %v122, %v122
  %128 = vst [vmem:[%s3] sm:$0xf] %v127
  // Predicated region
  $region14: #{correspondence_net_forward.100} parent=0 // pred_check
    _
  $region15: #{correspondence_net_forward.100} parent=0 // pred_check_branch
    %130 = sbr.rel (0) target = $region17
  $region16: #{correspondence_net_forward.100} parent=0 // pred_region
    _
  $region17: #{correspondence_net_forward.100} parent=0 // pred_fallthru
    _
  // Predicated region
  $region18: #{correspondence_net_forward.100} parent=0 // pred_check
    _
  $region19: #{correspondence_net_forward.100} parent=0 // pred_check_branch
    %132 = sbr.rel (0) target = $region21
  $region20: #{correspondence_net_forward.100} parent=0 // pred_region
    _
  $region21: #{correspondence_net_forward.100} parent=0 // pred_fallthru
    _

// kernel: correspondence_net_forward.169
$region0: #{correspondence_net_forward.169}
  #allocation0 [shape = 'u32[]', space=smem, size = 0x4, offset = 0x4, fixed_abs, tag = 'smem constant byte address 0x4 - core index']
  #allocation1 [shape = 'u32[144,128]{1,0:T(1,128)}', space=vmem, size = 0x12000, scoped, tag = 'internal scratch']
  #allocation2 [shape = 'bf16[4,32]{1,0:T(4,128)(2,1)}', space=vmem, size = 0x400, scoped, tag = 'scratch operand']
  #allocation3 [shape = 'f32[1,32]{1,0:T(1,128)}', space=vmem, size = 0x200, scoped, tag = 'scratch operand']
  %s0 = inlined_call_operand.vmem [shape: bf16[2,4,32], index: 0, kind: input, shape index: {}]
  %s1 = inlined_call_operand.vmem [shape: bf16[2,8,32], index: 1, kind: input, shape index: {}]
  %s2 = inlined_call_operand.vmem [shape: bf16[2,8,32], index: 2, kind: input, shape index: {}]
  %s3 = inlined_call_operand.vmem [shape: f32[32,3], index: 3, kind: input, shape index: {}]
  %s4 = inlined_call_operand.vmem [shape: f32[1,3], index: 4, kind: input, shape index: {}]
  %s5 = inlined_call_operand.hbm [shape: f32[2,4,32], index: 5, kind: output, shape index: {0}]
  %s6 = inlined_call_operand.hbm [shape: f32[2,4,3], index: 6, kind: output, shape index: {1}]
  %7 = xla_tuple %s5, %s6
  %s8 = sld [smem:[#allocation0]]
  $region69: #{correspondence_net_forward.169} parent=0
    _
  %s10 = ssub.s32 1, %s8
  %s11 = scalar_select 0, %s10, %s8
  $region1: #{correspondence_net_forward.169} parent=0
    #allocation4 [shape = 'u8[4096]{0}', space=vmem, size = 0x1000, scoped, tag = 'output window, operand 0']
    #allocation5 [shape = 's32[2]{0}', space=sflag, size = 0x8, scoped, tag = 'scoped memory for correspondence_net_forward.169']
    #allocation6 [shape = 'u8[4096]{0}', space=vmem, size = 0x1000, scoped, tag = 'output window, operand 1']
    #allocation7 [shape = 's32[2]{0}', space=sflag, size = 0x8, scoped, tag = 'scoped memory for correspondence_net_forward.169']
    %12 = vsyncpa [#allocation5], 0
    %s13 = scalar_lea.sflag [#allocation5], 1
    %14 = vsyncpa %s13, 0
    %15 = vsyncpa [#allocation7], 0
    %s16 = scalar_lea.sflag [#allocation7], 1
    %17 = vsyncpa %s16, 0
    loop: start=0, step=1, limit=4
    $region2: #{correspondence_net_forward.169} parent=1 // loop_pre_header
      _
    $region3: #{correspondence_net_forward.169} parent=1 // loop_header
      %s19 = sphi 0, %s23
      %p20 = scmp.ge.s32.totalorder %s19, 4
      %s26 = sphi 0, %s38
      %s27 = sphi 0, %s34
      %s28 = sphi 0, %s26
      %s29 = sphi 0, %s27
      %s30 = sphi 0, %s28
      %s31 = sphi 0, %s29
      %s41 = sphi 0, %s43
      %s44 = sphi 0, %s41
      %s45 = sphi 0, %s44
      %s61 = sphi 0, %s45
      %s67 = sphi 0, %s69
      %s70 = sphi 0, %s67
      %s71 = sphi 0, %s70
      %s87 = sphi 0, %s71
      %s93 = sphi 0, %s95
      %s96 = sphi 0, %s93
      %s97 = sphi 0, %s96
      %s113 = sphi 0, %s97
      %s117 = sphi 0, %s117
      %s119 = sphi 0, %s117
      %s120 = sphi 0, %s119
      %s134 = sphi 0, %s120
      %s138 = sphi 0, %s138
      %s140 = sphi 0, %s138
      %s141 = sphi 0, %s140
      %s155 = sphi 0, %s141
      %s161 = sphi 0, %s163
      %s164 = sphi 0, %s161
      %s165 = sphi 0, %s164
      %s181 = sphi 0, %s165
      %s187 = sphi 0, %s189
      %s190 = sphi 0, %s187
      %s191 = sphi 0, %s190
      %s207 = sphi 0, %s191
    $region4: #{correspondence_net_forward.169} parent=1 // loop_header_branch
      %22 = sbr.rel (%p20) target = $region8
    $region5: #{correspondence_net_forward.169} parent=1 // loop_body
      %s24 = ssub.s32 %s19, 1
      %s25 = ssub.s32 %s19, 2
      %s32 = sadd.s32 1, %s27
      %p33 = scmp.ge.s32.totalorder %s32, 1
      %s34 = scalar_select %p33, 0, %s32
      %s35 = sadd.s32 1, %s26
      %s36 = scalar_select %p33, %s35, %s26
      %p37 = scmp.ge.s32.totalorder %s36, 2
      %s38 = scalar_select %p37, 0, %s36
      %s39 = ssub.s32 %s26, %s38
      %p40 = scmp.eq.s32.totalorder %s39, 0
      %s42 = sadd.s32 %s41, 1
      %s43 = scalar_select %p40, %s41, %s42
      %p46 = pneg %p40
      %p47 = scmp.eq.s32.totalorder %s19, 1
      %p48 = por %p46, %p47
      %p49 = scmp.ne.s32.totalorder %s41, %s44
      %p50 = scmp.eq.s32.totalorder %s19, 0
      %p51 = por %p49, %p50
      %p52 = scmp.ne.s32.totalorder %s41, %s44
      %p53 = scmp.eq.s32.totalorder %s24, 1
      %p54 = por %p52, %p53
      %p55 = scmp.ne.s32.totalorder %s44, %s45
      %p56 = scmp.eq.s32.totalorder %s24, 0
      %p57 = por %p55, %p56
      %p58 = scmp.ne.s32.totalorder %s44, %s45
      %p59 = scmp.eq.s32.totalorder %s25, 1
      %p60 = por %p58, %p59
      %p62 = scmp.ne.s32.totalorder %s45, %s61
      %p63 = scmp.eq.s32.totalorder %s25, 0
      %p64 = por %p62, %p63
      %s65 = ssub.s32 %s26, %s38
      %p66 = scmp.eq.s32.totalorder %s65, 0
      %s68 = sadd.s32 %s67, 1
      %s69 = scalar_select %p66, %s67, %s68
      %p72 = pneg %p66
      %p73 = scmp.eq.s32.totalorder %s19, 1
      %p74 = por %p72, %p73
      %p75 = scmp.ne.s32.totalorder %s67, %s70
      %p76 = scmp.eq.s32.totalorder %s19, 0
      %p77 = por %p75, %p76
      %p78 = scmp.ne.s32.totalorder %s67, %s70
      %p79 = scmp.eq.s32.totalorder %s24, 1
      %p80 = por %p78, %p79
      %p81 = scmp.ne.s32.totalorder %s70, %s71
      %p82 = scmp.eq.s32.totalorder %s24, 0
      %p83 = por %p81, %p82
      %p84 = scmp.ne.s32.totalorder %s70, %s71
      %p85 = scmp.eq.s32.totalorder %s25, 1
      %p86 = por %p84, %p85
      %p88 = scmp.ne.s32.totalorder %s71, %s87
      %p89 = scmp.eq.s32.totalorder %s25, 0
      %p90 = por %p88, %p89
      %s91 = ssub.s32 %s26, %s38
      %p92 = scmp.eq.s32.totalorder %s91, 0
      %s94 = sadd.s32 %s93, 1
      %s95 = scalar_select %p92, %s93, %s94
      %p98 = pneg %p92
      %p99 = scmp.eq.s32.totalorder %s19, 1
      %p100 = por %p98, %p99
      %p101 = scmp.ne.s32.totalorder %s93, %s96
      %p102 = scmp.eq.s32.totalorder %s19, 0
      %p103 = por %p101, %p102
      %p104 = scmp.ne.s32.totalorder %s93, %s96
      %p105 = scmp.eq.s32.totalorder %s24, 1
      %p106 = por %p104, %p105
      %p107 = scmp.ne.s32.totalorder %s96, %s97
      %p108 = scmp.eq.s32.totalorder %s24, 0
      %p109 = por %p107, %p108
      %p110 = scmp.ne.s32.totalorder %s96, %s97
      %p111 = scmp.eq.s32.totalorder %s25, 1
      %p112 = por %p110, %p111
      %p114 = scmp.ne.s32.totalorder %s97, %s113
      %p115 = scmp.eq.s32.totalorder %s25, 0
      %p116 = por %p114, %p115
      %s118 = sadd.s32 %s117, 1
      %p121 = scmp.eq.s32.totalorder %s19, 1
      %p122 = scmp.ne.s32.totalorder %s117, %s119
      %p123 = scmp.eq.s32.totalorder %s19, 0
      %p124 = por %p122, %p123
      %p125 = scmp.ne.s32.totalorder %s117, %s119
      %p126 = scmp.eq.s32.totalorder %s24, 1
      %p127 = por %p125, %p126
      %p128 = scmp.ne.s32.totalorder %s119, %s120
      %p129 = scmp.eq.s32.totalorder %s24, 0
      %p130 = por %p128, %p129
      %p131 = scmp.ne.s32.totalorder %s119, %s120
      %p132 = scmp.eq.s32.totalorder %s25, 1
      %p133 = por %p131, %p132
      %p135 = scmp.ne.s32.totalorder %s120, %s134
      %p136 = scmp.eq.s32.totalorder %s25, 0
      %p137 = por %p135, %p136
      %s139 = sadd.s32 %s138, 1
      %p142 = scmp.eq.s32.totalorder %s19, 1
      %p143 = scmp.ne.s32.totalorder %s138, %s140
      %p144 = scmp.eq.s32.totalorder %s19, 0
      %p145 = por %p143, %p144
      %p146 = scmp.ne.s32.totalorder %s138, %s140
      %p147 = scmp.eq.s32.totalorder %s24, 1
      %p148 = por %p146, %p147
      %p149 = scmp.ne.s32.totalorder %s140, %s141
      %p150 = scmp.eq.s32.totalorder %s24, 0
      %p151 = por %p149, %p150
      %p152 = scmp.ne.s32.totalorder %s140, %s141
      %p153 = scmp.eq.s32.totalorder %s25, 1
      %p154 = por %p152, %p153
      %p156 = scmp.ne.s32.totalorder %s141, %s155
      %p157 = scmp.eq.s32.totalorder %s25, 0
      %p158 = por %p156, %p157
      %s159 = ssub.s32 %s26, %s38
      %p160 = scmp.eq.s32.totalorder %s159, 0
      %s162 = sadd.s32 %s161, 1
      %s163 = scalar_select %p160, %s161, %s162
      %p166 = pneg %p160
      %p167 = scmp.eq.s32.totalorder %s19, 1
      %p168 = por %p166, %p167
      %p169 = scmp.ne.s32.totalorder %s161, %s164
      %p170 = scmp.eq.s32.totalorder %s19, 0
      %p171 = por %p169, %p170
      %p172 = scmp.ne.s32.totalorder %s161, %s164
      %p173 = scmp.eq.s32.totalorder %s24, 1
      %p174 = por %p172, %p173
      %p175 = scmp.ne.s32.totalorder %s164, %s165
      %p176 = scmp.eq.s32.totalorder %s24, 0
      %p177 = por %p175, %p176
      %p178 = scmp.ne.s32.totalorder %s164, %s165
      %p179 = scmp.eq.s32.totalorder %s25, 1
      %p180 = por %p178, %p179
      %p182 = scmp.ne.s32.totalorder %s165, %s181
      %p183 = scmp.eq.s32.totalorder %s25, 0
      %p184 = por %p182, %p183
      %s185 = ssub.s32 %s26, %s38
      %p186 = scmp.eq.s32.totalorder %s185, 0
      %s188 = sadd.s32 %s187, 1
      %s189 = scalar_select %p186, %s187, %s188
      %p192 = pneg %p186
      %p193 = scmp.eq.s32.totalorder %s19, 1
      %p194 = por %p192, %p193
      %p195 = scmp.ne.s32.totalorder %s187, %s190
      %p196 = scmp.eq.s32.totalorder %s19, 0
      %p197 = por %p195, %p196
      %p198 = scmp.ne.s32.totalorder %s187, %s190
      %p199 = scmp.eq.s32.totalorder %s24, 1
      %p200 = por %p198, %p199
      %p201 = scmp.ne.s32.totalorder %s190, %s191
      %p202 = scmp.eq.s32.totalorder %s24, 0
      %p203 = por %p201, %p202
      %p204 = scmp.ne.s32.totalorder %s190, %s191
      %p205 = scmp.eq.s32.totalorder %s25, 1
      %p206 = por %p204, %p205
      %p208 = scmp.ne.s32.totalorder %s191, %s207
      %p209 = scmp.eq.s32.totalorder %s25, 0
      %p210 = por %p208, %p209
      %p211 = scmp.le.s32.totalorder 1, %s19
      %p212 = scmp.lt.s32.totalorder %s19, 3
      %p213 = pnand %p211, %p212
      %p214 = pneg %p213
      // Predicated region
      $region9: #{correspondence_net_forward.169} parent=5 // pred_check
        _
      $region10: #{correspondence_net_forward.169} parent=5 // pred_check_branch
        %216 = sbr.rel (%p213) target = $region12
      $region11: #{correspondence_net_forward.169} parent=5 // pred_region
        %s217 = ssub.s32 %s19, 1
        // Predicated region
        $region13: #{correspondence_net_forward.169} parent=11 // pred_check
          %p218 = pneg %p130
        $region14: #{correspondence_net_forward.169} parent=11 // pred_check_branch
          %220 = sbr.rel (%p218) target = $region16
        $region15: #{correspondence_net_forward.169} parent=11 // pred_region
          _
        $region16: #{correspondence_net_forward.169} parent=11 // pred_fallthru
          _
        // Predicated region
        $region17: #{correspondence_net_forward.169} parent=11 // pred_check
          %p221 = pneg %p151
        $region18: #{correspondence_net_forward.169} parent=11 // pred_check_branch
          %223 = sbr.rel (%p221) target = $region20
        $region19: #{correspondence_net_forward.169} parent=11 // pred_region
          _
        $region20: #{correspondence_net_forward.169} parent=11 // pred_fallthru
          _
      $region12: #{correspondence_net_forward.169} parent=5 // pred_fallthru
        _
      %p224 = scmp.lt.s32.totalorder %s19, 2
      // Predicated region
      $region21: #{correspondence_net_forward.169} parent=5 // pred_check
        %p225 = pneg %p224
      $region22: #{correspondence_net_forward.169} parent=5 // pred_check_branch
        %227 = sbr.rel (%p225) target = $region24
      $region23: #{correspondence_net_forward.169} parent=5 // pred_region
        // Predicated region
        $region25: #{correspondence_net_forward.169} parent=23 // pred_check
          %p228 = pneg %p51
        $region26: #{correspondence_net_forward.169} parent=23 // pred_check_branch
          %230 = sbr.rel (%p228) target = $region28
        $region27: #{correspondence_net_forward.169} parent=23 // pred_region
          %p231 = scmp.lt.s32.totalorder %s26, 1
          %s232 = scalar_select %p231, %s26, 1
          %s233 = smul.addr %s232, 2
          %s234 = scalar_lea.vmem %s0, %s233
        $region28: #{correspondence_net_forward.169} parent=23 // pred_fallthru
          _
        // Predicated region
        $region29: #{correspondence_net_forward.169} parent=23 // pred_check
          %p235 = pneg %p77
        $region30: #{correspondence_net_forward.169} parent=23 // pred_check_branch
          %237 = sbr.rel (%p235) target = $region32
        $region31: #{correspondence_net_forward.169} parent=23 // pred_region
          %p238 = scmp.lt.s32.totalorder %s26, 1
          %s239 = scalar_select %p238, %s26, 1
          %s240 = smul.addr %s239, 4
          %s241 = scalar_lea.vmem %s1, %s240
        $region32: #{correspondence_net_forward.169} parent=23 // pred_fallthru
          _
        // Predicated region
        $region33: #{correspondence_net_forward.169} parent=23 // pred_check
          %p242 = pneg %p103
        $region34: #{correspondence_net_forward.169} parent=23 // pred_check_branch
          %244 = sbr.rel (%p242) target = $region36
        $region35: #{correspondence_net_forward.169} parent=23 // pred_region
          %p245 = scmp.lt.s32.totalorder %s26, 1
          %s246 = scalar_select %p245, %s26, 1
          %s247 = smul.addr %s246, 4
          %s248 = scalar_lea.vmem %s2, %s247
        $region36: #{correspondence_net_forward.169} parent=23 // pred_fallthru
          _
      $region24: #{correspondence_net_forward.169} parent=5 // pred_fallthru
        _
      %p249 = scmp.le.s32.totalorder 1, %s19
      %p250 = scmp.lt.s32.totalorder %s19, 3
      %p251 = pnand %p249, %p250
      %p252 = pneg %p251
      // Predicated region
      $region37: #{correspondence_net_forward.169} parent=5 // pred_check
        _
      $region38: #{correspondence_net_forward.169} parent=5 // pred_check_branch
        %254 = sbr.rel (%p251) target = $region40
      $region39: #{correspondence_net_forward.169} parent=5 // pred_region
        %s255 = ssub.s32 %s19, 1
        %p256 = scmp.lt.s32.totalorder %s28, 1
        %s257 = scalar_select %p256, %s28, 1
        %s258 = smul.addr %s257, 2
        %s259 = scalar_lea.vmem %s0, %s258
        %p260 = pneg %p57
        %p261 = pneg %p54
        %p262 = scmp.lt.s32.totalorder %s28, 1
        %s263 = scalar_select %p262, %s28, 1
        %s264 = smul.addr %s263, 4
        %s265 = scalar_lea.vmem %s1, %s264
        %p266 = pneg %p83
        %p267 = pneg %p80
        %p268 = scmp.lt.s32.totalorder %s28, 1
        %s269 = scalar_select %p268, %s28, 1
        %s270 = smul.addr %s269, 4
        %s271 = scalar_lea.vmem %s2, %s270
        %p272 = pneg %p109
        %p273 = pneg %p106
        %p274 = pneg %p130
        %p275 = pneg %p127
        %p276 = pneg %p151
        %p277 = pneg %p148
        %p278 = pneg %p177
        %p279 = pneg %p174
        %s280 = sand.u32 %s164, 1
        %s281 = scalar_lea.sflag [#allocation5], %s280
        %s282 = sand.u32 %s164, 1
        %s283 = smul.addr %s282, 4
        %s284 = scalar_lea.vmem [#allocation4], %s283
        %p285 = pneg %p203
        %p286 = pneg %p200
        %s287 = sand.u32 %s190, 1
        %s288 = scalar_lea.sflag [#allocation7], %s287
        %s289 = sand.u32 %s190, 1
        %s290 = smul.addr %s289, 4
        %s291 = scalar_lea.vmem [#allocation6], %s290
        %p292 = scmp.lt.s32.totalorder %s28, 1
        %s293 = scalar_select %p292, %s28, 1
        %s294 = smul.addr %s293, 2
        %s295 = scalar_lea.vmem %s0, %s294
        %p296 = scmp.lt.s32.totalorder %s28, 1
        %s297 = scalar_select %p296, %s28, 1
        %s298 = smul.addr %s297, 4
        %s299 = scalar_lea.vmem %s1, %s298
        %p300 = scmp.lt.s32.totalorder %s28, 1
        %s301 = scalar_select %p300, %s28, 1
        %s302 = smul.addr %s301, 4
        %s303 = scalar_lea.vmem %s2, %s302
        %p305 = scmp.eq.s32.totalorder %s29, 0
        // Predicated region
        $region41: #{correspondence_net_forward.169} parent=39 // pred_check
          %p306 = pneg %p305
        $region42: #{correspondence_net_forward.169} parent=39 // pred_check_branch
          %308 = sbr.rel (%p306) target = $region44
        $region43: #{correspondence_net_forward.169} parent=39 // pred_region
          %vm309 = vcmask 257024
          %310 = vst.msk [vmem:[%s284] sm:$0xf] %vm309, 0.0
          %v311 = vld [vmem:[%s295] sm:$0x3]
          %v312 = vunpack.c.l.bf16 %v311
          %v313 = vld [vmem:[%s299] sm:$0xf]
          %v314 = vunpack.c.l.bf16 %v313
          %v315 = vsel %vm309, %v312, 0.0
          %v316 = vrot.slane %v315, 4
          %v317 = vadd.f32 %v315, %v316
          %v318 = vrot.slane %v317, 2
          %v319 = vadd.f32 %v317, %v318
          %v320 = vrot.slane %v319, 1
          %v321 = vadd.f32 %v319, %v320
          %v322 = vrcp.pop 4.0
          %v323 = vmul.f32 %v321, %v322
          %v324 = vsub.f32 %v312, %v323
          %v325 = vmul.f32 %v324, %v324
          %v326 = vsel %vm309, %v325, 0.0
          %327 = vadd.xlane.f32.xlu0 %v326
          %v328 = vpop.xlane.xlu0 %327
          %v329 = vrsqrt.pop %v328
          %v330 = vmul.f32 %v328, %v329
          %vm331 = vcmp.eq.f32.partialorder %v328, inf
          %v332 = vsel %vm331, %v328, %v330
          %vm333 = vcmp.eq.f32.partialorder %v328, 0.0
          %v334 = vand.u32 %v328, 2147483648
          %v335 = vsel %vm333, %v334, %v332
          %v336 = vlaneseq
          %v337 = vshrl.u32 %v336, 7
          %vm338 = vcmp.lt.s32.totalorder %v337, 4
          %v339 = vsel %vm338, 1, 0
          %v340 = vcvt.s32.f32 %v339
          %v341 = vmul.f32 %v314, %v340
          %vm342 = vcmask 261120
          %v343 = vsel %vm342, %v341, 0.0
          %v344 = vrot.slane %v343, 4
          %v345 = vadd.f32 %v343, %v344
          %v346 = vrot.slane %v345, 2
          %v347 = vadd.f32 %v345, %v346
          %v348 = vrot.slane %v347, 1
          %v349 = vadd.f32 %v347, %v348
          %v350 = vmul.f32 %v349, %v322
          %vm351 = vcmask 253952
          %352 = vst.msk [vmem:[#allocation3] sm:$0x1] %vm351, %v350
          %v353 = vsub.f32 %v314, %v350
          %v354 = vrcp.pop %v335
          %v355 = vmul.f32 %v353, %v354
          %v356 = vpack.c.bf16 %v355, %v355
          %vm357 = vcmask 254976
          %358 = vst.msk [vmem:[#allocation2] sm:$0x3] %vm357, %v356
        $region44: #{correspondence_net_forward.169} parent=39 // pred_fallthru
          _
        %v359 = vld [vmem:[#allocation3] sm:$0x1]
        %s360 = smul.u32 %s29, 8
        %s361 = sshra.s32 %s360, 3
        %s362 = sand.u32 %s360, 7
        %s363 = smul.addr %s361, 4
        %s364 = scalar_lea.vmem %s299, %s363
        %v365 = vld [vmem:[%s364] sm:$0xf]
        %v366 = vunpack.c.l.bf16 %v365
        %v368 = vlaneseq
        %v369 = vshrl.u32 %v368, 7
        %v370 = vsub.s32 0, %v369
        %v371 = vrot.slane %v359, %v370
        %v373 = vsub.f32 %v366, %v371
        %v374 = vmul.f32 %v373, %v373
        %vm375 = vcmask 261120
        %v376 = vsel %vm375, %v374, 0.0
        %377 = vadd.xlane.f32.xlu0 %v376
        %v378 = vpop.xlane.xlu0 %377
        %v379 = vrsqrt.pop %v378
        %v380 = vmul.f32 %v378, %v379
        %vm381 = vcmp.eq.f32.partialorder %v378, inf
        %v382 = vsel %vm381, %v378, %v380
        %vm383 = vcmp.eq.f32.partialorder %v378, 0.0
        %v384 = vand.u32 %v378, 2147483648
        %v385 = vsel %vm383, %v384, %v382
        %v386 = vrcp.pop %v385
        %v387 = vmul.f32 %v373, %v386
        %v388 = vpack.c.bf16 %v387, %v387
        %v389 = vld [vmem:[#allocation2] sm:$0x3]
        %v391 = vsel %vm375, %v389, 0
        %v394 = vsel %vm375, %v388, 0
        %396 = vmatprep.subr.bf16.mxu0 0
        %397 = vmatpush1.bf16.xpose.msra.mxu0 %v394
        %398 = vmatprep.subr.bf16.mxu0 0
        %399 = vmatpush1.bf16.xpose.msra.mxu0 0
        %400 = vmatprep.subr.bf16.mxu0 0
        %401 = vmatpush1.bf16.xpose.msra.mxu0 0
        %402 = vmatprep.subr.bf16.mxu0 0
        %403 = vmatpush1.bf16.xpose.msra.mxu0 0
        %404 = vmatprep.subr.bf16.mxu0 0
        %405 = vmatpush1.bf16.xpose.msra.mxu0 0
        %406 = vmatprep.subr.bf16.mxu0 0
        %407 = vmatpush1.bf16.xpose.msra.mxu0 0
        %408 = vmatprep.subr.bf16.mxu0 0
        %409 = vmatpush1.bf16.xpose.msra.mxu0 0
        %410 = vmatprep.subr.bf16.mxu0 0
        %411 = vmatpush1.bf16.xpose.msra.mxu0 0
        %412 = vmatprep.subr.bf16.mxu0 0
        %413 = vmatpush1.bf16.xpose.msra.mxu0 0
        %414 = vmatprep.subr.bf16.mxu0 0
        %415 = vmatpush1.bf16.xpose.msra.mxu0 0
        %416 = vmatprep.subr.bf16.mxu0 0
        %417 = vmatpush1.bf16.xpose.msra.mxu0 0
        %418 = vmatprep.subr.bf16.mxu0 0
        %419 = vmatpush1.bf16.xpose.msra.mxu0 0
        %420 = vmatprep.subr.bf16.mxu0 0
        %421 = vmatpush1.bf16.xpose.msra.mxu0 0
        %422 = vmatprep.subr.bf16.mxu0 0
        %423 = vmatpush1.bf16.xpose.msra.mxu0 0
        %424 = vmatprep.subr.bf16.mxu0 0
        %425 = vmatpush1.bf16.xpose.msra.mxu0 0
        %426 = vmatprep.subr.bf16.mxu0 0
        %427 = vmatpush1.bf16.xpose.msra.mxu0 0
        %428 = vmatprep.mubr.bf16.mxu0 0
        %429 = vmatmul.mubr.bf16.gmra.mrb[0].mxu0 %v391
        %v430 = vpop.f32.mrb[0].mxu0
        %v431 = vadd.f32 0.0, %v430
        %v432 = vpop.f32.mrb[0].mxu0
        %v433 = vpop.f32.mrb[0].mxu0
        %v434 = vpop.f32.mrb[0].mxu0
        %435 = vdwg.mxu0
        %vm436 = vcmask 60416
        %v437 = vsel %vm436, %v431, -inf
        %v438 = vrot.slane %v437, 4
        %v439 = vmax.f32 %v437, %v438
        %v440 = vrot.slane %v439, 2
        %v441 = vmax.f32 %v439, %v440
        %v442 = vrot.slane %v441, 1
        %v443 = vmax.f32 %v441, %v442
        %v444 = vsub.f32 %v431, %v443
        %v445 = vmul.f32 %v444, 1.442695
        %v446 = vpow.pop %v445
        %v447 = vsel %vm436, %v446, 0.0
        %v448 = vrot.slane %v447, 4
        %v449 = vadd.f32 %v447, %v448
        %v450 = vrot.slane %v449, 2
        %v451 = vadd.f32 %v449, %v450
        %v452 = vrot.slane %v451, 1
        %v453 = vadd.f32 %v451, %v452
        %v454 = vrcp.pop %v453
        %v455 = vmul.f32 1.0, %v454
        %v456 = vmul.f32 %v446, %v455
        %v457 = vpack.c.bf16 %v456, %v456
        %s458 = smul.addr %s361, 4
        %s459 = scalar_lea.vmem %s303, %s458
        %v460 = vld [vmem:[%s459] sm:$0xf]
        %v461 = vld [vmem:[%s284] sm:$0xf]
        %vm462 = vcmask 64512
        %v464 = vsel %vm462, %v457, 0
        %vm466 = vcmask 1043456
        %v468 = vsel %vm466, %v460, 0
        %470 = vmatprep.subr.bf16.mxu0 0
        %471 = vmatpush1.bf16.msra.mxu0 %v468
        %472 = vmatprep.subr.bf16.mxu0 0
        %473 = vmatpush1.bf16.msra.mxu0 0
        %474 = vmatprep.subr.bf16.mxu0 0
        %475 = vmatpush1.bf16.msra.mxu0 0
        %476 = vmatprep.subr.bf16.mxu0 0
        %477 = vmatpush1.bf16.msra.mxu0 0
        %478 = vmatprep.subr.bf16.mxu0 0
        %479 = vmatpush1.bf16.msra.mxu0 0
        %480 = vmatprep.subr.bf16.mxu0 0
        %481 = vmatpush1.bf16.msra.mxu0 0
        %482 = vmatprep.subr.bf16.mxu0 0
        %483 = vmatpush1.bf16.msra.mxu0 0
        %484 = vmatprep.subr.bf16.mxu0 0
        %485 = vmatpush1.bf16.msra.mxu0 0
        %486 = vmatprep.subr.bf16.mxu0 0
        %487 = vmatpush1.bf16.msra.mxu0 0
        %488 = vmatprep.subr.bf16.mxu0 0
        %489 = vmatpush1.bf16.msra.mxu0 0
        %490 = vmatprep.subr.bf16.mxu0 0
        %491 = vmatpush1.bf16.msra.mxu0 0
        %492 = vmatprep.subr.bf16.mxu0 0
        %493 = vmatpush1.bf16.msra.mxu0 0
        %494 = vmatprep.subr.bf16.mxu0 0
        %495 = vmatpush1.bf16.msra.mxu0 0
        %496 = vmatprep.subr.bf16.mxu0 0
        %497 = vmatpush1.bf16.msra.mxu0 0
        %498 = vmatprep.subr.bf16.mxu0 0
        %499 = vmatpush1.bf16.msra.mxu0 0
        %500 = vmatprep.subr.bf16.mxu0 0
        %501 = vmatpush1.bf16.msra.mxu0 0
        %502 = vmatprep.mubr.bf16.mxu0 0
        %503 = vmatmul.mubr.bf16.gmra.mrb[0].mxu0 %v464
        %v504 = vpop.f32.mrb[0].mxu0
        %v505 = vadd.f32 0.0, %v504
        %v506 = vpop.f32.mrb[0].mxu0
        %v507 = vpop.f32.mrb[0].mxu0
        %v508 = vpop.f32.mrb[0].mxu0
        %509 = vdwg.mxu0
        %v510 = vadd.f32 %v461, %v505
        %vm511 = vcmask 257024
        %512 = vst.msk [vmem:[%s284] sm:$0xf] %vm511, %v510
        // Predicated region
        $region45: #{correspondence_net_forward.169} parent=39 // pred_check
          %p513 = pneg %p305
        $region46: #{correspondence_net_forward.169} parent=39 // pred_check_branch
          %515 = sbr.rel (%p513) target = $region48
        $region47: #{correspondence_net_forward.169} parent=39 // pred_region
          %v516 = vld [vmem:[%s284] sm:$0xf]
          %v517 = vld [vmem:[%s3] sm:$0xff]
          %v518 = vld [vmem:[%s3 + $0x8] sm:$0xff]
          %v519 = vld [vmem:[%s3 + $0x10] sm:$0xff]
          %v520 = vld [vmem:[%s3 + $0x18] sm:$0xff]
          %v521 = vld [vmem:[%s4] sm:$0x1]
          %v523 = vlaneseq
          %v524 = vshrl.u32 %v523, 7
          %v525 = vsub.s32 0, %v524
          %v526 = vrot.slane %v521, %v525
          %v529 = vsel %vm375, %v516, 0
          %531 = vmatprep.subr.mxu0 0.0
          %532 = vmatpush1.msra.mxu0 %v517
          %533 = vmatprep.subr.mxu0 0.0
          %534 = vmatpush1.msra.mxu0 %v518
          %535 = vmatprep.subr.mxu0 0.0
          %536 = vmatpush1.msra.mxu0 %v519
          %537 = vmatprep.subr.mxu0 0.0
          %538 = vmatpush1.msra.mxu0 %v520
          %539 = vmatprep.subr.mxu0 0.0
          %540 = vmatpush1.msra.mxu0 0.0
          %541 = vmatprep.subr.mxu0 0.0
          %542 = vmatpush1.msra.mxu0 0.0
          %543 = vmatprep.subr.mxu0 0.0
          %544 = vmatpush1.msra.mxu0 0.0
          %545 = vmatprep.subr.mxu0 0.0
          %546 = vmatpush1.msra.mxu0 0.0
          %547 = vmatprep.subr.mxu0 0.0
          %548 = vmatpush1.msra.mxu0 0.0
          %549 = vmatprep.subr.mxu0 0.0
          %550 = vmatpush1.msra.mxu0 0.0
          %551 = vmatprep.subr.mxu0 0.0
          %552 = vmatpush1.msra.mxu0 0.0
          %553 = vmatprep.subr.mxu0 0.0
          %554 = vmatpush1.msra.mxu0 0.0
          %555 = vmatprep.subr.mxu0 0.0
          %556 = vmatpush1.msra.mxu0 0.0
          %557 = vmatprep.subr.mxu0 0.0
          %558 = vmatpush1.msra.mxu0 0.0
          %559 = vmatprep.subr.mxu0 0.0
          %560 = vmatpush1.msra.mxu0 0.0
          %561 = vmatprep.subr.mxu0 0.0
          %562 = vmatpush1.msra.mxu0 0.0
          %563 = vmatprep.subr.mxu0 0.0
          %564 = vmatpush1.msra.mxu0 0.0
          %565 = vmatprep.subr.mxu0 0.0
          %566 = vmatpush1.msra.mxu0 0.0
          %567 = vmatprep.subr.mxu0 0.0
          %568 = vmatpush1.msra.mxu0 0.0
          %569 = vmatprep.subr.mxu0 0.0
          %570 = vmatpush1.msra.mxu0 0.0
          %571 = vmatprep.subr.mxu0 0.0
          %572 = vmatpush1.msra.mxu0 0.0
          %573 = vmatprep.subr.mxu0 0.0
          %574 = vmatpush1.msra.mxu0 0.0
          %575 = vmatprep.subr.mxu0 0.0
          %576 = vmatpush1.msra.mxu0 0.0
          %577 = vmatprep.subr.mxu0 0.0
          %578 = vmatpush1.msra.mxu0 0.0
          %579 = vmatprep.subr.mxu0 0.0
          %580 = vmatpush1.msra.mxu0 0.0
          %581 = vmatprep.subr.mxu0 0.0
          %582 = vmatpush1.msra.mxu0 0.0
          %583 = vmatprep.subr.mxu0 0.0
          %584 = vmatpush1.msra.mxu0 0.0
          %585 = vmatprep.subr.mxu0 0.0
          %586 = vmatpush1.msra.mxu0 0.0
          %587 = vmatprep.subr.mxu0 0.0
          %588 = vmatpush1.msra.mxu0 0.0
          %589 = vmatprep.subr.mxu0 0.0
          %590 = vmatpush1.msra.mxu0 0.0
          %591 = vmatprep.subr.mxu0 0.0
          %592 = vmatpush1.msra.mxu0 0.0
          %593 = vmatprep.subr.mxu0 0.0
          %594 = vmatpush1.msra.mxu0 0.0
          %595 = vmatprep.mubr.f32.mxu0 0.0
          %596 = vmatmul.mubr.f32.gmra.mrb[0].mxu0 %v529
          %v597 = vpop.f32.mrb[0].mxu0
          %v598 = vadd.f32 %v526, %v597
          %v599 = vpop.f32.mrb[0].mxu0
          %600 = vdwg.mxu0
          %v601 = vtanh.pop %v598
          %vm602 = vcmask 19456
          %603 = vst.msk [vmem:[%s291] sm:$0xf] %vm602, %v601
        $region48: #{correspondence_net_forward.169} parent=39 // pred_fallthru
          _
        %s604 = sand.u32 %s164, 1
        %s605 = scalar_lea.sflag [#allocation5], %s604
        %s606 = sand.u32 %s164, 1
        %s607 = smul.addr %s606, 4
        %s608 = scalar_lea.vmem [#allocation4], %s607
        %s609 = sand.u32 %s190, 1
        %s610 = scalar_lea.sflag [#allocation7], %s609
        %s611 = sand.u32 %s190, 1
        %s612 = smul.addr %s611, 4
        %s613 = scalar_lea.vmem [#allocation6], %s612
        // Predicated region
        $region49: #{correspondence_net_forward.169} parent=39 // pred_check
          %p614 = pneg %p174
        $region50: #{correspondence_net_forward.169} parent=39 // pred_check_branch
          %616 = sbr.rel (%p614) target = $region52
        $region51: #{correspondence_net_forward.169} parent=39 // pred_region
          %s618 = ssub.s32 64, 64
          %619 = vsyncadd %s605, %s618
          %s620 = smul.addr %s28, 64
          %s621 = scalar_lea.hbm %s5, %s620
          %s623 = sshll.u32 %s608, 4
          %s624 = int_to_ptr.vmem [resolvable:$true] %s623
          %626 = dma.vmem_to_hbm [thread:$0]  %s624, 64, %s621, %s605
        $region52: #{correspondence_net_forward.169} parent=39 // pred_fallthru
          _
        // Predicated region
        $region53: #{correspondence_net_forward.169} parent=39 // pred_check
          %p627 = pneg %p200
        $region54: #{correspondence_net_forward.169} parent=39 // pred_check_branch
          %629 = sbr.rel (%p627) target = $region56
        $region55: #{correspondence_net_forward.169} parent=39 // pred_region
          %s631 = ssub.s32 64, 64
          %632 = vsyncadd %s610, %s631
          %s633 = smul.addr %s28, 64
          %s634 = scalar_lea.hbm %s6, %s633
          %s636 = sshll.u32 %s613, 4
          %s637 = int_to_ptr.vmem [resolvable:$true] %s636
          %639 = dma.vmem_to_hbm [thread:$0]  %s637, 64, %s634, %s610
        $region56: #{correspondence_net_forward.169} parent=39 // pred_fallthru
          _
      $region40: #{correspondence_net_forward.169} parent=5 // pred_fallthru
        _
      %p640 = scmp.le.s32.totalorder 2, %s19
      // Predicated region
      $region57: #{correspondence_net_forward.169} parent=5 // pred_check
        %p641 = pneg %p640
      $region58: #{correspondence_net_forward.169} parent=5 // pred_check_branch
        %643 = sbr.rel (%p641) target = $region60
      $region59: #{correspondence_net_forward.169} parent=5 // pred_region
        %s644 = ssub.s32 %s19, 2
        // Predicated region
        $region61: #{correspondence_net_forward.169} parent=59 // pred_check
          %p645 = pneg %p180
        $region62: #{correspondence_net_forward.169} parent=59 // pred_check_branch
          %647 = sbr.rel (%p645) target = $region64
        $region63: #{correspondence_net_forward.169} parent=59 // pred_region
          %s648 = sand.u32 %s165, 1
          %s649 = scalar_lea.sflag [#allocation5], %s648
          %s650 = sand.u32 %s165, 1
          %s651 = smul.addr %s650, 4
          %s652 = scalar_lea.vmem [#allocation4], %s651
          %653 = dma.done %s649, 64
        $region64: #{correspondence_net_forward.169} parent=59 // pred_fallthru
          _
        // Predicated region
        $region65: #{correspondence_net_forward.169} parent=59 // pred_check
          %p654 = pneg %p206
        $region66: #{correspondence_net_forward.169} parent=59 // pred_check_branch
          %656 = sbr.rel (%p654) target = $region68
        $region67: #{correspondence_net_forward.169} parent=59 // pred_region
          %s657 = sand.u32 %s191, 1
          %s658 = scalar_lea.sflag [#allocation7], %s657
          %s659 = sand.u32 %s191, 1
          %s660 = smul.addr %s659, 4
          %s661 = scalar_lea.vmem [#allocation6], %s660
          %662 = dma.done %s658, 64
        $region68: #{correspondence_net_forward.169} parent=59 // pred_fallthru
          _
      $region60: #{correspondence_net_forward.169} parent=5 // pred_fallthru
        _
    $region6: #{correspondence_net_forward.169} parent=1 // loop_footer
      %s23 = sadd.s32 1, %s19
    $region7: #{correspondence_net_forward.169} parent=1 // loop_footer_branch
      %18 = sbr.rel target = $region3
    $region8: #{correspondence_net_forward.169} parent=1 // loop_exit
      _
    %663 = vsyncpa [#allocation5], 1
    %s664 = scalar_lea.sflag [#allocation5], 1
    %665 = vsyncpa %s664, 1
    %666 = vsyncpa [#allocation7], 1
    %s667 = scalar_lea.sflag [#allocation7], 1
    %668 = vsyncpa %s667, 1

</llo_original>
